<compile_context>
chip_gen: v7x
topology: tpu7x:2x2x1
jax: 0.10.0
libtpu: 0.0.40
codegen_flags: <defaults>
</compile_context>

<pallas_src>
import functools

import jax
import jax.numpy as jnp
from jax.experimental import pallas as pl
from jax.experimental.pallas import tpu as pltpu

_EPS = 1e-5


def _round_up(x, m):
    return (x + m - 1) // m * m


# ------------------------------ Pallas kernel ------------------------------- #
def _fused_forward_kernel(cols_ref, w1_ref, wb1_ref, b1_ref, wb2_ref, b2_ref,
                          mask_ref, o_ref, abuf, bbuf, *, WP, R, margin):
    """Whole OneImageNetModel forward for one image, VMEM-resident.

    cols_ref : (R, K1P)    bf16  conv1 im2col, embedded in a zero-padded HPxWP grid
    w1_ref   : (K1P, FP)   bf16  conv1 weight matrix
    wb1_ref  : (9, FP, FP) bf16  BasicBlock conv1 taps, BN1 scale folded in
    b1_ref   : (1, FP)     f32   folded BN1 bias
    wb2_ref  : (9, FP, FP) bf16  BasicBlock conv2 taps, BN2 scale folded in
    b2_ref   : (1, FP)     f32   folded BN2 bias
    mask_ref : (R, 1)      f32   1.0 on interior rows of the padded grid, 0.0 on halo
    o_ref    : (R, FP)     f32   output on the padded grid (interior sliced outside)
    abuf/bbuf: (R + 2*margin, FP) f32 VMEM scratch with zero halo for shifted reads
    """
    FP = o_ref.shape[-1]

    # ---- conv1 (5x5 valid) as one MXU matmul (bf16 in, f32 acc) + ReLU.
    # Halo rows of cols are zero, so halo rows of y1 are exactly zero.
    y1 = jnp.dot(cols_ref[...], w1_ref[...], preferred_element_type=jnp.float32)
    y1 = jnp.maximum(y1, 0.0)                                   # (R, FP) f32

    # Zero only the halo (margin) rows of the staging buffers; the interior
    # R rows are fully overwritten below.  Unconditional => megacore-safe.
    halo = jnp.zeros((margin, FP), jnp.float32)                 # hoisted broadcast
    abuf[:margin, :] = halo
    abuf[margin + R:, :] = halo
    bbuf[:margin, :] = halo
    bbuf[margin + R:, :] = halo

    # Stage conv1 output (also the residual identity) into zero-halo buffer A.
    abuf[margin:margin + R, :] = y1

    # Flat-row offsets of the 9 taps of a 3x3 / pad=1 conv on the padded grid.
    taps = [(dy - 1) * WP + (dx - 1) for dy in range(3) for dx in range(3)]
    mask = mask_ref[...]                                        # (R, 1)

    def conv3x3(buf, w_ref):
        """9 shifted (R,FP)x(FP,FP) bf16 matmuls, f32 accumulation."""
        acc = None
        for k, off in enumerate(taps):
            a = buf[margin + off:margin + off + R, :].astype(jnp.bfloat16)
            d = jnp.dot(a, w_ref[k], preferred_element_type=jnp.float32)
            acc = d if acc is None else acc + d
        return acc

    # ---- BasicBlock conv1: folded BN bias + ReLU, re-zero grid-halo rows.
    z1 = jnp.maximum(conv3x3(abuf, wb1_ref) + b1_ref[...], 0.0) * mask
    bbuf[margin:margin + R, :] = z1

    # ---- BasicBlock conv2: folded BN bias + residual (conv1 out) + ReLU.
    acc = conv3x3(bbuf, wb2_ref) + b2_ref[...] + abuf[margin:margin + R, :]
    o_ref[...] = jnp.maximum(acc, 0.0)


# ------------------------------- JAX wrapper -------------------------------- #
def fold_bn(gamma, beta, mean, var):
    scale = gamma / jnp.sqrt(var + _EPS)
    bias = beta - mean * scale
    return scale, bias


def one_image_net_forward(x_nchw, p):
    """Pallas implementation of OneImageNetModel.forward (n=1, residuals=True, ReLU)."""
    x = jnp.transpose(x_nchw, (0, 2, 3, 1)).astype(jnp.float32)     # NHWC
    N, H, W, Cin = x.shape
    F = p["w1"].shape[0]
    KH = p["w1"].shape[2]                                           # 5
    OH, OW = H - KH + 1, W - KH + 1

    # Padded spatial grid: 1-pixel zero halo for the 3x3 "same" convs, W rounded
    # up to a multiple of 8 so flattening (HP, WP) -> R is tile-clean.
    HP = OH + 2
    WP = _round_up(OW + 2, 8)
    R = HP * WP
    K1 = KH * KH * Cin
    K1P = _round_up(K1, 128)                                        # lane-dense K
    FP = _round_up(F, 128)                                          # lane-dense F
    margin = _round_up(WP + 2, 8)                                   # > max tap offset

    # conv1 im2col (valid), tap order (kh, kw, c), embedded in the padded grid.
    patches = [x[:, kh:kh + OH, kw:kw + OW, :] for kh in range(KH) for kw in range(KH)]
    cols = jnp.concatenate(patches, axis=-1)                        # (N, OH, OW, K1)
    cols = jnp.pad(cols, ((0, 0), (1, HP - OH - 1), (1, WP - OW - 1), (0, K1P - K1)))
    cols = cols.reshape(N, R, K1P).astype(jnp.bfloat16)

    # conv1 weight -> (K1P, FP) matching the im2col column order.
    w1 = jnp.transpose(p["w1"], (2, 3, 1, 0)).reshape(K1, F)
    w1 = jnp.pad(w1, ((0, K1P - K1), (0, FP - F))).astype(jnp.bfloat16)

    # BasicBlock conv weights: fold BN scale in, split into 9 (Cin, Cout) taps.
    def prep_block(w_oihw, gamma, beta, mean, var):
        scale, bias = fold_bn(gamma, beta, mean, var)
        wt = jnp.transpose(w_oihw, (2, 3, 1, 0)) * scale[None, None, None, :]
        wt = wt.reshape(9, F, F)
        wt = jnp.pad(wt, ((0, 0), (0, FP - F), (0, FP - F))).astype(jnp.bfloat16)
        bp = jnp.pad(bias, (0, FP - F)).reshape(1, FP).astype(jnp.float32)
        return wt, bp

    wb1, b1 = prep_block(p["wb1"], p["bn1_gamma"], p["bn1_beta"],
                         p["bn1_mean"], p["bn1_var"])
    wb2, b2 = prep_block(p["wb2"], p["bn2_gamma"], p["bn2_beta"],
                         p["bn2_mean"], p["bn2_var"])

    # Interior mask of the padded grid (rows that hold real output pixels).
    hh = jnp.arange(HP)
    ww = jnp.arange(WP)
    m2 = ((hh >= 1) & (hh <= OH))[:, None] & ((ww >= 1) & (ww <= OW))[None, :]
    mask = m2.reshape(R, 1).astype(jnp.float32)

    kernel = functools.partial(_fused_forward_kernel, WP=WP, R=R, margin=margin)

    out = pl.pallas_call(
        kernel,
        out_shape=jax.ShapeDtypeStruct((N, R, FP), jnp.float32),
        grid=(N,),
        in_specs=[
            pl.BlockSpec((None, R, K1P), lambda n: (n, 0, 0)),      # cols
            pl.BlockSpec((K1P, FP), lambda n: (0, 0)),              # w1
            pl.BlockSpec((9, FP, FP), lambda n: (0, 0, 0)),         # wb1 (BN1 folded)
            pl.BlockSpec((1, FP), lambda n: (0, 0)),                # b1
            pl.BlockSpec((9, FP, FP), lambda n: (0, 0, 0)),         # wb2 (BN2 folded)
            pl.BlockSpec((1, FP), lambda n: (0, 0)),                # b2
            pl.BlockSpec((R, 1), lambda n: (0, 0)),                 # interior mask
        ],
        out_specs=pl.BlockSpec((None, R, FP), lambda n: (n, 0, 0)),
        scratch_shapes=[
            pltpu.VMEM((R + 2 * margin, FP), jnp.float32),
            pltpu.VMEM((R + 2 * margin, FP), jnp.float32),
        ],
        compiler_params=pltpu.CompilerParams(dimension_semantics=("parallel",)),
    )(cols, w1, wb1, b1, wb2, b2, mask)

    out = out.reshape(N, HP, WP, FP)[:, 1:1 + OH, 1:1 + OW, :F]
    return jnp.transpose(out, (0, 3, 1, 2))                         # back to NCHW


# ------------------------------ JAX reference -------------------------------- #
def ref_forward(x_nchw, p):
    def conv(x, w, padding):
        return jax.lax.conv_general_dilated(
            x, w, (1, 1), padding,
            dimension_numbers=("NCHW", "OIHW", "NCHW"),
            precision=jax.lax.Precision.HIGHEST,
        )

    def bn(x, g, b, m, v):
        g, b, m, v = (t[None, :, None, None] for t in (g, b, m, v))
        return (x - m) / jnp.sqrt(v + _EPS) * g + b

    y = jax.nn.relu(conv(x_nchw, p["w1"], "VALID"))
    identity = y
    y = jax.nn.relu(bn(conv(y, p["wb1"], "SAME"),
                       p["bn1_gamma"], p["bn1_beta"], p["bn1_mean"], p["bn1_var"]))
    y = bn(conv(y, p["wb2"], "SAME"),
           p["bn2_gamma"], p["bn2_beta"], p["bn2_mean"], p["bn2_var"]) + identity
    return jax.nn.relu(y)


# ---------------------------------- main ------------------------------------- #
if __name__ == "__main__":
    key = jax.random.PRNGKey(0)
    ks = jax.random.split(key, 12)
    F = 8  # output_filters

    params = {
        "w1":  0.1 * jax.random.normal(ks[0], (F, 3, 5, 5), jnp.float32),
        "wb1": 0.1 * jax.random.normal(ks[1], (F, F, 3, 3), jnp.float32),
        "wb2": 0.1 * jax.random.normal(ks[2], (F, F, 3, 3), jnp.float32),
        "bn1_gamma": 1.0 + 0.1 * jax.random.normal(ks[3], (F,), jnp.float32),
        "bn1_beta":  0.1 * jax.random.normal(ks[4], (F,), jnp.float32),
        "bn1_mean":  0.1 * jax.random.normal(ks[5], (F,), jnp.float32),
        "bn1_var":   0.5 + jax.nn.sigmoid(jax.random.normal(ks[6], (F,), jnp.float32)),
        "bn2_gamma": 1.0 + 0.1 * jax.random.normal(ks[7], (F,), jnp.float32),
        "bn2_beta":  0.1 * jax.random.normal(ks[8], (F,), jnp.float32),
        "bn2_mean":  0.1 * jax.random.normal(ks[9], (F,), jnp.float32),
        "bn2_var":   0.5 + jax.nn.sigmoid(jax.random.normal(ks[10], (F,), jnp.float32)),
    }

    x = jax.random.normal(ks[11], (2, 3, 16, 16), jnp.float32)  # NCHW, like PyTorch

    fwd = jax.jit(one_image_net_forward)
    ref_fn = jax.jit(ref_forward)

    out = jax.block_until_ready(fwd(x, params))
    ref = jax.block_until_ready(ref_fn(x, params))

    assert out.shape == (2, F, 12, 12), out.shape
    # bf16 MXU operands with f32 accumulation; reference is full-f32 HIGHEST.
    max_err = float(jnp.max(jnp.abs(out - ref)))
    assert jnp.allclose(out, ref, rtol=2e-2, atol=2e-2), max_err
    print("KERNEL_OK")
</pallas_src>

<mosaic_0001>
module attributes {stable_mosaic.version = 11 : i64} {
  func.func @_fused_forward_kernel(%arg0: i32, %arg1: memref<1x224x128xbf16, #tpu.memory_space<vmem>>, %arg2: memref<128x128xbf16, #tpu.memory_space<vmem>>, %arg3: memref<9x128x128xbf16, #tpu.memory_space<vmem>>, %arg4: memref<1x128xf32, #tpu.memory_space<vmem>>, %arg5: memref<9x128x128xbf16, #tpu.memory_space<vmem>>, %arg6: memref<1x128xf32, #tpu.memory_space<vmem>>, %arg7: memref<224x1xf32, #tpu.memory_space<vmem>>, %arg8: memref<1x224x128xf32, #tpu.memory_space<vmem>>, %arg9: memref<272x128xf32, #tpu.memory_space<vmem>>, %arg10: memref<272x128xf32, #tpu.memory_space<vmem>>) attributes {dimension_semantics = [#tpu.dimension_semantics<parallel>], iteration_bounds = array<i64: 2>, scalar_prefetch = 0 : i64, scratch_operands = 2 : i64, tpu.core_type = #tpu.core_type<tc>, window_params = [{transform_indices = @transform_0, window_bounds = array<i64: 1, 224, 128>}, {pipeline_mode = #tpu.pipeline_mode<synchronous>, transform_indices = @transform_1, window_bounds = array<i64: 128, 128>}, {pipeline_mode = #tpu.pipeline_mode<synchronous>, transform_indices = @transform_2, window_bounds = array<i64: 9, 128, 128>}, {pipeline_mode = #tpu.pipeline_mode<synchronous>, transform_indices = @transform_3, window_bounds = array<i64: 1, 128>}, {pipeline_mode = #tpu.pipeline_mode<synchronous>, transform_indices = @transform_4, window_bounds = array<i64: 9, 128, 128>}, {pipeline_mode = #tpu.pipeline_mode<synchronous>, transform_indices = @transform_5, window_bounds = array<i64: 1, 128>}, {pipeline_mode = #tpu.pipeline_mode<synchronous>, transform_indices = @transform_6, window_bounds = array<i64: 224, 1>}, {transform_indices = @transform_7, window_bounds = array<i64: 1, 224, 128>}]} {
    %c0 = arith.constant 0 : index
    %c0_0 = arith.constant 0 : index
    %c0_1 = arith.constant 0 : index
    %0 = vector.load %arg1[%c0, %c0_0, %c0_1] : memref<1x224x128xbf16, #tpu.memory_space<vmem>>, vector<1x224x128xbf16>
    %1 = vector.shape_cast %0 : vector<1x224x128xbf16> to vector<224x128xbf16>
    %c0_2 = arith.constant 0 : index
    %c0_3 = arith.constant 0 : index
    %2 = vector.load %arg2[%c0_2, %c0_3] : memref<128x128xbf16, #tpu.memory_space<vmem>>, vector<128x128xbf16>
    %cst = arith.constant dense<0.000000e+00> : vector<224x128xf32>
    %3 = tpu.matmul %1, %2, %cst {dimension_numbers = #tpu.dot_dimension_numbers<[1], [0], [0], [1], [0, 0, 1, 1], [], []>} : vector<224x128xbf16>, vector<128x128xbf16>, vector<224x128xf32> -> vector<224x128xf32>
    %cst_4 = arith.constant 0.000000e+00 : f32
    %4 = vector.broadcast %cst_4 : f32 to vector<224x128xf32>
    %5 = arith.maximumf %3, %4 : vector<224x128xf32>
    %cst_5 = arith.constant 0.000000e+00 : f32
    %6 = vector.broadcast %cst_5 : f32 to vector<24x128xf32>
    %c0_6 = arith.constant 0 : index
    %c0_7 = arith.constant 0 : index
    %7 = vector.load %arg9[%c0_6, %c0_7] : memref<272x128xf32, #tpu.memory_space<vmem>>, vector<24x128xf32>
    tpu.vector_store %arg9[%c0_6, %c0_7], %6 {strides = array<i32>} : memref<272x128xf32, #tpu.memory_space<vmem>>, vector<24x128xf32>,
    %c248 = arith.constant 248 : index
    %c0_8 = arith.constant 0 : index
    %8 = vector.load %arg9[%c248, %c0_8] : memref<272x128xf32, #tpu.memory_space<vmem>>, vector<24x128xf32>
    tpu.vector_store %arg9[%c248, %c0_8], %6 {strides = array<i32>} : memref<272x128xf32, #tpu.memory_space<vmem>>, vector<24x128xf32>,
    %c0_9 = arith.constant 0 : index
    %c0_10 = arith.constant 0 : index
    %9 = vector.load %arg10[%c0_9, %c0_10] : memref<272x128xf32, #tpu.memory_space<vmem>>, vector<24x128xf32>
    tpu.vector_store %arg10[%c0_9, %c0_10], %6 {strides = array<i32>} : memref<272x128xf32, #tpu.memory_space<vmem>>, vector<24x128xf32>,
    %c248_11 = arith.constant 248 : index
    %c0_12 = arith.constant 0 : index
    %10 = vector.load %arg10[%c248_11, %c0_12] : memref<272x128xf32, #tpu.memory_space<vmem>>, vector<24x128xf32>
    tpu.vector_store %arg10[%c248_11, %c0_12], %6 {strides = array<i32>} : memref<272x128xf32, #tpu.memory_space<vmem>>, vector<24x128xf32>,
    %c24 = arith.constant 24 : index
    %c0_13 = arith.constant 0 : index
    %11 = vector.load %arg9[%c24, %c0_13] : memref<272x128xf32, #tpu.memory_space<vmem>>, vector<224x128xf32>
    tpu.vector_store %arg9[%c24, %c0_13], %5 {strides = array<i32>} : memref<272x128xf32, #tpu.memory_space<vmem>>, vector<224x128xf32>,
    %c0_14 = arith.constant 0 : index
    %c0_15 = arith.constant 0 : index
    %12 = vector.load %arg7[%c0_14, %c0_15] : memref<224x1xf32, #tpu.memory_space<vmem>>, vector<224x1xf32>
    %c7 = arith.constant 7 : index
    %c0_16 = arith.constant 0 : index
    %13 = vector.load %arg9[%c7, %c0_16] : memref<272x128xf32, #tpu.memory_space<vmem>>, vector<224x128xf32>
    %14 = arith.truncf %13 : vector<224x128xf32> to vector<224x128xbf16>
    %c0_17 = arith.constant 0 : index
    %c0_18 = arith.constant 0 : index
    %c0_19 = arith.constant 0 : index
    %15 = vector.load %arg3[%c0_17, %c0_18, %c0_19] : memref<9x128x128xbf16, #tpu.memory_space<vmem>>, vector<1x128x128xbf16>
    %16 = vector.shape_cast %15 : vector<1x128x128xbf16> to vector<128x128xbf16>
    %cst_20 = arith.constant dense<0.000000e+00> : vector<224x128xf32>
    %17 = tpu.matmul %14, %16, %cst_20 {dimension_numbers = #tpu.dot_dimension_numbers<[1], [0], [0], [1], [0, 0, 1, 1], [], []>} : vector<224x128xbf16>, vector<128x128xbf16>, vector<224x128xf32> -> vector<224x128xf32>
    %c8 = arith.constant 8 : index
    %c0_21 = arith.constant 0 : index
    %18 = vector.load %arg9[%c8, %c0_21] : memref<272x128xf32, #tpu.memory_space<vmem>>, vector<224x128xf32>
    %19 = arith.truncf %18 : vector<224x128xf32> to vector<224x128xbf16>
    %c1 = arith.constant 1 : index
    %c0_22 = arith.constant 0 : index
    %c0_23 = arith.constant 0 : index
    %20 = vector.load %arg3[%c1, %c0_22, %c0_23] : memref<9x128x128xbf16, #tpu.memory_space<vmem>>, vector<1x128x128xbf16>
    %21 = vector.shape_cast %20 : vector<1x128x128xbf16> to vector<128x128xbf16>
    %cst_24 = arith.constant dense<0.000000e+00> : vector<224x128xf32>
    %22 = tpu.matmul %19, %21, %cst_24 {dimension_numbers = #tpu.dot_dimension_numbers<[1], [0], [0], [1], [0, 0, 1, 1], [], []>} : vector<224x128xbf16>, vector<128x128xbf16>, vector<224x128xf32> -> vector<224x128xf32>
    %23 = arith.addf %17, %22 : vector<224x128xf32>
    %c9 = arith.constant 9 : index
    %c0_25 = arith.constant 0 : index
    %24 = vector.load %arg9[%c9, %c0_25] : memref<272x128xf32, #tpu.memory_space<vmem>>, vector<224x128xf32>
    %25 = arith.truncf %24 : vector<224x128xf32> to vector<224x128xbf16>
    %c2 = arith.constant 2 : index
    %c0_26 = arith.constant 0 : index
    %c0_27 = arith.constant 0 : index
    %26 = vector.load %arg3[%c2, %c0_26, %c0_27] : memref<9x128x128xbf16, #tpu.memory_space<vmem>>, vector<1x128x128xbf16>
    %27 = vector.shape_cast %26 : vector<1x128x128xbf16> to vector<128x128xbf16>
    %cst_28 = arith.constant dense<0.000000e+00> : vector<224x128xf32>
    %28 = tpu.matmul %25, %27, %cst_28 {dimension_numbers = #tpu.dot_dimension_numbers<[1], [0], [0], [1], [0, 0, 1, 1], [], []>} : vector<224x128xbf16>, vector<128x128xbf16>, vector<224x128xf32> -> vector<224x128xf32>
    %29 = arith.addf %23, %28 : vector<224x128xf32>
    %c23 = arith.constant 23 : index
    %c0_29 = arith.constant 0 : index
    %30 = vector.load %arg9[%c23, %c0_29] : memref<272x128xf32, #tpu.memory_space<vmem>>, vector<224x128xf32>
    %31 = arith.truncf %30 : vector<224x128xf32> to vector<224x128xbf16>
    %c3 = arith.constant 3 : index
    %c0_30 = arith.constant 0 : index
    %c0_31 = arith.constant 0 : index
    %32 = vector.load %arg3[%c3, %c0_30, %c0_31] : memref<9x128x128xbf16, #tpu.memory_space<vmem>>, vector<1x128x128xbf16>
    %33 = vector.shape_cast %32 : vector<1x128x128xbf16> to vector<128x128xbf16>
    %cst_32 = arith.constant dense<0.000000e+00> : vector<224x128xf32>
    %34 = tpu.matmul %31, %33, %cst_32 {dimension_numbers = #tpu.dot_dimension_numbers<[1], [0], [0], [1], [0, 0, 1, 1], [], []>} : vector<224x128xbf16>, vector<128x128xbf16>, vector<224x128xf32> -> vector<224x128xf32>
    %35 = arith.addf %29, %34 : vector<224x128xf32>
    %c24_33 = arith.constant 24 : index
    %c0_34 = arith.constant 0 : index
    %36 = vector.load %arg9[%c24_33, %c0_34] : memref<272x128xf32, #tpu.memory_space<vmem>>, vector<224x128xf32>
    %37 = arith.truncf %36 : vector<224x128xf32> to vector<224x128xbf16>
    %c4 = arith.constant 4 : index
    %c0_35 = arith.constant 0 : index
    %c0_36 = arith.constant 0 : index
    %38 = vector.load %arg3[%c4, %c0_35, %c0_36] : memref<9x128x128xbf16, #tpu.memory_space<vmem>>, vector<1x128x128xbf16>
    %39 = vector.shape_cast %38 : vector<1x128x128xbf16> to vector<128x128xbf16>
    %cst_37 = arith.constant dense<0.000000e+00> : vector<224x128xf32>
    %40 = tpu.matmul %37, %39, %cst_37 {dimension_numbers = #tpu.dot_dimension_numbers<[1], [0], [0], [1], [0, 0, 1, 1], [], []>} : vector<224x128xbf16>, vector<128x128xbf16>, vector<224x128xf32> -> vector<224x128xf32>
    %41 = arith.addf %35, %40 : vector<224x128xf32>
    %c25 = arith.constant 25 : index
    %c0_38 = arith.constant 0 : index
    %42 = vector.load %arg9[%c25, %c0_38] : memref<272x128xf32, #tpu.memory_space<vmem>>, vector<224x128xf32>
    %43 = arith.truncf %42 : vector<224x128xf32> to vector<224x128xbf16>
    %c5 = arith.constant 5 : index
    %c0_39 = arith.constant 0 : index
    %c0_40 = arith.constant 0 : index
    %44 = vector.load %arg3[%c5, %c0_39, %c0_40] : memref<9x128x128xbf16, #tpu.memory_space<vmem>>, vector<1x128x128xbf16>
    %45 = vector.shape_cast %44 : vector<1x128x128xbf16> to vector<128x128xbf16>
    %cst_41 = arith.constant dense<0.000000e+00> : vector<224x128xf32>
    %46 = tpu.matmul %43, %45, %cst_41 {dimension_numbers = #tpu.dot_dimension_numbers<[1], [0], [0], [1], [0, 0, 1, 1], [], []>} : vector<224x128xbf16>, vector<128x128xbf16>, vector<224x128xf32> -> vector<224x128xf32>
    %47 = arith.addf %41, %46 : vector<224x128xf32>
    %c39 = arith.constant 39 : index
    %c0_42 = arith.constant 0 : index
    %48 = vector.load %arg9[%c39, %c0_42] : memref<272x128xf32, #tpu.memory_space<vmem>>, vector<224x128xf32>
    %49 = arith.truncf %48 : vector<224x128xf32> to vector<224x128xbf16>
    %c6 = arith.constant 6 : index
    %c0_43 = arith.constant 0 : index
    %c0_44 = arith.constant 0 : index
    %50 = vector.load %arg3[%c6, %c0_43, %c0_44] : memref<9x128x128xbf16, #tpu.memory_space<vmem>>, vector<1x128x128xbf16>
    %51 = vector.shape_cast %50 : vector<1x128x128xbf16> to vector<128x128xbf16>
    %cst_45 = arith.constant dense<0.000000e+00> : vector<224x128xf32>
    %52 = tpu.matmul %49, %51, %cst_45 {dimension_numbers = #tpu.dot_dimension_numbers<[1], [0], [0], [1], [0, 0, 1, 1], [], []>} : vector<224x128xbf16>, vector<128x128xbf16>, vector<224x128xf32> -> vector<224x128xf32>
    %53 = arith.addf %47, %52 : vector<224x128xf32>
    %c40 = arith.constant 40 : index
    %c0_46 = arith.constant 0 : index
    %54 = vector.load %arg9[%c40, %c0_46] : memref<272x128xf32, #tpu.memory_space<vmem>>, vector<224x128xf32>
    %55 = arith.truncf %54 : vector<224x128xf32> to vector<224x128xbf16>
    %c7_47 = arith.constant 7 : index
    %c0_48 = arith.constant 0 : index
    %c0_49 = arith.constant 0 : index
    %56 = vector.load %arg3[%c7_47, %c0_48, %c0_49] : memref<9x128x128xbf16, #tpu.memory_space<vmem>>, vector<1x128x128xbf16>
    %57 = vector.shape_cast %56 : vector<1x128x128xbf16> to vector<128x128xbf16>
    %cst_50 = arith.constant dense<0.000000e+00> : vector<224x128xf32>
    %58 = tpu.matmul %55, %57, %cst_50 {dimension_numbers = #tpu.dot_dimension_numbers<[1], [0], [0], [1], [0, 0, 1, 1], [], []>} : vector<224x128xbf16>, vector<128x128xbf16>, vector<224x128xf32> -> vector<224x128xf32>
    %59 = arith.addf %53, %58 : vector<224x128xf32>
    %c41 = arith.constant 41 : index
    %c0_51 = arith.constant 0 : index
    %60 = vector.load %arg9[%c41, %c0_51] : memref<272x128xf32, #tpu.memory_space<vmem>>, vector<224x128xf32>
    %61 = arith.truncf %60 : vector<224x128xf32> to vector<224x128xbf16>
    %c8_52 = arith.constant 8 : index
    %c0_53 = arith.constant 0 : index
    %c0_54 = arith.constant 0 : index
    %62 = vector.load %arg3[%c8_52, %c0_53, %c0_54] : memref<9x128x128xbf16, #tpu.memory_space<vmem>>, vector<1x128x128xbf16>
    %63 = vector.shape_cast %62 : vector<1x128x128xbf16> to vector<128x128xbf16>
    %cst_55 = arith.constant dense<0.000000e+00> : vector<224x128xf32>
    %64 = tpu.matmul %61, %63, %cst_55 {dimension_numbers = #tpu.dot_dimension_numbers<[1], [0], [0], [1], [0, 0, 1, 1], [], []>} : vector<224x128xbf16>, vector<128x128xbf16>, vector<224x128xf32> -> vector<224x128xf32>
    %65 = arith.addf %59, %64 : vector<224x128xf32>
    %c0_56 = arith.constant 0 : index
    %c0_57 = arith.constant 0 : index
    %66 = vector.load %arg4[%c0_56, %c0_57] : memref<1x128xf32, #tpu.memory_space<vmem>>, vector<1x128xf32>
    %67 = vector.broadcast %66 : vector<1x128xf32> to vector<224x128xf32>
    %68 = arith.addf %65, %67 : vector<224x128xf32>
    %cst_58 = arith.constant 0.000000e+00 : f32
    %69 = vector.broadcast %cst_58 : f32 to vector<224x128xf32>
    %70 = arith.maximumf %68, %69 : vector<224x128xf32>
    %71 = vector.broadcast %12 : vector<224x1xf32> to vector<224x128xf32>
    %72 = arith.mulf %70, %71 : vector<224x128xf32>
    %c24_59 = arith.constant 24 : index
    %c0_60 = arith.constant 0 : index
    %73 = vector.load %arg10[%c24_59, %c0_60] : memref<272x128xf32, #tpu.memory_space<vmem>>, vector<224x128xf32>
    tpu.vector_store %arg10[%c24_59, %c0_60], %72 {strides = array<i32>} : memref<272x128xf32, #tpu.memory_space<vmem>>, vector<224x128xf32>,
    %c7_61 = arith.constant 7 : index
    %c0_62 = arith.constant 0 : index
    %74 = vector.load %arg10[%c7_61, %c0_62] : memref<272x128xf32, #tpu.memory_space<vmem>>, vector<224x128xf32>
    %75 = arith.truncf %74 : vector<224x128xf32> to vector<224x128xbf16>
    %c0_63 = arith.constant 0 : index
    %c0_64 = arith.constant 0 : index
    %c0_65 = arith.constant 0 : index
    %76 = vector.load %arg5[%c0_63, %c0_64, %c0_65] : memref<9x128x128xbf16, #tpu.memory_space<vmem>>, vector<1x128x128xbf16>
    %77 = vector.shape_cast %76 : vector<1x128x128xbf16> to vector<128x128xbf16>
    %cst_66 = arith.constant dense<0.000000e+00> : vector<224x128xf32>
    %78 = tpu.matmul %75, %77, %cst_66 {dimension_numbers = #tpu.dot_dimension_numbers<[1], [0], [0], [1], [0, 0, 1, 1], [], []>} : vector<224x128xbf16>, vector<128x128xbf16>, vector<224x128xf32> -> vector<224x128xf32>
    %c8_67 = arith.constant 8 : index
    %c0_68 = arith.constant 0 : index
    %79 = vector.load %arg10[%c8_67, %c0_68] : memref<272x128xf32, #tpu.memory_space<vmem>>, vector<224x128xf32>
    %80 = arith.truncf %79 : vector<224x128xf32> to vector<224x128xbf16>
    %c1_69 = arith.constant 1 : index
    %c0_70 = arith.constant 0 : index
    %c0_71 = arith.constant 0 : index
    %81 = vector.load %arg5[%c1_69, %c0_70, %c0_71] : memref<9x128x128xbf16, #tpu.memory_space<vmem>>, vector<1x128x128xbf16>
    %82 = vector.shape_cast %81 : vector<1x128x128xbf16> to vector<128x128xbf16>
    %cst_72 = arith.constant dense<0.000000e+00> : vector<224x128xf32>
    %83 = tpu.matmul %80, %82, %cst_72 {dimension_numbers = #tpu.dot_dimension_numbers<[1], [0], [0], [1], [0, 0, 1, 1], [], []>} : vector<224x128xbf16>, vector<128x128xbf16>, vector<224x128xf32> -> vector<224x128xf32>
    %84 = arith.addf %78, %83 : vector<224x128xf32>
    %c9_73 = arith.constant 9 : index
    %c0_74 = arith.constant 0 : index
    %85 = vector.load %arg10[%c9_73, %c0_74] : memref<272x128xf32, #tpu.memory_space<vmem>>, vector<224x128xf32>
    %86 = arith.truncf %85 : vector<224x128xf32> to vector<224x128xbf16>
    %c2_75 = arith.constant 2 : index
    %c0_76 = arith.constant 0 : index
    %c0_77 = arith.constant 0 : index
    %87 = vector.load %arg5[%c2_75, %c0_76, %c0_77] : memref<9x128x128xbf16, #tpu.memory_space<vmem>>, vector<1x128x128xbf16>
    %88 = vector.shape_cast %87 : vector<1x128x128xbf16> to vector<128x128xbf16>
    %cst_78 = arith.constant dense<0.000000e+00> : vector<224x128xf32>
    %89 = tpu.matmul %86, %88, %cst_78 {dimension_numbers = #tpu.dot_dimension_numbers<[1], [0], [0], [1], [0, 0, 1, 1], [], []>} : vector<224x128xbf16>, vector<128x128xbf16>, vector<224x128xf32> -> vector<224x128xf32>
    %90 = arith.addf %84, %89 : vector<224x128xf32>
    %c23_79 = arith.constant 23 : index
    %c0_80 = arith.constant 0 : index
    %91 = vector.load %arg10[%c23_79, %c0_80] : memref<272x128xf32, #tpu.memory_space<vmem>>, vector<224x128xf32>
    %92 = arith.truncf %91 : vector<224x128xf32> to vector<224x128xbf16>
    %c3_81 = arith.constant 3 : index
    %c0_82 = arith.constant 0 : index
    %c0_83 = arith.constant 0 : index
    %93 = vector.load %arg5[%c3_81, %c0_82, %c0_83] : memref<9x128x128xbf16, #tpu.memory_space<vmem>>, vector<1x128x128xbf16>
    %94 = vector.shape_cast %93 : vector<1x128x128xbf16> to vector<128x128xbf16>
    %cst_84 = arith.constant dense<0.000000e+00> : vector<224x128xf32>
    %95 = tpu.matmul %92, %94, %cst_84 {dimension_numbers = #tpu.dot_dimension_numbers<[1], [0], [0], [1], [0, 0, 1, 1], [], []>} : vector<224x128xbf16>, vector<128x128xbf16>, vector<224x128xf32> -> vector<224x128xf32>
    %96 = arith.addf %90, %95 : vector<224x128xf32>
    %c24_85 = arith.constant 24 : index
    %c0_86 = arith.constant 0 : index
    %97 = vector.load %arg10[%c24_85, %c0_86] : memref<272x128xf32, #tpu.memory_space<vmem>>, vector<224x128xf32>
    %98 = arith.truncf %97 : vector<224x128xf32> to vector<224x128xbf16>
    %c4_87 = arith.constant 4 : index
    %c0_88 = arith.constant 0 : index
    %c0_89 = arith.constant 0 : index
    %99 = vector.load %arg5[%c4_87, %c0_88, %c0_89] : memref<9x128x128xbf16, #tpu.memory_space<vmem>>, vector<1x128x128xbf16>
    %100 = vector.shape_cast %99 : vector<1x128x128xbf16> to vector<128x128xbf16>
    %cst_90 = arith.constant dense<0.000000e+00> : vector<224x128xf32>
    %101 = tpu.matmul %98, %100, %cst_90 {dimension_numbers = #tpu.dot_dimension_numbers<[1], [0], [0], [1], [0, 0, 1, 1], [], []>} : vector<224x128xbf16>, vector<128x128xbf16>, vector<224x128xf32> -> vector<224x128xf32>
    %102 = arith.addf %96, %101 : vector<224x128xf32>
    %c25_91 = arith.constant 25 : index
    %c0_92 = arith.constant 0 : index
    %103 = vector.load %arg10[%c25_91, %c0_92] : memref<272x128xf32, #tpu.memory_space<vmem>>, vector<224x128xf32>
    %104 = arith.truncf %103 : vector<224x128xf32> to vector<224x128xbf16>
    %c5_93 = arith.constant 5 : index
    %c0_94 = arith.constant 0 : index
    %c0_95 = arith.constant 0 : index
    %105 = vector.load %arg5[%c5_93, %c0_94, %c0_95] : memref<9x128x128xbf16, #tpu.memory_space<vmem>>, vector<1x128x128xbf16>
    %106 = vector.shape_cast %105 : vector<1x128x128xbf16> to vector<128x128xbf16>
    %cst_96 = arith.constant dense<0.000000e+00> : vector<224x128xf32>
    %107 = tpu.matmul %104, %106, %cst_96 {dimension_numbers = #tpu.dot_dimension_numbers<[1], [0], [0], [1], [0, 0, 1, 1], [], []>} : vector<224x128xbf16>, vector<128x128xbf16>, vector<224x128xf32> -> vector<224x128xf32>
    %108 = arith.addf %102, %107 : vector<224x128xf32>
    %c39_97 = arith.constant 39 : index
    %c0_98 = arith.constant 0 : index
    %109 = vector.load %arg10[%c39_97, %c0_98] : memref<272x128xf32, #tpu.memory_space<vmem>>, vector<224x128xf32>
    %110 = arith.truncf %109 : vector<224x128xf32> to vector<224x128xbf16>
    %c6_99 = arith.constant 6 : index
    %c0_100 = arith.constant 0 : index
    %c0_101 = arith.constant 0 : index
    %111 = vector.load %arg5[%c6_99, %c0_100, %c0_101] : memref<9x128x128xbf16, #tpu.memory_space<vmem>>, vector<1x128x128xbf16>
    %112 = vector.shape_cast %111 : vector<1x128x128xbf16> to vector<128x128xbf16>
    %cst_102 = arith.constant dense<0.000000e+00> : vector<224x128xf32>
    %113 = tpu.matmul %110, %112, %cst_102 {dimension_numbers = #tpu.dot_dimension_numbers<[1], [0], [0], [1], [0, 0, 1, 1], [], []>} : vector<224x128xbf16>, vector<128x128xbf16>, vector<224x128xf32> -> vector<224x128xf32>
    %114 = arith.addf %108, %113 : vector<224x128xf32>
    %c40_103 = arith.constant 40 : index
    %c0_104 = arith.constant 0 : index
    %115 = vector.load %arg10[%c40_103, %c0_104] : memref<272x128xf32, #tpu.memory_space<vmem>>, vector<224x128xf32>
    %116 = arith.truncf %115 : vector<224x128xf32> to vector<224x128xbf16>
    %c7_105 = arith.constant 7 : index
    %c0_106 = arith.constant 0 : index
    %c0_107 = arith.constant 0 : index
    %117 = vector.load %arg5[%c7_105, %c0_106, %c0_107] : memref<9x128x128xbf16, #tpu.memory_space<vmem>>, vector<1x128x128xbf16>
    %118 = vector.shape_cast %117 : vector<1x128x128xbf16> to vector<128x128xbf16>
    %cst_108 = arith.constant dense<0.000000e+00> : vector<224x128xf32>
    %119 = tpu.matmul %116, %118, %cst_108 {dimension_numbers = #tpu.dot_dimension_numbers<[1], [0], [0], [1], [0, 0, 1, 1], [], []>} : vector<224x128xbf16>, vector<128x128xbf16>, vector<224x128xf32> -> vector<224x128xf32>
    %120 = arith.addf %114, %119 : vector<224x128xf32>
    %c41_109 = arith.constant 41 : index
    %c0_110 = arith.constant 0 : index
    %121 = vector.load %arg10[%c41_109, %c0_110] : memref<272x128xf32, #tpu.memory_space<vmem>>, vector<224x128xf32>
    %122 = arith.truncf %121 : vector<224x128xf32> to vector<224x128xbf16>
    %c8_111 = arith.constant 8 : index
    %c0_112 = arith.constant 0 : index
    %c0_113 = arith.constant 0 : index
    %123 = vector.load %arg5[%c8_111, %c0_112, %c0_113] : memref<9x128x128xbf16, #tpu.memory_space<vmem>>, vector<1x128x128xbf16>
    %124 = vector.shape_cast %123 : vector<1x128x128xbf16> to vector<128x128xbf16>
    %cst_114 = arith.constant dense<0.000000e+00> : vector<224x128xf32>
    %125 = tpu.matmul %122, %124, %cst_114 {dimension_numbers = #tpu.dot_dimension_numbers<[1], [0], [0], [1], [0, 0, 1, 1], [], []>} : vector<224x128xbf16>, vector<128x128xbf16>, vector<224x128xf32> -> vector<224x128xf32>
    %126 = arith.addf %120, %125 : vector<224x128xf32>
    %c0_115 = arith.constant 0 : index
    %c0_116 = arith.constant 0 : index
    %127 = vector.load %arg6[%c0_115, %c0_116] : memref<1x128xf32, #tpu.memory_space<vmem>>, vector<1x128xf32>
    %128 = vector.broadcast %127 : vector<1x128xf32> to vector<224x128xf32>
    %129 = arith.addf %126, %128 : vector<224x128xf32>
    %c24_117 = arith.constant 24 : index
    %c0_118 = arith.constant 0 : index
    %130 = vector.load %arg9[%c24_117, %c0_118] : memref<272x128xf32, #tpu.memory_space<vmem>>, vector<224x128xf32>
    %131 = arith.addf %129, %130 : vector<224x128xf32>
    %cst_119 = arith.constant 0.000000e+00 : f32
    %132 = vector.broadcast %cst_119 : f32 to vector<224x128xf32>
    %133 = arith.maximumf %131, %132 : vector<224x128xf32>
    %c0_120 = arith.constant 0 : index
    %c0_121 = arith.constant 0 : index
    %c0_122 = arith.constant 0 : index
    %134 = vector.load %arg8[%c0_120, %c0_121, %c0_122] : memref<1x224x128xf32, #tpu.memory_space<vmem>>, vector<1x224x128xf32>
    %135 = vector.shape_cast %134 : vector<1x224x128xf32> to vector<224x128xf32>
    %136 = vector.shape_cast %133 : vector<224x128xf32> to vector<1x224x128xf32>
    tpu.vector_store %arg8[%c0_120, %c0_121, %c0_122], %136 {strides = array<i32>} : memref<1x224x128xf32, #tpu.memory_space<vmem>>, vector<1x224x128xf32>,
    return
  }
  func.func @transform_0(%arg0: i32) -> (i32, i32, i32) {
    %c0_i32 = arith.constant 0 : i32
    %c0_i32_0 = arith.constant 0 : i32
    %c0_i32_1 = arith.constant 0 : i32
    return %arg0, %c0_i32, %c0_i32_0 : i32, i32, i32
  }
  func.func @transform_1(%arg0: i32) -> (i32, i32) {
    %c0_i32 = arith.constant 0 : i32
    %c0_i32_0 = arith.constant 0 : i32
    %c0_i32_1 = arith.constant 0 : i32
    return %c0_i32, %c0_i32_0 : i32, i32
  }
  func.func @transform_2(%arg0: i32) -> (i32, i32, i32) {
    %c0_i32 = arith.constant 0 : i32
    %c0_i32_0 = arith.constant 0 : i32
    %c0_i32_1 = arith.constant 0 : i32
    %c0_i32_2 = arith.constant 0 : i32
    return %c0_i32, %c0_i32_0, %c0_i32_1 : i32, i32, i32
  }
  func.func @transform_3(%arg0: i32) -> (i32, i32) {
    %c0_i32 = arith.constant 0 : i32
    %c0_i32_0 = arith.constant 0 : i32
    %c0_i32_1 = arith.constant 0 : i32
    return %c0_i32, %c0_i32_0 : i32, i32
  }
  func.func @transform_4(%arg0: i32) -> (i32, i32, i32) {
    %c0_i32 = arith.constant 0 : i32
    %c0_i32_0 = arith.constant 0 : i32
    %c0_i32_1 = arith.constant 0 : i32
    %c0_i32_2 = arith.constant 0 : i32
    return %c0_i32, %c0_i32_0, %c0_i32_1 : i32, i32, i32
  }
  func.func @transform_5(%arg0: i32) -> (i32, i32) {
    %c0_i32 = arith.constant 0 : i32
    %c0_i32_0 = arith.constant 0 : i32
    %c0_i32_1 = arith.constant 0 : i32
    return %c0_i32, %c0_i32_0 : i32, i32
  }
  func.func @transform_6(%arg0: i32) -> (i32, i32) {
    %c0_i32 = arith.constant 0 : i32
    %c0_i32_0 = arith.constant 0 : i32
    %c0_i32_1 = arith.constant 0 : i32
    return %c0_i32, %c0_i32_0 : i32, i32
  }
  func.func @transform_7(%arg0: i32) -> (i32, i32, i32) {
    %c0_i32 = arith.constant 0 : i32
    %c0_i32_0 = arith.constant 0 : i32
    %c0_i32_1 = arith.constant 0 : i32
    return %arg0, %c0_i32, %c0_i32_0 : i32, i32, i32
  }
}

</mosaic_0001>

<llo_original>
// kernel: one_image_net_forward.1
$region0: #{one_image_net_forward.1}
  #allocation0 [shape = 'u32[]', space=smem, size = 0x4, offset = 0x4, fixed_abs, tag = 'smem constant byte address 0x4 - core index']
  #allocation1 [shape = 'u32[144,128]{1,0:T(1,128)}', space=vmem, size = 0x12000, scoped, tag = 'internal scratch']
  #allocation2 [shape = 'f32[272,128]{1,0:T(8,128)}', space=vmem, size = 0x22000, scoped, tag = 'scratch operand']
  #allocation3 [shape = 'f32[272,128]{1,0:T(8,128)}', space=vmem, size = 0x22000, scoped, tag = 'scratch operand']
  %s0 = inlined_call_operand.vmem [shape: bf16[2,224,128], index: 0, kind: input, shape index: {}]
  %s1 = inlined_call_operand.vmem [shape: bf16[128,128], index: 1, kind: input, shape index: {}]
  %s2 = inlined_call_operand.vmem [shape: bf16[9,128,128], index: 2, kind: input, shape index: {}]
  %s3 = inlined_call_operand.vmem [shape: f32[1,128], index: 3, kind: input, shape index: {}]
  %s4 = inlined_call_operand.vmem [shape: bf16[9,128,128], index: 4, kind: input, shape index: {}]
  %s5 = inlined_call_operand.vmem [shape: f32[1,128], index: 5, kind: input, shape index: {}]
  %s6 = inlined_call_operand.vmem [shape: f32[224,1], index: 6, kind: input, shape index: {}]
  %s7 = inlined_call_operand.vmem [shape: f32[2,224,128], index: 7, kind: output, shape index: {}]
  %s8 = sld [smem:[#allocation0]]
  $region61: #{one_image_net_forward.1} parent=0
    _
  %s10 = ssub.s32 1, %s8
  %s11 = scalar_select 0, %s10, %s8
  loop: start=0, step=1, limit=4
  $region2: #{one_image_net_forward.1} parent=0 // loop_pre_header
    _
  $region3: #{one_image_net_forward.1} parent=0 // loop_header
    %s13 = sphi 0, %s17
    %p14 = scmp.ge.s32.totalorder %s13, 4
    %s23 = sphi 0, %s25
    %s26 = sphi 0, %s23
    %s27 = sphi 0, %s26
    %s43 = sphi 0, %s27
    %s47 = sphi 0, %s47
    %s49 = sphi 0, %s47
    %s50 = sphi 0, %s49
    %s64 = sphi 0, %s50
    %s68 = sphi 0, %s68
    %s70 = sphi 0, %s68
    %s71 = sphi 0, %s70
    %s85 = sphi 0, %s71
    %s89 = sphi 0, %s89
    %s91 = sphi 0, %s89
    %s92 = sphi 0, %s91
    %s106 = sphi 0, %s92
    %s110 = sphi 0, %s110
    %s112 = sphi 0, %s110
    %s113 = sphi 0, %s112
    %s127 = sphi 0, %s113
    %s131 = sphi 0, %s131
    %s133 = sphi 0, %s131
    %s134 = sphi 0, %s133
    %s148 = sphi 0, %s134
    %s152 = sphi 0, %s152
    %s154 = sphi 0, %s152
    %s155 = sphi 0, %s154
    %s169 = sphi 0, %s155
    %s175 = sphi 0, %s177
    %s178 = sphi 0, %s175
    %s179 = sphi 0, %s178
    %s195 = sphi 0, %s179
  $region4: #{one_image_net_forward.1} parent=0 // loop_header_branch
    %16 = sbr.rel (%p14) target = $region8
  $region5: #{one_image_net_forward.1} parent=0 // loop_body
    %s18 = ssub.s32 %s13, 1
    %s19 = ssub.s32 %s13, 2
    %s20 = sadd.s32 %s13, 1
    %s21 = ssub.s32 %s13, %s20
    %p22 = scmp.eq.s32.totalorder %s21, 0
    %s24 = sadd.s32 %s23, 1
    %s25 = scalar_select %p22, %s23, %s24
    %p28 = pneg %p22
    %p29 = scmp.eq.s32.totalorder %s13, 1
    %p30 = por %p28, %p29
    %p31 = scmp.ne.s32.totalorder %s23, %s26
    %p32 = scmp.eq.s32.totalorder %s13, 0
    %p33 = por %p31, %p32
    %p34 = scmp.ne.s32.totalorder %s23, %s26
    %p35 = scmp.eq.s32.totalorder %s18, 1
    %p36 = por %p34, %p35
    %p37 = scmp.ne.s32.totalorder %s26, %s27
    %p38 = scmp.eq.s32.totalorder %s18, 0
    %p39 = por %p37, %p38
    %p40 = scmp.ne.s32.totalorder %s26, %s27
    %p41 = scmp.eq.s32.totalorder %s19, 1
    %p42 = por %p40, %p41
    %p44 = scmp.ne.s32.totalorder %s27, %s43
    %p45 = scmp.eq.s32.totalorder %s19, 0
    %p46 = por %p44, %p45
    %s48 = sadd.s32 %s47, 1
    %p51 = scmp.eq.s32.totalorder %s13, 1
    %p52 = scmp.ne.s32.totalorder %s47, %s49
    %p53 = scmp.eq.s32.totalorder %s13, 0
    %p54 = por %p52, %p53
    %p55 = scmp.ne.s32.totalorder %s47, %s49
    %p56 = scmp.eq.s32.totalorder %s18, 1
    %p57 = por %p55, %p56
    %p58 = scmp.ne.s32.totalorder %s49, %s50
    %p59 = scmp.eq.s32.totalorder %s18, 0
    %p60 = por %p58, %p59
    %p61 = scmp.ne.s32.totalorder %s49, %s50
    %p62 = scmp.eq.s32.totalorder %s19, 1
    %p63 = por %p61, %p62
    %p65 = scmp.ne.s32.totalorder %s50, %s64
    %p66 = scmp.eq.s32.totalorder %s19, 0
    %p67 = por %p65, %p66
    %s69 = sadd.s32 %s68, 1
    %p72 = scmp.eq.s32.totalorder %s13, 1
    %p73 = scmp.ne.s32.totalorder %s68, %s70
    %p74 = scmp.eq.s32.totalorder %s13, 0
    %p75 = por %p73, %p74
    %p76 = scmp.ne.s32.totalorder %s68, %s70
    %p77 = scmp.eq.s32.totalorder %s18, 1
    %p78 = por %p76, %p77
    %p79 = scmp.ne.s32.totalorder %s70, %s71
    %p80 = scmp.eq.s32.totalorder %s18, 0
    %p81 = por %p79, %p80
    %p82 = scmp.ne.s32.totalorder %s70, %s71
    %p83 = scmp.eq.s32.totalorder %s19, 1
    %p84 = por %p82, %p83
    %p86 = scmp.ne.s32.totalorder %s71, %s85
    %p87 = scmp.eq.s32.totalorder %s19, 0
    %p88 = por %p86, %p87
    %s90 = sadd.s32 %s89, 1
    %p93 = scmp.eq.s32.totalorder %s13, 1
    %p94 = scmp.ne.s32.totalorder %s89, %s91
    %p95 = scmp.eq.s32.totalorder %s13, 0
    %p96 = por %p94, %p95
    %p97 = scmp.ne.s32.totalorder %s89, %s91
    %p98 = scmp.eq.s32.totalorder %s18, 1
    %p99 = por %p97, %p98
    %p100 = scmp.ne.s32.totalorder %s91, %s92
    %p101 = scmp.eq.s32.totalorder %s18, 0
    %p102 = por %p100, %p101
    %p103 = scmp.ne.s32.totalorder %s91, %s92
    %p104 = scmp.eq.s32.totalorder %s19, 1
    %p105 = por %p103, %p104
    %p107 = scmp.ne.s32.totalorder %s92, %s106
    %p108 = scmp.eq.s32.totalorder %s19, 0
    %p109 = por %p107, %p108
    %s111 = sadd.s32 %s110, 1
    %p114 = scmp.eq.s32.totalorder %s13, 1
    %p115 = scmp.ne.s32.totalorder %s110, %s112
    %p116 = scmp.eq.s32.totalorder %s13, 0
    %p117 = por %p115, %p116
    %p118 = scmp.ne.s32.totalorder %s110, %s112
    %p119 = scmp.eq.s32.totalorder %s18, 1
    %p120 = por %p118, %p119
    %p121 = scmp.ne.s32.totalorder %s112, %s113
    %p122 = scmp.eq.s32.totalorder %s18, 0
    %p123 = por %p121, %p122
    %p124 = scmp.ne.s32.totalorder %s112, %s113
    %p125 = scmp.eq.s32.totalorder %s19, 1
    %p126 = por %p124, %p125
    %p128 = scmp.ne.s32.totalorder %s113, %s127
    %p129 = scmp.eq.s32.totalorder %s19, 0
    %p130 = por %p128, %p129
    %s132 = sadd.s32 %s131, 1
    %p135 = scmp.eq.s32.totalorder %s13, 1
    %p136 = scmp.ne.s32.totalorder %s131, %s133
    %p137 = scmp.eq.s32.totalorder %s13, 0
    %p138 = por %p136, %p137
    %p139 = scmp.ne.s32.totalorder %s131, %s133
    %p140 = scmp.eq.s32.totalorder %s18, 1
    %p141 = por %p139, %p140
    %p142 = scmp.ne.s32.totalorder %s133, %s134
    %p143 = scmp.eq.s32.totalorder %s18, 0
    %p144 = por %p142, %p143
    %p145 = scmp.ne.s32.totalorder %s133, %s134
    %p146 = scmp.eq.s32.totalorder %s19, 1
    %p147 = por %p145, %p146
    %p149 = scmp.ne.s32.totalorder %s134, %s148
    %p150 = scmp.eq.s32.totalorder %s19, 0
    %p151 = por %p149, %p150
    %s153 = sadd.s32 %s152, 1
    %p156 = scmp.eq.s32.totalorder %s13, 1
    %p157 = scmp.ne.s32.totalorder %s152, %s154
    %p158 = scmp.eq.s32.totalorder %s13, 0
    %p159 = por %p157, %p158
    %p160 = scmp.ne.s32.totalorder %s152, %s154
    %p161 = scmp.eq.s32.totalorder %s18, 1
    %p162 = por %p160, %p161
    %p163 = scmp.ne.s32.totalorder %s154, %s155
    %p164 = scmp.eq.s32.totalorder %s18, 0
    %p165 = por %p163, %p164
    %p166 = scmp.ne.s32.totalorder %s154, %s155
    %p167 = scmp.eq.s32.totalorder %s19, 1
    %p168 = por %p166, %p167
    %p170 = scmp.ne.s32.totalorder %s155, %s169
    %p171 = scmp.eq.s32.totalorder %s19, 0
    %p172 = por %p170, %p171
    %s173 = ssub.s32 %s13, %s20
    %p174 = scmp.eq.s32.totalorder %s173, 0
    %s176 = sadd.s32 %s175, 1
    %s177 = scalar_select %p174, %s175, %s176
    %p180 = pneg %p174
    %p181 = scmp.eq.s32.totalorder %s13, 1
    %p182 = por %p180, %p181
    %p183 = scmp.ne.s32.totalorder %s175, %s178
    %p184 = scmp.eq.s32.totalorder %s13, 0
    %p185 = por %p183, %p184
    %p186 = scmp.ne.s32.totalorder %s175, %s178
    %p187 = scmp.eq.s32.totalorder %s18, 1
    %p188 = por %p186, %p187
    %p189 = scmp.ne.s32.totalorder %s178, %s179
    %p190 = scmp.eq.s32.totalorder %s18, 0
    %p191 = por %p189, %p190
    %p192 = scmp.ne.s32.totalorder %s178, %s179
    %p193 = scmp.eq.s32.totalorder %s19, 1
    %p194 = por %p192, %p193
    %p196 = scmp.ne.s32.totalorder %s179, %s195
    %p197 = scmp.eq.s32.totalorder %s19, 0
    %p198 = por %p196, %p197
    %p199 = scmp.le.s32.totalorder 1, %s13
    %p200 = scmp.lt.s32.totalorder %s13, 3
    %p201 = pnand %p199, %p200
    %p202 = pneg %p201
    // Predicated region
    $region9: #{one_image_net_forward.1} parent=5 // pred_check
      _
    $region10: #{one_image_net_forward.1} parent=5 // pred_check_branch
      %204 = sbr.rel (%p201) target = $region12
    $region11: #{one_image_net_forward.1} parent=5 // pred_region
      %s205 = ssub.s32 %s13, 1
      // Predicated region
      $region13: #{one_image_net_forward.1} parent=11 // pred_check
        %p206 = pneg %p60
      $region14: #{one_image_net_forward.1} parent=11 // pred_check_branch
        %208 = sbr.rel (%p206) target = $region16
      $region15: #{one_image_net_forward.1} parent=11 // pred_region
        _
      $region16: #{one_image_net_forward.1} parent=11 // pred_fallthru
        _
      // Predicated region
      $region17: #{one_image_net_forward.1} parent=11 // pred_check
        %p209 = pneg %p81
      $region18: #{one_image_net_forward.1} parent=11 // pred_check_branch
        %211 = sbr.rel (%p209) target = $region20
      $region19: #{one_image_net_forward.1} parent=11 // pred_region
        _
      $region20: #{one_image_net_forward.1} parent=11 // pred_fallthru
        _
      // Predicated region
      $region21: #{one_image_net_forward.1} parent=11 // pred_check
        %p212 = pneg %p102
      $region22: #{one_image_net_forward.1} parent=11 // pred_check_branch
        %214 = sbr.rel (%p212) target = $region24
      $region23: #{one_image_net_forward.1} parent=11 // pred_region
        _
      $region24: #{one_image_net_forward.1} parent=11 // pred_fallthru
        _
      // Predicated region
      $region25: #{one_image_net_forward.1} parent=11 // pred_check
        %p215 = pneg %p123
      $region26: #{one_image_net_forward.1} parent=11 // pred_check_branch
        %217 = sbr.rel (%p215) target = $region28
      $region27: #{one_image_net_forward.1} parent=11 // pred_region
        _
      $region28: #{one_image_net_forward.1} parent=11 // pred_fallthru
        _
      // Predicated region
      $region29: #{one_image_net_forward.1} parent=11 // pred_check
        %p218 = pneg %p144
      $region30: #{one_image_net_forward.1} parent=11 // pred_check_branch
        %220 = sbr.rel (%p218) target = $region32
      $region31: #{one_image_net_forward.1} parent=11 // pred_region
        _
      $region32: #{one_image_net_forward.1} parent=11 // pred_fallthru
        _
      // Predicated region
      $region33: #{one_image_net_forward.1} parent=11 // pred_check
        %p221 = pneg %p165
      $region34: #{one_image_net_forward.1} parent=11 // pred_check_branch
        %223 = sbr.rel (%p221) target = $region36
      $region35: #{one_image_net_forward.1} parent=11 // pred_region
        _
      $region36: #{one_image_net_forward.1} parent=11 // pred_fallthru
        _
    $region12: #{one_image_net_forward.1} parent=5 // pred_fallthru
      _
    %p224 = scmp.lt.s32.totalorder %s13, 2
    // Predicated region
    $region37: #{one_image_net_forward.1} parent=5 // pred_check
      %p225 = pneg %p224
    $region38: #{one_image_net_forward.1} parent=5 // pred_check_branch
      %227 = sbr.rel (%p225) target = $region40
    $region39: #{one_image_net_forward.1} parent=5 // pred_region
      // Predicated region
      $region41: #{one_image_net_forward.1} parent=39 // pred_check
        %p228 = pneg %p33
      $region42: #{one_image_net_forward.1} parent=39 // pred_check_branch
        %230 = sbr.rel (%p228) target = $region44
      $region43: #{one_image_net_forward.1} parent=39 // pred_region
        %p231 = scmp.lt.s32.totalorder %s13, 1
        %s232 = scalar_select %p231, %s13, 1
        %s233 = smul.addr %s232, 28
        %s234 = smul.addr %s233, 4
        %s235 = scalar_lea.vmem %s0, %s234
      $region44: #{one_image_net_forward.1} parent=39 // pred_fallthru
        _
    $region40: #{one_image_net_forward.1} parent=5 // pred_fallthru
      _
    %p236 = scmp.le.s32.totalorder 1, %s13
    %p237 = scmp.lt.s32.totalorder %s13, 3
    %p238 = pnand %p236, %p237
    %p239 = pneg %p238
    // Predicated region
    $region45: #{one_image_net_forward.1} parent=5 // pred_check
      _
    $region46: #{one_image_net_forward.1} parent=5 // pred_check_branch
      %241 = sbr.rel (%p238) target = $region48
    $region47: #{one_image_net_forward.1} parent=5 // pred_region
      %s242 = ssub.s32 %s13, 1
      %p243 = scmp.lt.s32.totalorder %s18, 1
      %s244 = scalar_select %p243, %s18, 1
      %s245 = smul.addr %s244, 28
      %s246 = smul.addr %s245, 4
      %s247 = scalar_lea.vmem %s0, %s246
      %p248 = pneg %p39
      %p249 = pneg %p36
      %p250 = pneg %p60
      %p251 = pneg %p57
      %p252 = pneg %p81
      %p253 = pneg %p78
      %p254 = pneg %p102
      %p255 = pneg %p99
      %p256 = pneg %p123
      %p257 = pneg %p120
      %p258 = pneg %p144
      %p259 = pneg %p141
      %p260 = pneg %p165
      %p261 = pneg %p162
      %p262 = pneg %p191
      %p263 = pneg %p188
      %p264 = scmp.lt.s32.totalorder %s18, 1
      %s265 = scalar_select %p264, %s18, 1
      %s266 = smul.addr %s265, 28
      %s267 = smul.addr %s266, 8
      %s268 = scalar_lea.vmem %s7, %s267
      %p269 = scmp.lt.s32.totalorder %s18, 1
      %s270 = scalar_select %p269, %s18, 1
      %s271 = smul.addr %s270, 28
      %s272 = smul.addr %s271, 4
      %s273 = scalar_lea.vmem %s0, %s272
      %p274 = scmp.lt.s32.totalorder %s18, 1
      %s275 = scalar_select %p274, %s18, 1
      %s276 = smul.addr %s275, 28
      %s277 = smul.addr %s276, 8
      %s278 = scalar_lea.vmem %s7, %s277
      %v280 = vld [vmem:[%s273] sm:$0xf]
      %v281 = vld [vmem:[%s273 + $0x4] sm:$0xf]
      %v282 = vld [vmem:[%s273 + $0x8] sm:$0xf]
      %v283 = vld [vmem:[%s273 + $0xc] sm:$0xf]
      %v284 = vld [vmem:[%s273 + $0x10] sm:$0xf]
      %v285 = vld [vmem:[%s273 + $0x14] sm:$0xf]
      %v286 = vld [vmem:[%s273 + $0x18] sm:$0xf]
      %v287 = vld [vmem:[%s273 + $0x1c] sm:$0xf]
      %v288 = vld [vmem:[%s273 + $0x20] sm:$0xf]
      %v289 = vld [vmem:[%s273 + $0x24] sm:$0xf]
      %v290 = vld [vmem:[%s273 + $0x28] sm:$0xf]
      %v291 = vld [vmem:[%s273 + $0x2c] sm:$0xf]
      %v292 = vld [vmem:[%s273 + $0x30] sm:$0xf]
      %v293 = vld [vmem:[%s273 + $0x34] sm:$0xf]
      %v294 = vld [vmem:[%s273 + $0x38] sm:$0xf]
      %v295 = vld [vmem:[%s273 + $0x3c] sm:$0xf]
      %v296 = vld [vmem:[%s273 + $0x40] sm:$0xf]
      %v297 = vld [vmem:[%s273 + $0x44] sm:$0xf]
      %v298 = vld [vmem:[%s273 + $0x48] sm:$0xf]
      %v299 = vld [vmem:[%s273 + $0x4c] sm:$0xf]
      %v300 = vld [vmem:[%s273 + $0x50] sm:$0xf]
      %v301 = vld [vmem:[%s273 + $0x54] sm:$0xf]
      %v302 = vld [vmem:[%s273 + $0x58] sm:$0xf]
      %v303 = vld [vmem:[%s273 + $0x5c] sm:$0xf]
      %v304 = vld [vmem:[%s273 + $0x60] sm:$0xf]
      %v305 = vld [vmem:[%s273 + $0x64] sm:$0xf]
      %v306 = vld [vmem:[%s273 + $0x68] sm:$0xf]
      %v307 = vld [vmem:[%s273 + $0x6c] sm:$0xf]
      %v308 = vld [vmem:[%s1] sm:$0xf]
      %v309 = vld [vmem:[%s1 + $0x4] sm:$0xf]
      %v310 = vld [vmem:[%s1 + $0x8] sm:$0xf]
      %v311 = vld [vmem:[%s1 + $0xc] sm:$0xf]
      %v312 = vld [vmem:[%s1 + $0x10] sm:$0xf]
      %v313 = vld [vmem:[%s1 + $0x14] sm:$0xf]
      %v314 = vld [vmem:[%s1 + $0x18] sm:$0xf]
      %v315 = vld [vmem:[%s1 + $0x1c] sm:$0xf]
      %v316 = vld [vmem:[%s1 + $0x20] sm:$0xf]
      %v317 = vld [vmem:[%s1 + $0x24] sm:$0xf]
      %v318 = vld [vmem:[%s1 + $0x28] sm:$0xf]
      %v319 = vld [vmem:[%s1 + $0x2c] sm:$0xf]
      %v320 = vld [vmem:[%s1 + $0x30] sm:$0xf]
      %v321 = vld [vmem:[%s1 + $0x34] sm:$0xf]
      %v322 = vld [vmem:[%s1 + $0x38] sm:$0xf]
      %v323 = vld [vmem:[%s1 + $0x3c] sm:$0xf]
      %v352 = vunpack.c.l.b16 %v280
      %v353 = vunpack.c.l.b16 %v281
      %v354 = vunpack.c.l.b16 %v282
      %v355 = vunpack.c.l.b16 %v283
      %v356 = vunpack.c.l.b16 %v284
      %v357 = vunpack.c.l.b16 %v285
      %v358 = vunpack.c.l.b16 %v286
      %v359 = vunpack.c.l.b16 %v287
      %v360 = vunpack.c.l.b16 %v288
      %v361 = vunpack.c.l.b16 %v289
      %v362 = vunpack.c.l.b16 %v290
      %v363 = vunpack.c.l.b16 %v291
      %v364 = vunpack.c.l.b16 %v292
      %v365 = vunpack.c.l.b16 %v293
      %v366 = vunpack.c.l.b16 %v294
      %v367 = vunpack.c.l.b16 %v295
      %v368 = vunpack.c.l.b16 %v296
      %v369 = vunpack.c.l.b16 %v297
      %v370 = vunpack.c.l.b16 %v298
      %v371 = vunpack.c.l.b16 %v299
      %v372 = vunpack.c.l.b16 %v300
      %v373 = vunpack.c.l.b16 %v301
      %v374 = vunpack.c.l.b16 %v302
      %v375 = vunpack.c.l.b16 %v303
      %v376 = vunpack.c.l.b16 %v304
      %v377 = vunpack.c.l.b16 %v305
      %v378 = vunpack.c.l.b16 %v306
      %v379 = vunpack.c.l.b16 %v307
      %v380 = vpack.c.b16 %v353, %v352
      %v381 = vpack.c.b16 %v355, %v354
      %v382 = vpack.c.b16 %v357, %v356
      %v383 = vpack.c.b16 %v359, %v358
      %v384 = vpack.c.b16 %v361, %v360
      %v385 = vpack.c.b16 %v363, %v362
      %v386 = vpack.c.b16 %v365, %v364
      %v387 = vpack.c.b16 %v367, %v366
      %v388 = vpack.c.b16 %v369, %v368
      %v389 = vpack.c.b16 %v371, %v370
      %v390 = vpack.c.b16 %v373, %v372
      %v391 = vpack.c.b16 %v375, %v374
      %v392 = vpack.c.b16 %v377, %v376
      %v393 = vpack.c.b16 %v379, %v378
      %v424 = vunpack.c.l.b16 %v308
      %v425 = vunpack.c.l.b16 %v309
      %v426 = vunpack.c.l.b16 %v310
      %v427 = vunpack.c.l.b16 %v311
      %v428 = vunpack.c.l.b16 %v312
      %v429 = vunpack.c.l.b16 %v313
      %v430 = vunpack.c.l.b16 %v314
      %v431 = vunpack.c.l.b16 %v315
      %v432 = vunpack.c.l.b16 %v316
      %v433 = vunpack.c.l.b16 %v317
      %v434 = vunpack.c.l.b16 %v318
      %v435 = vunpack.c.l.b16 %v319
      %v436 = vunpack.c.l.b16 %v320
      %v437 = vunpack.c.l.b16 %v321
      %v438 = vunpack.c.l.b16 %v322
      %v439 = vunpack.c.l.b16 %v323
      %v440 = vpack.c.b16 %v425, %v424
      %v441 = vpack.c.b16 %v427, %v426
      %v442 = vpack.c.b16 %v429, %v428
      %v443 = vpack.c.b16 %v431, %v430
      %v444 = vpack.c.b16 %v433, %v432
      %v445 = vpack.c.b16 %v435, %v434
      %v446 = vpack.c.b16 %v437, %v436
      %v447 = vpack.c.b16 %v439, %v438
      %456 = vmatprep.subr.bf16.mxu0 0
      %457 = vmatpush1.bf16.msra.mxu0 %v440
      %458 = vmatprep.subr.bf16.mxu0 0
      %459 = vmatpush1.bf16.msra.mxu0 %v441
      %460 = vmatprep.subr.bf16.mxu0 0
      %461 = vmatpush1.bf16.msra.mxu0 %v442
      %462 = vmatprep.subr.bf16.mxu0 0
      %463 = vmatpush1.bf16.msra.mxu0 %v443
      %464 = vmatprep.subr.bf16.mxu0 0
      %465 = vmatpush1.bf16.msra.mxu0 %v444
      %466 = vmatprep.subr.bf16.mxu0 0
      %467 = vmatpush1.bf16.msra.mxu0 %v445
      %468 = vmatprep.subr.bf16.mxu0 0
      %469 = vmatpush1.bf16.msra.mxu0 %v446
      %470 = vmatprep.subr.bf16.mxu0 0
      %471 = vmatpush1.bf16.msra.mxu0 %v447
      %472 = vmatprep.subr.bf16.mxu0 0
      %473 = vmatpush1.bf16.msra.mxu0 0
      %474 = vmatprep.subr.bf16.mxu0 0
      %475 = vmatpush1.bf16.msra.mxu0 0
      %476 = vmatprep.subr.bf16.mxu0 0
      %477 = vmatpush1.bf16.msra.mxu0 0
      %478 = vmatprep.subr.bf16.mxu0 0
      %479 = vmatpush1.bf16.msra.mxu0 0
      %480 = vmatprep.subr.bf16.mxu0 0
      %481 = vmatpush1.bf16.msra.mxu0 0
      %482 = vmatprep.subr.bf16.mxu0 0
      %483 = vmatpush1.bf16.msra.mxu0 0
      %484 = vmatprep.subr.bf16.mxu0 0
      %485 = vmatpush1.bf16.msra.mxu0 0
      %486 = vmatprep.subr.bf16.mxu0 0
      %487 = vmatpush1.bf16.msra.mxu0 0
      %488 = vmatprep.mubr.bf16.mxu0 0
      %489 = vmatmul.mubr.bf16.gmra.mrb[0].mxu0 %v380
      %v490 = vpop.f32.mrb[0].mxu0
      %v491 = vadd.f32 0.0, %v490
      %v492 = vpop.f32.mrb[0].mxu0
      %v493 = vpop.f32.mrb[0].mxu0
      %v494 = vadd.f32 0.0, %v493
      %v495 = vpop.f32.mrb[0].mxu0
      %496 = vmatprep.mubr.bf16.mxu0 0
      %497 = vmatmul.mubr.bf16.gmra.mrb[0].mxu0 %v381
      %v498 = vpop.f32.mrb[0].mxu0
      %v499 = vadd.f32 0.0, %v498
      %v500 = vpop.f32.mrb[0].mxu0
      %v501 = vpop.f32.mrb[0].mxu0
      %v502 = vadd.f32 0.0, %v501
      %v503 = vpop.f32.mrb[0].mxu0
      %504 = vmatprep.mubr.bf16.mxu0 0
      %505 = vmatmul.mubr.bf16.gmra.mrb[0].mxu0 %v382
      %v506 = vpop.f32.mrb[0].mxu0
      %v507 = vadd.f32 0.0, %v506
      %v508 = vpop.f32.mrb[0].mxu0
      %v509 = vpop.f32.mrb[0].mxu0
      %v510 = vadd.f32 0.0, %v509
      %v511 = vpop.f32.mrb[0].mxu0
      %512 = vmatprep.mubr.bf16.mxu0 0
      %513 = vmatmul.mubr.bf16.gmra.mrb[0].mxu0 %v383
      %v514 = vpop.f32.mrb[0].mxu0
      %v515 = vadd.f32 0.0, %v514
      %v516 = vpop.f32.mrb[0].mxu0
      %v517 = vpop.f32.mrb[0].mxu0
      %v518 = vadd.f32 0.0, %v517
      %v519 = vpop.f32.mrb[0].mxu0
      %520 = vmatprep.mubr.bf16.mxu0 0
      %521 = vmatmul.mubr.bf16.gmra.mrb[0].mxu0 %v384
      %v522 = vpop.f32.mrb[0].mxu0
      %v523 = vadd.f32 0.0, %v522
      %v524 = vpop.f32.mrb[0].mxu0
      %v525 = vpop.f32.mrb[0].mxu0
      %v526 = vadd.f32 0.0, %v525
      %v527 = vpop.f32.mrb[0].mxu0
      %528 = vmatprep.mubr.bf16.mxu0 0
      %529 = vmatmul.mubr.bf16.gmra.mrb[0].mxu0 %v385
      %v530 = vpop.f32.mrb[0].mxu0
      %v531 = vadd.f32 0.0, %v530
      %v532 = vpop.f32.mrb[0].mxu0
      %v533 = vpop.f32.mrb[0].mxu0
      %v534 = vadd.f32 0.0, %v533
      %v535 = vpop.f32.mrb[0].mxu0
      %536 = vmatprep.mubr.bf16.mxu0 0
      %537 = vmatmul.mubr.bf16.gmra.mrb[0].mxu0 %v386
      %v538 = vpop.f32.mrb[0].mxu0
      %v539 = vadd.f32 0.0, %v538
      %v540 = vpop.f32.mrb[0].mxu0
      %v541 = vpop.f32.mrb[0].mxu0
      %v542 = vadd.f32 0.0, %v541
      %v543 = vpop.f32.mrb[0].mxu0
      %544 = vmatprep.mubr.bf16.mxu0 0
      %545 = vmatmul.mubr.bf16.gmra.mrb[0].mxu0 %v387
      %v546 = vpop.f32.mrb[0].mxu0
      %v547 = vadd.f32 0.0, %v546
      %v548 = vpop.f32.mrb[0].mxu0
      %v549 = vpop.f32.mrb[0].mxu0
      %v550 = vadd.f32 0.0, %v549
      %v551 = vpop.f32.mrb[0].mxu0
      %552 = vmatprep.mubr.bf16.mxu0 0
      %553 = vmatmul.mubr.bf16.gmra.mrb[0].mxu0 %v388
      %v554 = vpop.f32.mrb[0].mxu0
      %v555 = vadd.f32 0.0, %v554
      %v556 = vpop.f32.mrb[0].mxu0
      %v557 = vpop.f32.mrb[0].mxu0
      %v558 = vadd.f32 0.0, %v557
      %v559 = vpop.f32.mrb[0].mxu0
      %560 = vmatprep.mubr.bf16.mxu0 0
      %561 = vmatmul.mubr.bf16.gmra.mrb[0].mxu0 %v389
      %v562 = vpop.f32.mrb[0].mxu0
      %v563 = vadd.f32 0.0, %v562
      %v564 = vpop.f32.mrb[0].mxu0
      %v565 = vpop.f32.mrb[0].mxu0
      %v566 = vadd.f32 0.0, %v565
      %v567 = vpop.f32.mrb[0].mxu0
      %568 = vmatprep.mubr.bf16.mxu0 0
      %569 = vmatmul.mubr.bf16.gmra.mrb[0].mxu0 %v390
      %v570 = vpop.f32.mrb[0].mxu0
      %v571 = vadd.f32 0.0, %v570
      %v572 = vpop.f32.mrb[0].mxu0
      %v573 = vpop.f32.mrb[0].mxu0
      %v574 = vadd.f32 0.0, %v573
      %v575 = vpop.f32.mrb[0].mxu0
      %576 = vmatprep.mubr.bf16.mxu0 0
      %577 = vmatmul.mubr.bf16.gmra.mrb[0].mxu0 %v391
      %v578 = vpop.f32.mrb[0].mxu0
      %v579 = vadd.f32 0.0, %v578
      %v580 = vpop.f32.mrb[0].mxu0
      %v581 = vpop.f32.mrb[0].mxu0
      %v582 = vadd.f32 0.0, %v581
      %v583 = vpop.f32.mrb[0].mxu0
      %584 = vmatprep.mubr.bf16.mxu0 0
      %585 = vmatmul.mubr.bf16.gmra.mrb[0].mxu0 %v392
      %v586 = vpop.f32.mrb[0].mxu0
      %v587 = vadd.f32 0.0, %v586
      %v588 = vpop.f32.mrb[0].mxu0
      %v589 = vpop.f32.mrb[0].mxu0
      %v590 = vadd.f32 0.0, %v589
      %v591 = vpop.f32.mrb[0].mxu0
      %592 = vmatprep.mubr.bf16.mxu0 0
      %593 = vmatmul.mubr.bf16.gmra.mrb[0].mxu0 %v393
      %v594 = vpop.f32.mrb[0].mxu0
      %v595 = vadd.f32 0.0, %v594
      %v596 = vpop.f32.mrb[0].mxu0
      %v597 = vpop.f32.mrb[0].mxu0
      %v598 = vadd.f32 0.0, %v597
      %v599 = vpop.f32.mrb[0].mxu0
      %600 = vdwg.mxu0
      %v601 = vmax.f32 %v491, 0.0
      %v602 = vmax.f32 %v494, 0.0
      %v603 = vmax.f32 %v499, 0.0
      %v604 = vmax.f32 %v502, 0.0
      %v605 = vmax.f32 %v507, 0.0
      %v606 = vmax.f32 %v510, 0.0
      %v607 = vmax.f32 %v515, 0.0
      %v608 = vmax.f32 %v518, 0.0
      %v609 = vmax.f32 %v523, 0.0
      %v610 = vmax.f32 %v526, 0.0
      %v611 = vmax.f32 %v531, 0.0
      %v612 = vmax.f32 %v534, 0.0
      %v613 = vmax.f32 %v539, 0.0
      %v614 = vmax.f32 %v542, 0.0
      %v615 = vmax.f32 %v547, 0.0
      %v616 = vmax.f32 %v550, 0.0
      %v617 = vmax.f32 %v555, 0.0
      %v618 = vmax.f32 %v558, 0.0
      %v619 = vmax.f32 %v563, 0.0
      %v620 = vmax.f32 %v566, 0.0
      %v621 = vmax.f32 %v571, 0.0
      %v622 = vmax.f32 %v574, 0.0
      %v623 = vmax.f32 %v579, 0.0
      %v624 = vmax.f32 %v582, 0.0
      %v625 = vmax.f32 %v587, 0.0
      %v626 = vmax.f32 %v590, 0.0
      %v627 = vmax.f32 %v595, 0.0
      %v628 = vmax.f32 %v598, 0.0
      %629 = vst [vmem:[#allocation2] sm:$0xff] 0.0
      %630 = vst [vmem:[#allocation2 + $0x8] sm:$0xff] 0.0
      %631 = vst [vmem:[#allocation2 + $0x10] sm:$0xff] 0.0
      %632 = vst [vmem:[#allocation2 + $0xf8] sm:$0xff] 0.0
      %633 = vst [vmem:[#allocation2 + $0x100] sm:$0xff] 0.0
      %634 = vst [vmem:[#allocation2 + $0x108] sm:$0xff] 0.0
      %635 = vst [vmem:[#allocation3] sm:$0xff] 0.0
      %636 = vst [vmem:[#allocation3 + $0x8] sm:$0xff] 0.0
      %637 = vst [vmem:[#allocation3 + $0x10] sm:$0xff] 0.0
      %638 = vst [vmem:[#allocation3 + $0xf8] sm:$0xff] 0.0
      %639 = vst [vmem:[#allocation3 + $0x100] sm:$0xff] 0.0
      %640 = vst [vmem:[#allocation3 + $0x108] sm:$0xff] 0.0
      %641 = vst [vmem:[#allocation2 + $0x18] sm:$0xff] %v601
      %642 = vst [vmem:[#allocation2 + $0x20] sm:$0xff] %v602
      %643 = vst [vmem:[#allocation2 + $0x28] sm:$0xff] %v603
      %644 = vst [vmem:[#allocation2 + $0x30] sm:$0xff] %v604
      %645 = vst [vmem:[#allocation2 + $0x38] sm:$0xff] %v605
      %646 = vst [vmem:[#allocation2 + $0x40] sm:$0xff] %v606
      %647 = vst [vmem:[#allocation2 + $0x48] sm:$0xff] %v607
      %648 = vst [vmem:[#allocation2 + $0x50] sm:$0xff] %v608
      %649 = vst [vmem:[#allocation2 + $0x58] sm:$0xff] %v609
      %650 = vst [vmem:[#allocation2 + $0x60] sm:$0xff] %v610
      %651 = vst [vmem:[#allocation2 + $0x68] sm:$0xff] %v611
      %652 = vst [vmem:[#allocation2 + $0x70] sm:$0xff] %v612
      %653 = vst [vmem:[#allocation2 + $0x78] sm:$0xff] %v613
      %654 = vst [vmem:[#allocation2 + $0x80] sm:$0xff] %v614
      %655 = vst [vmem:[#allocation2 + $0x88] sm:$0xff] %v615
      %656 = vst [vmem:[#allocation2 + $0x90] sm:$0xff] %v616
      %657 = vst [vmem:[#allocation2 + $0x98] sm:$0xff] %v617
      %658 = vst [vmem:[#allocation2 + $0xa0] sm:$0xff] %v618
      %659 = vst [vmem:[#allocation2 + $0xa8] sm:$0xff] %v619
      %660 = vst [vmem:[#allocation2 + $0xb0] sm:$0xff] %v620
      %661 = vst [vmem:[#allocation2 + $0xb8] sm:$0xff] %v621
      %662 = vst [vmem:[#allocation2 + $0xc0] sm:$0xff] %v622
      %663 = vst [vmem:[#allocation2 + $0xc8] sm:$0xff] %v623
      %664 = vst [vmem:[#allocation2 + $0xd0] sm:$0xff] %v624
      %665 = vst [vmem:[#allocation2 + $0xd8] sm:$0xff] %v625
      %666 = vst [vmem:[#allocation2 + $0xe0] sm:$0xff] %v626
      %667 = vst [vmem:[#allocation2 + $0xe8] sm:$0xff] %v627
      %668 = vst [vmem:[#allocation2 + $0xf0] sm:$0xff] %v628
      %v669 = vld [vmem:[%s6] sm:$0xff]
      %v670 = vld [vmem:[%s6 + $0x8] sm:$0xff]
      %v671 = vld [vmem:[%s6 + $0x10] sm:$0xff]
      %v672 = vld [vmem:[%s6 + $0x18] sm:$0xff]
      %v673 = vld [vmem:[%s6 + $0x20] sm:$0xff]
      %v674 = vld [vmem:[%s6 + $0x28] sm:$0xff]
      %v675 = vld [vmem:[%s6 + $0x30] sm:$0xff]
      %v676 = vld [vmem:[%s6 + $0x38] sm:$0xff]
      %v677 = vld [vmem:[%s6 + $0x40] sm:$0xff]
      %v678 = vld [vmem:[%s6 + $0x48] sm:$0xff]
      %v679 = vld [vmem:[%s6 + $0x50] sm:$0xff]
      %v680 = vld [vmem:[%s6 + $0x58] sm:$0xff]
      %v681 = vld [vmem:[%s6 + $0x60] sm:$0xff]
      %v682 = vld [vmem:[%s6 + $0x68] sm:$0xff]
      %v683 = vld [vmem:[%s6 + $0x70] sm:$0xff]
      %v684 = vld [vmem:[%s6 + $0x78] sm:$0xff]
      %v685 = vld [vmem:[%s6 + $0x80] sm:$0xff]
      %v686 = vld [vmem:[%s6 + $0x88] sm:$0xff]
      %v687 = vld [vmem:[%s6 + $0x90] sm:$0xff]
      %v688 = vld [vmem:[%s6 + $0x98] sm:$0xff]
      %v689 = vld [vmem:[%s6 + $0xa0] sm:$0xff]
      %v690 = vld [vmem:[%s6 + $0xa8] sm:$0xff]
      %v691 = vld [vmem:[%s6 + $0xb0] sm:$0xff]
      %v692 = vld [vmem:[%s6 + $0xb8] sm:$0xff]
      %v693 = vld [vmem:[%s6 + $0xc0] sm:$0xff]
      %v694 = vld [vmem:[%s6 + $0xc8] sm:$0xff]
      %v695 = vld [vmem:[%s6 + $0xd0] sm:$0xff]
      %v696 = vld [vmem:[%s6 + $0xd8] sm:$0xff]
      %v697 = vld [vmem:[#allocation2 + $0x7] sm:$0xff]
      %v698 = vld [vmem:[#allocation2 + $0xf] sm:$0xff]
      %v699 = vld [vmem:[#allocation2 + $0x17] sm:$0xff]
      %v700 = vld [vmem:[#allocation2 + $0x1f] sm:$0xff]
      %v701 = vld [vmem:[#allocation2 + $0x27] sm:$0xff]
      %v702 = vld [vmem:[#allocation2 + $0x2f] sm:$0xff]
      %v703 = vld [vmem:[#allocation2 + $0x37] sm:$0xff]
      %v704 = vld [vmem:[#allocation2 + $0x3f] sm:$0xff]
      %v705 = vld [vmem:[#allocation2 + $0x47] sm:$0xff]
      %v706 = vld [vmem:[#allocation2 + $0x4f] sm:$0xff]
      %v707 = vld [vmem:[#allocation2 + $0x57] sm:$0xff]
      %v708 = vld [vmem:[#allocation2 + $0x5f] sm:$0xff]
      %v709 = vld [vmem:[#allocation2 + $0x67] sm:$0xff]
      %v710 = vld [vmem:[#allocation2 + $0x6f] sm:$0xff]
      %v711 = vld [vmem:[#allocation2 + $0x77] sm:$0xff]
      %v712 = vld [vmem:[#allocation2 + $0x7f] sm:$0xff]
      %v713 = vld [vmem:[#allocation2 + $0x87] sm:$0xff]
      %v714 = vld [vmem:[#allocation2 + $0x8f] sm:$0xff]
      %v715 = vld [vmem:[#allocation2 + $0x97] sm:$0xff]
      %v716 = vld [vmem:[#allocation2 + $0x9f] sm:$0xff]
      %v717 = vld [vmem:[#allocation2 + $0xa7] sm:$0xff]
      %v718 = vld [vmem:[#allocation2 + $0xaf] sm:$0xff]
      %v719 = vld [vmem:[#allocation2 + $0xb7] sm:$0xff]
      %v720 = vld [vmem:[#allocation2 + $0xbf] sm:$0xff]
      %v721 = vld [vmem:[#allocation2 + $0xc7] sm:$0xff]
      %v722 = vld [vmem:[#allocation2 + $0xcf] sm:$0xff]
      %v723 = vld [vmem:[#allocation2 + $0xd7] sm:$0xff]
      %v724 = vld [vmem:[#allocation2 + $0xdf] sm:$0xff]
      %v725 = vpack.c.bf16 %v698, %v697
      %v726 = vpack.c.bf16 %v700, %v699
      %v727 = vpack.c.bf16 %v702, %v701
      %v728 = vpack.c.bf16 %v704, %v703
      %v729 = vpack.c.bf16 %v706, %v705
      %v730 = vpack.c.bf16 %v708, %v707
      %v731 = vpack.c.bf16 %v710, %v709
      %v732 = vpack.c.bf16 %v712, %v711
      %v733 = vpack.c.bf16 %v714, %v713
      %v734 = vpack.c.bf16 %v716, %v715
      %v735 = vpack.c.bf16 %v718, %v717
      %v736 = vpack.c.bf16 %v720, %v719
      %v737 = vpack.c.bf16 %v722, %v721
      %v738 = vpack.c.bf16 %v724, %v723
      %v739 = vld [vmem:[%s2] sm:$0xf]
      %v740 = vld [vmem:[%s2 + $0x4] sm:$0xf]
      %v741 = vld [vmem:[%s2 + $0x8] sm:$0xf]
      %v742 = vld [vmem:[%s2 + $0xc] sm:$0xf]
      %v743 = vld [vmem:[%s2 + $0x10] sm:$0xf]
      %v744 = vld [vmem:[%s2 + $0x14] sm:$0xf]
      %v745 = vld [vmem:[%s2 + $0x18] sm:$0xf]
      %v746 = vld [vmem:[%s2 + $0x1c] sm:$0xf]
      %v747 = vld [vmem:[%s2 + $0x20] sm:$0xf]
      %v748 = vld [vmem:[%s2 + $0x24] sm:$0xf]
      %v749 = vld [vmem:[%s2 + $0x28] sm:$0xf]
      %v750 = vld [vmem:[%s2 + $0x2c] sm:$0xf]
      %v751 = vld [vmem:[%s2 + $0x30] sm:$0xf]
      %v752 = vld [vmem:[%s2 + $0x34] sm:$0xf]
      %v753 = vld [vmem:[%s2 + $0x38] sm:$0xf]
      %v754 = vld [vmem:[%s2 + $0x3c] sm:$0xf]
      %v755 = vld [vmem:[#allocation2 + $0x8] sm:$0xff]
      %v756 = vld [vmem:[#allocation2 + $0x10] sm:$0xff]
      %v757 = vld [vmem:[#allocation2 + $0x18] sm:$0xff]
      %v758 = vld [vmem:[#allocation2 + $0x20] sm:$0xff]
      %v759 = vld [vmem:[#allocation2 + $0x28] sm:$0xff]
      %v760 = vld [vmem:[#allocation2 + $0x30] sm:$0xff]
      %v761 = vld [vmem:[#allocation2 + $0x38] sm:$0xff]
      %v762 = vld [vmem:[#allocation2 + $0x40] sm:$0xff]
      %v763 = vld [vmem:[#allocation2 + $0x48] sm:$0xff]
      %v764 = vld [vmem:[#allocation2 + $0x50] sm:$0xff]
      %v765 = vld [vmem:[#allocation2 + $0x58] sm:$0xff]
      %v766 = vld [vmem:[#allocation2 + $0x60] sm:$0xff]
      %v767 = vld [vmem:[#allocation2 + $0x68] sm:$0xff]
      %v768 = vld [vmem:[#allocation2 + $0x70] sm:$0xff]
      %v769 = vld [vmem:[#allocation2 + $0x78] sm:$0xff]
      %v770 = vld [vmem:[#allocation2 + $0x80] sm:$0xff]
      %v771 = vld [vmem:[#allocation2 + $0x88] sm:$0xff]
      %v772 = vld [vmem:[#allocation2 + $0x90] sm:$0xff]
      %v773 = vld [vmem:[#allocation2 + $0x98] sm:$0xff]
      %v774 = vld [vmem:[#allocation2 + $0xa0] sm:$0xff]
      %v775 = vld [vmem:[#allocation2 + $0xa8] sm:$0xff]
      %v776 = vld [vmem:[#allocation2 + $0xb0] sm:$0xff]
      %v777 = vld [vmem:[#allocation2 + $0xb8] sm:$0xff]
      %v778 = vld [vmem:[#allocation2 + $0xc0] sm:$0xff]
      %v779 = vld [vmem:[#allocation2 + $0xc8] sm:$0xff]
      %v780 = vld [vmem:[#allocation2 + $0xd0] sm:$0xff]
      %v781 = vld [vmem:[#allocation2 + $0xd8] sm:$0xff]
      %v782 = vld [vmem:[#allocation2 + $0xe0] sm:$0xff]
      %v783 = vpack.c.bf16 %v756, %v755
      %v784 = vpack.c.bf16 %v758, %v757
      %v785 = vpack.c.bf16 %v760, %v759
      %v786 = vpack.c.bf16 %v762, %v761
      %v787 = vpack.c.bf16 %v764, %v763
      %v788 = vpack.c.bf16 %v766, %v765
      %v789 = vpack.c.bf16 %v768, %v767
      %v790 = vpack.c.bf16 %v770, %v769
      %v791 = vpack.c.bf16 %v772, %v771
      %v792 = vpack.c.bf16 %v774, %v773
      %v793 = vpack.c.bf16 %v776, %v775
      %v794 = vpack.c.bf16 %v778, %v777
      %v795 = vpack.c.bf16 %v780, %v779
      %v796 = vpack.c.bf16 %v782, %v781
      %s797 = scalar_lea.vmem %s2, 64
      %v798 = vld [vmem:[%s797] sm:$0xf]
      %v799 = vld [vmem:[%s797 + $0x4] sm:$0xf]
      %v800 = vld [vmem:[%s797 + $0x8] sm:$0xf]
      %v801 = vld [vmem:[%s797 + $0xc] sm:$0xf]
      %v802 = vld [vmem:[%s797 + $0x10] sm:$0xf]
      %v803 = vld [vmem:[%s797 + $0x14] sm:$0xf]
      %v804 = vld [vmem:[%s797 + $0x18] sm:$0xf]
      %v805 = vld [vmem:[%s797 + $0x1c] sm:$0xf]
      %v806 = vld [vmem:[%s797 + $0x20] sm:$0xf]
      %v807 = vld [vmem:[%s797 + $0x24] sm:$0xf]
      %v808 = vld [vmem:[%s797 + $0x28] sm:$0xf]
      %v809 = vld [vmem:[%s797 + $0x2c] sm:$0xf]
      %v810 = vld [vmem:[%s797 + $0x30] sm:$0xf]
      %v811 = vld [vmem:[%s797 + $0x34] sm:$0xf]
      %v812 = vld [vmem:[%s797 + $0x38] sm:$0xf]
      %v813 = vld [vmem:[%s797 + $0x3c] sm:$0xf]
      %v830 = vunpack.c.l.b16 %v798
      %v831 = vunpack.c.l.b16 %v799
      %v832 = vunpack.c.l.b16 %v800
      %v833 = vunpack.c.l.b16 %v801
      %v834 = vunpack.c.l.b16 %v802
      %v835 = vunpack.c.l.b16 %v803
      %v836 = vunpack.c.l.b16 %v804
      %v837 = vunpack.c.l.b16 %v805
      %v838 = vunpack.c.l.b16 %v806
      %v839 = vunpack.c.l.b16 %v807
      %v840 = vunpack.c.l.b16 %v808
      %v841 = vunpack.c.l.b16 %v809
      %v842 = vunpack.c.l.b16 %v810
      %v843 = vunpack.c.l.b16 %v811
      %v844 = vunpack.c.l.b16 %v812
      %v845 = vunpack.c.l.b16 %v813
      %v846 = vpack.c.b16 %v831, %v830
      %v847 = vpack.c.b16 %v833, %v832
      %v848 = vpack.c.b16 %v835, %v834
      %v849 = vpack.c.b16 %v837, %v836
      %v850 = vpack.c.b16 %v839, %v838
      %v851 = vpack.c.b16 %v841, %v840
      %v852 = vpack.c.b16 %v843, %v842
      %v853 = vpack.c.b16 %v845, %v844
      %862 = vmatprep.subr.bf16.mxu0 0
      %863 = vmatpush1.bf16.msra.mxu0 %v846
      %864 = vmatprep.subr.bf16.mxu0 0
      %865 = vmatpush1.bf16.msra.mxu0 %v847
      %866 = vmatprep.subr.bf16.mxu0 0
      %867 = vmatpush1.bf16.msra.mxu0 %v848
      %868 = vmatprep.subr.bf16.mxu0 0
      %869 = vmatpush1.bf16.msra.mxu0 %v849
      %870 = vmatprep.subr.bf16.mxu0 0
      %871 = vmatpush1.bf16.msra.mxu0 %v850
      %872 = vmatprep.subr.bf16.mxu0 0
      %873 = vmatpush1.bf16.msra.mxu0 %v851
      %874 = vmatprep.subr.bf16.mxu0 0
      %875 = vmatpush1.bf16.msra.mxu0 %v852
      %876 = vmatprep.subr.bf16.mxu0 0
      %877 = vmatpush1.bf16.msra.mxu0 %v853
      %878 = vmatprep.subr.bf16.mxu0 0
      %879 = vmatpush1.bf16.msra.mxu0 0
      %880 = vmatprep.subr.bf16.mxu0 0
      %881 = vmatpush1.bf16.msra.mxu0 0
      %882 = vmatprep.subr.bf16.mxu0 0
      %883 = vmatpush1.bf16.msra.mxu0 0
      %884 = vmatprep.subr.bf16.mxu0 0
      %885 = vmatpush1.bf16.msra.mxu0 0
      %886 = vmatprep.subr.bf16.mxu0 0
      %887 = vmatpush1.bf16.msra.mxu0 0
      %888 = vmatprep.subr.bf16.mxu0 0
      %889 = vmatpush1.bf16.msra.mxu0 0
      %890 = vmatprep.subr.bf16.mxu0 0
      %891 = vmatpush1.bf16.msra.mxu0 0
      %892 = vmatprep.subr.bf16.mxu0 0
      %893 = vmatpush1.bf16.msra.mxu0 0
      %894 = vmatprep.mubr.bf16.mxu0 0
      %895 = vmatmul.mubr.bf16.gmra.mrb[0].mxu0 %v783
      %v896 = vpop.f32.mrb[0].mxu0
      %v897 = vadd.f32 0.0, %v896
      %v898 = vpop.f32.mrb[0].mxu0
      %v899 = vpop.f32.mrb[0].mxu0
      %v900 = vadd.f32 0.0, %v899
      %v901 = vpop.f32.mrb[0].mxu0
      %902 = vmatprep.mubr.bf16.mxu0 0
      %903 = vmatmul.mubr.bf16.gmra.mrb[0].mxu0 %v784
      %v904 = vpop.f32.mrb[0].mxu0
      %v905 = vadd.f32 0.0, %v904
      %v906 = vpop.f32.mrb[0].mxu0
      %v907 = vpop.f32.mrb[0].mxu0
      %v908 = vadd.f32 0.0, %v907
      %v909 = vpop.f32.mrb[0].mxu0
      %910 = vmatprep.mubr.bf16.mxu0 0
      %911 = vmatmul.mubr.bf16.gmra.mrb[0].mxu0 %v785
      %v912 = vpop.f32.mrb[0].mxu0
      %v913 = vadd.f32 0.0, %v912
      %v914 = vpop.f32.mrb[0].mxu0
      %v915 = vpop.f32.mrb[0].mxu0
      %v916 = vadd.f32 0.0, %v915
      %v917 = vpop.f32.mrb[0].mxu0
      %918 = vmatprep.mubr.bf16.mxu0 0
      %919 = vmatmul.mubr.bf16.gmra.mrb[0].mxu0 %v786
      %v920 = vpop.f32.mrb[0].mxu0
      %v921 = vadd.f32 0.0, %v920
      %v922 = vpop.f32.mrb[0].mxu0
      %v923 = vpop.f32.mrb[0].mxu0
      %v924 = vadd.f32 0.0, %v923
      %v925 = vpop.f32.mrb[0].mxu0
      %926 = vmatprep.mubr.bf16.mxu0 0
      %927 = vmatmul.mubr.bf16.gmra.mrb[0].mxu0 %v787
      %v928 = vpop.f32.mrb[0].mxu0
      %v929 = vadd.f32 0.0, %v928
      %v930 = vpop.f32.mrb[0].mxu0
      %v931 = vpop.f32.mrb[0].mxu0
      %v932 = vadd.f32 0.0, %v931
      %v933 = vpop.f32.mrb[0].mxu0
      %934 = vmatprep.mubr.bf16.mxu0 0
      %935 = vmatmul.mubr.bf16.gmra.mrb[0].mxu0 %v788
      %v936 = vpop.f32.mrb[0].mxu0
      %v937 = vadd.f32 0.0, %v936
      %v938 = vpop.f32.mrb[0].mxu0
      %v939 = vpop.f32.mrb[0].mxu0
      %v940 = vadd.f32 0.0, %v939
      %v941 = vpop.f32.mrb[0].mxu0
      %942 = vmatprep.mubr.bf16.mxu0 0
      %943 = vmatmul.mubr.bf16.gmra.mrb[0].mxu0 %v789
      %v944 = vpop.f32.mrb[0].mxu0
      %v945 = vadd.f32 0.0, %v944
      %v946 = vpop.f32.mrb[0].mxu0
      %v947 = vpop.f32.mrb[0].mxu0
      %v948 = vadd.f32 0.0, %v947
      %v949 = vpop.f32.mrb[0].mxu0
      %950 = vmatprep.mubr.bf16.mxu0 0
      %951 = vmatmul.mubr.bf16.gmra.mrb[0].mxu0 %v790
      %v952 = vpop.f32.mrb[0].mxu0
      %v953 = vadd.f32 0.0, %v952
      %v954 = vpop.f32.mrb[0].mxu0
      %v955 = vpop.f32.mrb[0].mxu0
      %v956 = vadd.f32 0.0, %v955
      %v957 = vpop.f32.mrb[0].mxu0
      %958 = vmatprep.mubr.bf16.mxu0 0
      %959 = vmatmul.mubr.bf16.gmra.mrb[0].mxu0 %v791
      %v960 = vpop.f32.mrb[0].mxu0
      %v961 = vadd.f32 0.0, %v960
      %v962 = vpop.f32.mrb[0].mxu0
      %v963 = vpop.f32.mrb[0].mxu0
      %v964 = vadd.f32 0.0, %v963
      %v965 = vpop.f32.mrb[0].mxu0
      %966 = vmatprep.mubr.bf16.mxu0 0
      %967 = vmatmul.mubr.bf16.gmra.mrb[0].mxu0 %v792
      %v968 = vpop.f32.mrb[0].mxu0
      %v969 = vadd.f32 0.0, %v968
      %v970 = vpop.f32.mrb[0].mxu0
      %v971 = vpop.f32.mrb[0].mxu0
      %v972 = vadd.f32 0.0, %v971
      %v973 = vpop.f32.mrb[0].mxu0
      %974 = vmatprep.mubr.bf16.mxu0 0
      %975 = vmatmul.mubr.bf16.gmra.mrb[0].mxu0 %v793
      %v976 = vpop.f32.mrb[0].mxu0
      %v977 = vadd.f32 0.0, %v976
      %v978 = vpop.f32.mrb[0].mxu0
      %v979 = vpop.f32.mrb[0].mxu0
      %v980 = vadd.f32 0.0, %v979
      %v981 = vpop.f32.mrb[0].mxu0
      %982 = vmatprep.mubr.bf16.mxu0 0
      %983 = vmatmul.mubr.bf16.gmra.mrb[0].mxu0 %v794
      %v984 = vpop.f32.mrb[0].mxu0
      %v985 = vadd.f32 0.0, %v984
      %v986 = vpop.f32.mrb[0].mxu0
      %v987 = vpop.f32.mrb[0].mxu0
      %v988 = vadd.f32 0.0, %v987
      %v989 = vpop.f32.mrb[0].mxu0
      %990 = vmatprep.mubr.bf16.mxu0 0
      %991 = vmatmul.mubr.bf16.gmra.mrb[0].mxu0 %v795
      %v992 = vpop.f32.mrb[0].mxu0
      %v993 = vadd.f32 0.0, %v992
      %v994 = vpop.f32.mrb[0].mxu0
      %v995 = vpop.f32.mrb[0].mxu0
      %v996 = vadd.f32 0.0, %v995
      %v997 = vpop.f32.mrb[0].mxu0
      %998 = vmatprep.mubr.bf16.mxu0 0
      %999 = vmatmul.mubr.bf16.gmra.mrb[0].mxu0 %v796
      %v1000 = vpop.f32.mrb[0].mxu0
      %v1001 = vadd.f32 0.0, %v1000
      %v1002 = vpop.f32.mrb[0].mxu0
      %v1003 = vpop.f32.mrb[0].mxu0
      %v1004 = vadd.f32 0.0, %v1003
      %v1005 = vpop.f32.mrb[0].mxu0
      %1006 = vdwg.mxu0
      %v1023 = vunpack.c.l.b16 %v739
      %v1024 = vunpack.c.l.b16 %v740
      %v1025 = vunpack.c.l.b16 %v741
      %v1026 = vunpack.c.l.b16 %v742
      %v1027 = vunpack.c.l.b16 %v743
      %v1028 = vunpack.c.l.b16 %v744
      %v1029 = vunpack.c.l.b16 %v745
      %v1030 = vunpack.c.l.b16 %v746
      %v1031 = vunpack.c.l.b16 %v747
      %v1032 = vunpack.c.l.b16 %v748
      %v1033 = vunpack.c.l.b16 %v749
      %v1034 = vunpack.c.l.b16 %v750
      %v1035 = vunpack.c.l.b16 %v751
      %v1036 = vunpack.c.l.b16 %v752
      %v1037 = vunpack.c.l.b16 %v753
      %v1038 = vunpack.c.l.b16 %v754
      %v1039 = vpack.c.b16 %v1024, %v1023
      %v1040 = vpack.c.b16 %v1026, %v1025
      %v1041 = vpack.c.b16 %v1028, %v1027
      %v1042 = vpack.c.b16 %v1030, %v1029
      %v1043 = vpack.c.b16 %v1032, %v1031
      %v1044 = vpack.c.b16 %v1034, %v1033
      %v1045 = vpack.c.b16 %v1036, %v1035
      %v1046 = vpack.c.b16 %v1038, %v1037
      %1055 = vmatprep.subr.bf16.mxu0 0
      %1056 = vmatpush1.bf16.msra.mxu0 %v1039
      %1057 = vmatprep.subr.bf16.mxu0 0
      %1058 = vmatpush1.bf16.msra.mxu0 %v1040
      %1059 = vmatprep.subr.bf16.mxu0 0
      %1060 = vmatpush1.bf16.msra.mxu0 %v1041
      %1061 = vmatprep.subr.bf16.mxu0 0
      %1062 = vmatpush1.bf16.msra.mxu0 %v1042
      %1063 = vmatprep.subr.bf16.mxu0 0
      %1064 = vmatpush1.bf16.msra.mxu0 %v1043
      %1065 = vmatprep.subr.bf16.mxu0 0
      %1066 = vmatpush1.bf16.msra.mxu0 %v1044
      %1067 = vmatprep.subr.bf16.mxu0 0
      %1068 = vmatpush1.bf16.msra.mxu0 %v1045
      %1069 = vmatprep.subr.bf16.mxu0 0
      %1070 = vmatpush1.bf16.msra.mxu0 %v1046
      %1071 = vmatprep.subr.bf16.mxu0 0
      %1072 = vmatpush1.bf16.msra.mxu0 0
      %1073 = vmatprep.subr.bf16.mxu0 0
      %1074 = vmatpush1.bf16.msra.mxu0 0
      %1075 = vmatprep.subr.bf16.mxu0 0
      %1076 = vmatpush1.bf16.msra.mxu0 0
      %1077 = vmatprep.subr.bf16.mxu0 0
      %1078 = vmatpush1.bf16.msra.mxu0 0
      %1079 = vmatprep.subr.bf16.mxu0 0
      %1080 = vmatpush1.bf16.msra.mxu0 0
      %1081 = vmatprep.subr.bf16.mxu0 0
      %1082 = vmatpush1.bf16.msra.mxu0 0
      %1083 = vmatprep.subr.bf16.mxu0 0
      %1084 = vmatpush1.bf16.msra.mxu0 0
      %1085 = vmatprep.subr.bf16.mxu0 0
      %1086 = vmatpush1.bf16.msra.mxu0 0
      %1087 = vmatprep.mubr.bf16.mxu0 0
      %1088 = vmatmul.mubr.bf16.gmra.mrb[0].mxu0 %v725
      %v1089 = vpop.f32.mrb[0].mxu0
      %v1090 = vadd.f32 %v897, %v1089
      %v1091 = vpop.f32.mrb[0].mxu0
      %v1092 = vpop.f32.mrb[0].mxu0
      %v1093 = vadd.f32 %v900, %v1092
      %v1094 = vpop.f32.mrb[0].mxu0
      %1095 = vmatprep.mubr.bf16.mxu0 0
      %1096 = vmatmul.mubr.bf16.gmra.mrb[0].mxu0 %v726
      %v1097 = vpop.f32.mrb[0].mxu0
      %v1098 = vadd.f32 %v905, %v1097
      %v1099 = vpop.f32.mrb[0].mxu0
      %v1100 = vpop.f32.mrb[0].mxu0
      %v1101 = vadd.f32 %v908, %v1100
      %v1102 = vpop.f32.mrb[0].mxu0
      %1103 = vmatprep.mubr.bf16.mxu0 0
      %1104 = vmatmul.mubr.bf16.gmra.mrb[0].mxu0 %v727
      %v1105 = vpop.f32.mrb[0].mxu0
      %v1106 = vadd.f32 %v913, %v1105
      %v1107 = vpop.f32.mrb[0].mxu0
      %v1108 = vpop.f32.mrb[0].mxu0
      %v1109 = vadd.f32 %v916, %v1108
      %v1110 = vpop.f32.mrb[0].mxu0
      %1111 = vmatprep.mubr.bf16.mxu0 0
      %1112 = vmatmul.mubr.bf16.gmra.mrb[0].mxu0 %v728
      %v1113 = vpop.f32.mrb[0].mxu0
      %v1114 = vadd.f32 %v921, %v1113
      %v1115 = vpop.f32.mrb[0].mxu0
      %v1116 = vpop.f32.mrb[0].mxu0
      %v1117 = vadd.f32 %v924, %v1116
      %v1118 = vpop.f32.mrb[0].mxu0
      %1119 = vmatprep.mubr.bf16.mxu0 0
      %1120 = vmatmul.mubr.bf16.gmra.mrb[0].mxu0 %v729
      %v1121 = vpop.f32.mrb[0].mxu0
      %v1122 = vadd.f32 %v929, %v1121
      %v1123 = vpop.f32.mrb[0].mxu0
      %v1124 = vpop.f32.mrb[0].mxu0
      %v1125 = vadd.f32 %v932, %v1124
      %v1126 = vpop.f32.mrb[0].mxu0
      %1127 = vmatprep.mubr.bf16.mxu0 0
      %1128 = vmatmul.mubr.bf16.gmra.mrb[0].mxu0 %v730
      %v1129 = vpop.f32.mrb[0].mxu0
      %v1130 = vadd.f32 %v937, %v1129
      %v1131 = vpop.f32.mrb[0].mxu0
      %v1132 = vpop.f32.mrb[0].mxu0
      %v1133 = vadd.f32 %v940, %v1132
      %v1134 = vpop.f32.mrb[0].mxu0
      %1135 = vmatprep.mubr.bf16.mxu0 0
      %1136 = vmatmul.mubr.bf16.gmra.mrb[0].mxu0 %v731
      %v1137 = vpop.f32.mrb[0].mxu0
      %v1138 = vadd.f32 %v945, %v1137
      %v1139 = vpop.f32.mrb[0].mxu0
      %v1140 = vpop.f32.mrb[0].mxu0
      %v1141 = vadd.f32 %v948, %v1140
      %v1142 = vpop.f32.mrb[0].mxu0
      %1143 = vmatprep.mubr.bf16.mxu0 0
      %1144 = vmatmul.mubr.bf16.gmra.mrb[0].mxu0 %v732
      %v1145 = vpop.f32.mrb[0].mxu0
      %v1146 = vadd.f32 %v953, %v1145
      %v1147 = vpop.f32.mrb[0].mxu0
      %v1148 = vpop.f32.mrb[0].mxu0
      %v1149 = vadd.f32 %v956, %v1148
      %v1150 = vpop.f32.mrb[0].mxu0
      %1151 = vmatprep.mubr.bf16.mxu0 0
      %1152 = vmatmul.mubr.bf16.gmra.mrb[0].mxu0 %v733
      %v1153 = vpop.f32.mrb[0].mxu0
      %v1154 = vadd.f32 %v961, %v1153
      %v1155 = vpop.f32.mrb[0].mxu0
      %v1156 = vpop.f32.mrb[0].mxu0
      %v1157 = vadd.f32 %v964, %v1156
      %v1158 = vpop.f32.mrb[0].mxu0
      %1159 = vmatprep.mubr.bf16.mxu0 0
      %1160 = vmatmul.mubr.bf16.gmra.mrb[0].mxu0 %v734
      %v1161 = vpop.f32.mrb[0].mxu0
      %v1162 = vadd.f32 %v969, %v1161
      %v1163 = vpop.f32.mrb[0].mxu0
      %v1164 = vpop.f32.mrb[0].mxu0
      %v1165 = vadd.f32 %v972, %v1164
      %v1166 = vpop.f32.mrb[0].mxu0
      %1167 = vmatprep.mubr.bf16.mxu0 0
      %1168 = vmatmul.mubr.bf16.gmra.mrb[0].mxu0 %v735
      %v1169 = vpop.f32.mrb[0].mxu0
      %v1170 = vadd.f32 %v977, %v1169
      %v1171 = vpop.f32.mrb[0].mxu0
      %v1172 = vpop.f32.mrb[0].mxu0
      %v1173 = vadd.f32 %v980, %v1172
      %v1174 = vpop.f32.mrb[0].mxu0
      %1175 = vmatprep.mubr.bf16.mxu0 0
      %1176 = vmatmul.mubr.bf16.gmra.mrb[0].mxu0 %v736
      %v1177 = vpop.f32.mrb[0].mxu0
      %v1178 = vadd.f32 %v985, %v1177
      %v1179 = vpop.f32.mrb[0].mxu0
      %v1180 = vpop.f32.mrb[0].mxu0
      %v1181 = vadd.f32 %v988, %v1180
      %v1182 = vpop.f32.mrb[0].mxu0
      %1183 = vmatprep.mubr.bf16.mxu0 0
      %1184 = vmatmul.mubr.bf16.gmra.mrb[0].mxu0 %v737
      %v1185 = vpop.f32.mrb[0].mxu0
      %v1186 = vadd.f32 %v993, %v1185
      %v1187 = vpop.f32.mrb[0].mxu0
      %v1188 = vpop.f32.mrb[0].mxu0
      %v1189 = vadd.f32 %v996, %v1188
      %v1190 = vpop.f32.mrb[0].mxu0
      %1191 = vmatprep.mubr.bf16.mxu0 0
      %1192 = vmatmul.mubr.bf16.gmra.mrb[0].mxu0 %v738
      %v1193 = vpop.f32.mrb[0].mxu0
      %v1194 = vadd.f32 %v1001, %v1193
      %v1195 = vpop.f32.mrb[0].mxu0
      %v1196 = vpop.f32.mrb[0].mxu0
      %v1197 = vadd.f32 %v1004, %v1196
      %v1198 = vpop.f32.mrb[0].mxu0
      %1199 = vdwg.mxu0
      %v1200 = vld [vmem:[#allocation2 + $0x9] sm:$0xff]
      %v1201 = vld [vmem:[#allocation2 + $0x11] sm:$0xff]
      %v1202 = vld [vmem:[#allocation2 + $0x19] sm:$0xff]
      %v1203 = vld [vmem:[#allocation2 + $0x21] sm:$0xff]
      %v1204 = vld [vmem:[#allocation2 + $0x29] sm:$0xff]
      %v1205 = vld [vmem:[#allocation2 + $0x31] sm:$0xff]
      %v1206 = vld [vmem:[#allocation2 + $0x39] sm:$0xff]
      %v1207 = vld [vmem:[#allocation2 + $0x41] sm:$0xff]
      %v1208 = vld [vmem:[#allocation2 + $0x49] sm:$0xff]
      %v1209 = vld [vmem:[#allocation2 + $0x51] sm:$0xff]
      %v1210 = vld [vmem:[#allocation2 + $0x59] sm:$0xff]
      %v1211 = vld [vmem:[#allocation2 + $0x61] sm:$0xff]
      %v1212 = vld [vmem:[#allocation2 + $0x69] sm:$0xff]
      %v1213 = vld [vmem:[#allocation2 + $0x71] sm:$0xff]
      %v1214 = vld [vmem:[#allocation2 + $0x79] sm:$0xff]
      %v1215 = vld [vmem:[#allocation2 + $0x81] sm:$0xff]
      %v1216 = vld [vmem:[#allocation2 + $0x89] sm:$0xff]
      %v1217 = vld [vmem:[#allocation2 + $0x91] sm:$0xff]
      %v1218 = vld [vmem:[#allocation2 + $0x99] sm:$0xff]
      %v1219 = vld [vmem:[#allocation2 + $0xa1] sm:$0xff]
      %v1220 = vld [vmem:[#allocation2 + $0xa9] sm:$0xff]
      %v1221 = vld [vmem:[#allocation2 + $0xb1] sm:$0xff]
      %v1222 = vld [vmem:[#allocation2 + $0xb9] sm:$0xff]
      %v1223 = vld [vmem:[#allocation2 + $0xc1] sm:$0xff]
      %v1224 = vld [vmem:[#allocation2 + $0xc9] sm:$0xff]
      %v1225 = vld [vmem:[#allocation2 + $0xd1] sm:$0xff]
      %v1226 = vld [vmem:[#allocation2 + $0xd9] sm:$0xff]
      %v1227 = vld [vmem:[#allocation2 + $0xe1] sm:$0xff]
      %v1228 = vpack.c.bf16 %v1201, %v1200
      %v1229 = vpack.c.bf16 %v1203, %v1202
      %v1230 = vpack.c.bf16 %v1205, %v1204
      %v1231 = vpack.c.bf16 %v1207, %v1206
      %v1232 = vpack.c.bf16 %v1209, %v1208
      %v1233 = vpack.c.bf16 %v1211, %v1210
      %v1234 = vpack.c.bf16 %v1213, %v1212
      %v1235 = vpack.c.bf16 %v1215, %v1214
      %v1236 = vpack.c.bf16 %v1217, %v1216
      %v1237 = vpack.c.bf16 %v1219, %v1218
      %v1238 = vpack.c.bf16 %v1221, %v1220
      %v1239 = vpack.c.bf16 %v1223, %v1222
      %v1240 = vpack.c.bf16 %v1225, %v1224
      %v1241 = vpack.c.bf16 %v1227, %v1226
      %s1242 = scalar_lea.vmem %s2, 128
      %v1243 = vld [vmem:[%s1242] sm:$0xf]
      %v1244 = vld [vmem:[%s1242 + $0x4] sm:$0xf]
      %v1245 = vld [vmem:[%s1242 + $0x8] sm:$0xf]
      %v1246 = vld [vmem:[%s1242 + $0xc] sm:$0xf]
      %v1247 = vld [vmem:[%s1242 + $0x10] sm:$0xf]
      %v1248 = vld [vmem:[%s1242 + $0x14] sm:$0xf]
      %v1249 = vld [vmem:[%s1242 + $0x18] sm:$0xf]
      %v1250 = vld [vmem:[%s1242 + $0x1c] sm:$0xf]
      %v1251 = vld [vmem:[%s1242 + $0x20] sm:$0xf]
      %v1252 = vld [vmem:[%s1242 + $0x24] sm:$0xf]
      %v1253 = vld [vmem:[%s1242 + $0x28] sm:$0xf]
      %v1254 = vld [vmem:[%s1242 + $0x2c] sm:$0xf]
      %v1255 = vld [vmem:[%s1242 + $0x30] sm:$0xf]
      %v1256 = vld [vmem:[%s1242 + $0x34] sm:$0xf]
      %v1257 = vld [vmem:[%s1242 + $0x38] sm:$0xf]
      %v1258 = vld [vmem:[%s1242 + $0x3c] sm:$0xf]
      %v1275 = vunpack.c.l.b16 %v1243
      %v1276 = vunpack.c.l.b16 %v1244
      %v1277 = vunpack.c.l.b16 %v1245
      %v1278 = vunpack.c.l.b16 %v1246
      %v1279 = vunpack.c.l.b16 %v1247
      %v1280 = vunpack.c.l.b16 %v1248
      %v1281 = vunpack.c.l.b16 %v1249
      %v1282 = vunpack.c.l.b16 %v1250
      %v1283 = vunpack.c.l.b16 %v1251
      %v1284 = vunpack.c.l.b16 %v1252
      %v1285 = vunpack.c.l.b16 %v1253
      %v1286 = vunpack.c.l.b16 %v1254
      %v1287 = vunpack.c.l.b16 %v1255
      %v1288 = vunpack.c.l.b16 %v1256
      %v1289 = vunpack.c.l.b16 %v1257
      %v1290 = vunpack.c.l.b16 %v1258
      %v1291 = vpack.c.b16 %v1276, %v1275
      %v1292 = vpack.c.b16 %v1278, %v1277
      %v1293 = vpack.c.b16 %v1280, %v1279
      %v1294 = vpack.c.b16 %v1282, %v1281
      %v1295 = vpack.c.b16 %v1284, %v1283
      %v1296 = vpack.c.b16 %v1286, %v1285
      %v1297 = vpack.c.b16 %v1288, %v1287
      %v1298 = vpack.c.b16 %v1290, %v1289
      %1307 = vmatprep.subr.bf16.mxu0 0
      %1308 = vmatpush1.bf16.msra.mxu0 %v1291
      %1309 = vmatprep.subr.bf16.mxu0 0
      %1310 = vmatpush1.bf16.msra.mxu0 %v1292
      %1311 = vmatprep.subr.bf16.mxu0 0
      %1312 = vmatpush1.bf16.msra.mxu0 %v1293
      %1313 = vmatprep.subr.bf16.mxu0 0
      %1314 = vmatpush1.bf16.msra.mxu0 %v1294
      %1315 = vmatprep.subr.bf16.mxu0 0
      %1316 = vmatpush1.bf16.msra.mxu0 %v1295
      %1317 = vmatprep.subr.bf16.mxu0 0
      %1318 = vmatpush1.bf16.msra.mxu0 %v1296
      %1319 = vmatprep.subr.bf16.mxu0 0
      %1320 = vmatpush1.bf16.msra.mxu0 %v1297
      %1321 = vmatprep.subr.bf16.mxu0 0
      %1322 = vmatpush1.bf16.msra.mxu0 %v1298
      %1323 = vmatprep.subr.bf16.mxu0 0
      %1324 = vmatpush1.bf16.msra.mxu0 0
      %1325 = vmatprep.subr.bf16.mxu0 0
      %1326 = vmatpush1.bf16.msra.mxu0 0
      %1327 = vmatprep.subr.bf16.mxu0 0
      %1328 = vmatpush1.bf16.msra.mxu0 0
      %1329 = vmatprep.subr.bf16.mxu0 0
      %1330 = vmatpush1.bf16.msra.mxu0 0
      %1331 = vmatprep.subr.bf16.mxu0 0
      %1332 = vmatpush1.bf16.msra.mxu0 0
      %1333 = vmatprep.subr.bf16.mxu0 0
      %1334 = vmatpush1.bf16.msra.mxu0 0
      %1335 = vmatprep.subr.bf16.mxu0 0
      %1336 = vmatpush1.bf16.msra.mxu0 0
      %1337 = vmatprep.subr.bf16.mxu0 0
      %1338 = vmatpush1.bf16.msra.mxu0 0
      %1339 = vmatprep.mubr.bf16.mxu0 0
      %1340 = vmatmul.mubr.bf16.gmra.mrb[0].mxu0 %v1228
      %v1341 = vpop.f32.mrb[0].mxu0
      %v1342 = vadd.f32 0.0, %v1341
      %v1343 = vpop.f32.mrb[0].mxu0
      %v1344 = vpop.f32.mrb[0].mxu0
      %v1345 = vadd.f32 0.0, %v1344
      %v1346 = vpop.f32.mrb[0].mxu0
      %1347 = vmatprep.mubr.bf16.mxu0 0
      %1348 = vmatmul.mubr.bf16.gmra.mrb[0].mxu0 %v1229
      %v1349 = vpop.f32.mrb[0].mxu0
      %v1350 = vadd.f32 0.0, %v1349
      %v1351 = vpop.f32.mrb[0].mxu0
      %v1352 = vpop.f32.mrb[0].mxu0
      %v1353 = vadd.f32 0.0, %v1352
      %v1354 = vpop.f32.mrb[0].mxu0
      %1355 = vmatprep.mubr.bf16.mxu0 0
      %1356 = vmatmul.mubr.bf16.gmra.mrb[0].mxu0 %v1230
      %v1357 = vpop.f32.mrb[0].mxu0
      %v1358 = vadd.f32 0.0, %v1357
      %v1359 = vpop.f32.mrb[0].mxu0
      %v1360 = vpop.f32.mrb[0].mxu0
      %v1361 = vadd.f32 0.0, %v1360
      %v1362 = vpop.f32.mrb[0].mxu0
      %1363 = vmatprep.mubr.bf16.mxu0 0
      %1364 = vmatmul.mubr.bf16.gmra.mrb[0].mxu0 %v1231
      %v1365 = vpop.f32.mrb[0].mxu0
      %v1366 = vadd.f32 0.0, %v1365
      %v1367 = vpop.f32.mrb[0].mxu0
      %v1368 = vpop.f32.mrb[0].mxu0
      %v1369 = vadd.f32 0.0, %v1368
      %v1370 = vpop.f32.mrb[0].mxu0
      %1371 = vmatprep.mubr.bf16.mxu0 0
      %1372 = vmatmul.mubr.bf16.gmra.mrb[0].mxu0 %v1232
      %v1373 = vpop.f32.mrb[0].mxu0
      %v1374 = vadd.f32 0.0, %v1373
      %v1375 = vpop.f32.mrb[0].mxu0
      %v1376 = vpop.f32.mrb[0].mxu0
      %v1377 = vadd.f32 0.0, %v1376
      %v1378 = vpop.f32.mrb[0].mxu0
      %1379 = vmatprep.mubr.bf16.mxu0 0
      %1380 = vmatmul.mubr.bf16.gmra.mrb[0].mxu0 %v1233
      %v1381 = vpop.f32.mrb[0].mxu0
      %v1382 = vadd.f32 0.0, %v1381
      %v1383 = vpop.f32.mrb[0].mxu0
      %v1384 = vpop.f32.mrb[0].mxu0
      %v1385 = vadd.f32 0.0, %v1384
      %v1386 = vpop.f32.mrb[0].mxu0
      %1387 = vmatprep.mubr.bf16.mxu0 0
      %1388 = vmatmul.mubr.bf16.gmra.mrb[0].mxu0 %v1234
      %v1389 = vpop.f32.mrb[0].mxu0
      %v1390 = vadd.f32 0.0, %v1389
      %v1391 = vpop.f32.mrb[0].mxu0
      %v1392 = vpop.f32.mrb[0].mxu0
      %v1393 = vadd.f32 0.0, %v1392
      %v1394 = vpop.f32.mrb[0].mxu0
      %1395 = vmatprep.mubr.bf16.mxu0 0
      %1396 = vmatmul.mubr.bf16.gmra.mrb[0].mxu0 %v1235
      %v1397 = vpop.f32.mrb[0].mxu0
      %v1398 = vadd.f32 0.0, %v1397
      %v1399 = vpop.f32.mrb[0].mxu0
      %v1400 = vpop.f32.mrb[0].mxu0
      %v1401 = vadd.f32 0.0, %v1400
      %v1402 = vpop.f32.mrb[0].mxu0
      %1403 = vmatprep.mubr.bf16.mxu0 0
      %1404 = vmatmul.mubr.bf16.gmra.mrb[0].mxu0 %v1236
      %v1405 = vpop.f32.mrb[0].mxu0
      %v1406 = vadd.f32 0.0, %v1405
      %v1407 = vpop.f32.mrb[0].mxu0
      %v1408 = vpop.f32.mrb[0].mxu0
      %v1409 = vadd.f32 0.0, %v1408
      %v1410 = vpop.f32.mrb[0].mxu0
      %1411 = vmatprep.mubr.bf16.mxu0 0
      %1412 = vmatmul.mubr.bf16.gmra.mrb[0].mxu0 %v1237
      %v1413 = vpop.f32.mrb[0].mxu0
      %v1414 = vadd.f32 0.0, %v1413
      %v1415 = vpop.f32.mrb[0].mxu0
      %v1416 = vpop.f32.mrb[0].mxu0
      %v1417 = vadd.f32 0.0, %v1416
      %v1418 = vpop.f32.mrb[0].mxu0
      %1419 = vmatprep.mubr.bf16.mxu0 0
      %1420 = vmatmul.mubr.bf16.gmra.mrb[0].mxu0 %v1238
      %v1421 = vpop.f32.mrb[0].mxu0
      %v1422 = vadd.f32 0.0, %v1421
      %v1423 = vpop.f32.mrb[0].mxu0
      %v1424 = vpop.f32.mrb[0].mxu0
      %v1425 = vadd.f32 0.0, %v1424
      %v1426 = vpop.f32.mrb[0].mxu0
      %1427 = vmatprep.mubr.bf16.mxu0 0
      %1428 = vmatmul.mubr.bf16.gmra.mrb[0].mxu0 %v1239
      %v1429 = vpop.f32.mrb[0].mxu0
      %v1430 = vadd.f32 0.0, %v1429
      %v1431 = vpop.f32.mrb[0].mxu0
      %v1432 = vpop.f32.mrb[0].mxu0
      %v1433 = vadd.f32 0.0, %v1432
      %v1434 = vpop.f32.mrb[0].mxu0
      %1435 = vmatprep.mubr.bf16.mxu0 0
      %1436 = vmatmul.mubr.bf16.gmra.mrb[0].mxu0 %v1240
      %v1437 = vpop.f32.mrb[0].mxu0
      %v1438 = vadd.f32 0.0, %v1437
      %v1439 = vpop.f32.mrb[0].mxu0
      %v1440 = vpop.f32.mrb[0].mxu0
      %v1441 = vadd.f32 0.0, %v1440
      %v1442 = vpop.f32.mrb[0].mxu0
      %1443 = vmatprep.mubr.bf16.mxu0 0
      %1444 = vmatmul.mubr.bf16.gmra.mrb[0].mxu0 %v1241
      %v1445 = vpop.f32.mrb[0].mxu0
      %v1446 = vadd.f32 0.0, %v1445
      %v1447 = vpop.f32.mrb[0].mxu0
      %v1448 = vpop.f32.mrb[0].mxu0
      %v1449 = vadd.f32 0.0, %v1448
      %v1450 = vpop.f32.mrb[0].mxu0
      %1451 = vdwg.mxu0
      %v1452 = vadd.f32 %v1090, %v1342
      %v1453 = vadd.f32 %v1093, %v1345
      %v1454 = vadd.f32 %v1098, %v1350
      %v1455 = vadd.f32 %v1101, %v1353
      %v1456 = vadd.f32 %v1106, %v1358
      %v1457 = vadd.f32 %v1109, %v1361
      %v1458 = vadd.f32 %v1114, %v1366
      %v1459 = vadd.f32 %v1117, %v1369
      %v1460 = vadd.f32 %v1122, %v1374
      %v1461 = vadd.f32 %v1125, %v1377
      %v1462 = vadd.f32 %v1130, %v1382
      %v1463 = vadd.f32 %v1133, %v1385
      %v1464 = vadd.f32 %v1138, %v1390
      %v1465 = vadd.f32 %v1141, %v1393
      %v1466 = vadd.f32 %v1146, %v1398
      %v1467 = vadd.f32 %v1149, %v1401
      %v1468 = vadd.f32 %v1154, %v1406
      %v1469 = vadd.f32 %v1157, %v1409
      %v1470 = vadd.f32 %v1162, %v1414
      %v1471 = vadd.f32 %v1165, %v1417
      %v1472 = vadd.f32 %v1170, %v1422
      %v1473 = vadd.f32 %v1173, %v1425
      %v1474 = vadd.f32 %v1178, %v1430
      %v1475 = vadd.f32 %v1181, %v1433
      %v1476 = vadd.f32 %v1186, %v1438
      %v1477 = vadd.f32 %v1189, %v1441
      %v1478 = vadd.f32 %v1194, %v1446
      %v1479 = vadd.f32 %v1197, %v1449
      %v1480 = vld [vmem:[#allocation2 + $0x17] sm:$0xff]
      %v1481 = vld [vmem:[#allocation2 + $0x1f] sm:$0xff]
      %v1482 = vld [vmem:[#allocation2 + $0x27] sm:$0xff]
      %v1483 = vld [vmem:[#allocation2 + $0x2f] sm:$0xff]
      %v1484 = vld [vmem:[#allocation2 + $0x37] sm:$0xff]
      %v1485 = vld [vmem:[#allocation2 + $0x3f] sm:$0xff]
      %v1486 = vld [vmem:[#allocation2 + $0x47] sm:$0xff]
      %v1487 = vld [vmem:[#allocation2 + $0x4f] sm:$0xff]
      %v1488 = vld [vmem:[#allocation2 + $0x57] sm:$0xff]
      %v1489 = vld [vmem:[#allocation2 + $0x5f] sm:$0xff]
      %v1490 = vld [vmem:[#allocation2 + $0x67] sm:$0xff]
      %v1491 = vld [vmem:[#allocation2 + $0x6f] sm:$0xff]
      %v1492 = vld [vmem:[#allocation2 + $0x77] sm:$0xff]
      %v1493 = vld [vmem:[#allocation2 + $0x7f] sm:$0xff]
      %v1494 = vld [vmem:[#allocation2 + $0x87] sm:$0xff]
      %v1495 = vld [vmem:[#allocation2 + $0x8f] sm:$0xff]
      %v1496 = vld [vmem:[#allocation2 + $0x97] sm:$0xff]
      %v1497 = vld [vmem:[#allocation2 + $0x9f] sm:$0xff]
      %v1498 = vld [vmem:[#allocation2 + $0xa7] sm:$0xff]
      %v1499 = vld [vmem:[#allocation2 + $0xaf] sm:$0xff]
      %v1500 = vld [vmem:[#allocation2 + $0xb7] sm:$0xff]
      %v1501 = vld [vmem:[#allocation2 + $0xbf] sm:$0xff]
      %v1502 = vld [vmem:[#allocation2 + $0xc7] sm:$0xff]
      %v1503 = vld [vmem:[#allocation2 + $0xcf] sm:$0xff]
      %v1504 = vld [vmem:[#allocation2 + $0xd7] sm:$0xff]
      %v1505 = vld [vmem:[#allocation2 + $0xdf] sm:$0xff]
      %v1506 = vld [vmem:[#allocation2 + $0xe7] sm:$0xff]
      %v1507 = vld [vmem:[#allocation2 + $0xef] sm:$0xff]
      %v1508 = vpack.c.bf16 %v1481, %v1480
      %v1509 = vpack.c.bf16 %v1483, %v1482
      %v1510 = vpack.c.bf16 %v1485, %v1484
      %v1511 = vpack.c.bf16 %v1487, %v1486
      %v1512 = vpack.c.bf16 %v1489, %v1488
      %v1513 = vpack.c.bf16 %v1491, %v1490
      %v1514 = vpack.c.bf16 %v1493, %v1492
      %v1515 = vpack.c.bf16 %v1495, %v1494
      %v1516 = vpack.c.bf16 %v1497, %v1496
      %v1517 = vpack.c.bf16 %v1499, %v1498
      %v1518 = vpack.c.bf16 %v1501, %v1500
      %v1519 = vpack.c.bf16 %v1503, %v1502
      %v1520 = vpack.c.bf16 %v1505, %v1504
      %v1521 = vpack.c.bf16 %v1507, %v1506
      %s1522 = scalar_lea.vmem %s2, 192
      %v1523 = vld [vmem:[%s1522] sm:$0xf]
      %v1524 = vld [vmem:[%s1522 + $0x4] sm:$0xf]
      %v1525 = vld [vmem:[%s1522 + $0x8] sm:$0xf]
      %v1526 = vld [vmem:[%s1522 + $0xc] sm:$0xf]
      %v1527 = vld [vmem:[%s1522 + $0x10] sm:$0xf]
      %v1528 = vld [vmem:[%s1522 + $0x14] sm:$0xf]
      %v1529 = vld [vmem:[%s1522 + $0x18] sm:$0xf]
      %v1530 = vld [vmem:[%s1522 + $0x1c] sm:$0xf]
      %v1531 = vld [vmem:[%s1522 + $0x20] sm:$0xf]
      %v1532 = vld [vmem:[%s1522 + $0x24] sm:$0xf]
      %v1533 = vld [vmem:[%s1522 + $0x28] sm:$0xf]
      %v1534 = vld [vmem:[%s1522 + $0x2c] sm:$0xf]
      %v1535 = vld [vmem:[%s1522 + $0x30] sm:$0xf]
      %v1536 = vld [vmem:[%s1522 + $0x34] sm:$0xf]
      %v1537 = vld [vmem:[%s1522 + $0x38] sm:$0xf]
      %v1538 = vld [vmem:[%s1522 + $0x3c] sm:$0xf]
      %v1555 = vunpack.c.l.b16 %v1523
      %v1556 = vunpack.c.l.b16 %v1524
      %v1557 = vunpack.c.l.b16 %v1525
      %v1558 = vunpack.c.l.b16 %v1526
      %v1559 = vunpack.c.l.b16 %v1527
      %v1560 = vunpack.c.l.b16 %v1528
      %v1561 = vunpack.c.l.b16 %v1529
      %v1562 = vunpack.c.l.b16 %v1530
      %v1563 = vunpack.c.l.b16 %v1531
      %v1564 = vunpack.c.l.b16 %v1532
      %v1565 = vunpack.c.l.b16 %v1533
      %v1566 = vunpack.c.l.b16 %v1534
      %v1567 = vunpack.c.l.b16 %v1535
      %v1568 = vunpack.c.l.b16 %v1536
      %v1569 = vunpack.c.l.b16 %v1537
      %v1570 = vunpack.c.l.b16 %v1538
      %v1571 = vpack.c.b16 %v1556, %v1555
      %v1572 = vpack.c.b16 %v1558, %v1557
      %v1573 = vpack.c.b16 %v1560, %v1559
      %v1574 = vpack.c.b16 %v1562, %v1561
      %v1575 = vpack.c.b16 %v1564, %v1563
      %v1576 = vpack.c.b16 %v1566, %v1565
      %v1577 = vpack.c.b16 %v1568, %v1567
      %v1578 = vpack.c.b16 %v1570, %v1569
      %1587 = vmatprep.subr.bf16.mxu0 0
      %1588 = vmatpush1.bf16.msra.mxu0 %v1571
      %1589 = vmatprep.subr.bf16.mxu0 0
      %1590 = vmatpush1.bf16.msra.mxu0 %v1572
      %1591 = vmatprep.subr.bf16.mxu0 0
      %1592 = vmatpush1.bf16.msra.mxu0 %v1573
      %1593 = vmatprep.subr.bf16.mxu0 0
      %1594 = vmatpush1.bf16.msra.mxu0 %v1574
      %1595 = vmatprep.subr.bf16.mxu0 0
      %1596 = vmatpush1.bf16.msra.mxu0 %v1575
      %1597 = vmatprep.subr.bf16.mxu0 0
      %1598 = vmatpush1.bf16.msra.mxu0 %v1576
      %1599 = vmatprep.subr.bf16.mxu0 0
      %1600 = vmatpush1.bf16.msra.mxu0 %v1577
      %1601 = vmatprep.subr.bf16.mxu0 0
      %1602 = vmatpush1.bf16.msra.mxu0 %v1578
      %1603 = vmatprep.subr.bf16.mxu0 0
      %1604 = vmatpush1.bf16.msra.mxu0 0
      %1605 = vmatprep.subr.bf16.mxu0 0
      %1606 = vmatpush1.bf16.msra.mxu0 0
      %1607 = vmatprep.subr.bf16.mxu0 0
      %1608 = vmatpush1.bf16.msra.mxu0 0
      %1609 = vmatprep.subr.bf16.mxu0 0
      %1610 = vmatpush1.bf16.msra.mxu0 0
      %1611 = vmatprep.subr.bf16.mxu0 0
      %1612 = vmatpush1.bf16.msra.mxu0 0
      %1613 = vmatprep.subr.bf16.mxu0 0
      %1614 = vmatpush1.bf16.msra.mxu0 0
      %1615 = vmatprep.subr.bf16.mxu0 0
      %1616 = vmatpush1.bf16.msra.mxu0 0
      %1617 = vmatprep.subr.bf16.mxu0 0
      %1618 = vmatpush1.bf16.msra.mxu0 0
      %1619 = vmatprep.mubr.bf16.mxu0 0
      %1620 = vmatmul.mubr.bf16.gmra.mrb[0].mxu0 %v1508
      %v1621 = vpop.f32.mrb[0].mxu0
      %v1622 = vadd.f32 0.0, %v1621
      %v1623 = vpop.f32.mrb[0].mxu0
      %v1624 = vpop.f32.mrb[0].mxu0
      %v1625 = vadd.f32 0.0, %v1624
      %v1626 = vpop.f32.mrb[0].mxu0
      %1627 = vmatprep.mubr.bf16.mxu0 0
      %1628 = vmatmul.mubr.bf16.gmra.mrb[0].mxu0 %v1509
      %v1629 = vpop.f32.mrb[0].mxu0
      %v1630 = vadd.f32 0.0, %v1629
      %v1631 = vpop.f32.mrb[0].mxu0
      %v1632 = vpop.f32.mrb[0].mxu0
      %v1633 = vadd.f32 0.0, %v1632
      %v1634 = vpop.f32.mrb[0].mxu0
      %1635 = vmatprep.mubr.bf16.mxu0 0
      %1636 = vmatmul.mubr.bf16.gmra.mrb[0].mxu0 %v1510
      %v1637 = vpop.f32.mrb[0].mxu0
      %v1638 = vadd.f32 0.0, %v1637
      %v1639 = vpop.f32.mrb[0].mxu0
      %v1640 = vpop.f32.mrb[0].mxu0
      %v1641 = vadd.f32 0.0, %v1640
      %v1642 = vpop.f32.mrb[0].mxu0
      %1643 = vmatprep.mubr.bf16.mxu0 0
      %1644 = vmatmul.mubr.bf16.gmra.mrb[0].mxu0 %v1511
      %v1645 = vpop.f32.mrb[0].mxu0
      %v1646 = vadd.f32 0.0, %v1645
      %v1647 = vpop.f32.mrb[0].mxu0
      %v1648 = vpop.f32.mrb[0].mxu0
      %v1649 = vadd.f32 0.0, %v1648
      %v1650 = vpop.f32.mrb[0].mxu0
      %1651 = vmatprep.mubr.bf16.mxu0 0
      %1652 = vmatmul.mubr.bf16.gmra.mrb[0].mxu0 %v1512
      %v1653 = vpop.f32.mrb[0].mxu0
      %v1654 = vadd.f32 0.0, %v1653
      %v1655 = vpop.f32.mrb[0].mxu0
      %v1656 = vpop.f32.mrb[0].mxu0
      %v1657 = vadd.f32 0.0, %v1656
      %v1658 = vpop.f32.mrb[0].mxu0
      %1659 = vmatprep.mubr.bf16.mxu0 0
      %1660 = vmatmul.mubr.bf16.gmra.mrb[0].mxu0 %v1513
      %v1661 = vpop.f32.mrb[0].mxu0
      %v1662 = vadd.f32 0.0, %v1661
      %v1663 = vpop.f32.mrb[0].mxu0
      %v1664 = vpop.f32.mrb[0].mxu0
      %v1665 = vadd.f32 0.0, %v1664
      %v1666 = vpop.f32.mrb[0].mxu0
      %1667 = vmatprep.mubr.bf16.mxu0 0
      %1668 = vmatmul.mubr.bf16.gmra.mrb[0].mxu0 %v1514
      %v1669 = vpop.f32.mrb[0].mxu0
      %v1670 = vadd.f32 0.0, %v1669
      %v1671 = vpop.f32.mrb[0].mxu0
      %v1672 = vpop.f32.mrb[0].mxu0
      %v1673 = vadd.f32 0.0, %v1672
      %v1674 = vpop.f32.mrb[0].mxu0
      %1675 = vmatprep.mubr.bf16.mxu0 0
      %1676 = vmatmul.mubr.bf16.gmra.mrb[0].mxu0 %v1515
      %v1677 = vpop.f32.mrb[0].mxu0
      %v1678 = vadd.f32 0.0, %v1677
      %v1679 = vpop.f32.mrb[0].mxu0
      %v1680 = vpop.f32.mrb[0].mxu0
      %v1681 = vadd.f32 0.0, %v1680
      %v1682 = vpop.f32.mrb[0].mxu0
      %1683 = vmatprep.mubr.bf16.mxu0 0
      %1684 = vmatmul.mubr.bf16.gmra.mrb[0].mxu0 %v1516
      %v1685 = vpop.f32.mrb[0].mxu0
      %v1686 = vadd.f32 0.0, %v1685
      %v1687 = vpop.f32.mrb[0].mxu0
      %v1688 = vpop.f32.mrb[0].mxu0
      %v1689 = vadd.f32 0.0, %v1688
      %v1690 = vpop.f32.mrb[0].mxu0
      %1691 = vmatprep.mubr.bf16.mxu0 0
      %1692 = vmatmul.mubr.bf16.gmra.mrb[0].mxu0 %v1517
      %v1693 = vpop.f32.mrb[0].mxu0
      %v1694 = vadd.f32 0.0, %v1693
      %v1695 = vpop.f32.mrb[0].mxu0
      %v1696 = vpop.f32.mrb[0].mxu0
      %v1697 = vadd.f32 0.0, %v1696
      %v1698 = vpop.f32.mrb[0].mxu0
      %1699 = vmatprep.mubr.bf16.mxu0 0
      %1700 = vmatmul.mubr.bf16.gmra.mrb[0].mxu0 %v1518
      %v1701 = vpop.f32.mrb[0].mxu0
      %v1702 = vadd.f32 0.0, %v1701
      %v1703 = vpop.f32.mrb[0].mxu0
      %v1704 = vpop.f32.mrb[0].mxu0
      %v1705 = vadd.f32 0.0, %v1704
      %v1706 = vpop.f32.mrb[0].mxu0
      %1707 = vmatprep.mubr.bf16.mxu0 0
      %1708 = vmatmul.mubr.bf16.gmra.mrb[0].mxu0 %v1519
      %v1709 = vpop.f32.mrb[0].mxu0
      %v1710 = vadd.f32 0.0, %v1709
      %v1711 = vpop.f32.mrb[0].mxu0
      %v1712 = vpop.f32.mrb[0].mxu0
      %v1713 = vadd.f32 0.0, %v1712
      %v1714 = vpop.f32.mrb[0].mxu0
      %1715 = vmatprep.mubr.bf16.mxu0 0
      %1716 = vmatmul.mubr.bf16.gmra.mrb[0].mxu0 %v1520
      %v1717 = vpop.f32.mrb[0].mxu0
      %v1718 = vadd.f32 0.0, %v1717
      %v1719 = vpop.f32.mrb[0].mxu0
      %v1720 = vpop.f32.mrb[0].mxu0
      %v1721 = vadd.f32 0.0, %v1720
      %v1722 = vpop.f32.mrb[0].mxu0
      %1723 = vmatprep.mubr.bf16.mxu0 0
      %1724 = vmatmul.mubr.bf16.gmra.mrb[0].mxu0 %v1521
      %v1725 = vpop.f32.mrb[0].mxu0
      %v1726 = vadd.f32 0.0, %v1725
      %v1727 = vpop.f32.mrb[0].mxu0
      %v1728 = vpop.f32.mrb[0].mxu0
      %v1729 = vadd.f32 0.0, %v1728
      %v1730 = vpop.f32.mrb[0].mxu0
      %1731 = vdwg.mxu0
      %v1732 = vadd.f32 %v1452, %v1622
      %v1733 = vadd.f32 %v1453, %v1625
      %v1734 = vadd.f32 %v1454, %v1630
      %v1735 = vadd.f32 %v1455, %v1633
      %v1736 = vadd.f32 %v1456, %v1638
      %v1737 = vadd.f32 %v1457, %v1641
      %v1738 = vadd.f32 %v1458, %v1646
      %v1739 = vadd.f32 %v1459, %v1649
      %v1740 = vadd.f32 %v1460, %v1654
      %v1741 = vadd.f32 %v1461, %v1657
      %v1742 = vadd.f32 %v1462, %v1662
      %v1743 = vadd.f32 %v1463, %v1665
      %v1744 = vadd.f32 %v1464, %v1670
      %v1745 = vadd.f32 %v1465, %v1673
      %v1746 = vadd.f32 %v1466, %v1678
      %v1747 = vadd.f32 %v1467, %v1681
      %v1748 = vadd.f32 %v1468, %v1686
      %v1749 = vadd.f32 %v1469, %v1689
      %v1750 = vadd.f32 %v1470, %v1694
      %v1751 = vadd.f32 %v1471, %v1697
      %v1752 = vadd.f32 %v1472, %v1702
      %v1753 = vadd.f32 %v1473, %v1705
      %v1754 = vadd.f32 %v1474, %v1710
      %v1755 = vadd.f32 %v1475, %v1713
      %v1756 = vadd.f32 %v1476, %v1718
      %v1757 = vadd.f32 %v1477, %v1721
      %v1758 = vadd.f32 %v1478, %v1726
      %v1759 = vadd.f32 %v1479, %v1729
      %v1760 = vld [vmem:[#allocation2 + $0x18] sm:$0xff]
      %v1761 = vld [vmem:[#allocation2 + $0x20] sm:$0xff]
      %v1762 = vld [vmem:[#allocation2 + $0x28] sm:$0xff]
      %v1763 = vld [vmem:[#allocation2 + $0x30] sm:$0xff]
      %v1764 = vld [vmem:[#allocation2 + $0x38] sm:$0xff]
      %v1765 = vld [vmem:[#allocation2 + $0x40] sm:$0xff]
      %v1766 = vld [vmem:[#allocation2 + $0x48] sm:$0xff]
      %v1767 = vld [vmem:[#allocation2 + $0x50] sm:$0xff]
      %v1768 = vld [vmem:[#allocation2 + $0x58] sm:$0xff]
      %v1769 = vld [vmem:[#allocation2 + $0x60] sm:$0xff]
      %v1770 = vld [vmem:[#allocation2 + $0x68] sm:$0xff]
      %v1771 = vld [vmem:[#allocation2 + $0x70] sm:$0xff]
      %v1772 = vld [vmem:[#allocation2 + $0x78] sm:$0xff]
      %v1773 = vld [vmem:[#allocation2 + $0x80] sm:$0xff]
      %v1774 = vld [vmem:[#allocation2 + $0x88] sm:$0xff]
      %v1775 = vld [vmem:[#allocation2 + $0x90] sm:$0xff]
      %v1776 = vld [vmem:[#allocation2 + $0x98] sm:$0xff]
      %v1777 = vld [vmem:[#allocation2 + $0xa0] sm:$0xff]
      %v1778 = vld [vmem:[#allocation2 + $0xa8] sm:$0xff]
      %v1779 = vld [vmem:[#allocation2 + $0xb0] sm:$0xff]
      %v1780 = vld [vmem:[#allocation2 + $0xb8] sm:$0xff]
      %v1781 = vld [vmem:[#allocation2 + $0xc0] sm:$0xff]
      %v1782 = vld [vmem:[#allocation2 + $0xc8] sm:$0xff]
      %v1783 = vld [vmem:[#allocation2 + $0xd0] sm:$0xff]
      %v1784 = vld [vmem:[#allocation2 + $0xd8] sm:$0xff]
      %v1785 = vld [vmem:[#allocation2 + $0xe0] sm:$0xff]
      %v1786 = vld [vmem:[#allocation2 + $0xe8] sm:$0xff]
      %v1787 = vld [vmem:[#allocation2 + $0xf0] sm:$0xff]
      %v1788 = vpack.c.bf16 %v1761, %v1760
      %v1789 = vpack.c.bf16 %v1763, %v1762
      %v1790 = vpack.c.bf16 %v1765, %v1764
      %v1791 = vpack.c.bf16 %v1767, %v1766
      %v1792 = vpack.c.bf16 %v1769, %v1768
      %v1793 = vpack.c.bf16 %v1771, %v1770
      %v1794 = vpack.c.bf16 %v1773, %v1772
      %v1795 = vpack.c.bf16 %v1775, %v1774
      %v1796 = vpack.c.bf16 %v1777, %v1776
      %v1797 = vpack.c.bf16 %v1779, %v1778
      %v1798 = vpack.c.bf16 %v1781, %v1780
      %v1799 = vpack.c.bf16 %v1783, %v1782
      %v1800 = vpack.c.bf16 %v1785, %v1784
      %v1801 = vpack.c.bf16 %v1787, %v1786
      %s1802 = scalar_lea.vmem %s2, 256
      %v1803 = vld [vmem:[%s1802] sm:$0xf]
      %v1804 = vld [vmem:[%s1802 + $0x4] sm:$0xf]
      %v1805 = vld [vmem:[%s1802 + $0x8] sm:$0xf]
      %v1806 = vld [vmem:[%s1802 + $0xc] sm:$0xf]
      %v1807 = vld [vmem:[%s1802 + $0x10] sm:$0xf]
      %v1808 = vld [vmem:[%s1802 + $0x14] sm:$0xf]
      %v1809 = vld [vmem:[%s1802 + $0x18] sm:$0xf]
      %v1810 = vld [vmem:[%s1802 + $0x1c] sm:$0xf]
      %v1811 = vld [vmem:[%s1802 + $0x20] sm:$0xf]
      %v1812 = vld [vmem:[%s1802 + $0x24] sm:$0xf]
      %v1813 = vld [vmem:[%s1802 + $0x28] sm:$0xf]
      %v1814 = vld [vmem:[%s1802 + $0x2c] sm:$0xf]
      %v1815 = vld [vmem:[%s1802 + $0x30] sm:$0xf]
      %v1816 = vld [vmem:[%s1802 + $0x34] sm:$0xf]
      %v1817 = vld [vmem:[%s1802 + $0x38] sm:$0xf]
      %v1818 = vld [vmem:[%s1802 + $0x3c] sm:$0xf]
      %v1835 = vunpack.c.l.b16 %v1803
      %v1836 = vunpack.c.l.b16 %v1804
      %v1837 = vunpack.c.l.b16 %v1805
      %v1838 = vunpack.c.l.b16 %v1806
      %v1839 = vunpack.c.l.b16 %v1807
      %v1840 = vunpack.c.l.b16 %v1808
      %v1841 = vunpack.c.l.b16 %v1809
      %v1842 = vunpack.c.l.b16 %v1810
      %v1843 = vunpack.c.l.b16 %v1811
      %v1844 = vunpack.c.l.b16 %v1812
      %v1845 = vunpack.c.l.b16 %v1813
      %v1846 = vunpack.c.l.b16 %v1814
      %v1847 = vunpack.c.l.b16 %v1815
      %v1848 = vunpack.c.l.b16 %v1816
      %v1849 = vunpack.c.l.b16 %v1817
      %v1850 = vunpack.c.l.b16 %v1818
      %v1851 = vpack.c.b16 %v1836, %v1835
      %v1852 = vpack.c.b16 %v1838, %v1837
      %v1853 = vpack.c.b16 %v1840, %v1839
      %v1854 = vpack.c.b16 %v1842, %v1841
      %v1855 = vpack.c.b16 %v1844, %v1843
      %v1856 = vpack.c.b16 %v1846, %v1845
      %v1857 = vpack.c.b16 %v1848, %v1847
      %v1858 = vpack.c.b16 %v1850, %v1849
      %1867 = vmatprep.subr.bf16.mxu0 0
      %1868 = vmatpush1.bf16.msra.mxu0 %v1851
      %1869 = vmatprep.subr.bf16.mxu0 0
      %1870 = vmatpush1.bf16.msra.mxu0 %v1852
      %1871 = vmatprep.subr.bf16.mxu0 0
      %1872 = vmatpush1.bf16.msra.mxu0 %v1853
      %1873 = vmatprep.subr.bf16.mxu0 0
      %1874 = vmatpush1.bf16.msra.mxu0 %v1854
      %1875 = vmatprep.subr.bf16.mxu0 0
      %1876 = vmatpush1.bf16.msra.mxu0 %v1855
      %1877 = vmatprep.subr.bf16.mxu0 0
      %1878 = vmatpush1.bf16.msra.mxu0 %v1856
      %1879 = vmatprep.subr.bf16.mxu0 0
      %1880 = vmatpush1.bf16.msra.mxu0 %v1857
      %1881 = vmatprep.subr.bf16.mxu0 0
      %1882 = vmatpush1.bf16.msra.mxu0 %v1858
      %1883 = vmatprep.subr.bf16.mxu0 0
      %1884 = vmatpush1.bf16.msra.mxu0 0
      %1885 = vmatprep.subr.bf16.mxu0 0
      %1886 = vmatpush1.bf16.msra.mxu0 0
      %1887 = vmatprep.subr.bf16.mxu0 0
      %1888 = vmatpush1.bf16.msra.mxu0 0
      %1889 = vmatprep.subr.bf16.mxu0 0
      %1890 = vmatpush1.bf16.msra.mxu0 0
      %1891 = vmatprep.subr.bf16.mxu0 0
      %1892 = vmatpush1.bf16.msra.mxu0 0
      %1893 = vmatprep.subr.bf16.mxu0 0
      %1894 = vmatpush1.bf16.msra.mxu0 0
      %1895 = vmatprep.subr.bf16.mxu0 0
      %1896 = vmatpush1.bf16.msra.mxu0 0
      %1897 = vmatprep.subr.bf16.mxu0 0
      %1898 = vmatpush1.bf16.msra.mxu0 0
      %1899 = vmatprep.mubr.bf16.mxu0 0
      %1900 = vmatmul.mubr.bf16.gmra.mrb[0].mxu0 %v1788
      %v1901 = vpop.f32.mrb[0].mxu0
      %v1902 = vadd.f32 0.0, %v1901
      %v1903 = vpop.f32.mrb[0].mxu0
      %v1904 = vpop.f32.mrb[0].mxu0
      %v1905 = vadd.f32 0.0, %v1904
      %v1906 = vpop.f32.mrb[0].mxu0
      %1907 = vmatprep.mubr.bf16.mxu0 0
      %1908 = vmatmul.mubr.bf16.gmra.mrb[0].mxu0 %v1789
      %v1909 = vpop.f32.mrb[0].mxu0
      %v1910 = vadd.f32 0.0, %v1909
      %v1911 = vpop.f32.mrb[0].mxu0
      %v1912 = vpop.f32.mrb[0].mxu0
      %v1913 = vadd.f32 0.0, %v1912
      %v1914 = vpop.f32.mrb[0].mxu0
      %1915 = vmatprep.mubr.bf16.mxu0 0
      %1916 = vmatmul.mubr.bf16.gmra.mrb[0].mxu0 %v1790
      %v1917 = vpop.f32.mrb[0].mxu0
      %v1918 = vadd.f32 0.0, %v1917
      %v1919 = vpop.f32.mrb[0].mxu0
      %v1920 = vpop.f32.mrb[0].mxu0
      %v1921 = vadd.f32 0.0, %v1920
      %v1922 = vpop.f32.mrb[0].mxu0
      %1923 = vmatprep.mubr.bf16.mxu0 0
      %1924 = vmatmul.mubr.bf16.gmra.mrb[0].mxu0 %v1791
      %v1925 = vpop.f32.mrb[0].mxu0
      %v1926 = vadd.f32 0.0, %v1925
      %v1927 = vpop.f32.mrb[0].mxu0
      %v1928 = vpop.f32.mrb[0].mxu0
      %v1929 = vadd.f32 0.0, %v1928
      %v1930 = vpop.f32.mrb[0].mxu0
      %1931 = vmatprep.mubr.bf16.mxu0 0
      %1932 = vmatmul.mubr.bf16.gmra.mrb[0].mxu0 %v1792
      %v1933 = vpop.f32.mrb[0].mxu0
      %v1934 = vadd.f32 0.0, %v1933
      %v1935 = vpop.f32.mrb[0].mxu0
      %v1936 = vpop.f32.mrb[0].mxu0
      %v1937 = vadd.f32 0.0, %v1936
      %v1938 = vpop.f32.mrb[0].mxu0
      %1939 = vmatprep.mubr.bf16.mxu0 0
      %1940 = vmatmul.mubr.bf16.gmra.mrb[0].mxu0 %v1793
      %v1941 = vpop.f32.mrb[0].mxu0
      %v1942 = vadd.f32 0.0, %v1941
      %v1943 = vpop.f32.mrb[0].mxu0
      %v1944 = vpop.f32.mrb[0].mxu0
      %v1945 = vadd.f32 0.0, %v1944
      %v1946 = vpop.f32.mrb[0].mxu0
      %1947 = vmatprep.mubr.bf16.mxu0 0
      %1948 = vmatmul.mubr.bf16.gmra.mrb[0].mxu0 %v1794
      %v1949 = vpop.f32.mrb[0].mxu0
      %v1950 = vadd.f32 0.0, %v1949
      %v1951 = vpop.f32.mrb[0].mxu0
      %v1952 = vpop.f32.mrb[0].mxu0
      %v1953 = vadd.f32 0.0, %v1952
      %v1954 = vpop.f32.mrb[0].mxu0
      %1955 = vmatprep.mubr.bf16.mxu0 0
      %1956 = vmatmul.mubr.bf16.gmra.mrb[0].mxu0 %v1795
      %v1957 = vpop.f32.mrb[0].mxu0
      %v1958 = vadd.f32 0.0, %v1957
      %v1959 = vpop.f32.mrb[0].mxu0
      %v1960 = vpop.f32.mrb[0].mxu0
      %v1961 = vadd.f32 0.0, %v1960
      %v1962 = vpop.f32.mrb[0].mxu0
      %1963 = vmatprep.mubr.bf16.mxu0 0
      %1964 = vmatmul.mubr.bf16.gmra.mrb[0].mxu0 %v1796
      %v1965 = vpop.f32.mrb[0].mxu0
      %v1966 = vadd.f32 0.0, %v1965
      %v1967 = vpop.f32.mrb[0].mxu0
      %v1968 = vpop.f32.mrb[0].mxu0
      %v1969 = vadd.f32 0.0, %v1968
      %v1970 = vpop.f32.mrb[0].mxu0
      %1971 = vmatprep.mubr.bf16.mxu0 0
      %1972 = vmatmul.mubr.bf16.gmra.mrb[0].mxu0 %v1797
      %v1973 = vpop.f32.mrb[0].mxu0
      %v1974 = vadd.f32 0.0, %v1973
      %v1975 = vpop.f32.mrb[0].mxu0
      %v1976 = vpop.f32.mrb[0].mxu0
      %v1977 = vadd.f32 0.0, %v1976
      %v1978 = vpop.f32.mrb[0].mxu0
      %1979 = vmatprep.mubr.bf16.mxu0 0
      %1980 = vmatmul.mubr.bf16.gmra.mrb[0].mxu0 %v1798
      %v1981 = vpop.f32.mrb[0].mxu0
      %v1982 = vadd.f32 0.0, %v1981
      %v1983 = vpop.f32.mrb[0].mxu0
      %v1984 = vpop.f32.mrb[0].mxu0
      %v1985 = vadd.f32 0.0, %v1984
      %v1986 = vpop.f32.mrb[0].mxu0
      %1987 = vmatprep.mubr.bf16.mxu0 0
      %1988 = vmatmul.mubr.bf16.gmra.mrb[0].mxu0 %v1799
      %v1989 = vpop.f32.mrb[0].mxu0
      %v1990 = vadd.f32 0.0, %v1989
      %v1991 = vpop.f32.mrb[0].mxu0
      %v1992 = vpop.f32.mrb[0].mxu0
      %v1993 = vadd.f32 0.0, %v1992
      %v1994 = vpop.f32.mrb[0].mxu0
      %1995 = vmatprep.mubr.bf16.mxu0 0
      %1996 = vmatmul.mubr.bf16.gmra.mrb[0].mxu0 %v1800
      %v1997 = vpop.f32.mrb[0].mxu0
      %v1998 = vadd.f32 0.0, %v1997
      %v1999 = vpop.f32.mrb[0].mxu0
      %v2000 = vpop.f32.mrb[0].mxu0
      %v2001 = vadd.f32 0.0, %v2000
      %v2002 = vpop.f32.mrb[0].mxu0
      %2003 = vmatprep.mubr.bf16.mxu0 0
      %2004 = vmatmul.mubr.bf16.gmra.mrb[0].mxu0 %v1801
      %v2005 = vpop.f32.mrb[0].mxu0
      %v2006 = vadd.f32 0.0, %v2005
      %v2007 = vpop.f32.mrb[0].mxu0
      %v2008 = vpop.f32.mrb[0].mxu0
      %v2009 = vadd.f32 0.0, %v2008
      %v2010 = vpop.f32.mrb[0].mxu0
      %2011 = vdwg.mxu0
      %v2012 = vadd.f32 %v1732, %v1902
      %v2013 = vadd.f32 %v1733, %v1905
      %v2014 = vadd.f32 %v1734, %v1910
      %v2015 = vadd.f32 %v1735, %v1913
      %v2016 = vadd.f32 %v1736, %v1918
      %v2017 = vadd.f32 %v1737, %v1921
      %v2018 = vadd.f32 %v1738, %v1926
      %v2019 = vadd.f32 %v1739, %v1929
      %v2020 = vadd.f32 %v1740, %v1934
      %v2021 = vadd.f32 %v1741, %v1937
      %v2022 = vadd.f32 %v1742, %v1942
      %v2023 = vadd.f32 %v1743, %v1945
      %v2024 = vadd.f32 %v1744, %v1950
      %v2025 = vadd.f32 %v1745, %v1953
      %v2026 = vadd.f32 %v1746, %v1958
      %v2027 = vadd.f32 %v1747, %v1961
      %v2028 = vadd.f32 %v1748, %v1966
      %v2029 = vadd.f32 %v1749, %v1969
      %v2030 = vadd.f32 %v1750, %v1974
      %v2031 = vadd.f32 %v1751, %v1977
      %v2032 = vadd.f32 %v1752, %v1982
      %v2033 = vadd.f32 %v1753, %v1985
      %v2034 = vadd.f32 %v1754, %v1990
      %v2035 = vadd.f32 %v1755, %v1993
      %v2036 = vadd.f32 %v1756, %v1998
      %v2037 = vadd.f32 %v1757, %v2001
      %v2038 = vadd.f32 %v1758, %v2006
      %v2039 = vadd.f32 %v1759, %v2009
      %v2040 = vld [vmem:[#allocation2 + $0x19] sm:$0xff]
      %v2041 = vld [vmem:[#allocation2 + $0x21] sm:$0xff]
      %v2042 = vld [vmem:[#allocation2 + $0x29] sm:$0xff]
      %v2043 = vld [vmem:[#allocation2 + $0x31] sm:$0xff]
      %v2044 = vld [vmem:[#allocation2 + $0x39] sm:$0xff]
      %v2045 = vld [vmem:[#allocation2 + $0x41] sm:$0xff]
      %v2046 = vld [vmem:[#allocation2 + $0x49] sm:$0xff]
      %v2047 = vld [vmem:[#allocation2 + $0x51] sm:$0xff]
      %v2048 = vld [vmem:[#allocation2 + $0x59] sm:$0xff]
      %v2049 = vld [vmem:[#allocation2 + $0x61] sm:$0xff]
      %v2050 = vld [vmem:[#allocation2 + $0x69] sm:$0xff]
      %v2051 = vld [vmem:[#allocation2 + $0x71] sm:$0xff]
      %v2052 = vld [vmem:[#allocation2 + $0x79] sm:$0xff]
      %v2053 = vld [vmem:[#allocation2 + $0x81] sm:$0xff]
      %v2054 = vld [vmem:[#allocation2 + $0x89] sm:$0xff]
      %v2055 = vld [vmem:[#allocation2 + $0x91] sm:$0xff]
      %v2056 = vld [vmem:[#allocation2 + $0x99] sm:$0xff]
      %v2057 = vld [vmem:[#allocation2 + $0xa1] sm:$0xff]
      %v2058 = vld [vmem:[#allocation2 + $0xa9] sm:$0xff]
      %v2059 = vld [vmem:[#allocation2 + $0xb1] sm:$0xff]
      %v2060 = vld [vmem:[#allocation2 + $0xb9] sm:$0xff]
      %v2061 = vld [vmem:[#allocation2 + $0xc1] sm:$0xff]
      %v2062 = vld [vmem:[#allocation2 + $0xc9] sm:$0xff]
      %v2063 = vld [vmem:[#allocation2 + $0xd1] sm:$0xff]
      %v2064 = vld [vmem:[#allocation2 + $0xd9] sm:$0xff]
      %v2065 = vld [vmem:[#allocation2 + $0xe1] sm:$0xff]
      %v2066 = vld [vmem:[#allocation2 + $0xe9] sm:$0xff]
      %v2067 = vld [vmem:[#allocation2 + $0xf1] sm:$0xff]
      %v2068 = vpack.c.bf16 %v2041, %v2040
      %v2069 = vpack.c.bf16 %v2043, %v2042
      %v2070 = vpack.c.bf16 %v2045, %v2044
      %v2071 = vpack.c.bf16 %v2047, %v2046
      %v2072 = vpack.c.bf16 %v2049, %v2048
      %v2073 = vpack.c.bf16 %v2051, %v2050
      %v2074 = vpack.c.bf16 %v2053, %v2052
      %v2075 = vpack.c.bf16 %v2055, %v2054
      %v2076 = vpack.c.bf16 %v2057, %v2056
      %v2077 = vpack.c.bf16 %v2059, %v2058
      %v2078 = vpack.c.bf16 %v2061, %v2060
      %v2079 = vpack.c.bf16 %v2063, %v2062
      %v2080 = vpack.c.bf16 %v2065, %v2064
      %v2081 = vpack.c.bf16 %v2067, %v2066
      %s2082 = scalar_lea.vmem %s2, 320
      %v2083 = vld [vmem:[%s2082] sm:$0xf]
      %v2084 = vld [vmem:[%s2082 + $0x4] sm:$0xf]
      %v2085 = vld [vmem:[%s2082 + $0x8] sm:$0xf]
      %v2086 = vld [vmem:[%s2082 + $0xc] sm:$0xf]
      %v2087 = vld [vmem:[%s2082 + $0x10] sm:$0xf]
      %v2088 = vld [vmem:[%s2082 + $0x14] sm:$0xf]
      %v2089 = vld [vmem:[%s2082 + $0x18] sm:$0xf]
      %v2090 = vld [vmem:[%s2082 + $0x1c] sm:$0xf]
      %v2091 = vld [vmem:[%s2082 + $0x20] sm:$0xf]
      %v2092 = vld [vmem:[%s2082 + $0x24] sm:$0xf]
      %v2093 = vld [vmem:[%s2082 + $0x28] sm:$0xf]
      %v2094 = vld [vmem:[%s2082 + $0x2c] sm:$0xf]
      %v2095 = vld [vmem:[%s2082 + $0x30] sm:$0xf]
      %v2096 = vld [vmem:[%s2082 + $0x34] sm:$0xf]
      %v2097 = vld [vmem:[%s2082 + $0x38] sm:$0xf]
      %v2098 = vld [vmem:[%s2082 + $0x3c] sm:$0xf]
      %v2115 = vunpack.c.l.b16 %v2083
      %v2116 = vunpack.c.l.b16 %v2084
      %v2117 = vunpack.c.l.b16 %v2085
      %v2118 = vunpack.c.l.b16 %v2086
      %v2119 = vunpack.c.l.b16 %v2087
      %v2120 = vunpack.c.l.b16 %v2088
      %v2121 = vunpack.c.l.b16 %v2089
      %v2122 = vunpack.c.l.b16 %v2090
      %v2123 = vunpack.c.l.b16 %v2091
      %v2124 = vunpack.c.l.b16 %v2092
      %v2125 = vunpack.c.l.b16 %v2093
      %v2126 = vunpack.c.l.b16 %v2094
      %v2127 = vunpack.c.l.b16 %v2095
      %v2128 = vunpack.c.l.b16 %v2096
      %v2129 = vunpack.c.l.b16 %v2097
      %v2130 = vunpack.c.l.b16 %v2098
      %v2131 = vpack.c.b16 %v2116, %v2115
      %v2132 = vpack.c.b16 %v2118, %v2117
      %v2133 = vpack.c.b16 %v2120, %v2119
      %v2134 = vpack.c.b16 %v2122, %v2121
      %v2135 = vpack.c.b16 %v2124, %v2123
      %v2136 = vpack.c.b16 %v2126, %v2125
      %v2137 = vpack.c.b16 %v2128, %v2127
      %v2138 = vpack.c.b16 %v2130, %v2129
      %2147 = vmatprep.subr.bf16.mxu0 0
      %2148 = vmatpush1.bf16.msra.mxu0 %v2131
      %2149 = vmatprep.subr.bf16.mxu0 0
      %2150 = vmatpush1.bf16.msra.mxu0 %v2132
      %2151 = vmatprep.subr.bf16.mxu0 0
      %2152 = vmatpush1.bf16.msra.mxu0 %v2133
      %2153 = vmatprep.subr.bf16.mxu0 0
      %2154 = vmatpush1.bf16.msra.mxu0 %v2134
      %2155 = vmatprep.subr.bf16.mxu0 0
      %2156 = vmatpush1.bf16.msra.mxu0 %v2135
      %2157 = vmatprep.subr.bf16.mxu0 0
      %2158 = vmatpush1.bf16.msra.mxu0 %v2136
      %2159 = vmatprep.subr.bf16.mxu0 0
      %2160 = vmatpush1.bf16.msra.mxu0 %v2137
      %2161 = vmatprep.subr.bf16.mxu0 0
      %2162 = vmatpush1.bf16.msra.mxu0 %v2138
      %2163 = vmatprep.subr.bf16.mxu0 0
      %2164 = vmatpush1.bf16.msra.mxu0 0
      %2165 = vmatprep.subr.bf16.mxu0 0
      %2166 = vmatpush1.bf16.msra.mxu0 0
      %2167 = vmatprep.subr.bf16.mxu0 0
      %2168 = vmatpush1.bf16.msra.mxu0 0
      %2169 = vmatprep.subr.bf16.mxu0 0
      %2170 = vmatpush1.bf16.msra.mxu0 0
      %2171 = vmatprep.subr.bf16.mxu0 0
      %2172 = vmatpush1.bf16.msra.mxu0 0
      %2173 = vmatprep.subr.bf16.mxu0 0
      %2174 = vmatpush1.bf16.msra.mxu0 0
      %2175 = vmatprep.subr.bf16.mxu0 0
      %2176 = vmatpush1.bf16.msra.mxu0 0
      %2177 = vmatprep.subr.bf16.mxu0 0
      %2178 = vmatpush1.bf16.msra.mxu0 0
      %2179 = vmatprep.mubr.bf16.mxu0 0
      %2180 = vmatmul.mubr.bf16.gmra.mrb[0].mxu0 %v2068
      %v2181 = vpop.f32.mrb[0].mxu0
      %v2182 = vadd.f32 0.0, %v2181
      %v2183 = vpop.f32.mrb[0].mxu0
      %v2184 = vpop.f32.mrb[0].mxu0
      %v2185 = vadd.f32 0.0, %v2184
      %v2186 = vpop.f32.mrb[0].mxu0
      %2187 = vmatprep.mubr.bf16.mxu0 0
      %2188 = vmatmul.mubr.bf16.gmra.mrb[0].mxu0 %v2069
      %v2189 = vpop.f32.mrb[0].mxu0
      %v2190 = vadd.f32 0.0, %v2189
      %v2191 = vpop.f32.mrb[0].mxu0
      %v2192 = vpop.f32.mrb[0].mxu0
      %v2193 = vadd.f32 0.0, %v2192
      %v2194 = vpop.f32.mrb[0].mxu0
      %2195 = vmatprep.mubr.bf16.mxu0 0
      %2196 = vmatmul.mubr.bf16.gmra.mrb[0].mxu0 %v2070
      %v2197 = vpop.f32.mrb[0].mxu0
      %v2198 = vadd.f32 0.0, %v2197
      %v2199 = vpop.f32.mrb[0].mxu0
      %v2200 = vpop.f32.mrb[0].mxu0
      %v2201 = vadd.f32 0.0, %v2200
      %v2202 = vpop.f32.mrb[0].mxu0
      %2203 = vmatprep.mubr.bf16.mxu0 0
      %2204 = vmatmul.mubr.bf16.gmra.mrb[0].mxu0 %v2071
      %v2205 = vpop.f32.mrb[0].mxu0
      %v2206 = vadd.f32 0.0, %v2205
      %v2207 = vpop.f32.mrb[0].mxu0
      %v2208 = vpop.f32.mrb[0].mxu0
      %v2209 = vadd.f32 0.0, %v2208
      %v2210 = vpop.f32.mrb[0].mxu0
      %2211 = vmatprep.mubr.bf16.mxu0 0
      %2212 = vmatmul.mubr.bf16.gmra.mrb[0].mxu0 %v2072
      %v2213 = vpop.f32.mrb[0].mxu0
      %v2214 = vadd.f32 0.0, %v2213
      %v2215 = vpop.f32.mrb[0].mxu0
      %v2216 = vpop.f32.mrb[0].mxu0
      %v2217 = vadd.f32 0.0, %v2216
      %v2218 = vpop.f32.mrb[0].mxu0
      %2219 = vmatprep.mubr.bf16.mxu0 0
      %2220 = vmatmul.mubr.bf16.gmra.mrb[0].mxu0 %v2073
      %v2221 = vpop.f32.mrb[0].mxu0
      %v2222 = vadd.f32 0.0, %v2221
      %v2223 = vpop.f32.mrb[0].mxu0
      %v2224 = vpop.f32.mrb[0].mxu0
      %v2225 = vadd.f32 0.0, %v2224
      %v2226 = vpop.f32.mrb[0].mxu0
      %2227 = vmatprep.mubr.bf16.mxu0 0
      %2228 = vmatmul.mubr.bf16.gmra.mrb[0].mxu0 %v2074
      %v2229 = vpop.f32.mrb[0].mxu0
      %v2230 = vadd.f32 0.0, %v2229
      %v2231 = vpop.f32.mrb[0].mxu0
      %v2232 = vpop.f32.mrb[0].mxu0
      %v2233 = vadd.f32 0.0, %v2232
      %v2234 = vpop.f32.mrb[0].mxu0
      %2235 = vmatprep.mubr.bf16.mxu0 0
      %2236 = vmatmul.mubr.bf16.gmra.mrb[0].mxu0 %v2075
      %v2237 = vpop.f32.mrb[0].mxu0
      %v2238 = vadd.f32 0.0, %v2237
      %v2239 = vpop.f32.mrb[0].mxu0
      %v2240 = vpop.f32.mrb[0].mxu0
      %v2241 = vadd.f32 0.0, %v2240
      %v2242 = vpop.f32.mrb[0].mxu0
      %2243 = vmatprep.mubr.bf16.mxu0 0
      %2244 = vmatmul.mubr.bf16.gmra.mrb[0].mxu0 %v2076
      %v2245 = vpop.f32.mrb[0].mxu0
      %v2246 = vadd.f32 0.0, %v2245
      %v2247 = vpop.f32.mrb[0].mxu0
      %v2248 = vpop.f32.mrb[0].mxu0
      %v2249 = vadd.f32 0.0, %v2248
      %v2250 = vpop.f32.mrb[0].mxu0
      %2251 = vmatprep.mubr.bf16.mxu0 0
      %2252 = vmatmul.mubr.bf16.gmra.mrb[0].mxu0 %v2077
      %v2253 = vpop.f32.mrb[0].mxu0
      %v2254 = vadd.f32 0.0, %v2253
      %v2255 = vpop.f32.mrb[0].mxu0
      %v2256 = vpop.f32.mrb[0].mxu0
      %v2257 = vadd.f32 0.0, %v2256
      %v2258 = vpop.f32.mrb[0].mxu0
      %2259 = vmatprep.mubr.bf16.mxu0 0
      %2260 = vmatmul.mubr.bf16.gmra.mrb[0].mxu0 %v2078
      %v2261 = vpop.f32.mrb[0].mxu0
      %v2262 = vadd.f32 0.0, %v2261
      %v2263 = vpop.f32.mrb[0].mxu0
      %v2264 = vpop.f32.mrb[0].mxu0
      %v2265 = vadd.f32 0.0, %v2264
      %v2266 = vpop.f32.mrb[0].mxu0
      %2267 = vmatprep.mubr.bf16.mxu0 0
      %2268 = vmatmul.mubr.bf16.gmra.mrb[0].mxu0 %v2079
      %v2269 = vpop.f32.mrb[0].mxu0
      %v2270 = vadd.f32 0.0, %v2269
      %v2271 = vpop.f32.mrb[0].mxu0
      %v2272 = vpop.f32.mrb[0].mxu0
      %v2273 = vadd.f32 0.0, %v2272
      %v2274 = vpop.f32.mrb[0].mxu0
      %2275 = vmatprep.mubr.bf16.mxu0 0
      %2276 = vmatmul.mubr.bf16.gmra.mrb[0].mxu0 %v2080
      %v2277 = vpop.f32.mrb[0].mxu0
      %v2278 = vadd.f32 0.0, %v2277
      %v2279 = vpop.f32.mrb[0].mxu0
      %v2280 = vpop.f32.mrb[0].mxu0
      %v2281 = vadd.f32 0.0, %v2280
      %v2282 = vpop.f32.mrb[0].mxu0
      %2283 = vmatprep.mubr.bf16.mxu0 0
      %2284 = vmatmul.mubr.bf16.gmra.mrb[0].mxu0 %v2081
      %v2285 = vpop.f32.mrb[0].mxu0
      %v2286 = vadd.f32 0.0, %v2285
      %v2287 = vpop.f32.mrb[0].mxu0
      %v2288 = vpop.f32.mrb[0].mxu0
      %v2289 = vadd.f32 0.0, %v2288
      %v2290 = vpop.f32.mrb[0].mxu0
      %2291 = vdwg.mxu0
      %v2292 = vadd.f32 %v2012, %v2182
      %v2293 = vadd.f32 %v2013, %v2185
      %v2294 = vadd.f32 %v2014, %v2190
      %v2295 = vadd.f32 %v2015, %v2193
      %v2296 = vadd.f32 %v2016, %v2198
      %v2297 = vadd.f32 %v2017, %v2201
      %v2298 = vadd.f32 %v2018, %v2206
      %v2299 = vadd.f32 %v2019, %v2209
      %v2300 = vadd.f32 %v2020, %v2214
      %v2301 = vadd.f32 %v2021, %v2217
      %v2302 = vadd.f32 %v2022, %v2222
      %v2303 = vadd.f32 %v2023, %v2225
      %v2304 = vadd.f32 %v2024, %v2230
      %v2305 = vadd.f32 %v2025, %v2233
      %v2306 = vadd.f32 %v2026, %v2238
      %v2307 = vadd.f32 %v2027, %v2241
      %v2308 = vadd.f32 %v2028, %v2246
      %v2309 = vadd.f32 %v2029, %v2249
      %v2310 = vadd.f32 %v2030, %v2254
      %v2311 = vadd.f32 %v2031, %v2257
      %v2312 = vadd.f32 %v2032, %v2262
      %v2313 = vadd.f32 %v2033, %v2265
      %v2314 = vadd.f32 %v2034, %v2270
      %v2315 = vadd.f32 %v2035, %v2273
      %v2316 = vadd.f32 %v2036, %v2278
      %v2317 = vadd.f32 %v2037, %v2281
      %v2318 = vadd.f32 %v2038, %v2286
      %v2319 = vadd.f32 %v2039, %v2289
      %v2320 = vld [vmem:[#allocation2 + $0x27] sm:$0xff]
      %v2321 = vld [vmem:[#allocation2 + $0x2f] sm:$0xff]
      %v2322 = vld [vmem:[#allocation2 + $0x37] sm:$0xff]
      %v2323 = vld [vmem:[#allocation2 + $0x3f] sm:$0xff]
      %v2324 = vld [vmem:[#allocation2 + $0x47] sm:$0xff]
      %v2325 = vld [vmem:[#allocation2 + $0x4f] sm:$0xff]
      %v2326 = vld [vmem:[#allocation2 + $0x57] sm:$0xff]
      %v2327 = vld [vmem:[#allocation2 + $0x5f] sm:$0xff]
      %v2328 = vld [vmem:[#allocation2 + $0x67] sm:$0xff]
      %v2329 = vld [vmem:[#allocation2 + $0x6f] sm:$0xff]
      %v2330 = vld [vmem:[#allocation2 + $0x77] sm:$0xff]
      %v2331 = vld [vmem:[#allocation2 + $0x7f] sm:$0xff]
      %v2332 = vld [vmem:[#allocation2 + $0x87] sm:$0xff]
      %v2333 = vld [vmem:[#allocation2 + $0x8f] sm:$0xff]
      %v2334 = vld [vmem:[#allocation2 + $0x97] sm:$0xff]
      %v2335 = vld [vmem:[#allocation2 + $0x9f] sm:$0xff]
      %v2336 = vld [vmem:[#allocation2 + $0xa7] sm:$0xff]
      %v2337 = vld [vmem:[#allocation2 + $0xaf] sm:$0xff]
      %v2338 = vld [vmem:[#allocation2 + $0xb7] sm:$0xff]
      %v2339 = vld [vmem:[#allocation2 + $0xbf] sm:$0xff]
      %v2340 = vld [vmem:[#allocation2 + $0xc7] sm:$0xff]
      %v2341 = vld [vmem:[#allocation2 + $0xcf] sm:$0xff]
      %v2342 = vld [vmem:[#allocation2 + $0xd7] sm:$0xff]
      %v2343 = vld [vmem:[#allocation2 + $0xdf] sm:$0xff]
      %v2344 = vld [vmem:[#allocation2 + $0xe7] sm:$0xff]
      %v2345 = vld [vmem:[#allocation2 + $0xef] sm:$0xff]
      %v2346 = vld [vmem:[#allocation2 + $0xf7] sm:$0xff]
      %v2347 = vld [vmem:[#allocation2 + $0xff] sm:$0xff]
      %v2348 = vpack.c.bf16 %v2321, %v2320
      %v2349 = vpack.c.bf16 %v2323, %v2322
      %v2350 = vpack.c.bf16 %v2325, %v2324
      %v2351 = vpack.c.bf16 %v2327, %v2326
      %v2352 = vpack.c.bf16 %v2329, %v2328
      %v2353 = vpack.c.bf16 %v2331, %v2330
      %v2354 = vpack.c.bf16 %v2333, %v2332
      %v2355 = vpack.c.bf16 %v2335, %v2334
      %v2356 = vpack.c.bf16 %v2337, %v2336
      %v2357 = vpack.c.bf16 %v2339, %v2338
      %v2358 = vpack.c.bf16 %v2341, %v2340
      %v2359 = vpack.c.bf16 %v2343, %v2342
      %v2360 = vpack.c.bf16 %v2345, %v2344
      %v2361 = vpack.c.bf16 %v2347, %v2346
      %s2362 = scalar_lea.vmem %s2, 384
      %v2363 = vld [vmem:[%s2362] sm:$0xf]
      %v2364 = vld [vmem:[%s2362 + $0x4] sm:$0xf]
      %v2365 = vld [vmem:[%s2362 + $0x8] sm:$0xf]
      %v2366 = vld [vmem:[%s2362 + $0xc] sm:$0xf]
      %v2367 = vld [vmem:[%s2362 + $0x10] sm:$0xf]
      %v2368 = vld [vmem:[%s2362 + $0x14] sm:$0xf]
      %v2369 = vld [vmem:[%s2362 + $0x18] sm:$0xf]
      %v2370 = vld [vmem:[%s2362 + $0x1c] sm:$0xf]
      %v2371 = vld [vmem:[%s2362 + $0x20] sm:$0xf]
      %v2372 = vld [vmem:[%s2362 + $0x24] sm:$0xf]
      %v2373 = vld [vmem:[%s2362 + $0x28] sm:$0xf]
      %v2374 = vld [vmem:[%s2362 + $0x2c] sm:$0xf]
      %v2375 = vld [vmem:[%s2362 + $0x30] sm:$0xf]
      %v2376 = vld [vmem:[%s2362 + $0x34] sm:$0xf]
      %v2377 = vld [vmem:[%s2362 + $0x38] sm:$0xf]
      %v2378 = vld [vmem:[%s2362 + $0x3c] sm:$0xf]
      %v2395 = vunpack.c.l.b16 %v2363
      %v2396 = vunpack.c.l.b16 %v2364
      %v2397 = vunpack.c.l.b16 %v2365
      %v2398 = vunpack.c.l.b16 %v2366
      %v2399 = vunpack.c.l.b16 %v2367
      %v2400 = vunpack.c.l.b16 %v2368
      %v2401 = vunpack.c.l.b16 %v2369
      %v2402 = vunpack.c.l.b16 %v2370
      %v2403 = vunpack.c.l.b16 %v2371
      %v2404 = vunpack.c.l.b16 %v2372
      %v2405 = vunpack.c.l.b16 %v2373
      %v2406 = vunpack.c.l.b16 %v2374
      %v2407 = vunpack.c.l.b16 %v2375
      %v2408 = vunpack.c.l.b16 %v2376
      %v2409 = vunpack.c.l.b16 %v2377
      %v2410 = vunpack.c.l.b16 %v2378
      %v2411 = vpack.c.b16 %v2396, %v2395
      %v2412 = vpack.c.b16 %v2398, %v2397
      %v2413 = vpack.c.b16 %v2400, %v2399
      %v2414 = vpack.c.b16 %v2402, %v2401
      %v2415 = vpack.c.b16 %v2404, %v2403
      %v2416 = vpack.c.b16 %v2406, %v2405
      %v2417 = vpack.c.b16 %v2408, %v2407
      %v2418 = vpack.c.b16 %v2410, %v2409
      %2427 = vmatprep.subr.bf16.mxu0 0
      %2428 = vmatpush1.bf16.msra.mxu0 %v2411
      %2429 = vmatprep.subr.bf16.mxu0 0
      %2430 = vmatpush1.bf16.msra.mxu0 %v2412
      %2431 = vmatprep.subr.bf16.mxu0 0
      %2432 = vmatpush1.bf16.msra.mxu0 %v2413
      %2433 = vmatprep.subr.bf16.mxu0 0
      %2434 = vmatpush1.bf16.msra.mxu0 %v2414
      %2435 = vmatprep.subr.bf16.mxu0 0
      %2436 = vmatpush1.bf16.msra.mxu0 %v2415
      %2437 = vmatprep.subr.bf16.mxu0 0
      %2438 = vmatpush1.bf16.msra.mxu0 %v2416
      %2439 = vmatprep.subr.bf16.mxu0 0
      %2440 = vmatpush1.bf16.msra.mxu0 %v2417
      %2441 = vmatprep.subr.bf16.mxu0 0
      %2442 = vmatpush1.bf16.msra.mxu0 %v2418
      %2443 = vmatprep.subr.bf16.mxu0 0
      %2444 = vmatpush1.bf16.msra.mxu0 0
      %2445 = vmatprep.subr.bf16.mxu0 0
      %2446 = vmatpush1.bf16.msra.mxu0 0
      %2447 = vmatprep.subr.bf16.mxu0 0
      %2448 = vmatpush1.bf16.msra.mxu0 0
      %2449 = vmatprep.subr.bf16.mxu0 0
      %2450 = vmatpush1.bf16.msra.mxu0 0
      %2451 = vmatprep.subr.bf16.mxu0 0
      %2452 = vmatpush1.bf16.msra.mxu0 0
      %2453 = vmatprep.subr.bf16.mxu0 0
      %2454 = vmatpush1.bf16.msra.mxu0 0
      %2455 = vmatprep.subr.bf16.mxu0 0
      %2456 = vmatpush1.bf16.msra.mxu0 0
      %2457 = vmatprep.subr.bf16.mxu0 0
      %2458 = vmatpush1.bf16.msra.mxu0 0
      %2459 = vmatprep.mubr.bf16.mxu0 0
      %2460 = vmatmul.mubr.bf16.gmra.mrb[0].mxu0 %v2348
      %v2461 = vpop.f32.mrb[0].mxu0
      %v2462 = vadd.f32 0.0, %v2461
      %v2463 = vpop.f32.mrb[0].mxu0
      %v2464 = vpop.f32.mrb[0].mxu0
      %v2465 = vadd.f32 0.0, %v2464
      %v2466 = vpop.f32.mrb[0].mxu0
      %2467 = vmatprep.mubr.bf16.mxu0 0
      %2468 = vmatmul.mubr.bf16.gmra.mrb[0].mxu0 %v2349
      %v2469 = vpop.f32.mrb[0].mxu0
      %v2470 = vadd.f32 0.0, %v2469
      %v2471 = vpop.f32.mrb[0].mxu0
      %v2472 = vpop.f32.mrb[0].mxu0
      %v2473 = vadd.f32 0.0, %v2472
      %v2474 = vpop.f32.mrb[0].mxu0
      %2475 = vmatprep.mubr.bf16.mxu0 0
      %2476 = vmatmul.mubr.bf16.gmra.mrb[0].mxu0 %v2350
      %v2477 = vpop.f32.mrb[0].mxu0
      %v2478 = vadd.f32 0.0, %v2477
      %v2479 = vpop.f32.mrb[0].mxu0
      %v2480 = vpop.f32.mrb[0].mxu0
      %v2481 = vadd.f32 0.0, %v2480
      %v2482 = vpop.f32.mrb[0].mxu0
      %2483 = vmatprep.mubr.bf16.mxu0 0
      %2484 = vmatmul.mubr.bf16.gmra.mrb[0].mxu0 %v2351
      %v2485 = vpop.f32.mrb[0].mxu0
      %v2486 = vadd.f32 0.0, %v2485
      %v2487 = vpop.f32.mrb[0].mxu0
      %v2488 = vpop.f32.mrb[0].mxu0
      %v2489 = vadd.f32 0.0, %v2488
      %v2490 = vpop.f32.mrb[0].mxu0
      %2491 = vmatprep.mubr.bf16.mxu0 0
      %2492 = vmatmul.mubr.bf16.gmra.mrb[0].mxu0 %v2352
      %v2493 = vpop.f32.mrb[0].mxu0
      %v2494 = vadd.f32 0.0, %v2493
      %v2495 = vpop.f32.mrb[0].mxu0
      %v2496 = vpop.f32.mrb[0].mxu0
      %v2497 = vadd.f32 0.0, %v2496
      %v2498 = vpop.f32.mrb[0].mxu0
      %2499 = vmatprep.mubr.bf16.mxu0 0
      %2500 = vmatmul.mubr.bf16.gmra.mrb[0].mxu0 %v2353
      %v2501 = vpop.f32.mrb[0].mxu0
      %v2502 = vadd.f32 0.0, %v2501
      %v2503 = vpop.f32.mrb[0].mxu0
      %v2504 = vpop.f32.mrb[0].mxu0
      %v2505 = vadd.f32 0.0, %v2504
      %v2506 = vpop.f32.mrb[0].mxu0
      %2507 = vmatprep.mubr.bf16.mxu0 0
      %2508 = vmatmul.mubr.bf16.gmra.mrb[0].mxu0 %v2354
      %v2509 = vpop.f32.mrb[0].mxu0
      %v2510 = vadd.f32 0.0, %v2509
      %v2511 = vpop.f32.mrb[0].mxu0
      %v2512 = vpop.f32.mrb[0].mxu0
      %v2513 = vadd.f32 0.0, %v2512
      %v2514 = vpop.f32.mrb[0].mxu0
      %2515 = vmatprep.mubr.bf16.mxu0 0
      %2516 = vmatmul.mubr.bf16.gmra.mrb[0].mxu0 %v2355
      %v2517 = vpop.f32.mrb[0].mxu0
      %v2518 = vadd.f32 0.0, %v2517
      %v2519 = vpop.f32.mrb[0].mxu0
      %v2520 = vpop.f32.mrb[0].mxu0
      %v2521 = vadd.f32 0.0, %v2520
      %v2522 = vpop.f32.mrb[0].mxu0
      %2523 = vmatprep.mubr.bf16.mxu0 0
      %2524 = vmatmul.mubr.bf16.gmra.mrb[0].mxu0 %v2356
      %v2525 = vpop.f32.mrb[0].mxu0
      %v2526 = vadd.f32 0.0, %v2525
      %v2527 = vpop.f32.mrb[0].mxu0
      %v2528 = vpop.f32.mrb[0].mxu0
      %v2529 = vadd.f32 0.0, %v2528
      %v2530 = vpop.f32.mrb[0].mxu0
      %2531 = vmatprep.mubr.bf16.mxu0 0
      %2532 = vmatmul.mubr.bf16.gmra.mrb[0].mxu0 %v2357
      %v2533 = vpop.f32.mrb[0].mxu0
      %v2534 = vadd.f32 0.0, %v2533
      %v2535 = vpop.f32.mrb[0].mxu0
      %v2536 = vpop.f32.mrb[0].mxu0
      %v2537 = vadd.f32 0.0, %v2536
      %v2538 = vpop.f32.mrb[0].mxu0
      %2539 = vmatprep.mubr.bf16.mxu0 0
      %2540 = vmatmul.mubr.bf16.gmra.mrb[0].mxu0 %v2358
      %v2541 = vpop.f32.mrb[0].mxu0
      %v2542 = vadd.f32 0.0, %v2541
      %v2543 = vpop.f32.mrb[0].mxu0
      %v2544 = vpop.f32.mrb[0].mxu0
      %v2545 = vadd.f32 0.0, %v2544
      %v2546 = vpop.f32.mrb[0].mxu0
      %2547 = vmatprep.mubr.bf16.mxu0 0
      %2548 = vmatmul.mubr.bf16.gmra.mrb[0].mxu0 %v2359
      %v2549 = vpop.f32.mrb[0].mxu0
      %v2550 = vadd.f32 0.0, %v2549
      %v2551 = vpop.f32.mrb[0].mxu0
      %v2552 = vpop.f32.mrb[0].mxu0
      %v2553 = vadd.f32 0.0, %v2552
      %v2554 = vpop.f32.mrb[0].mxu0
      %2555 = vmatprep.mubr.bf16.mxu0 0
      %2556 = vmatmul.mubr.bf16.gmra.mrb[0].mxu0 %v2360
      %v2557 = vpop.f32.mrb[0].mxu0
      %v2558 = vadd.f32 0.0, %v2557
      %v2559 = vpop.f32.mrb[0].mxu0
      %v2560 = vpop.f32.mrb[0].mxu0
      %v2561 = vadd.f32 0.0, %v2560
      %v2562 = vpop.f32.mrb[0].mxu0
      %2563 = vmatprep.mubr.bf16.mxu0 0
      %2564 = vmatmul.mubr.bf16.gmra.mrb[0].mxu0 %v2361
      %v2565 = vpop.f32.mrb[0].mxu0
      %v2566 = vadd.f32 0.0, %v2565
      %v2567 = vpop.f32.mrb[0].mxu0
      %v2568 = vpop.f32.mrb[0].mxu0
      %v2569 = vadd.f32 0.0, %v2568
      %v2570 = vpop.f32.mrb[0].mxu0
      %2571 = vdwg.mxu0
      %v2572 = vadd.f32 %v2292, %v2462
      %v2573 = vadd.f32 %v2293, %v2465
      %v2574 = vadd.f32 %v2294, %v2470
      %v2575 = vadd.f32 %v2295, %v2473
      %v2576 = vadd.f32 %v2296, %v2478
      %v2577 = vadd.f32 %v2297, %v2481
      %v2578 = vadd.f32 %v2298, %v2486
      %v2579 = vadd.f32 %v2299, %v2489
      %v2580 = vadd.f32 %v2300, %v2494
      %v2581 = vadd.f32 %v2301, %v2497
      %v2582 = vadd.f32 %v2302, %v2502
      %v2583 = vadd.f32 %v2303, %v2505
      %v2584 = vadd.f32 %v2304, %v2510
      %v2585 = vadd.f32 %v2305, %v2513
      %v2586 = vadd.f32 %v2306, %v2518
      %v2587 = vadd.f32 %v2307, %v2521
      %v2588 = vadd.f32 %v2308, %v2526
      %v2589 = vadd.f32 %v2309, %v2529
      %v2590 = vadd.f32 %v2310, %v2534
      %v2591 = vadd.f32 %v2311, %v2537
      %v2592 = vadd.f32 %v2312, %v2542
      %v2593 = vadd.f32 %v2313, %v2545
      %v2594 = vadd.f32 %v2314, %v2550
      %v2595 = vadd.f32 %v2315, %v2553
      %v2596 = vadd.f32 %v2316, %v2558
      %v2597 = vadd.f32 %v2317, %v2561
      %v2598 = vadd.f32 %v2318, %v2566
      %v2599 = vadd.f32 %v2319, %v2569
      %v2600 = vld [vmem:[#allocation2 + $0x28] sm:$0xff]
      %v2601 = vld [vmem:[#allocation2 + $0x30] sm:$0xff]
      %v2602 = vld [vmem:[#allocation2 + $0x38] sm:$0xff]
      %v2603 = vld [vmem:[#allocation2 + $0x40] sm:$0xff]
      %v2604 = vld [vmem:[#allocation2 + $0x48] sm:$0xff]
      %v2605 = vld [vmem:[#allocation2 + $0x50] sm:$0xff]
      %v2606 = vld [vmem:[#allocation2 + $0x58] sm:$0xff]
      %v2607 = vld [vmem:[#allocation2 + $0x60] sm:$0xff]
      %v2608 = vld [vmem:[#allocation2 + $0x68] sm:$0xff]
      %v2609 = vld [vmem:[#allocation2 + $0x70] sm:$0xff]
      %v2610 = vld [vmem:[#allocation2 + $0x78] sm:$0xff]
      %v2611 = vld [vmem:[#allocation2 + $0x80] sm:$0xff]
      %v2612 = vld [vmem:[#allocation2 + $0x88] sm:$0xff]
      %v2613 = vld [vmem:[#allocation2 + $0x90] sm:$0xff]
      %v2614 = vld [vmem:[#allocation2 + $0x98] sm:$0xff]
      %v2615 = vld [vmem:[#allocation2 + $0xa0] sm:$0xff]
      %v2616 = vld [vmem:[#allocation2 + $0xa8] sm:$0xff]
      %v2617 = vld [vmem:[#allocation2 + $0xb0] sm:$0xff]
      %v2618 = vld [vmem:[#allocation2 + $0xb8] sm:$0xff]
      %v2619 = vld [vmem:[#allocation2 + $0xc0] sm:$0xff]
      %v2620 = vld [vmem:[#allocation2 + $0xc8] sm:$0xff]
      %v2621 = vld [vmem:[#allocation2 + $0xd0] sm:$0xff]
      %v2622 = vld [vmem:[#allocation2 + $0xd8] sm:$0xff]
      %v2623 = vld [vmem:[#allocation2 + $0xe0] sm:$0xff]
      %v2624 = vld [vmem:[#allocation2 + $0xe8] sm:$0xff]
      %v2625 = vld [vmem:[#allocation2 + $0xf0] sm:$0xff]
      %v2626 = vld [vmem:[#allocation2 + $0xf8] sm:$0xff]
      %v2627 = vld [vmem:[#allocation2 + $0x100] sm:$0xff]
      %v2628 = vpack.c.bf16 %v2601, %v2600
      %v2629 = vpack.c.bf16 %v2603, %v2602
      %v2630 = vpack.c.bf16 %v2605, %v2604
      %v2631 = vpack.c.bf16 %v2607, %v2606
      %v2632 = vpack.c.bf16 %v2609, %v2608
      %v2633 = vpack.c.bf16 %v2611, %v2610
      %v2634 = vpack.c.bf16 %v2613, %v2612
      %v2635 = vpack.c.bf16 %v2615, %v2614
      %v2636 = vpack.c.bf16 %v2617, %v2616
      %v2637 = vpack.c.bf16 %v2619, %v2618
      %v2638 = vpack.c.bf16 %v2621, %v2620
      %v2639 = vpack.c.bf16 %v2623, %v2622
      %v2640 = vpack.c.bf16 %v2625, %v2624
      %v2641 = vpack.c.bf16 %v2627, %v2626
      %s2642 = scalar_lea.vmem %s2, 448
      %v2643 = vld [vmem:[%s2642] sm:$0xf]
      %v2644 = vld [vmem:[%s2642 + $0x4] sm:$0xf]
      %v2645 = vld [vmem:[%s2642 + $0x8] sm:$0xf]
      %v2646 = vld [vmem:[%s2642 + $0xc] sm:$0xf]
      %v2647 = vld [vmem:[%s2642 + $0x10] sm:$0xf]
      %v2648 = vld [vmem:[%s2642 + $0x14] sm:$0xf]
      %v2649 = vld [vmem:[%s2642 + $0x18] sm:$0xf]
      %v2650 = vld [vmem:[%s2642 + $0x1c] sm:$0xf]
      %v2651 = vld [vmem:[%s2642 + $0x20] sm:$0xf]
      %v2652 = vld [vmem:[%s2642 + $0x24] sm:$0xf]
      %v2653 = vld [vmem:[%s2642 + $0x28] sm:$0xf]
      %v2654 = vld [vmem:[%s2642 + $0x2c] sm:$0xf]
      %v2655 = vld [vmem:[%s2642 + $0x30] sm:$0xf]
      %v2656 = vld [vmem:[%s2642 + $0x34] sm:$0xf]
      %v2657 = vld [vmem:[%s2642 + $0x38] sm:$0xf]
      %v2658 = vld [vmem:[%s2642 + $0x3c] sm:$0xf]
      %v2675 = vunpack.c.l.b16 %v2643
      %v2676 = vunpack.c.l.b16 %v2644
      %v2677 = vunpack.c.l.b16 %v2645
      %v2678 = vunpack.c.l.b16 %v2646
      %v2679 = vunpack.c.l.b16 %v2647
      %v2680 = vunpack.c.l.b16 %v2648
      %v2681 = vunpack.c.l.b16 %v2649
      %v2682 = vunpack.c.l.b16 %v2650
      %v2683 = vunpack.c.l.b16 %v2651
      %v2684 = vunpack.c.l.b16 %v2652
      %v2685 = vunpack.c.l.b16 %v2653
      %v2686 = vunpack.c.l.b16 %v2654
      %v2687 = vunpack.c.l.b16 %v2655
      %v2688 = vunpack.c.l.b16 %v2656
      %v2689 = vunpack.c.l.b16 %v2657
      %v2690 = vunpack.c.l.b16 %v2658
      %v2691 = vpack.c.b16 %v2676, %v2675
      %v2692 = vpack.c.b16 %v2678, %v2677
      %v2693 = vpack.c.b16 %v2680, %v2679
      %v2694 = vpack.c.b16 %v2682, %v2681
      %v2695 = vpack.c.b16 %v2684, %v2683
      %v2696 = vpack.c.b16 %v2686, %v2685
      %v2697 = vpack.c.b16 %v2688, %v2687
      %v2698 = vpack.c.b16 %v2690, %v2689
      %2707 = vmatprep.subr.bf16.mxu0 0
      %2708 = vmatpush1.bf16.msra.mxu0 %v2691
      %2709 = vmatprep.subr.bf16.mxu0 0
      %2710 = vmatpush1.bf16.msra.mxu0 %v2692
      %2711 = vmatprep.subr.bf16.mxu0 0
      %2712 = vmatpush1.bf16.msra.mxu0 %v2693
      %2713 = vmatprep.subr.bf16.mxu0 0
      %2714 = vmatpush1.bf16.msra.mxu0 %v2694
      %2715 = vmatprep.subr.bf16.mxu0 0
      %2716 = vmatpush1.bf16.msra.mxu0 %v2695
      %2717 = vmatprep.subr.bf16.mxu0 0
      %2718 = vmatpush1.bf16.msra.mxu0 %v2696
      %2719 = vmatprep.subr.bf16.mxu0 0
      %2720 = vmatpush1.bf16.msra.mxu0 %v2697
      %2721 = vmatprep.subr.bf16.mxu0 0
      %2722 = vmatpush1.bf16.msra.mxu0 %v2698
      %2723 = vmatprep.subr.bf16.mxu0 0
      %2724 = vmatpush1.bf16.msra.mxu0 0
      %2725 = vmatprep.subr.bf16.mxu0 0
      %2726 = vmatpush1.bf16.msra.mxu0 0
      %2727 = vmatprep.subr.bf16.mxu0 0
      %2728 = vmatpush1.bf16.msra.mxu0 0
      %2729 = vmatprep.subr.bf16.mxu0 0
      %2730 = vmatpush1.bf16.msra.mxu0 0
      %2731 = vmatprep.subr.bf16.mxu0 0
      %2732 = vmatpush1.bf16.msra.mxu0 0
      %2733 = vmatprep.subr.bf16.mxu0 0
      %2734 = vmatpush1.bf16.msra.mxu0 0
      %2735 = vmatprep.subr.bf16.mxu0 0
      %2736 = vmatpush1.bf16.msra.mxu0 0
      %2737 = vmatprep.subr.bf16.mxu0 0
      %2738 = vmatpush1.bf16.msra.mxu0 0
      %2739 = vmatprep.mubr.bf16.mxu0 0
      %2740 = vmatmul.mubr.bf16.gmra.mrb[0].mxu0 %v2628
      %v2741 = vpop.f32.mrb[0].mxu0
      %v2742 = vadd.f32 0.0, %v2741
      %v2743 = vpop.f32.mrb[0].mxu0
      %v2744 = vpop.f32.mrb[0].mxu0
      %v2745 = vadd.f32 0.0, %v2744
      %v2746 = vpop.f32.mrb[0].mxu0
      %2747 = vmatprep.mubr.bf16.mxu0 0
      %2748 = vmatmul.mubr.bf16.gmra.mrb[0].mxu0 %v2629
      %v2749 = vpop.f32.mrb[0].mxu0
      %v2750 = vadd.f32 0.0, %v2749
      %v2751 = vpop.f32.mrb[0].mxu0
      %v2752 = vpop.f32.mrb[0].mxu0
      %v2753 = vadd.f32 0.0, %v2752
      %v2754 = vpop.f32.mrb[0].mxu0
      %2755 = vmatprep.mubr.bf16.mxu0 0
      %2756 = vmatmul.mubr.bf16.gmra.mrb[0].mxu0 %v2630
      %v2757 = vpop.f32.mrb[0].mxu0
      %v2758 = vadd.f32 0.0, %v2757
      %v2759 = vpop.f32.mrb[0].mxu0
      %v2760 = vpop.f32.mrb[0].mxu0
      %v2761 = vadd.f32 0.0, %v2760
      %v2762 = vpop.f32.mrb[0].mxu0
      %2763 = vmatprep.mubr.bf16.mxu0 0
      %2764 = vmatmul.mubr.bf16.gmra.mrb[0].mxu0 %v2631
      %v2765 = vpop.f32.mrb[0].mxu0
      %v2766 = vadd.f32 0.0, %v2765
      %v2767 = vpop.f32.mrb[0].mxu0
      %v2768 = vpop.f32.mrb[0].mxu0
      %v2769 = vadd.f32 0.0, %v2768
      %v2770 = vpop.f32.mrb[0].mxu0
      %2771 = vmatprep.mubr.bf16.mxu0 0
      %2772 = vmatmul.mubr.bf16.gmra.mrb[0].mxu0 %v2632
      %v2773 = vpop.f32.mrb[0].mxu0
      %v2774 = vadd.f32 0.0, %v2773
      %v2775 = vpop.f32.mrb[0].mxu0
      %v2776 = vpop.f32.mrb[0].mxu0
      %v2777 = vadd.f32 0.0, %v2776
      %v2778 = vpop.f32.mrb[0].mxu0
      %2779 = vmatprep.mubr.bf16.mxu0 0
      %2780 = vmatmul.mubr.bf16.gmra.mrb[0].mxu0 %v2633
      %v2781 = vpop.f32.mrb[0].mxu0
      %v2782 = vadd.f32 0.0, %v2781
      %v2783 = vpop.f32.mrb[0].mxu0
      %v2784 = vpop.f32.mrb[0].mxu0
      %v2785 = vadd.f32 0.0, %v2784
      %v2786 = vpop.f32.mrb[0].mxu0
      %2787 = vmatprep.mubr.bf16.mxu0 0
      %2788 = vmatmul.mubr.bf16.gmra.mrb[0].mxu0 %v2634
      %v2789 = vpop.f32.mrb[0].mxu0
      %v2790 = vadd.f32 0.0, %v2789
      %v2791 = vpop.f32.mrb[0].mxu0
      %v2792 = vpop.f32.mrb[0].mxu0
      %v2793 = vadd.f32 0.0, %v2792
      %v2794 = vpop.f32.mrb[0].mxu0
      %2795 = vmatprep.mubr.bf16.mxu0 0
      %2796 = vmatmul.mubr.bf16.gmra.mrb[0].mxu0 %v2635
      %v2797 = vpop.f32.mrb[0].mxu0
      %v2798 = vadd.f32 0.0, %v2797
      %v2799 = vpop.f32.mrb[0].mxu0
      %v2800 = vpop.f32.mrb[0].mxu0
      %v2801 = vadd.f32 0.0, %v2800
      %v2802 = vpop.f32.mrb[0].mxu0
      %2803 = vmatprep.mubr.bf16.mxu0 0
      %2804 = vmatmul.mubr.bf16.gmra.mrb[0].mxu0 %v2636
      %v2805 = vpop.f32.mrb[0].mxu0
      %v2806 = vadd.f32 0.0, %v2805
      %v2807 = vpop.f32.mrb[0].mxu0
      %v2808 = vpop.f32.mrb[0].mxu0
      %v2809 = vadd.f32 0.0, %v2808
      %v2810 = vpop.f32.mrb[0].mxu0
      %2811 = vmatprep.mubr.bf16.mxu0 0
      %2812 = vmatmul.mubr.bf16.gmra.mrb[0].mxu0 %v2637
      %v2813 = vpop.f32.mrb[0].mxu0
      %v2814 = vadd.f32 0.0, %v2813
      %v2815 = vpop.f32.mrb[0].mxu0
      %v2816 = vpop.f32.mrb[0].mxu0
      %v2817 = vadd.f32 0.0, %v2816
      %v2818 = vpop.f32.mrb[0].mxu0
      %2819 = vmatprep.mubr.bf16.mxu0 0
      %2820 = vmatmul.mubr.bf16.gmra.mrb[0].mxu0 %v2638
      %v2821 = vpop.f32.mrb[0].mxu0
      %v2822 = vadd.f32 0.0, %v2821
      %v2823 = vpop.f32.mrb[0].mxu0
      %v2824 = vpop.f32.mrb[0].mxu0
      %v2825 = vadd.f32 0.0, %v2824
      %v2826 = vpop.f32.mrb[0].mxu0
      %2827 = vmatprep.mubr.bf16.mxu0 0
      %2828 = vmatmul.mubr.bf16.gmra.mrb[0].mxu0 %v2639
      %v2829 = vpop.f32.mrb[0].mxu0
      %v2830 = vadd.f32 0.0, %v2829
      %v2831 = vpop.f32.mrb[0].mxu0
      %v2832 = vpop.f32.mrb[0].mxu0
      %v2833 = vadd.f32 0.0, %v2832
      %v2834 = vpop.f32.mrb[0].mxu0
      %2835 = vmatprep.mubr.bf16.mxu0 0
      %2836 = vmatmul.mubr.bf16.gmra.mrb[0].mxu0 %v2640
      %v2837 = vpop.f32.mrb[0].mxu0
      %v2838 = vadd.f32 0.0, %v2837
      %v2839 = vpop.f32.mrb[0].mxu0
      %v2840 = vpop.f32.mrb[0].mxu0
      %v2841 = vadd.f32 0.0, %v2840
      %v2842 = vpop.f32.mrb[0].mxu0
      %2843 = vmatprep.mubr.bf16.mxu0 0
      %2844 = vmatmul.mubr.bf16.gmra.mrb[0].mxu0 %v2641
      %v2845 = vpop.f32.mrb[0].mxu0
      %v2846 = vadd.f32 0.0, %v2845
      %v2847 = vpop.f32.mrb[0].mxu0
      %v2848 = vpop.f32.mrb[0].mxu0
      %v2849 = vadd.f32 0.0, %v2848
      %v2850 = vpop.f32.mrb[0].mxu0
      %2851 = vdwg.mxu0
      %v2852 = vadd.f32 %v2572, %v2742
      %v2853 = vadd.f32 %v2573, %v2745
      %v2854 = vadd.f32 %v2574, %v2750
      %v2855 = vadd.f32 %v2575, %v2753
      %v2856 = vadd.f32 %v2576, %v2758
      %v2857 = vadd.f32 %v2577, %v2761
      %v2858 = vadd.f32 %v2578, %v2766
      %v2859 = vadd.f32 %v2579, %v2769
      %v2860 = vadd.f32 %v2580, %v2774
      %v2861 = vadd.f32 %v2581, %v2777
      %v2862 = vadd.f32 %v2582, %v2782
      %v2863 = vadd.f32 %v2583, %v2785
      %v2864 = vadd.f32 %v2584, %v2790
      %v2865 = vadd.f32 %v2585, %v2793
      %v2866 = vadd.f32 %v2586, %v2798
      %v2867 = vadd.f32 %v2587, %v2801
      %v2868 = vadd.f32 %v2588, %v2806
      %v2869 = vadd.f32 %v2589, %v2809
      %v2870 = vadd.f32 %v2590, %v2814
      %v2871 = vadd.f32 %v2591, %v2817
      %v2872 = vadd.f32 %v2592, %v2822
      %v2873 = vadd.f32 %v2593, %v2825
      %v2874 = vadd.f32 %v2594, %v2830
      %v2875 = vadd.f32 %v2595, %v2833
      %v2876 = vadd.f32 %v2596, %v2838
      %v2877 = vadd.f32 %v2597, %v2841
      %v2878 = vadd.f32 %v2598, %v2846
      %v2879 = vadd.f32 %v2599, %v2849
      %v2880 = vld [vmem:[#allocation2 + $0x29] sm:$0xff]
      %v2881 = vld [vmem:[#allocation2 + $0x31] sm:$0xff]
      %v2882 = vld [vmem:[#allocation2 + $0x39] sm:$0xff]
      %v2883 = vld [vmem:[#allocation2 + $0x41] sm:$0xff]
      %v2884 = vld [vmem:[#allocation2 + $0x49] sm:$0xff]
      %v2885 = vld [vmem:[#allocation2 + $0x51] sm:$0xff]
      %v2886 = vld [vmem:[#allocation2 + $0x59] sm:$0xff]
      %v2887 = vld [vmem:[#allocation2 + $0x61] sm:$0xff]
      %v2888 = vld [vmem:[#allocation2 + $0x69] sm:$0xff]
      %v2889 = vld [vmem:[#allocation2 + $0x71] sm:$0xff]
      %v2890 = vld [vmem:[#allocation2 + $0x79] sm:$0xff]
      %v2891 = vld [vmem:[#allocation2 + $0x81] sm:$0xff]
      %v2892 = vld [vmem:[#allocation2 + $0x89] sm:$0xff]
      %v2893 = vld [vmem:[#allocation2 + $0x91] sm:$0xff]
      %v2894 = vld [vmem:[#allocation2 + $0x99] sm:$0xff]
      %v2895 = vld [vmem:[#allocation2 + $0xa1] sm:$0xff]
      %v2896 = vld [vmem:[#allocation2 + $0xa9] sm:$0xff]
      %v2897 = vld [vmem:[#allocation2 + $0xb1] sm:$0xff]
      %v2898 = vld [vmem:[#allocation2 + $0xb9] sm:$0xff]
      %v2899 = vld [vmem:[#allocation2 + $0xc1] sm:$0xff]
      %v2900 = vld [vmem:[#allocation2 + $0xc9] sm:$0xff]
      %v2901 = vld [vmem:[#allocation2 + $0xd1] sm:$0xff]
      %v2902 = vld [vmem:[#allocation2 + $0xd9] sm:$0xff]
      %v2903 = vld [vmem:[#allocation2 + $0xe1] sm:$0xff]
      %v2904 = vld [vmem:[#allocation2 + $0xe9] sm:$0xff]
      %v2905 = vld [vmem:[#allocation2 + $0xf1] sm:$0xff]
      %v2906 = vld [vmem:[#allocation2 + $0xf9] sm:$0xff]
      %v2907 = vld [vmem:[#allocation2 + $0x101] sm:$0xff]
      %v2908 = vpack.c.bf16 %v2881, %v2880
      %v2909 = vpack.c.bf16 %v2883, %v2882
      %v2910 = vpack.c.bf16 %v2885, %v2884
      %v2911 = vpack.c.bf16 %v2887, %v2886
      %v2912 = vpack.c.bf16 %v2889, %v2888
      %v2913 = vpack.c.bf16 %v2891, %v2890
      %v2914 = vpack.c.bf16 %v2893, %v2892
      %v2915 = vpack.c.bf16 %v2895, %v2894
      %v2916 = vpack.c.bf16 %v2897, %v2896
      %v2917 = vpack.c.bf16 %v2899, %v2898
      %v2918 = vpack.c.bf16 %v2901, %v2900
      %v2919 = vpack.c.bf16 %v2903, %v2902
      %v2920 = vpack.c.bf16 %v2905, %v2904
      %v2921 = vpack.c.bf16 %v2907, %v2906
      %s2922 = scalar_lea.vmem %s2, 512
      %v2923 = vld [vmem:[%s2922] sm:$0xf]
      %v2924 = vld [vmem:[%s2922 + $0x4] sm:$0xf]
      %v2925 = vld [vmem:[%s2922 + $0x8] sm:$0xf]
      %v2926 = vld [vmem:[%s2922 + $0xc] sm:$0xf]
      %v2927 = vld [vmem:[%s2922 + $0x10] sm:$0xf]
      %v2928 = vld [vmem:[%s2922 + $0x14] sm:$0xf]
      %v2929 = vld [vmem:[%s2922 + $0x18] sm:$0xf]
      %v2930 = vld [vmem:[%s2922 + $0x1c] sm:$0xf]
      %v2931 = vld [vmem:[%s2922 + $0x20] sm:$0xf]
      %v2932 = vld [vmem:[%s2922 + $0x24] sm:$0xf]
      %v2933 = vld [vmem:[%s2922 + $0x28] sm:$0xf]
      %v2934 = vld [vmem:[%s2922 + $0x2c] sm:$0xf]
      %v2935 = vld [vmem:[%s2922 + $0x30] sm:$0xf]
      %v2936 = vld [vmem:[%s2922 + $0x34] sm:$0xf]
      %v2937 = vld [vmem:[%s2922 + $0x38] sm:$0xf]
      %v2938 = vld [vmem:[%s2922 + $0x3c] sm:$0xf]
      %v2955 = vunpack.c.l.b16 %v2923
      %v2956 = vunpack.c.l.b16 %v2924
      %v2957 = vunpack.c.l.b16 %v2925
      %v2958 = vunpack.c.l.b16 %v2926
      %v2959 = vunpack.c.l.b16 %v2927
      %v2960 = vunpack.c.l.b16 %v2928
      %v2961 = vunpack.c.l.b16 %v2929
      %v2962 = vunpack.c.l.b16 %v2930
      %v2963 = vunpack.c.l.b16 %v2931
      %v2964 = vunpack.c.l.b16 %v2932
      %v2965 = vunpack.c.l.b16 %v2933
      %v2966 = vunpack.c.l.b16 %v2934
      %v2967 = vunpack.c.l.b16 %v2935
      %v2968 = vunpack.c.l.b16 %v2936
      %v2969 = vunpack.c.l.b16 %v2937
      %v2970 = vunpack.c.l.b16 %v2938
      %v2971 = vpack.c.b16 %v2956, %v2955
      %v2972 = vpack.c.b16 %v2958, %v2957
      %v2973 = vpack.c.b16 %v2960, %v2959
      %v2974 = vpack.c.b16 %v2962, %v2961
      %v2975 = vpack.c.b16 %v2964, %v2963
      %v2976 = vpack.c.b16 %v2966, %v2965
      %v2977 = vpack.c.b16 %v2968, %v2967
      %v2978 = vpack.c.b16 %v2970, %v2969
      %2987 = vmatprep.subr.bf16.mxu0 0
      %2988 = vmatpush1.bf16.msra.mxu0 %v2971
      %2989 = vmatprep.subr.bf16.mxu0 0
      %2990 = vmatpush1.bf16.msra.mxu0 %v2972
      %2991 = vmatprep.subr.bf16.mxu0 0
      %2992 = vmatpush1.bf16.msra.mxu0 %v2973
      %2993 = vmatprep.subr.bf16.mxu0 0
      %2994 = vmatpush1.bf16.msra.mxu0 %v2974
      %2995 = vmatprep.subr.bf16.mxu0 0
      %2996 = vmatpush1.bf16.msra.mxu0 %v2975
      %2997 = vmatprep.subr.bf16.mxu0 0
      %2998 = vmatpush1.bf16.msra.mxu0 %v2976
      %2999 = vmatprep.subr.bf16.mxu0 0
      %3000 = vmatpush1.bf16.msra.mxu0 %v2977
      %3001 = vmatprep.subr.bf16.mxu0 0
      %3002 = vmatpush1.bf16.msra.mxu0 %v2978
      %3003 = vmatprep.subr.bf16.mxu0 0
      %3004 = vmatpush1.bf16.msra.mxu0 0
      %3005 = vmatprep.subr.bf16.mxu0 0
      %3006 = vmatpush1.bf16.msra.mxu0 0
      %3007 = vmatprep.subr.bf16.mxu0 0
      %3008 = vmatpush1.bf16.msra.mxu0 0
      %3009 = vmatprep.subr.bf16.mxu0 0
      %3010 = vmatpush1.bf16.msra.mxu0 0
      %3011 = vmatprep.subr.bf16.mxu0 0
      %3012 = vmatpush1.bf16.msra.mxu0 0
      %3013 = vmatprep.subr.bf16.mxu0 0
      %3014 = vmatpush1.bf16.msra.mxu0 0
      %3015 = vmatprep.subr.bf16.mxu0 0
      %3016 = vmatpush1.bf16.msra.mxu0 0
      %3017 = vmatprep.subr.bf16.mxu0 0
      %3018 = vmatpush1.bf16.msra.mxu0 0
      %3019 = vmatprep.mubr.bf16.mxu0 0
      %3020 = vmatmul.mubr.bf16.gmra.mrb[0].mxu0 %v2908
      %v3021 = vpop.f32.mrb[0].mxu0
      %v3022 = vadd.f32 0.0, %v3021
      %v3023 = vpop.f32.mrb[0].mxu0
      %v3024 = vpop.f32.mrb[0].mxu0
      %v3025 = vadd.f32 0.0, %v3024
      %v3026 = vpop.f32.mrb[0].mxu0
      %3027 = vmatprep.mubr.bf16.mxu0 0
      %3028 = vmatmul.mubr.bf16.gmra.mrb[0].mxu0 %v2909
      %v3029 = vpop.f32.mrb[0].mxu0
      %v3030 = vadd.f32 0.0, %v3029
      %v3031 = vpop.f32.mrb[0].mxu0
      %v3032 = vpop.f32.mrb[0].mxu0
      %v3033 = vadd.f32 0.0, %v3032
      %v3034 = vpop.f32.mrb[0].mxu0
      %3035 = vmatprep.mubr.bf16.mxu0 0
      %3036 = vmatmul.mubr.bf16.gmra.mrb[0].mxu0 %v2910
      %v3037 = vpop.f32.mrb[0].mxu0
      %v3038 = vadd.f32 0.0, %v3037
      %v3039 = vpop.f32.mrb[0].mxu0
      %v3040 = vpop.f32.mrb[0].mxu0
      %v3041 = vadd.f32 0.0, %v3040
      %v3042 = vpop.f32.mrb[0].mxu0
      %3043 = vmatprep.mubr.bf16.mxu0 0
      %3044 = vmatmul.mubr.bf16.gmra.mrb[0].mxu0 %v2911
      %v3045 = vpop.f32.mrb[0].mxu0
      %v3046 = vadd.f32 0.0, %v3045
      %v3047 = vpop.f32.mrb[0].mxu0
      %v3048 = vpop.f32.mrb[0].mxu0
      %v3049 = vadd.f32 0.0, %v3048
      %v3050 = vpop.f32.mrb[0].mxu0
      %3051 = vmatprep.mubr.bf16.mxu0 0
      %3052 = vmatmul.mubr.bf16.gmra.mrb[0].mxu0 %v2912
      %v3053 = vpop.f32.mrb[0].mxu0
      %v3054 = vadd.f32 0.0, %v3053
      %v3055 = vpop.f32.mrb[0].mxu0
      %v3056 = vpop.f32.mrb[0].mxu0
      %v3057 = vadd.f32 0.0, %v3056
      %v3058 = vpop.f32.mrb[0].mxu0
      %3059 = vmatprep.mubr.bf16.mxu0 0
      %3060 = vmatmul.mubr.bf16.gmra.mrb[0].mxu0 %v2913
      %v3061 = vpop.f32.mrb[0].mxu0
      %v3062 = vadd.f32 0.0, %v3061
      %v3063 = vpop.f32.mrb[0].mxu0
      %v3064 = vpop.f32.mrb[0].mxu0
      %v3065 = vadd.f32 0.0, %v3064
      %v3066 = vpop.f32.mrb[0].mxu0
      %3067 = vmatprep.mubr.bf16.mxu0 0
      %3068 = vmatmul.mubr.bf16.gmra.mrb[0].mxu0 %v2914
      %v3069 = vpop.f32.mrb[0].mxu0
      %v3070 = vadd.f32 0.0, %v3069
      %v3071 = vpop.f32.mrb[0].mxu0
      %v3072 = vpop.f32.mrb[0].mxu0
      %v3073 = vadd.f32 0.0, %v3072
      %v3074 = vpop.f32.mrb[0].mxu0
      %3075 = vmatprep.mubr.bf16.mxu0 0
      %3076 = vmatmul.mubr.bf16.gmra.mrb[0].mxu0 %v2915
      %v3077 = vpop.f32.mrb[0].mxu0
      %v3078 = vadd.f32 0.0, %v3077
      %v3079 = vpop.f32.mrb[0].mxu0
      %v3080 = vpop.f32.mrb[0].mxu0
      %v3081 = vadd.f32 0.0, %v3080
      %v3082 = vpop.f32.mrb[0].mxu0
      %3083 = vmatprep.mubr.bf16.mxu0 0
      %3084 = vmatmul.mubr.bf16.gmra.mrb[0].mxu0 %v2916
      %v3085 = vpop.f32.mrb[0].mxu0
      %v3086 = vadd.f32 0.0, %v3085
      %v3087 = vpop.f32.mrb[0].mxu0
      %v3088 = vpop.f32.mrb[0].mxu0
      %v3089 = vadd.f32 0.0, %v3088
      %v3090 = vpop.f32.mrb[0].mxu0
      %3091 = vmatprep.mubr.bf16.mxu0 0
      %3092 = vmatmul.mubr.bf16.gmra.mrb[0].mxu0 %v2917
      %v3093 = vpop.f32.mrb[0].mxu0
      %v3094 = vadd.f32 0.0, %v3093
      %v3095 = vpop.f32.mrb[0].mxu0
      %v3096 = vpop.f32.mrb[0].mxu0
      %v3097 = vadd.f32 0.0, %v3096
      %v3098 = vpop.f32.mrb[0].mxu0
      %3099 = vmatprep.mubr.bf16.mxu0 0
      %3100 = vmatmul.mubr.bf16.gmra.mrb[0].mxu0 %v2918
      %v3101 = vpop.f32.mrb[0].mxu0
      %v3102 = vadd.f32 0.0, %v3101
      %v3103 = vpop.f32.mrb[0].mxu0
      %v3104 = vpop.f32.mrb[0].mxu0
      %v3105 = vadd.f32 0.0, %v3104
      %v3106 = vpop.f32.mrb[0].mxu0
      %3107 = vmatprep.mubr.bf16.mxu0 0
      %3108 = vmatmul.mubr.bf16.gmra.mrb[0].mxu0 %v2919
      %v3109 = vpop.f32.mrb[0].mxu0
      %v3110 = vadd.f32 0.0, %v3109
      %v3111 = vpop.f32.mrb[0].mxu0
      %v3112 = vpop.f32.mrb[0].mxu0
      %v3113 = vadd.f32 0.0, %v3112
      %v3114 = vpop.f32.mrb[0].mxu0
      %3115 = vmatprep.mubr.bf16.mxu0 0
      %3116 = vmatmul.mubr.bf16.gmra.mrb[0].mxu0 %v2920
      %v3117 = vpop.f32.mrb[0].mxu0
      %v3118 = vadd.f32 0.0, %v3117
      %v3119 = vpop.f32.mrb[0].mxu0
      %v3120 = vpop.f32.mrb[0].mxu0
      %v3121 = vadd.f32 0.0, %v3120
      %v3122 = vpop.f32.mrb[0].mxu0
      %3123 = vmatprep.mubr.bf16.mxu0 0
      %3124 = vmatmul.mubr.bf16.gmra.mrb[0].mxu0 %v2921
      %v3125 = vpop.f32.mrb[0].mxu0
      %v3126 = vadd.f32 0.0, %v3125
      %v3127 = vpop.f32.mrb[0].mxu0
      %v3128 = vpop.f32.mrb[0].mxu0
      %v3129 = vadd.f32 0.0, %v3128
      %v3130 = vpop.f32.mrb[0].mxu0
      %3131 = vdwg.mxu0
      %v3132 = vadd.f32 %v2852, %v3022
      %v3133 = vadd.f32 %v2853, %v3025
      %v3134 = vadd.f32 %v2854, %v3030
      %v3135 = vadd.f32 %v2855, %v3033
      %v3136 = vadd.f32 %v2856, %v3038
      %v3137 = vadd.f32 %v2857, %v3041
      %v3138 = vadd.f32 %v2858, %v3046
      %v3139 = vadd.f32 %v2859, %v3049
      %v3140 = vadd.f32 %v2860, %v3054
      %v3141 = vadd.f32 %v2861, %v3057
      %v3142 = vadd.f32 %v2862, %v3062
      %v3143 = vadd.f32 %v2863, %v3065
      %v3144 = vadd.f32 %v2864, %v3070
      %v3145 = vadd.f32 %v2865, %v3073
      %v3146 = vadd.f32 %v2866, %v3078
      %v3147 = vadd.f32 %v2867, %v3081
      %v3148 = vadd.f32 %v2868, %v3086
      %v3149 = vadd.f32 %v2869, %v3089
      %v3150 = vadd.f32 %v2870, %v3094
      %v3151 = vadd.f32 %v2871, %v3097
      %v3152 = vadd.f32 %v2872, %v3102
      %v3153 = vadd.f32 %v2873, %v3105
      %v3154 = vadd.f32 %v2874, %v3110
      %v3155 = vadd.f32 %v2875, %v3113
      %v3156 = vadd.f32 %v2876, %v3118
      %v3157 = vadd.f32 %v2877, %v3121
      %v3158 = vadd.f32 %v2878, %v3126
      %v3159 = vadd.f32 %v2879, %v3129
      %v3160 = vld [vmem:[%s3] sm:$0x1]
      %v3162 = vlaneseq
      %v3163 = vshrl.u32 %v3162, 7
      %v3164 = vsub.s32 0, %v3163
      %v3165 = vrot.slane %v3160, %v3164
      %v3167 = vadd.f32 %v3132, %v3165
      %v3168 = vadd.f32 %v3133, %v3165
      %v3169 = vadd.f32 %v3134, %v3165
      %v3170 = vadd.f32 %v3135, %v3165
      %v3171 = vadd.f32 %v3136, %v3165
      %v3172 = vadd.f32 %v3137, %v3165
      %v3173 = vadd.f32 %v3138, %v3165
      %v3174 = vadd.f32 %v3139, %v3165
      %v3175 = vadd.f32 %v3140, %v3165
      %v3176 = vadd.f32 %v3141, %v3165
      %v3177 = vadd.f32 %v3142, %v3165
      %v3178 = vadd.f32 %v3143, %v3165
      %v3179 = vadd.f32 %v3144, %v3165
      %v3180 = vadd.f32 %v3145, %v3165
      %v3181 = vadd.f32 %v3146, %v3165
      %v3182 = vadd.f32 %v3147, %v3165
      %v3183 = vadd.f32 %v3148, %v3165
      %v3184 = vadd.f32 %v3149, %v3165
      %v3185 = vadd.f32 %v3150, %v3165
      %v3186 = vadd.f32 %v3151, %v3165
      %v3187 = vadd.f32 %v3152, %v3165
      %v3188 = vadd.f32 %v3153, %v3165
      %v3189 = vadd.f32 %v3154, %v3165
      %v3190 = vadd.f32 %v3155, %v3165
      %v3191 = vadd.f32 %v3156, %v3165
      %v3192 = vadd.f32 %v3157, %v3165
      %v3193 = vadd.f32 %v3158, %v3165
      %v3194 = vadd.f32 %v3159, %v3165
      %v3195 = vmax.f32 %v3167, 0.0
      %v3196 = vmax.f32 %v3168, 0.0
      %v3197 = vmax.f32 %v3169, 0.0
      %v3198 = vmax.f32 %v3170, 0.0
      %v3199 = vmax.f32 %v3171, 0.0
      %v3200 = vmax.f32 %v3172, 0.0
      %v3201 = vmax.f32 %v3173, 0.0
      %v3202 = vmax.f32 %v3174, 0.0
      %v3203 = vmax.f32 %v3175, 0.0
      %v3204 = vmax.f32 %v3176, 0.0
      %v3205 = vmax.f32 %v3177, 0.0
      %v3206 = vmax.f32 %v3178, 0.0
      %v3207 = vmax.f32 %v3179, 0.0
      %v3208 = vmax.f32 %v3180, 0.0
      %v3209 = vmax.f32 %v3181, 0.0
      %v3210 = vmax.f32 %v3182, 0.0
      %v3211 = vmax.f32 %v3183, 0.0
      %v3212 = vmax.f32 %v3184, 0.0
      %v3213 = vmax.f32 %v3185, 0.0
      %v3214 = vmax.f32 %v3186, 0.0
      %v3215 = vmax.f32 %v3187, 0.0
      %v3216 = vmax.f32 %v3188, 0.0
      %v3217 = vmax.f32 %v3189, 0.0
      %v3218 = vmax.f32 %v3190, 0.0
      %v3219 = vmax.f32 %v3191, 0.0
      %v3220 = vmax.f32 %v3192, 0.0
      %v3221 = vmax.f32 %v3193, 0.0
      %v3222 = vmax.f32 %v3194, 0.0
      %3224 = vset.pattern.permute.xlu0 0
      %3225 = vperm.xlu0 %3224, %v669
      %v3226 = vpop.permute.xlu0 %3225
      %3229 = vset.pattern.permute.xlu0 0
      %3230 = vperm.xlu0 %3229, %v670
      %v3231 = vpop.permute.xlu0 %3230
      %3234 = vset.pattern.permute.xlu0 0
      %3235 = vperm.xlu0 %3234, %v671
      %v3236 = vpop.permute.xlu0 %3235
      %3239 = vset.pattern.permute.xlu0 0
      %3240 = vperm.xlu0 %3239, %v672
      %v3241 = vpop.permute.xlu0 %3240
      %3244 = vset.pattern.permute.xlu0 0
      %3245 = vperm.xlu0 %3244, %v673
      %v3246 = vpop.permute.xlu0 %3245
      %3249 = vset.pattern.permute.xlu0 0
      %3250 = vperm.xlu0 %3249, %v674
      %v3251 = vpop.permute.xlu0 %3250
      %3254 = vset.pattern.permute.xlu0 0
      %3255 = vperm.xlu0 %3254, %v675
      %v3256 = vpop.permute.xlu0 %3255
      %3259 = vset.pattern.permute.xlu0 0
      %3260 = vperm.xlu0 %3259, %v676
      %v3261 = vpop.permute.xlu0 %3260
      %3264 = vset.pattern.permute.xlu0 0
      %3265 = vperm.xlu0 %3264, %v677
      %v3266 = vpop.permute.xlu0 %3265
      %3269 = vset.pattern.permute.xlu0 0
      %3270 = vperm.xlu0 %3269, %v678
      %v3271 = vpop.permute.xlu0 %3270
      %3274 = vset.pattern.permute.xlu0 0
      %3275 = vperm.xlu0 %3274, %v679
      %v3276 = vpop.permute.xlu0 %3275
      %3279 = vset.pattern.permute.xlu0 0
      %3280 = vperm.xlu0 %3279, %v680
      %v3281 = vpop.permute.xlu0 %3280
      %3284 = vset.pattern.permute.xlu0 0
      %3285 = vperm.xlu0 %3284, %v681
      %v3286 = vpop.permute.xlu0 %3285
      %3289 = vset.pattern.permute.xlu0 0
      %3290 = vperm.xlu0 %3289, %v682
      %v3291 = vpop.permute.xlu0 %3290
      %3294 = vset.pattern.permute.xlu0 0
      %3295 = vperm.xlu0 %3294, %v683
      %v3296 = vpop.permute.xlu0 %3295
      %3299 = vset.pattern.permute.xlu0 0
      %3300 = vperm.xlu0 %3299, %v684
      %v3301 = vpop.permute.xlu0 %3300
      %3304 = vset.pattern.permute.xlu0 0
      %3305 = vperm.xlu0 %3304, %v685
      %v3306 = vpop.permute.xlu0 %3305
      %3309 = vset.pattern.permute.xlu0 0
      %3310 = vperm.xlu0 %3309, %v686
      %v3311 = vpop.permute.xlu0 %3310
      %3314 = vset.pattern.permute.xlu0 0
      %3315 = vperm.xlu0 %3314, %v687
      %v3316 = vpop.permute.xlu0 %3315
      %3319 = vset.pattern.permute.xlu0 0
      %3320 = vperm.xlu0 %3319, %v688
      %v3321 = vpop.permute.xlu0 %3320
      %3324 = vset.pattern.permute.xlu0 0
      %3325 = vperm.xlu0 %3324, %v689
      %v3326 = vpop.permute.xlu0 %3325
      %3329 = vset.pattern.permute.xlu0 0
      %3330 = vperm.xlu0 %3329, %v690
      %v3331 = vpop.permute.xlu0 %3330
      %3334 = vset.pattern.permute.xlu0 0
      %3335 = vperm.xlu0 %3334, %v691
      %v3336 = vpop.permute.xlu0 %3335
      %3339 = vset.pattern.permute.xlu0 0
      %3340 = vperm.xlu0 %3339, %v692
      %v3341 = vpop.permute.xlu0 %3340
      %3344 = vset.pattern.permute.xlu0 0
      %3345 = vperm.xlu0 %3344, %v693
      %v3346 = vpop.permute.xlu0 %3345
      %3349 = vset.pattern.permute.xlu0 0
      %3350 = vperm.xlu0 %3349, %v694
      %v3351 = vpop.permute.xlu0 %3350
      %3354 = vset.pattern.permute.xlu0 0
      %3355 = vperm.xlu0 %3354, %v695
      %v3356 = vpop.permute.xlu0 %3355
      %3359 = vset.pattern.permute.xlu0 0
      %3360 = vperm.xlu0 %3359, %v696
      %v3361 = vpop.permute.xlu0 %3360
      %v3363 = vmul.f32 %v3195, %v3226
      %v3364 = vmul.f32 %v3196, %v3231
      %v3365 = vmul.f32 %v3197, %v3236
      %v3366 = vmul.f32 %v3198, %v3241
      %v3367 = vmul.f32 %v3199, %v3246
      %v3368 = vmul.f32 %v3200, %v3251
      %v3369 = vmul.f32 %v3201, %v3256
      %v3370 = vmul.f32 %v3202, %v3261
      %v3371 = vmul.f32 %v3203, %v3266
      %v3372 = vmul.f32 %v3204, %v3271
      %v3373 = vmul.f32 %v3205, %v3276
      %v3374 = vmul.f32 %v3206, %v3281
      %v3375 = vmul.f32 %v3207, %v3286
      %v3376 = vmul.f32 %v3208, %v3291
      %v3377 = vmul.f32 %v3209, %v3296
      %v3378 = vmul.f32 %v3210, %v3301
      %v3379 = vmul.f32 %v3211, %v3306
      %v3380 = vmul.f32 %v3212, %v3311
      %v3381 = vmul.f32 %v3213, %v3316
      %v3382 = vmul.f32 %v3214, %v3321
      %v3383 = vmul.f32 %v3215, %v3326
      %v3384 = vmul.f32 %v3216, %v3331
      %v3385 = vmul.f32 %v3217, %v3336
      %v3386 = vmul.f32 %v3218, %v3341
      %v3387 = vmul.f32 %v3219, %v3346
      %v3388 = vmul.f32 %v3220, %v3351
      %v3389 = vmul.f32 %v3221, %v3356
      %v3390 = vmul.f32 %v3222, %v3361
      %3391 = vst [vmem:[#allocation3 + $0x18] sm:$0xff] %v3363
      %3392 = vst [vmem:[#allocation3 + $0x20] sm:$0xff] %v3364
      %3393 = vst [vmem:[#allocation3 + $0x28] sm:$0xff] %v3365
      %3394 = vst [vmem:[#allocation3 + $0x30] sm:$0xff] %v3366
      %3395 = vst [vmem:[#allocation3 + $0x38] sm:$0xff] %v3367
      %3396 = vst [vmem:[#allocation3 + $0x40] sm:$0xff] %v3368
      %3397 = vst [vmem:[#allocation3 + $0x48] sm:$0xff] %v3369
      %3398 = vst [vmem:[#allocation3 + $0x50] sm:$0xff] %v3370
      %3399 = vst [vmem:[#allocation3 + $0x58] sm:$0xff] %v3371
      %3400 = vst [vmem:[#allocation3 + $0x60] sm:$0xff] %v3372
      %3401 = vst [vmem:[#allocation3 + $0x68] sm:$0xff] %v3373
      %3402 = vst [vmem:[#allocation3 + $0x70] sm:$0xff] %v3374
      %3403 = vst [vmem:[#allocation3 + $0x78] sm:$0xff] %v3375
      %3404 = vst [vmem:[#allocation3 + $0x80] sm:$0xff] %v3376
      %3405 = vst [vmem:[#allocation3 + $0x88] sm:$0xff] %v3377
      %3406 = vst [vmem:[#allocation3 + $0x90] sm:$0xff] %v3378
      %3407 = vst [vmem:[#allocation3 + $0x98] sm:$0xff] %v3379
      %3408 = vst [vmem:[#allocation3 + $0xa0] sm:$0xff] %v3380
      %3409 = vst [vmem:[#allocation3 + $0xa8] sm:$0xff] %v3381
      %3410 = vst [vmem:[#allocation3 + $0xb0] sm:$0xff] %v3382
      %3411 = vst [vmem:[#allocation3 + $0xb8] sm:$0xff] %v3383
      %3412 = vst [vmem:[#allocation3 + $0xc0] sm:$0xff] %v3384
      %3413 = vst [vmem:[#allocation3 + $0xc8] sm:$0xff] %v3385
      %3414 = vst [vmem:[#allocation3 + $0xd0] sm:$0xff] %v3386
      %3415 = vst [vmem:[#allocation3 + $0xd8] sm:$0xff] %v3387
      %3416 = vst [vmem:[#allocation3 + $0xe0] sm:$0xff] %v3388
      %3417 = vst [vmem:[#allocation3 + $0xe8] sm:$0xff] %v3389
      %3418 = vst [vmem:[#allocation3 + $0xf0] sm:$0xff] %v3390
      %v3419 = vld [vmem:[#allocation3 + $0x7] sm:$0xff]
      %v3420 = vld [vmem:[#allocation3 + $0xf] sm:$0xff]
      %v3421 = vld [vmem:[#allocation3 + $0x17] sm:$0xff]
      %v3422 = vld [vmem:[#allocation3 + $0x1f] sm:$0xff]
      %v3423 = vld [vmem:[#allocation3 + $0x27] sm:$0xff]
      %v3424 = vld [vmem:[#allocation3 + $0x2f] sm:$0xff]
      %v3425 = vld [vmem:[#allocation3 + $0x37] sm:$0xff]
      %v3426 = vld [vmem:[#allocation3 + $0x3f] sm:$0xff]
      %v3427 = vld [vmem:[#allocation3 + $0x47] sm:$0xff]
      %v3428 = vld [vmem:[#allocation3 + $0x4f] sm:$0xff]
      %v3429 = vld [vmem:[#allocation3 + $0x57] sm:$0xff]
      %v3430 = vld [vmem:[#allocation3 + $0x5f] sm:$0xff]
      %v3431 = vld [vmem:[#allocation3 + $0x67] sm:$0xff]
      %v3432 = vld [vmem:[#allocation3 + $0x6f] sm:$0xff]
      %v3433 = vld [vmem:[#allocation3 + $0x77] sm:$0xff]
      %v3434 = vld [vmem:[#allocation3 + $0x7f] sm:$0xff]
      %v3435 = vld [vmem:[#allocation3 + $0x87] sm:$0xff]
      %v3436 = vld [vmem:[#allocation3 + $0x8f] sm:$0xff]
      %v3437 = vld [vmem:[#allocation3 + $0x97] sm:$0xff]
      %v3438 = vld [vmem:[#allocation3 + $0x9f] sm:$0xff]
      %v3439 = vld [vmem:[#allocation3 + $0xa7] sm:$0xff]
      %v3440 = vld [vmem:[#allocation3 + $0xaf] sm:$0xff]
      %v3441 = vld [vmem:[#allocation3 + $0xb7] sm:$0xff]
      %v3442 = vld [vmem:[#allocation3 + $0xbf] sm:$0xff]
      %v3443 = vld [vmem:[#allocation3 + $0xc7] sm:$0xff]
      %v3444 = vld [vmem:[#allocation3 + $0xcf] sm:$0xff]
      %v3445 = vld [vmem:[#allocation3 + $0xd7] sm:$0xff]
      %v3446 = vld [vmem:[#allocation3 + $0xdf] sm:$0xff]
      %v3447 = vpack.c.bf16 %v3420, %v3419
      %v3448 = vpack.c.bf16 %v3422, %v3421
      %v3449 = vpack.c.bf16 %v3424, %v3423
      %v3450 = vpack.c.bf16 %v3426, %v3425
      %v3451 = vpack.c.bf16 %v3428, %v3427
      %v3452 = vpack.c.bf16 %v3430, %v3429
      %v3453 = vpack.c.bf16 %v3432, %v3431
      %v3454 = vpack.c.bf16 %v3434, %v3433
      %v3455 = vpack.c.bf16 %v3436, %v3435
      %v3456 = vpack.c.bf16 %v3438, %v3437
      %v3457 = vpack.c.bf16 %v3440, %v3439
      %v3458 = vpack.c.bf16 %v3442, %v3441
      %v3459 = vpack.c.bf16 %v3444, %v3443
      %v3460 = vpack.c.bf16 %v3446, %v3445
      %v3461 = vld [vmem:[%s4] sm:$0xf]
      %v3462 = vld [vmem:[%s4 + $0x4] sm:$0xf]
      %v3463 = vld [vmem:[%s4 + $0x8] sm:$0xf]
      %v3464 = vld [vmem:[%s4 + $0xc] sm:$0xf]
      %v3465 = vld [vmem:[%s4 + $0x10] sm:$0xf]
      %v3466 = vld [vmem:[%s4 + $0x14] sm:$0xf]
      %v3467 = vld [vmem:[%s4 + $0x18] sm:$0xf]
      %v3468 = vld [vmem:[%s4 + $0x1c] sm:$0xf]
      %v3469 = vld [vmem:[%s4 + $0x20] sm:$0xf]
      %v3470 = vld [vmem:[%s4 + $0x24] sm:$0xf]
      %v3471 = vld [vmem:[%s4 + $0x28] sm:$0xf]
      %v3472 = vld [vmem:[%s4 + $0x2c] sm:$0xf]
      %v3473 = vld [vmem:[%s4 + $0x30] sm:$0xf]
      %v3474 = vld [vmem:[%s4 + $0x34] sm:$0xf]
      %v3475 = vld [vmem:[%s4 + $0x38] sm:$0xf]
      %v3476 = vld [vmem:[%s4 + $0x3c] sm:$0xf]
      %v3477 = vld [vmem:[#allocation3 + $0x8] sm:$0xff]
      %v3478 = vld [vmem:[#allocation3 + $0x10] sm:$0xff]
      %v3479 = vld [vmem:[#allocation3 + $0x18] sm:$0xff]
      %v3480 = vld [vmem:[#allocation3 + $0x20] sm:$0xff]
      %v3481 = vld [vmem:[#allocation3 + $0x28] sm:$0xff]
      %v3482 = vld [vmem:[#allocation3 + $0x30] sm:$0xff]
      %v3483 = vld [vmem:[#allocation3 + $0x38] sm:$0xff]
      %v3484 = vld [vmem:[#allocation3 + $0x40] sm:$0xff]
      %v3485 = vld [vmem:[#allocation3 + $0x48] sm:$0xff]
      %v3486 = vld [vmem:[#allocation3 + $0x50] sm:$0xff]
      %v3487 = vld [vmem:[#allocation3 + $0x58] sm:$0xff]
      %v3488 = vld [vmem:[#allocation3 + $0x60] sm:$0xff]
      %v3489 = vld [vmem:[#allocation3 + $0x68] sm:$0xff]
      %v3490 = vld [vmem:[#allocation3 + $0x70] sm:$0xff]
      %v3491 = vld [vmem:[#allocation3 + $0x78] sm:$0xff]
      %v3492 = vld [vmem:[#allocation3 + $0x80] sm:$0xff]
      %v3493 = vld [vmem:[#allocation3 + $0x88] sm:$0xff]
      %v3494 = vld [vmem:[#allocation3 + $0x90] sm:$0xff]
      %v3495 = vld [vmem:[#allocation3 + $0x98] sm:$0xff]
      %v3496 = vld [vmem:[#allocation3 + $0xa0] sm:$0xff]
      %v3497 = vld [vmem:[#allocation3 + $0xa8] sm:$0xff]
      %v3498 = vld [vmem:[#allocation3 + $0xb0] sm:$0xff]
      %v3499 = vld [vmem:[#allocation3 + $0xb8] sm:$0xff]
      %v3500 = vld [vmem:[#allocation3 + $0xc0] sm:$0xff]
      %v3501 = vld [vmem:[#allocation3 + $0xc8] sm:$0xff]
      %v3502 = vld [vmem:[#allocation3 + $0xd0] sm:$0xff]
      %v3503 = vld [vmem:[#allocation3 + $0xd8] sm:$0xff]
      %v3504 = vld [vmem:[#allocation3 + $0xe0] sm:$0xff]
      %v3505 = vpack.c.bf16 %v3478, %v3477
      %v3506 = vpack.c.bf16 %v3480, %v3479
      %v3507 = vpack.c.bf16 %v3482, %v3481
      %v3508 = vpack.c.bf16 %v3484, %v3483
      %v3509 = vpack.c.bf16 %v3486, %v3485
      %v3510 = vpack.c.bf16 %v3488, %v3487
      %v3511 = vpack.c.bf16 %v3490, %v3489
      %v3512 = vpack.c.bf16 %v3492, %v3491
      %v3513 = vpack.c.bf16 %v3494, %v3493
      %v3514 = vpack.c.bf16 %v3496, %v3495
      %v3515 = vpack.c.bf16 %v3498, %v3497
      %v3516 = vpack.c.bf16 %v3500, %v3499
      %v3517 = vpack.c.bf16 %v3502, %v3501
      %v3518 = vpack.c.bf16 %v3504, %v3503
      %s3519 = scalar_lea.vmem %s4, 64
      %v3520 = vld [vmem:[%s3519] sm:$0xf]
      %v3521 = vld [vmem:[%s3519 + $0x4] sm:$0xf]
      %v3522 = vld [vmem:[%s3519 + $0x8] sm:$0xf]
      %v3523 = vld [vmem:[%s3519 + $0xc] sm:$0xf]
      %v3524 = vld [vmem:[%s3519 + $0x10] sm:$0xf]
      %v3525 = vld [vmem:[%s3519 + $0x14] sm:$0xf]
      %v3526 = vld [vmem:[%s3519 + $0x18] sm:$0xf]
      %v3527 = vld [vmem:[%s3519 + $0x1c] sm:$0xf]
      %v3528 = vld [vmem:[%s3519 + $0x20] sm:$0xf]
      %v3529 = vld [vmem:[%s3519 + $0x24] sm:$0xf]
      %v3530 = vld [vmem:[%s3519 + $0x28] sm:$0xf]
      %v3531 = vld [vmem:[%s3519 + $0x2c] sm:$0xf]
      %v3532 = vld [vmem:[%s3519 + $0x30] sm:$0xf]
      %v3533 = vld [vmem:[%s3519 + $0x34] sm:$0xf]
      %v3534 = vld [vmem:[%s3519 + $0x38] sm:$0xf]
      %v3535 = vld [vmem:[%s3519 + $0x3c] sm:$0xf]
      %v3552 = vunpack.c.l.b16 %v3520
      %v3553 = vunpack.c.l.b16 %v3521
      %v3554 = vunpack.c.l.b16 %v3522
      %v3555 = vunpack.c.l.b16 %v3523
      %v3556 = vunpack.c.l.b16 %v3524
      %v3557 = vunpack.c.l.b16 %v3525
      %v3558 = vunpack.c.l.b16 %v3526
      %v3559 = vunpack.c.l.b16 %v3527
      %v3560 = vunpack.c.l.b16 %v3528
      %v3561 = vunpack.c.l.b16 %v3529
      %v3562 = vunpack.c.l.b16 %v3530
      %v3563 = vunpack.c.l.b16 %v3531
      %v3564 = vunpack.c.l.b16 %v3532
      %v3565 = vunpack.c.l.b16 %v3533
      %v3566 = vunpack.c.l.b16 %v3534
      %v3567 = vunpack.c.l.b16 %v3535
      %v3568 = vpack.c.b16 %v3553, %v3552
      %v3569 = vpack.c.b16 %v3555, %v3554
      %v3570 = vpack.c.b16 %v3557, %v3556
      %v3571 = vpack.c.b16 %v3559, %v3558
      %v3572 = vpack.c.b16 %v3561, %v3560
      %v3573 = vpack.c.b16 %v3563, %v3562
      %v3574 = vpack.c.b16 %v3565, %v3564
      %v3575 = vpack.c.b16 %v3567, %v3566
      %3584 = vmatprep.subr.bf16.mxu0 0
      %3585 = vmatpush1.bf16.msra.mxu0 %v3568
      %3586 = vmatprep.subr.bf16.mxu0 0
      %3587 = vmatpush1.bf16.msra.mxu0 %v3569
      %3588 = vmatprep.subr.bf16.mxu0 0
      %3589 = vmatpush1.bf16.msra.mxu0 %v3570
      %3590 = vmatprep.subr.bf16.mxu0 0
      %3591 = vmatpush1.bf16.msra.mxu0 %v3571
      %3592 = vmatprep.subr.bf16.mxu0 0
      %3593 = vmatpush1.bf16.msra.mxu0 %v3572
      %3594 = vmatprep.subr.bf16.mxu0 0
      %3595 = vmatpush1.bf16.msra.mxu0 %v3573
      %3596 = vmatprep.subr.bf16.mxu0 0
      %3597 = vmatpush1.bf16.msra.mxu0 %v3574
      %3598 = vmatprep.subr.bf16.mxu0 0
      %3599 = vmatpush1.bf16.msra.mxu0 %v3575
      %3600 = vmatprep.subr.bf16.mxu0 0
      %3601 = vmatpush1.bf16.msra.mxu0 0
      %3602 = vmatprep.subr.bf16.mxu0 0
      %3603 = vmatpush1.bf16.msra.mxu0 0
      %3604 = vmatprep.subr.bf16.mxu0 0
      %3605 = vmatpush1.bf16.msra.mxu0 0
      %3606 = vmatprep.subr.bf16.mxu0 0
      %3607 = vmatpush1.bf16.msra.mxu0 0
      %3608 = vmatprep.subr.bf16.mxu0 0
      %3609 = vmatpush1.bf16.msra.mxu0 0
      %3610 = vmatprep.subr.bf16.mxu0 0
      %3611 = vmatpush1.bf16.msra.mxu0 0
      %3612 = vmatprep.subr.bf16.mxu0 0
      %3613 = vmatpush1.bf16.msra.mxu0 0
      %3614 = vmatprep.subr.bf16.mxu0 0
      %3615 = vmatpush1.bf16.msra.mxu0 0
      %3616 = vmatprep.mubr.bf16.mxu0 0
      %3617 = vmatmul.mubr.bf16.gmra.mrb[0].mxu0 %v3505
      %v3618 = vpop.f32.mrb[0].mxu0
      %v3619 = vadd.f32 0.0, %v3618
      %v3620 = vpop.f32.mrb[0].mxu0
      %v3621 = vpop.f32.mrb[0].mxu0
      %v3622 = vadd.f32 0.0, %v3621
      %v3623 = vpop.f32.mrb[0].mxu0
      %3624 = vmatprep.mubr.bf16.mxu0 0
      %3625 = vmatmul.mubr.bf16.gmra.mrb[0].mxu0 %v3506
      %v3626 = vpop.f32.mrb[0].mxu0
      %v3627 = vadd.f32 0.0, %v3626
      %v3628 = vpop.f32.mrb[0].mxu0
      %v3629 = vpop.f32.mrb[0].mxu0
      %v3630 = vadd.f32 0.0, %v3629
      %v3631 = vpop.f32.mrb[0].mxu0
      %3632 = vmatprep.mubr.bf16.mxu0 0
      %3633 = vmatmul.mubr.bf16.gmra.mrb[0].mxu0 %v3507
      %v3634 = vpop.f32.mrb[0].mxu0
      %v3635 = vadd.f32 0.0, %v3634
      %v3636 = vpop.f32.mrb[0].mxu0
      %v3637 = vpop.f32.mrb[0].mxu0
      %v3638 = vadd.f32 0.0, %v3637
      %v3639 = vpop.f32.mrb[0].mxu0
      %3640 = vmatprep.mubr.bf16.mxu0 0
      %3641 = vmatmul.mubr.bf16.gmra.mrb[0].mxu0 %v3508
      %v3642 = vpop.f32.mrb[0].mxu0
      %v3643 = vadd.f32 0.0, %v3642
      %v3644 = vpop.f32.mrb[0].mxu0
      %v3645 = vpop.f32.mrb[0].mxu0
      %v3646 = vadd.f32 0.0, %v3645
      %v3647 = vpop.f32.mrb[0].mxu0
      %3648 = vmatprep.mubr.bf16.mxu0 0
      %3649 = vmatmul.mubr.bf16.gmra.mrb[0].mxu0 %v3509
      %v3650 = vpop.f32.mrb[0].mxu0
      %v3651 = vadd.f32 0.0, %v3650
      %v3652 = vpop.f32.mrb[0].mxu0
      %v3653 = vpop.f32.mrb[0].mxu0
      %v3654 = vadd.f32 0.0, %v3653
      %v3655 = vpop.f32.mrb[0].mxu0
      %3656 = vmatprep.mubr.bf16.mxu0 0
      %3657 = vmatmul.mubr.bf16.gmra.mrb[0].mxu0 %v3510
      %v3658 = vpop.f32.mrb[0].mxu0
      %v3659 = vadd.f32 0.0, %v3658
      %v3660 = vpop.f32.mrb[0].mxu0
      %v3661 = vpop.f32.mrb[0].mxu0
      %v3662 = vadd.f32 0.0, %v3661
      %v3663 = vpop.f32.mrb[0].mxu0
      %3664 = vmatprep.mubr.bf16.mxu0 0
      %3665 = vmatmul.mubr.bf16.gmra.mrb[0].mxu0 %v3511
      %v3666 = vpop.f32.mrb[0].mxu0
      %v3667 = vadd.f32 0.0, %v3666
      %v3668 = vpop.f32.mrb[0].mxu0
      %v3669 = vpop.f32.mrb[0].mxu0
      %v3670 = vadd.f32 0.0, %v3669
      %v3671 = vpop.f32.mrb[0].mxu0
      %3672 = vmatprep.mubr.bf16.mxu0 0
      %3673 = vmatmul.mubr.bf16.gmra.mrb[0].mxu0 %v3512
      %v3674 = vpop.f32.mrb[0].mxu0
      %v3675 = vadd.f32 0.0, %v3674
      %v3676 = vpop.f32.mrb[0].mxu0
      %v3677 = vpop.f32.mrb[0].mxu0
      %v3678 = vadd.f32 0.0, %v3677
      %v3679 = vpop.f32.mrb[0].mxu0
      %3680 = vmatprep.mubr.bf16.mxu0 0
      %3681 = vmatmul.mubr.bf16.gmra.mrb[0].mxu0 %v3513
      %v3682 = vpop.f32.mrb[0].mxu0
      %v3683 = vadd.f32 0.0, %v3682
      %v3684 = vpop.f32.mrb[0].mxu0
      %v3685 = vpop.f32.mrb[0].mxu0
      %v3686 = vadd.f32 0.0, %v3685
      %v3687 = vpop.f32.mrb[0].mxu0
      %3688 = vmatprep.mubr.bf16.mxu0 0
      %3689 = vmatmul.mubr.bf16.gmra.mrb[0].mxu0 %v3514
      %v3690 = vpop.f32.mrb[0].mxu0
      %v3691 = vadd.f32 0.0, %v3690
      %v3692 = vpop.f32.mrb[0].mxu0
      %v3693 = vpop.f32.mrb[0].mxu0
      %v3694 = vadd.f32 0.0, %v3693
      %v3695 = vpop.f32.mrb[0].mxu0
      %3696 = vmatprep.mubr.bf16.mxu0 0
      %3697 = vmatmul.mubr.bf16.gmra.mrb[0].mxu0 %v3515
      %v3698 = vpop.f32.mrb[0].mxu0
      %v3699 = vadd.f32 0.0, %v3698
      %v3700 = vpop.f32.mrb[0].mxu0
      %v3701 = vpop.f32.mrb[0].mxu0
      %v3702 = vadd.f32 0.0, %v3701
      %v3703 = vpop.f32.mrb[0].mxu0
      %3704 = vmatprep.mubr.bf16.mxu0 0
      %3705 = vmatmul.mubr.bf16.gmra.mrb[0].mxu0 %v3516
      %v3706 = vpop.f32.mrb[0].mxu0
      %v3707 = vadd.f32 0.0, %v3706
      %v3708 = vpop.f32.mrb[0].mxu0
      %v3709 = vpop.f32.mrb[0].mxu0
      %v3710 = vadd.f32 0.0, %v3709
      %v3711 = vpop.f32.mrb[0].mxu0
      %3712 = vmatprep.mubr.bf16.mxu0 0
      %3713 = vmatmul.mubr.bf16.gmra.mrb[0].mxu0 %v3517
      %v3714 = vpop.f32.mrb[0].mxu0
      %v3715 = vadd.f32 0.0, %v3714
      %v3716 = vpop.f32.mrb[0].mxu0
      %v3717 = vpop.f32.mrb[0].mxu0
      %v3718 = vadd.f32 0.0, %v3717
      %v3719 = vpop.f32.mrb[0].mxu0
      %3720 = vmatprep.mubr.bf16.mxu0 0
      %3721 = vmatmul.mubr.bf16.gmra.mrb[0].mxu0 %v3518
      %v3722 = vpop.f32.mrb[0].mxu0
      %v3723 = vadd.f32 0.0, %v3722
      %v3724 = vpop.f32.mrb[0].mxu0
      %v3725 = vpop.f32.mrb[0].mxu0
      %v3726 = vadd.f32 0.0, %v3725
      %v3727 = vpop.f32.mrb[0].mxu0
      %3728 = vdwg.mxu0
      %v3745 = vunpack.c.l.b16 %v3461
      %v3746 = vunpack.c.l.b16 %v3462
      %v3747 = vunpack.c.l.b16 %v3463
      %v3748 = vunpack.c.l.b16 %v3464
      %v3749 = vunpack.c.l.b16 %v3465
      %v3750 = vunpack.c.l.b16 %v3466
      %v3751 = vunpack.c.l.b16 %v3467
      %v3752 = vunpack.c.l.b16 %v3468
      %v3753 = vunpack.c.l.b16 %v3469
      %v3754 = vunpack.c.l.b16 %v3470
      %v3755 = vunpack.c.l.b16 %v3471
      %v3756 = vunpack.c.l.b16 %v3472
      %v3757 = vunpack.c.l.b16 %v3473
      %v3758 = vunpack.c.l.b16 %v3474
      %v3759 = vunpack.c.l.b16 %v3475
      %v3760 = vunpack.c.l.b16 %v3476
      %v3761 = vpack.c.b16 %v3746, %v3745
      %v3762 = vpack.c.b16 %v3748, %v3747
      %v3763 = vpack.c.b16 %v3750, %v3749
      %v3764 = vpack.c.b16 %v3752, %v3751
      %v3765 = vpack.c.b16 %v3754, %v3753
      %v3766 = vpack.c.b16 %v3756, %v3755
      %v3767 = vpack.c.b16 %v3758, %v3757
      %v3768 = vpack.c.b16 %v3760, %v3759
      %3777 = vmatprep.subr.bf16.mxu0 0
      %3778 = vmatpush1.bf16.msra.mxu0 %v3761
      %3779 = vmatprep.subr.bf16.mxu0 0
      %3780 = vmatpush1.bf16.msra.mxu0 %v3762
      %3781 = vmatprep.subr.bf16.mxu0 0
      %3782 = vmatpush1.bf16.msra.mxu0 %v3763
      %3783 = vmatprep.subr.bf16.mxu0 0
      %3784 = vmatpush1.bf16.msra.mxu0 %v3764
      %3785 = vmatprep.subr.bf16.mxu0 0
      %3786 = vmatpush1.bf16.msra.mxu0 %v3765
      %3787 = vmatprep.subr.bf16.mxu0 0
      %3788 = vmatpush1.bf16.msra.mxu0 %v3766
      %3789 = vmatprep.subr.bf16.mxu0 0
      %3790 = vmatpush1.bf16.msra.mxu0 %v3767
      %3791 = vmatprep.subr.bf16.mxu0 0
      %3792 = vmatpush1.bf16.msra.mxu0 %v3768
      %3793 = vmatprep.subr.bf16.mxu0 0
      %3794 = vmatpush1.bf16.msra.mxu0 0
      %3795 = vmatprep.subr.bf16.mxu0 0
      %3796 = vmatpush1.bf16.msra.mxu0 0
      %3797 = vmatprep.subr.bf16.mxu0 0
      %3798 = vmatpush1.bf16.msra.mxu0 0
      %3799 = vmatprep.subr.bf16.mxu0 0
      %3800 = vmatpush1.bf16.msra.mxu0 0
      %3801 = vmatprep.subr.bf16.mxu0 0
      %3802 = vmatpush1.bf16.msra.mxu0 0
      %3803 = vmatprep.subr.bf16.mxu0 0
      %3804 = vmatpush1.bf16.msra.mxu0 0
      %3805 = vmatprep.subr.bf16.mxu0 0
      %3806 = vmatpush1.bf16.msra.mxu0 0
      %3807 = vmatprep.subr.bf16.mxu0 0
      %3808 = vmatpush1.bf16.msra.mxu0 0
      %3809 = vmatprep.mubr.bf16.mxu0 0
      %3810 = vmatmul.mubr.bf16.gmra.mrb[0].mxu0 %v3447
      %v3811 = vpop.f32.mrb[0].mxu0
      %v3812 = vadd.f32 %v3619, %v3811
      %v3813 = vpop.f32.mrb[0].mxu0
      %v3814 = vpop.f32.mrb[0].mxu0
      %v3815 = vadd.f32 %v3622, %v3814
      %v3816 = vpop.f32.mrb[0].mxu0
      %3817 = vmatprep.mubr.bf16.mxu0 0
      %3818 = vmatmul.mubr.bf16.gmra.mrb[0].mxu0 %v3448
      %v3819 = vpop.f32.mrb[0].mxu0
      %v3820 = vadd.f32 %v3627, %v3819
      %v3821 = vpop.f32.mrb[0].mxu0
      %v3822 = vpop.f32.mrb[0].mxu0
      %v3823 = vadd.f32 %v3630, %v3822
      %v3824 = vpop.f32.mrb[0].mxu0
      %3825 = vmatprep.mubr.bf16.mxu0 0
      %3826 = vmatmul.mubr.bf16.gmra.mrb[0].mxu0 %v3449
      %v3827 = vpop.f32.mrb[0].mxu0
      %v3828 = vadd.f32 %v3635, %v3827
      %v3829 = vpop.f32.mrb[0].mxu0
      %v3830 = vpop.f32.mrb[0].mxu0
      %v3831 = vadd.f32 %v3638, %v3830
      %v3832 = vpop.f32.mrb[0].mxu0
      %3833 = vmatprep.mubr.bf16.mxu0 0
      %3834 = vmatmul.mubr.bf16.gmra.mrb[0].mxu0 %v3450
      %v3835 = vpop.f32.mrb[0].mxu0
      %v3836 = vadd.f32 %v3643, %v3835
      %v3837 = vpop.f32.mrb[0].mxu0
      %v3838 = vpop.f32.mrb[0].mxu0
      %v3839 = vadd.f32 %v3646, %v3838
      %v3840 = vpop.f32.mrb[0].mxu0
      %3841 = vmatprep.mubr.bf16.mxu0 0
      %3842 = vmatmul.mubr.bf16.gmra.mrb[0].mxu0 %v3451
      %v3843 = vpop.f32.mrb[0].mxu0
      %v3844 = vadd.f32 %v3651, %v3843
      %v3845 = vpop.f32.mrb[0].mxu0
      %v3846 = vpop.f32.mrb[0].mxu0
      %v3847 = vadd.f32 %v3654, %v3846
      %v3848 = vpop.f32.mrb[0].mxu0
      %3849 = vmatprep.mubr.bf16.mxu0 0
      %3850 = vmatmul.mubr.bf16.gmra.mrb[0].mxu0 %v3452
      %v3851 = vpop.f32.mrb[0].mxu0
      %v3852 = vadd.f32 %v3659, %v3851
      %v3853 = vpop.f32.mrb[0].mxu0
      %v3854 = vpop.f32.mrb[0].mxu0
      %v3855 = vadd.f32 %v3662, %v3854
      %v3856 = vpop.f32.mrb[0].mxu0
      %3857 = vmatprep.mubr.bf16.mxu0 0
      %3858 = vmatmul.mubr.bf16.gmra.mrb[0].mxu0 %v3453
      %v3859 = vpop.f32.mrb[0].mxu0
      %v3860 = vadd.f32 %v3667, %v3859
      %v3861 = vpop.f32.mrb[0].mxu0
      %v3862 = vpop.f32.mrb[0].mxu0
      %v3863 = vadd.f32 %v3670, %v3862
      %v3864 = vpop.f32.mrb[0].mxu0
      %3865 = vmatprep.mubr.bf16.mxu0 0
      %3866 = vmatmul.mubr.bf16.gmra.mrb[0].mxu0 %v3454
      %v3867 = vpop.f32.mrb[0].mxu0
      %v3868 = vadd.f32 %v3675, %v3867
      %v3869 = vpop.f32.mrb[0].mxu0
      %v3870 = vpop.f32.mrb[0].mxu0
      %v3871 = vadd.f32 %v3678, %v3870
      %v3872 = vpop.f32.mrb[0].mxu0
      %3873 = vmatprep.mubr.bf16.mxu0 0
      %3874 = vmatmul.mubr.bf16.gmra.mrb[0].mxu0 %v3455
      %v3875 = vpop.f32.mrb[0].mxu0
      %v3876 = vadd.f32 %v3683, %v3875
      %v3877 = vpop.f32.mrb[0].mxu0
      %v3878 = vpop.f32.mrb[0].mxu0
      %v3879 = vadd.f32 %v3686, %v3878
      %v3880 = vpop.f32.mrb[0].mxu0
      %3881 = vmatprep.mubr.bf16.mxu0 0
      %3882 = vmatmul.mubr.bf16.gmra.mrb[0].mxu0 %v3456
      %v3883 = vpop.f32.mrb[0].mxu0
      %v3884 = vadd.f32 %v3691, %v3883
      %v3885 = vpop.f32.mrb[0].mxu0
      %v3886 = vpop.f32.mrb[0].mxu0
      %v3887 = vadd.f32 %v3694, %v3886
      %v3888 = vpop.f32.mrb[0].mxu0
      %3889 = vmatprep.mubr.bf16.mxu0 0
      %3890 = vmatmul.mubr.bf16.gmra.mrb[0].mxu0 %v3457
      %v3891 = vpop.f32.mrb[0].mxu0
      %v3892 = vadd.f32 %v3699, %v3891
      %v3893 = vpop.f32.mrb[0].mxu0
      %v3894 = vpop.f32.mrb[0].mxu0
      %v3895 = vadd.f32 %v3702, %v3894
      %v3896 = vpop.f32.mrb[0].mxu0
      %3897 = vmatprep.mubr.bf16.mxu0 0
      %3898 = vmatmul.mubr.bf16.gmra.mrb[0].mxu0 %v3458
      %v3899 = vpop.f32.mrb[0].mxu0
      %v3900 = vadd.f32 %v3707, %v3899
      %v3901 = vpop.f32.mrb[0].mxu0
      %v3902 = vpop.f32.mrb[0].mxu0
      %v3903 = vadd.f32 %v3710, %v3902
      %v3904 = vpop.f32.mrb[0].mxu0
      %3905 = vmatprep.mubr.bf16.mxu0 0
      %3906 = vmatmul.mubr.bf16.gmra.mrb[0].mxu0 %v3459
      %v3907 = vpop.f32.mrb[0].mxu0
      %v3908 = vadd.f32 %v3715, %v3907
      %v3909 = vpop.f32.mrb[0].mxu0
      %v3910 = vpop.f32.mrb[0].mxu0
      %v3911 = vadd.f32 %v3718, %v3910
      %v3912 = vpop.f32.mrb[0].mxu0
      %3913 = vmatprep.mubr.bf16.mxu0 0
      %3914 = vmatmul.mubr.bf16.gmra.mrb[0].mxu0 %v3460
      %v3915 = vpop.f32.mrb[0].mxu0
      %v3916 = vadd.f32 %v3723, %v3915
      %v3917 = vpop.f32.mrb[0].mxu0
      %v3918 = vpop.f32.mrb[0].mxu0
      %v3919 = vadd.f32 %v3726, %v3918
      %v3920 = vpop.f32.mrb[0].mxu0
      %3921 = vdwg.mxu0
      %v3922 = vld [vmem:[#allocation3 + $0x9] sm:$0xff]
      %v3923 = vld [vmem:[#allocation3 + $0x11] sm:$0xff]
      %v3924 = vld [vmem:[#allocation3 + $0x19] sm:$0xff]
      %v3925 = vld [vmem:[#allocation3 + $0x21] sm:$0xff]
      %v3926 = vld [vmem:[#allocation3 + $0x29] sm:$0xff]
      %v3927 = vld [vmem:[#allocation3 + $0x31] sm:$0xff]
      %v3928 = vld [vmem:[#allocation3 + $0x39] sm:$0xff]
      %v3929 = vld [vmem:[#allocation3 + $0x41] sm:$0xff]
      %v3930 = vld [vmem:[#allocation3 + $0x49] sm:$0xff]
      %v3931 = vld [vmem:[#allocation3 + $0x51] sm:$0xff]
      %v3932 = vld [vmem:[#allocation3 + $0x59] sm:$0xff]
      %v3933 = vld [vmem:[#allocation3 + $0x61] sm:$0xff]
      %v3934 = vld [vmem:[#allocation3 + $0x69] sm:$0xff]
      %v3935 = vld [vmem:[#allocation3 + $0x71] sm:$0xff]
      %v3936 = vld [vmem:[#allocation3 + $0x79] sm:$0xff]
      %v3937 = vld [vmem:[#allocation3 + $0x81] sm:$0xff]
      %v3938 = vld [vmem:[#allocation3 + $0x89] sm:$0xff]
      %v3939 = vld [vmem:[#allocation3 + $0x91] sm:$0xff]
      %v3940 = vld [vmem:[#allocation3 + $0x99] sm:$0xff]
      %v3941 = vld [vmem:[#allocation3 + $0xa1] sm:$0xff]
      %v3942 = vld [vmem:[#allocation3 + $0xa9] sm:$0xff]
      %v3943 = vld [vmem:[#allocation3 + $0xb1] sm:$0xff]
      %v3944 = vld [vmem:[#allocation3 + $0xb9] sm:$0xff]
      %v3945 = vld [vmem:[#allocation3 + $0xc1] sm:$0xff]
      %v3946 = vld [vmem:[#allocation3 + $0xc9] sm:$0xff]
      %v3947 = vld [vmem:[#allocation3 + $0xd1] sm:$0xff]
      %v3948 = vld [vmem:[#allocation3 + $0xd9] sm:$0xff]
      %v3949 = vld [vmem:[#allocation3 + $0xe1] sm:$0xff]
      %v3950 = vpack.c.bf16 %v3923, %v3922
      %v3951 = vpack.c.bf16 %v3925, %v3924
      %v3952 = vpack.c.bf16 %v3927, %v3926
      %v3953 = vpack.c.bf16 %v3929, %v3928
      %v3954 = vpack.c.bf16 %v3931, %v3930
      %v3955 = vpack.c.bf16 %v3933, %v3932
      %v3956 = vpack.c.bf16 %v3935, %v3934
      %v3957 = vpack.c.bf16 %v3937, %v3936
      %v3958 = vpack.c.bf16 %v3939, %v3938
      %v3959 = vpack.c.bf16 %v3941, %v3940
      %v3960 = vpack.c.bf16 %v3943, %v3942
      %v3961 = vpack.c.bf16 %v3945, %v3944
      %v3962 = vpack.c.bf16 %v3947, %v3946
      %v3963 = vpack.c.bf16 %v3949, %v3948
      %s3964 = scalar_lea.vmem %s4, 128
      %v3965 = vld [vmem:[%s3964] sm:$0xf]
      %v3966 = vld [vmem:[%s3964 + $0x4] sm:$0xf]
      %v3967 = vld [vmem:[%s3964 + $0x8] sm:$0xf]
      %v3968 = vld [vmem:[%s3964 + $0xc] sm:$0xf]
      %v3969 = vld [vmem:[%s3964 + $0x10] sm:$0xf]
      %v3970 = vld [vmem:[%s3964 + $0x14] sm:$0xf]
      %v3971 = vld [vmem:[%s3964 + $0x18] sm:$0xf]
      %v3972 = vld [vmem:[%s3964 + $0x1c] sm:$0xf]
      %v3973 = vld [vmem:[%s3964 + $0x20] sm:$0xf]
      %v3974 = vld [vmem:[%s3964 + $0x24] sm:$0xf]
      %v3975 = vld [vmem:[%s3964 + $0x28] sm:$0xf]
      %v3976 = vld [vmem:[%s3964 + $0x2c] sm:$0xf]
      %v3977 = vld [vmem:[%s3964 + $0x30] sm:$0xf]
      %v3978 = vld [vmem:[%s3964 + $0x34] sm:$0xf]
      %v3979 = vld [vmem:[%s3964 + $0x38] sm:$0xf]
      %v3980 = vld [vmem:[%s3964 + $0x3c] sm:$0xf]
      %v3997 = vunpack.c.l.b16 %v3965
      %v3998 = vunpack.c.l.b16 %v3966
      %v3999 = vunpack.c.l.b16 %v3967
      %v4000 = vunpack.c.l.b16 %v3968
      %v4001 = vunpack.c.l.b16 %v3969
      %v4002 = vunpack.c.l.b16 %v3970
      %v4003 = vunpack.c.l.b16 %v3971
      %v4004 = vunpack.c.l.b16 %v3972
      %v4005 = vunpack.c.l.b16 %v3973
      %v4006 = vunpack.c.l.b16 %v3974
      %v4007 = vunpack.c.l.b16 %v3975
      %v4008 = vunpack.c.l.b16 %v3976
      %v4009 = vunpack.c.l.b16 %v3977
      %v4010 = vunpack.c.l.b16 %v3978
      %v4011 = vunpack.c.l.b16 %v3979
      %v4012 = vunpack.c.l.b16 %v3980
      %v4013 = vpack.c.b16 %v3998, %v3997
      %v4014 = vpack.c.b16 %v4000, %v3999
      %v4015 = vpack.c.b16 %v4002, %v4001
      %v4016 = vpack.c.b16 %v4004, %v4003
      %v4017 = vpack.c.b16 %v4006, %v4005
      %v4018 = vpack.c.b16 %v4008, %v4007
      %v4019 = vpack.c.b16 %v4010, %v4009
      %v4020 = vpack.c.b16 %v4012, %v4011
      %4029 = vmatprep.subr.bf16.mxu0 0
      %4030 = vmatpush1.bf16.msra.mxu0 %v4013
      %4031 = vmatprep.subr.bf16.mxu0 0
      %4032 = vmatpush1.bf16.msra.mxu0 %v4014
      %4033 = vmatprep.subr.bf16.mxu0 0
      %4034 = vmatpush1.bf16.msra.mxu0 %v4015
      %4035 = vmatprep.subr.bf16.mxu0 0
      %4036 = vmatpush1.bf16.msra.mxu0 %v4016
      %4037 = vmatprep.subr.bf16.mxu0 0
      %4038 = vmatpush1.bf16.msra.mxu0 %v4017
      %4039 = vmatprep.subr.bf16.mxu0 0
      %4040 = vmatpush1.bf16.msra.mxu0 %v4018
      %4041 = vmatprep.subr.bf16.mxu0 0
      %4042 = vmatpush1.bf16.msra.mxu0 %v4019
      %4043 = vmatprep.subr.bf16.mxu0 0
      %4044 = vmatpush1.bf16.msra.mxu0 %v4020
      %4045 = vmatprep.subr.bf16.mxu0 0
      %4046 = vmatpush1.bf16.msra.mxu0 0
      %4047 = vmatprep.subr.bf16.mxu0 0
      %4048 = vmatpush1.bf16.msra.mxu0 0
      %4049 = vmatprep.subr.bf16.mxu0 0
      %4050 = vmatpush1.bf16.msra.mxu0 0
      %4051 = vmatprep.subr.bf16.mxu0 0
      %4052 = vmatpush1.bf16.msra.mxu0 0
      %4053 = vmatprep.subr.bf16.mxu0 0
      %4054 = vmatpush1.bf16.msra.mxu0 0
      %4055 = vmatprep.subr.bf16.mxu0 0
      %4056 = vmatpush1.bf16.msra.mxu0 0
      %4057 = vmatprep.subr.bf16.mxu0 0
      %4058 = vmatpush1.bf16.msra.mxu0 0
      %4059 = vmatprep.subr.bf16.mxu0 0
      %4060 = vmatpush1.bf16.msra.mxu0 0
      %4061 = vmatprep.mubr.bf16.mxu0 0
      %4062 = vmatmul.mubr.bf16.gmra.mrb[0].mxu0 %v3950
      %v4063 = vpop.f32.mrb[0].mxu0
      %v4064 = vadd.f32 0.0, %v4063
      %v4065 = vpop.f32.mrb[0].mxu0
      %v4066 = vpop.f32.mrb[0].mxu0
      %v4067 = vadd.f32 0.0, %v4066
      %v4068 = vpop.f32.mrb[0].mxu0
      %4069 = vmatprep.mubr.bf16.mxu0 0
      %4070 = vmatmul.mubr.bf16.gmra.mrb[0].mxu0 %v3951
      %v4071 = vpop.f32.mrb[0].mxu0
      %v4072 = vadd.f32 0.0, %v4071
      %v4073 = vpop.f32.mrb[0].mxu0
      %v4074 = vpop.f32.mrb[0].mxu0
      %v4075 = vadd.f32 0.0, %v4074
      %v4076 = vpop.f32.mrb[0].mxu0
      %4077 = vmatprep.mubr.bf16.mxu0 0
      %4078 = vmatmul.mubr.bf16.gmra.mrb[0].mxu0 %v3952
      %v4079 = vpop.f32.mrb[0].mxu0
      %v4080 = vadd.f32 0.0, %v4079
      %v4081 = vpop.f32.mrb[0].mxu0
      %v4082 = vpop.f32.mrb[0].mxu0
      %v4083 = vadd.f32 0.0, %v4082
      %v4084 = vpop.f32.mrb[0].mxu0
      %4085 = vmatprep.mubr.bf16.mxu0 0
      %4086 = vmatmul.mubr.bf16.gmra.mrb[0].mxu0 %v3953
      %v4087 = vpop.f32.mrb[0].mxu0
      %v4088 = vadd.f32 0.0, %v4087
      %v4089 = vpop.f32.mrb[0].mxu0
      %v4090 = vpop.f32.mrb[0].mxu0
      %v4091 = vadd.f32 0.0, %v4090
      %v4092 = vpop.f32.mrb[0].mxu0
      %4093 = vmatprep.mubr.bf16.mxu0 0
      %4094 = vmatmul.mubr.bf16.gmra.mrb[0].mxu0 %v3954
      %v4095 = vpop.f32.mrb[0].mxu0
      %v4096 = vadd.f32 0.0, %v4095
      %v4097 = vpop.f32.mrb[0].mxu0
      %v4098 = vpop.f32.mrb[0].mxu0
      %v4099 = vadd.f32 0.0, %v4098
      %v4100 = vpop.f32.mrb[0].mxu0
      %4101 = vmatprep.mubr.bf16.mxu0 0
      %4102 = vmatmul.mubr.bf16.gmra.mrb[0].mxu0 %v3955
      %v4103 = vpop.f32.mrb[0].mxu0
      %v4104 = vadd.f32 0.0, %v4103
      %v4105 = vpop.f32.mrb[0].mxu0
      %v4106 = vpop.f32.mrb[0].mxu0
      %v4107 = vadd.f32 0.0, %v4106
      %v4108 = vpop.f32.mrb[0].mxu0
      %4109 = vmatprep.mubr.bf16.mxu0 0
      %4110 = vmatmul.mubr.bf16.gmra.mrb[0].mxu0 %v3956
      %v4111 = vpop.f32.mrb[0].mxu0
      %v4112 = vadd.f32 0.0, %v4111
      %v4113 = vpop.f32.mrb[0].mxu0
      %v4114 = vpop.f32.mrb[0].mxu0
      %v4115 = vadd.f32 0.0, %v4114
      %v4116 = vpop.f32.mrb[0].mxu0
      %4117 = vmatprep.mubr.bf16.mxu0 0
      %4118 = vmatmul.mubr.bf16.gmra.mrb[0].mxu0 %v3957
      %v4119 = vpop.f32.mrb[0].mxu0
      %v4120 = vadd.f32 0.0, %v4119
      %v4121 = vpop.f32.mrb[0].mxu0
      %v4122 = vpop.f32.mrb[0].mxu0
      %v4123 = vadd.f32 0.0, %v4122
      %v4124 = vpop.f32.mrb[0].mxu0
      %4125 = vmatprep.mubr.bf16.mxu0 0
      %4126 = vmatmul.mubr.bf16.gmra.mrb[0].mxu0 %v3958
      %v4127 = vpop.f32.mrb[0].mxu0
      %v4128 = vadd.f32 0.0, %v4127
      %v4129 = vpop.f32.mrb[0].mxu0
      %v4130 = vpop.f32.mrb[0].mxu0
      %v4131 = vadd.f32 0.0, %v4130
      %v4132 = vpop.f32.mrb[0].mxu0
      %4133 = vmatprep.mubr.bf16.mxu0 0
      %4134 = vmatmul.mubr.bf16.gmra.mrb[0].mxu0 %v3959
      %v4135 = vpop.f32.mrb[0].mxu0
      %v4136 = vadd.f32 0.0, %v4135
      %v4137 = vpop.f32.mrb[0].mxu0
      %v4138 = vpop.f32.mrb[0].mxu0
      %v4139 = vadd.f32 0.0, %v4138
      %v4140 = vpop.f32.mrb[0].mxu0
      %4141 = vmatprep.mubr.bf16.mxu0 0
      %4142 = vmatmul.mubr.bf16.gmra.mrb[0].mxu0 %v3960
      %v4143 = vpop.f32.mrb[0].mxu0
      %v4144 = vadd.f32 0.0, %v4143
      %v4145 = vpop.f32.mrb[0].mxu0
      %v4146 = vpop.f32.mrb[0].mxu0
      %v4147 = vadd.f32 0.0, %v4146
      %v4148 = vpop.f32.mrb[0].mxu0
      %4149 = vmatprep.mubr.bf16.mxu0 0
      %4150 = vmatmul.mubr.bf16.gmra.mrb[0].mxu0 %v3961
      %v4151 = vpop.f32.mrb[0].mxu0
      %v4152 = vadd.f32 0.0, %v4151
      %v4153 = vpop.f32.mrb[0].mxu0
      %v4154 = vpop.f32.mrb[0].mxu0
      %v4155 = vadd.f32 0.0, %v4154
      %v4156 = vpop.f32.mrb[0].mxu0
      %4157 = vmatprep.mubr.bf16.mxu0 0
      %4158 = vmatmul.mubr.bf16.gmra.mrb[0].mxu0 %v3962
      %v4159 = vpop.f32.mrb[0].mxu0
      %v4160 = vadd.f32 0.0, %v4159
      %v4161 = vpop.f32.mrb[0].mxu0
      %v4162 = vpop.f32.mrb[0].mxu0
      %v4163 = vadd.f32 0.0, %v4162
      %v4164 = vpop.f32.mrb[0].mxu0
      %4165 = vmatprep.mubr.bf16.mxu0 0
      %4166 = vmatmul.mubr.bf16.gmra.mrb[0].mxu0 %v3963
      %v4167 = vpop.f32.mrb[0].mxu0
      %v4168 = vadd.f32 0.0, %v4167
      %v4169 = vpop.f32.mrb[0].mxu0
      %v4170 = vpop.f32.mrb[0].mxu0
      %v4171 = vadd.f32 0.0, %v4170
      %v4172 = vpop.f32.mrb[0].mxu0
      %4173 = vdwg.mxu0
      %v4174 = vadd.f32 %v3812, %v4064
      %v4175 = vadd.f32 %v3815, %v4067
      %v4176 = vadd.f32 %v3820, %v4072
      %v4177 = vadd.f32 %v3823, %v4075
      %v4178 = vadd.f32 %v3828, %v4080
      %v4179 = vadd.f32 %v3831, %v4083
      %v4180 = vadd.f32 %v3836, %v4088
      %v4181 = vadd.f32 %v3839, %v4091
      %v4182 = vadd.f32 %v3844, %v4096
      %v4183 = vadd.f32 %v3847, %v4099
      %v4184 = vadd.f32 %v3852, %v4104
      %v4185 = vadd.f32 %v3855, %v4107
      %v4186 = vadd.f32 %v3860, %v4112
      %v4187 = vadd.f32 %v3863, %v4115
      %v4188 = vadd.f32 %v3868, %v4120
      %v4189 = vadd.f32 %v3871, %v4123
      %v4190 = vadd.f32 %v3876, %v4128
      %v4191 = vadd.f32 %v3879, %v4131
      %v4192 = vadd.f32 %v3884, %v4136
      %v4193 = vadd.f32 %v3887, %v4139
      %v4194 = vadd.f32 %v3892, %v4144
      %v4195 = vadd.f32 %v3895, %v4147
      %v4196 = vadd.f32 %v3900, %v4152
      %v4197 = vadd.f32 %v3903, %v4155
      %v4198 = vadd.f32 %v3908, %v4160
      %v4199 = vadd.f32 %v3911, %v4163
      %v4200 = vadd.f32 %v3916, %v4168
      %v4201 = vadd.f32 %v3919, %v4171
      %v4202 = vld [vmem:[#allocation3 + $0x17] sm:$0xff]
      %v4203 = vld [vmem:[#allocation3 + $0x1f] sm:$0xff]
      %v4204 = vld [vmem:[#allocation3 + $0x27] sm:$0xff]
      %v4205 = vld [vmem:[#allocation3 + $0x2f] sm:$0xff]
      %v4206 = vld [vmem:[#allocation3 + $0x37] sm:$0xff]
      %v4207 = vld [vmem:[#allocation3 + $0x3f] sm:$0xff]
      %v4208 = vld [vmem:[#allocation3 + $0x47] sm:$0xff]
      %v4209 = vld [vmem:[#allocation3 + $0x4f] sm:$0xff]
      %v4210 = vld [vmem:[#allocation3 + $0x57] sm:$0xff]
      %v4211 = vld [vmem:[#allocation3 + $0x5f] sm:$0xff]
      %v4212 = vld [vmem:[#allocation3 + $0x67] sm:$0xff]
      %v4213 = vld [vmem:[#allocation3 + $0x6f] sm:$0xff]
      %v4214 = vld [vmem:[#allocation3 + $0x77] sm:$0xff]
      %v4215 = vld [vmem:[#allocation3 + $0x7f] sm:$0xff]
      %v4216 = vld [vmem:[#allocation3 + $0x87] sm:$0xff]
      %v4217 = vld [vmem:[#allocation3 + $0x8f] sm:$0xff]
      %v4218 = vld [vmem:[#allocation3 + $0x97] sm:$0xff]
      %v4219 = vld [vmem:[#allocation3 + $0x9f] sm:$0xff]
      %v4220 = vld [vmem:[#allocation3 + $0xa7] sm:$0xff]
      %v4221 = vld [vmem:[#allocation3 + $0xaf] sm:$0xff]
      %v4222 = vld [vmem:[#allocation3 + $0xb7] sm:$0xff]
      %v4223 = vld [vmem:[#allocation3 + $0xbf] sm:$0xff]
      %v4224 = vld [vmem:[#allocation3 + $0xc7] sm:$0xff]
      %v4225 = vld [vmem:[#allocation3 + $0xcf] sm:$0xff]
      %v4226 = vld [vmem:[#allocation3 + $0xd7] sm:$0xff]
      %v4227 = vld [vmem:[#allocation3 + $0xdf] sm:$0xff]
      %v4228 = vld [vmem:[#allocation3 + $0xe7] sm:$0xff]
      %v4229 = vld [vmem:[#allocation3 + $0xef] sm:$0xff]
      %v4230 = vpack.c.bf16 %v4203, %v4202
      %v4231 = vpack.c.bf16 %v4205, %v4204
      %v4232 = vpack.c.bf16 %v4207, %v4206
      %v4233 = vpack.c.bf16 %v4209, %v4208
      %v4234 = vpack.c.bf16 %v4211, %v4210
      %v4235 = vpack.c.bf16 %v4213, %v4212
      %v4236 = vpack.c.bf16 %v4215, %v4214
      %v4237 = vpack.c.bf16 %v4217, %v4216
      %v4238 = vpack.c.bf16 %v4219, %v4218
      %v4239 = vpack.c.bf16 %v4221, %v4220
      %v4240 = vpack.c.bf16 %v4223, %v4222
      %v4241 = vpack.c.bf16 %v4225, %v4224
      %v4242 = vpack.c.bf16 %v4227, %v4226
      %v4243 = vpack.c.bf16 %v4229, %v4228
      %s4244 = scalar_lea.vmem %s4, 192
      %v4245 = vld [vmem:[%s4244] sm:$0xf]
      %v4246 = vld [vmem:[%s4244 + $0x4] sm:$0xf]
      %v4247 = vld [vmem:[%s4244 + $0x8] sm:$0xf]
      %v4248 = vld [vmem:[%s4244 + $0xc] sm:$0xf]
      %v4249 = vld [vmem:[%s4244 + $0x10] sm:$0xf]
      %v4250 = vld [vmem:[%s4244 + $0x14] sm:$0xf]
      %v4251 = vld [vmem:[%s4244 + $0x18] sm:$0xf]
      %v4252 = vld [vmem:[%s4244 + $0x1c] sm:$0xf]
      %v4253 = vld [vmem:[%s4244 + $0x20] sm:$0xf]
      %v4254 = vld [vmem:[%s4244 + $0x24] sm:$0xf]
      %v4255 = vld [vmem:[%s4244 + $0x28] sm:$0xf]
      %v4256 = vld [vmem:[%s4244 + $0x2c] sm:$0xf]
      %v4257 = vld [vmem:[%s4244 + $0x30] sm:$0xf]
      %v4258 = vld [vmem:[%s4244 + $0x34] sm:$0xf]
      %v4259 = vld [vmem:[%s4244 + $0x38] sm:$0xf]
      %v4260 = vld [vmem:[%s4244 + $0x3c] sm:$0xf]
      %v4277 = vunpack.c.l.b16 %v4245
      %v4278 = vunpack.c.l.b16 %v4246
      %v4279 = vunpack.c.l.b16 %v4247
      %v4280 = vunpack.c.l.b16 %v4248
      %v4281 = vunpack.c.l.b16 %v4249
      %v4282 = vunpack.c.l.b16 %v4250
      %v4283 = vunpack.c.l.b16 %v4251
      %v4284 = vunpack.c.l.b16 %v4252
      %v4285 = vunpack.c.l.b16 %v4253
      %v4286 = vunpack.c.l.b16 %v4254
      %v4287 = vunpack.c.l.b16 %v4255
      %v4288 = vunpack.c.l.b16 %v4256
      %v4289 = vunpack.c.l.b16 %v4257
      %v4290 = vunpack.c.l.b16 %v4258
      %v4291 = vunpack.c.l.b16 %v4259
      %v4292 = vunpack.c.l.b16 %v4260
      %v4293 = vpack.c.b16 %v4278, %v4277
      %v4294 = vpack.c.b16 %v4280, %v4279
      %v4295 = vpack.c.b16 %v4282, %v4281
      %v4296 = vpack.c.b16 %v4284, %v4283
      %v4297 = vpack.c.b16 %v4286, %v4285
      %v4298 = vpack.c.b16 %v4288, %v4287
      %v4299 = vpack.c.b16 %v4290, %v4289
      %v4300 = vpack.c.b16 %v4292, %v4291
      %4309 = vmatprep.subr.bf16.mxu0 0
      %4310 = vmatpush1.bf16.msra.mxu0 %v4293
      %4311 = vmatprep.subr.bf16.mxu0 0
      %4312 = vmatpush1.bf16.msra.mxu0 %v4294
      %4313 = vmatprep.subr.bf16.mxu0 0
      %4314 = vmatpush1.bf16.msra.mxu0 %v4295
      %4315 = vmatprep.subr.bf16.mxu0 0
      %4316 = vmatpush1.bf16.msra.mxu0 %v4296
      %4317 = vmatprep.subr.bf16.mxu0 0
      %4318 = vmatpush1.bf16.msra.mxu0 %v4297
      %4319 = vmatprep.subr.bf16.mxu0 0
      %4320 = vmatpush1.bf16.msra.mxu0 %v4298
      %4321 = vmatprep.subr.bf16.mxu0 0
      %4322 = vmatpush1.bf16.msra.mxu0 %v4299
      %4323 = vmatprep.subr.bf16.mxu0 0
      %4324 = vmatpush1.bf16.msra.mxu0 %v4300
      %4325 = vmatprep.subr.bf16.mxu0 0
      %4326 = vmatpush1.bf16.msra.mxu0 0
      %4327 = vmatprep.subr.bf16.mxu0 0
      %4328 = vmatpush1.bf16.msra.mxu0 0
      %4329 = vmatprep.subr.bf16.mxu0 0
      %4330 = vmatpush1.bf16.msra.mxu0 0
      %4331 = vmatprep.subr.bf16.mxu0 0
      %4332 = vmatpush1.bf16.msra.mxu0 0
      %4333 = vmatprep.subr.bf16.mxu0 0
      %4334 = vmatpush1.bf16.msra.mxu0 0
      %4335 = vmatprep.subr.bf16.mxu0 0
      %4336 = vmatpush1.bf16.msra.mxu0 0
      %4337 = vmatprep.subr.bf16.mxu0 0
      %4338 = vmatpush1.bf16.msra.mxu0 0
      %4339 = vmatprep.subr.bf16.mxu0 0
      %4340 = vmatpush1.bf16.msra.mxu0 0
      %4341 = vmatprep.mubr.bf16.mxu0 0
      %4342 = vmatmul.mubr.bf16.gmra.mrb[0].mxu0 %v4230
      %v4343 = vpop.f32.mrb[0].mxu0
      %v4344 = vadd.f32 0.0, %v4343
      %v4345 = vpop.f32.mrb[0].mxu0
      %v4346 = vpop.f32.mrb[0].mxu0
      %v4347 = vadd.f32 0.0, %v4346
      %v4348 = vpop.f32.mrb[0].mxu0
      %4349 = vmatprep.mubr.bf16.mxu0 0
      %4350 = vmatmul.mubr.bf16.gmra.mrb[0].mxu0 %v4231
      %v4351 = vpop.f32.mrb[0].mxu0
      %v4352 = vadd.f32 0.0, %v4351
      %v4353 = vpop.f32.mrb[0].mxu0
      %v4354 = vpop.f32.mrb[0].mxu0
      %v4355 = vadd.f32 0.0, %v4354
      %v4356 = vpop.f32.mrb[0].mxu0
      %4357 = vmatprep.mubr.bf16.mxu0 0
      %4358 = vmatmul.mubr.bf16.gmra.mrb[0].mxu0 %v4232
      %v4359 = vpop.f32.mrb[0].mxu0
      %v4360 = vadd.f32 0.0, %v4359
      %v4361 = vpop.f32.mrb[0].mxu0
      %v4362 = vpop.f32.mrb[0].mxu0
      %v4363 = vadd.f32 0.0, %v4362
      %v4364 = vpop.f32.mrb[0].mxu0
      %4365 = vmatprep.mubr.bf16.mxu0 0
      %4366 = vmatmul.mubr.bf16.gmra.mrb[0].mxu0 %v4233
      %v4367 = vpop.f32.mrb[0].mxu0
      %v4368 = vadd.f32 0.0, %v4367
      %v4369 = vpop.f32.mrb[0].mxu0
      %v4370 = vpop.f32.mrb[0].mxu0
      %v4371 = vadd.f32 0.0, %v4370
      %v4372 = vpop.f32.mrb[0].mxu0
      %4373 = vmatprep.mubr.bf16.mxu0 0
      %4374 = vmatmul.mubr.bf16.gmra.mrb[0].mxu0 %v4234
      %v4375 = vpop.f32.mrb[0].mxu0
      %v4376 = vadd.f32 0.0, %v4375
      %v4377 = vpop.f32.mrb[0].mxu0
      %v4378 = vpop.f32.mrb[0].mxu0
      %v4379 = vadd.f32 0.0, %v4378
      %v4380 = vpop.f32.mrb[0].mxu0
      %4381 = vmatprep.mubr.bf16.mxu0 0
      %4382 = vmatmul.mubr.bf16.gmra.mrb[0].mxu0 %v4235
      %v4383 = vpop.f32.mrb[0].mxu0
      %v4384 = vadd.f32 0.0, %v4383
      %v4385 = vpop.f32.mrb[0].mxu0
      %v4386 = vpop.f32.mrb[0].mxu0
      %v4387 = vadd.f32 0.0, %v4386
      %v4388 = vpop.f32.mrb[0].mxu0
      %4389 = vmatprep.mubr.bf16.mxu0 0
      %4390 = vmatmul.mubr.bf16.gmra.mrb[0].mxu0 %v4236
      %v4391 = vpop.f32.mrb[0].mxu0
      %v4392 = vadd.f32 0.0, %v4391
      %v4393 = vpop.f32.mrb[0].mxu0
      %v4394 = vpop.f32.mrb[0].mxu0
      %v4395 = vadd.f32 0.0, %v4394
      %v4396 = vpop.f32.mrb[0].mxu0
      %4397 = vmatprep.mubr.bf16.mxu0 0
      %4398 = vmatmul.mubr.bf16.gmra.mrb[0].mxu0 %v4237
      %v4399 = vpop.f32.mrb[0].mxu0
      %v4400 = vadd.f32 0.0, %v4399
      %v4401 = vpop.f32.mrb[0].mxu0
      %v4402 = vpop.f32.mrb[0].mxu0
      %v4403 = vadd.f32 0.0, %v4402
      %v4404 = vpop.f32.mrb[0].mxu0
      %4405 = vmatprep.mubr.bf16.mxu0 0
      %4406 = vmatmul.mubr.bf16.gmra.mrb[0].mxu0 %v4238
      %v4407 = vpop.f32.mrb[0].mxu0
      %v4408 = vadd.f32 0.0, %v4407
      %v4409 = vpop.f32.mrb[0].mxu0
      %v4410 = vpop.f32.mrb[0].mxu0
      %v4411 = vadd.f32 0.0, %v4410
      %v4412 = vpop.f32.mrb[0].mxu0
      %4413 = vmatprep.mubr.bf16.mxu0 0
      %4414 = vmatmul.mubr.bf16.gmra.mrb[0].mxu0 %v4239
      %v4415 = vpop.f32.mrb[0].mxu0
      %v4416 = vadd.f32 0.0, %v4415
      %v4417 = vpop.f32.mrb[0].mxu0
      %v4418 = vpop.f32.mrb[0].mxu0
      %v4419 = vadd.f32 0.0, %v4418
      %v4420 = vpop.f32.mrb[0].mxu0
      %4421 = vmatprep.mubr.bf16.mxu0 0
      %4422 = vmatmul.mubr.bf16.gmra.mrb[0].mxu0 %v4240
      %v4423 = vpop.f32.mrb[0].mxu0
      %v4424 = vadd.f32 0.0, %v4423
      %v4425 = vpop.f32.mrb[0].mxu0
      %v4426 = vpop.f32.mrb[0].mxu0
      %v4427 = vadd.f32 0.0, %v4426
      %v4428 = vpop.f32.mrb[0].mxu0
      %4429 = vmatprep.mubr.bf16.mxu0 0
      %4430 = vmatmul.mubr.bf16.gmra.mrb[0].mxu0 %v4241
      %v4431 = vpop.f32.mrb[0].mxu0
      %v4432 = vadd.f32 0.0, %v4431
      %v4433 = vpop.f32.mrb[0].mxu0
      %v4434 = vpop.f32.mrb[0].mxu0
      %v4435 = vadd.f32 0.0, %v4434
      %v4436 = vpop.f32.mrb[0].mxu0
      %4437 = vmatprep.mubr.bf16.mxu0 0
      %4438 = vmatmul.mubr.bf16.gmra.mrb[0].mxu0 %v4242
      %v4439 = vpop.f32.mrb[0].mxu0
      %v4440 = vadd.f32 0.0, %v4439
      %v4441 = vpop.f32.mrb[0].mxu0
      %v4442 = vpop.f32.mrb[0].mxu0
      %v4443 = vadd.f32 0.0, %v4442
      %v4444 = vpop.f32.mrb[0].mxu0
      %4445 = vmatprep.mubr.bf16.mxu0 0
      %4446 = vmatmul.mubr.bf16.gmra.mrb[0].mxu0 %v4243
      %v4447 = vpop.f32.mrb[0].mxu0
      %v4448 = vadd.f32 0.0, %v4447
      %v4449 = vpop.f32.mrb[0].mxu0
      %v4450 = vpop.f32.mrb[0].mxu0
      %v4451 = vadd.f32 0.0, %v4450
      %v4452 = vpop.f32.mrb[0].mxu0
      %4453 = vdwg.mxu0
      %v4454 = vadd.f32 %v4174, %v4344
      %v4455 = vadd.f32 %v4175, %v4347
      %v4456 = vadd.f32 %v4176, %v4352
      %v4457 = vadd.f32 %v4177, %v4355
      %v4458 = vadd.f32 %v4178, %v4360
      %v4459 = vadd.f32 %v4179, %v4363
      %v4460 = vadd.f32 %v4180, %v4368
      %v4461 = vadd.f32 %v4181, %v4371
      %v4462 = vadd.f32 %v4182, %v4376
      %v4463 = vadd.f32 %v4183, %v4379
      %v4464 = vadd.f32 %v4184, %v4384
      %v4465 = vadd.f32 %v4185, %v4387
      %v4466 = vadd.f32 %v4186, %v4392
      %v4467 = vadd.f32 %v4187, %v4395
      %v4468 = vadd.f32 %v4188, %v4400
      %v4469 = vadd.f32 %v4189, %v4403
      %v4470 = vadd.f32 %v4190, %v4408
      %v4471 = vadd.f32 %v4191, %v4411
      %v4472 = vadd.f32 %v4192, %v4416
      %v4473 = vadd.f32 %v4193, %v4419
      %v4474 = vadd.f32 %v4194, %v4424
      %v4475 = vadd.f32 %v4195, %v4427
      %v4476 = vadd.f32 %v4196, %v4432
      %v4477 = vadd.f32 %v4197, %v4435
      %v4478 = vadd.f32 %v4198, %v4440
      %v4479 = vadd.f32 %v4199, %v4443
      %v4480 = vadd.f32 %v4200, %v4448
      %v4481 = vadd.f32 %v4201, %v4451
      %v4482 = vld [vmem:[#allocation3 + $0x18] sm:$0xff]
      %v4483 = vld [vmem:[#allocation3 + $0x20] sm:$0xff]
      %v4484 = vld [vmem:[#allocation3 + $0x28] sm:$0xff]
      %v4485 = vld [vmem:[#allocation3 + $0x30] sm:$0xff]
      %v4486 = vld [vmem:[#allocation3 + $0x38] sm:$0xff]
      %v4487 = vld [vmem:[#allocation3 + $0x40] sm:$0xff]
      %v4488 = vld [vmem:[#allocation3 + $0x48] sm:$0xff]
      %v4489 = vld [vmem:[#allocation3 + $0x50] sm:$0xff]
      %v4490 = vld [vmem:[#allocation3 + $0x58] sm:$0xff]
      %v4491 = vld [vmem:[#allocation3 + $0x60] sm:$0xff]
      %v4492 = vld [vmem:[#allocation3 + $0x68] sm:$0xff]
      %v4493 = vld [vmem:[#allocation3 + $0x70] sm:$0xff]
      %v4494 = vld [vmem:[#allocation3 + $0x78] sm:$0xff]
      %v4495 = vld [vmem:[#allocation3 + $0x80] sm:$0xff]
      %v4496 = vld [vmem:[#allocation3 + $0x88] sm:$0xff]
      %v4497 = vld [vmem:[#allocation3 + $0x90] sm:$0xff]
      %v4498 = vld [vmem:[#allocation3 + $0x98] sm:$0xff]
      %v4499 = vld [vmem:[#allocation3 + $0xa0] sm:$0xff]
      %v4500 = vld [vmem:[#allocation3 + $0xa8] sm:$0xff]
      %v4501 = vld [vmem:[#allocation3 + $0xb0] sm:$0xff]
      %v4502 = vld [vmem:[#allocation3 + $0xb8] sm:$0xff]
      %v4503 = vld [vmem:[#allocation3 + $0xc0] sm:$0xff]
      %v4504 = vld [vmem:[#allocation3 + $0xc8] sm:$0xff]
      %v4505 = vld [vmem:[#allocation3 + $0xd0] sm:$0xff]
      %v4506 = vld [vmem:[#allocation3 + $0xd8] sm:$0xff]
      %v4507 = vld [vmem:[#allocation3 + $0xe0] sm:$0xff]
      %v4508 = vld [vmem:[#allocation3 + $0xe8] sm:$0xff]
      %v4509 = vld [vmem:[#allocation3 + $0xf0] sm:$0xff]
      %v4510 = vpack.c.bf16 %v4483, %v4482
      %v4511 = vpack.c.bf16 %v4485, %v4484
      %v4512 = vpack.c.bf16 %v4487, %v4486
      %v4513 = vpack.c.bf16 %v4489, %v4488
      %v4514 = vpack.c.bf16 %v4491, %v4490
      %v4515 = vpack.c.bf16 %v4493, %v4492
      %v4516 = vpack.c.bf16 %v4495, %v4494
      %v4517 = vpack.c.bf16 %v4497, %v4496
      %v4518 = vpack.c.bf16 %v4499, %v4498
      %v4519 = vpack.c.bf16 %v4501, %v4500
      %v4520 = vpack.c.bf16 %v4503, %v4502
      %v4521 = vpack.c.bf16 %v4505, %v4504
      %v4522 = vpack.c.bf16 %v4507, %v4506
      %v4523 = vpack.c.bf16 %v4509, %v4508
      %s4524 = scalar_lea.vmem %s4, 256
      %v4525 = vld [vmem:[%s4524] sm:$0xf]
      %v4526 = vld [vmem:[%s4524 + $0x4] sm:$0xf]
      %v4527 = vld [vmem:[%s4524 + $0x8] sm:$0xf]
      %v4528 = vld [vmem:[%s4524 + $0xc] sm:$0xf]
      %v4529 = vld [vmem:[%s4524 + $0x10] sm:$0xf]
      %v4530 = vld [vmem:[%s4524 + $0x14] sm:$0xf]
      %v4531 = vld [vmem:[%s4524 + $0x18] sm:$0xf]
      %v4532 = vld [vmem:[%s4524 + $0x1c] sm:$0xf]
      %v4533 = vld [vmem:[%s4524 + $0x20] sm:$0xf]
      %v4534 = vld [vmem:[%s4524 + $0x24] sm:$0xf]
      %v4535 = vld [vmem:[%s4524 + $0x28] sm:$0xf]
      %v4536 = vld [vmem:[%s4524 + $0x2c] sm:$0xf]
      %v4537 = vld [vmem:[%s4524 + $0x30] sm:$0xf]
      %v4538 = vld [vmem:[%s4524 + $0x34] sm:$0xf]
      %v4539 = vld [vmem:[%s4524 + $0x38] sm:$0xf]
      %v4540 = vld [vmem:[%s4524 + $0x3c] sm:$0xf]
      %v4557 = vunpack.c.l.b16 %v4525
      %v4558 = vunpack.c.l.b16 %v4526
      %v4559 = vunpack.c.l.b16 %v4527
      %v4560 = vunpack.c.l.b16 %v4528
      %v4561 = vunpack.c.l.b16 %v4529
      %v4562 = vunpack.c.l.b16 %v4530
      %v4563 = vunpack.c.l.b16 %v4531
      %v4564 = vunpack.c.l.b16 %v4532
      %v4565 = vunpack.c.l.b16 %v4533
      %v4566 = vunpack.c.l.b16 %v4534
      %v4567 = vunpack.c.l.b16 %v4535
      %v4568 = vunpack.c.l.b16 %v4536
      %v4569 = vunpack.c.l.b16 %v4537
      %v4570 = vunpack.c.l.b16 %v4538
      %v4571 = vunpack.c.l.b16 %v4539
      %v4572 = vunpack.c.l.b16 %v4540
      %v4573 = vpack.c.b16 %v4558, %v4557
      %v4574 = vpack.c.b16 %v4560, %v4559
      %v4575 = vpack.c.b16 %v4562, %v4561
      %v4576 = vpack.c.b16 %v4564, %v4563
      %v4577 = vpack.c.b16 %v4566, %v4565
      %v4578 = vpack.c.b16 %v4568, %v4567
      %v4579 = vpack.c.b16 %v4570, %v4569
      %v4580 = vpack.c.b16 %v4572, %v4571
      %4589 = vmatprep.subr.bf16.mxu0 0
      %4590 = vmatpush1.bf16.msra.mxu0 %v4573
      %4591 = vmatprep.subr.bf16.mxu0 0
      %4592 = vmatpush1.bf16.msra.mxu0 %v4574
      %4593 = vmatprep.subr.bf16.mxu0 0
      %4594 = vmatpush1.bf16.msra.mxu0 %v4575
      %4595 = vmatprep.subr.bf16.mxu0 0
      %4596 = vmatpush1.bf16.msra.mxu0 %v4576
      %4597 = vmatprep.subr.bf16.mxu0 0
      %4598 = vmatpush1.bf16.msra.mxu0 %v4577
      %4599 = vmatprep.subr.bf16.mxu0 0
      %4600 = vmatpush1.bf16.msra.mxu0 %v4578
      %4601 = vmatprep.subr.bf16.mxu0 0
      %4602 = vmatpush1.bf16.msra.mxu0 %v4579
      %4603 = vmatprep.subr.bf16.mxu0 0
      %4604 = vmatpush1.bf16.msra.mxu0 %v4580
      %4605 = vmatprep.subr.bf16.mxu0 0
      %4606 = vmatpush1.bf16.msra.mxu0 0
      %4607 = vmatprep.subr.bf16.mxu0 0
      %4608 = vmatpush1.bf16.msra.mxu0 0
      %4609 = vmatprep.subr.bf16.mxu0 0
      %4610 = vmatpush1.bf16.msra.mxu0 0
      %4611 = vmatprep.subr.bf16.mxu0 0
      %4612 = vmatpush1.bf16.msra.mxu0 0
      %4613 = vmatprep.subr.bf16.mxu0 0
      %4614 = vmatpush1.bf16.msra.mxu0 0
      %4615 = vmatprep.subr.bf16.mxu0 0
      %4616 = vmatpush1.bf16.msra.mxu0 0
      %4617 = vmatprep.subr.bf16.mxu0 0
      %4618 = vmatpush1.bf16.msra.mxu0 0
      %4619 = vmatprep.subr.bf16.mxu0 0
      %4620 = vmatpush1.bf16.msra.mxu0 0
      %4621 = vmatprep.mubr.bf16.mxu0 0
      %4622 = vmatmul.mubr.bf16.gmra.mrb[0].mxu0 %v4510
      %v4623 = vpop.f32.mrb[0].mxu0
      %v4624 = vadd.f32 0.0, %v4623
      %v4625 = vpop.f32.mrb[0].mxu0
      %v4626 = vpop.f32.mrb[0].mxu0
      %v4627 = vadd.f32 0.0, %v4626
      %v4628 = vpop.f32.mrb[0].mxu0
      %4629 = vmatprep.mubr.bf16.mxu0 0
      %4630 = vmatmul.mubr.bf16.gmra.mrb[0].mxu0 %v4511
      %v4631 = vpop.f32.mrb[0].mxu0
      %v4632 = vadd.f32 0.0, %v4631
      %v4633 = vpop.f32.mrb[0].mxu0
      %v4634 = vpop.f32.mrb[0].mxu0
      %v4635 = vadd.f32 0.0, %v4634
      %v4636 = vpop.f32.mrb[0].mxu0
      %4637 = vmatprep.mubr.bf16.mxu0 0
      %4638 = vmatmul.mubr.bf16.gmra.mrb[0].mxu0 %v4512
      %v4639 = vpop.f32.mrb[0].mxu0
      %v4640 = vadd.f32 0.0, %v4639
      %v4641 = vpop.f32.mrb[0].mxu0
      %v4642 = vpop.f32.mrb[0].mxu0
      %v4643 = vadd.f32 0.0, %v4642
      %v4644 = vpop.f32.mrb[0].mxu0
      %4645 = vmatprep.mubr.bf16.mxu0 0
      %4646 = vmatmul.mubr.bf16.gmra.mrb[0].mxu0 %v4513
      %v4647 = vpop.f32.mrb[0].mxu0
      %v4648 = vadd.f32 0.0, %v4647
      %v4649 = vpop.f32.mrb[0].mxu0
      %v4650 = vpop.f32.mrb[0].mxu0
      %v4651 = vadd.f32 0.0, %v4650
      %v4652 = vpop.f32.mrb[0].mxu0
      %4653 = vmatprep.mubr.bf16.mxu0 0
      %4654 = vmatmul.mubr.bf16.gmra.mrb[0].mxu0 %v4514
      %v4655 = vpop.f32.mrb[0].mxu0
      %v4656 = vadd.f32 0.0, %v4655
      %v4657 = vpop.f32.mrb[0].mxu0
      %v4658 = vpop.f32.mrb[0].mxu0
      %v4659 = vadd.f32 0.0, %v4658
      %v4660 = vpop.f32.mrb[0].mxu0
      %4661 = vmatprep.mubr.bf16.mxu0 0
      %4662 = vmatmul.mubr.bf16.gmra.mrb[0].mxu0 %v4515
      %v4663 = vpop.f32.mrb[0].mxu0
      %v4664 = vadd.f32 0.0, %v4663
      %v4665 = vpop.f32.mrb[0].mxu0
      %v4666 = vpop.f32.mrb[0].mxu0
      %v4667 = vadd.f32 0.0, %v4666
      %v4668 = vpop.f32.mrb[0].mxu0
      %4669 = vmatprep.mubr.bf16.mxu0 0
      %4670 = vmatmul.mubr.bf16.gmra.mrb[0].mxu0 %v4516
      %v4671 = vpop.f32.mrb[0].mxu0
      %v4672 = vadd.f32 0.0, %v4671
      %v4673 = vpop.f32.mrb[0].mxu0
      %v4674 = vpop.f32.mrb[0].mxu0
      %v4675 = vadd.f32 0.0, %v4674
      %v4676 = vpop.f32.mrb[0].mxu0
      %4677 = vmatprep.mubr.bf16.mxu0 0
      %4678 = vmatmul.mubr.bf16.gmra.mrb[0].mxu0 %v4517
      %v4679 = vpop.f32.mrb[0].mxu0
      %v4680 = vadd.f32 0.0, %v4679
      %v4681 = vpop.f32.mrb[0].mxu0
      %v4682 = vpop.f32.mrb[0].mxu0
      %v4683 = vadd.f32 0.0, %v4682
      %v4684 = vpop.f32.mrb[0].mxu0
      %4685 = vmatprep.mubr.bf16.mxu0 0
      %4686 = vmatmul.mubr.bf16.gmra.mrb[0].mxu0 %v4518
      %v4687 = vpop.f32.mrb[0].mxu0
      %v4688 = vadd.f32 0.0, %v4687
      %v4689 = vpop.f32.mrb[0].mxu0
      %v4690 = vpop.f32.mrb[0].mxu0
      %v4691 = vadd.f32 0.0, %v4690
      %v4692 = vpop.f32.mrb[0].mxu0
      %4693 = vmatprep.mubr.bf16.mxu0 0
      %4694 = vmatmul.mubr.bf16.gmra.mrb[0].mxu0 %v4519
      %v4695 = vpop.f32.mrb[0].mxu0
      %v4696 = vadd.f32 0.0, %v4695
      %v4697 = vpop.f32.mrb[0].mxu0
      %v4698 = vpop.f32.mrb[0].mxu0
      %v4699 = vadd.f32 0.0, %v4698
      %v4700 = vpop.f32.mrb[0].mxu0
      %4701 = vmatprep.mubr.bf16.mxu0 0
      %4702 = vmatmul.mubr.bf16.gmra.mrb[0].mxu0 %v4520
      %v4703 = vpop.f32.mrb[0].mxu0
      %v4704 = vadd.f32 0.0, %v4703
      %v4705 = vpop.f32.mrb[0].mxu0
      %v4706 = vpop.f32.mrb[0].mxu0
      %v4707 = vadd.f32 0.0, %v4706
      %v4708 = vpop.f32.mrb[0].mxu0
      %4709 = vmatprep.mubr.bf16.mxu0 0
      %4710 = vmatmul.mubr.bf16.gmra.mrb[0].mxu0 %v4521
      %v4711 = vpop.f32.mrb[0].mxu0
      %v4712 = vadd.f32 0.0, %v4711
      %v4713 = vpop.f32.mrb[0].mxu0
      %v4714 = vpop.f32.mrb[0].mxu0
      %v4715 = vadd.f32 0.0, %v4714
      %v4716 = vpop.f32.mrb[0].mxu0
      %4717 = vmatprep.mubr.bf16.mxu0 0
      %4718 = vmatmul.mubr.bf16.gmra.mrb[0].mxu0 %v4522
      %v4719 = vpop.f32.mrb[0].mxu0
      %v4720 = vadd.f32 0.0, %v4719
      %v4721 = vpop.f32.mrb[0].mxu0
      %v4722 = vpop.f32.mrb[0].mxu0
      %v4723 = vadd.f32 0.0, %v4722
      %v4724 = vpop.f32.mrb[0].mxu0
      %4725 = vmatprep.mubr.bf16.mxu0 0
      %4726 = vmatmul.mubr.bf16.gmra.mrb[0].mxu0 %v4523
      %v4727 = vpop.f32.mrb[0].mxu0
      %v4728 = vadd.f32 0.0, %v4727
      %v4729 = vpop.f32.mrb[0].mxu0
      %v4730 = vpop.f32.mrb[0].mxu0
      %v4731 = vadd.f32 0.0, %v4730
      %v4732 = vpop.f32.mrb[0].mxu0
      %4733 = vdwg.mxu0
      %v4734 = vadd.f32 %v4454, %v4624
      %v4735 = vadd.f32 %v4455, %v4627
      %v4736 = vadd.f32 %v4456, %v4632
      %v4737 = vadd.f32 %v4457, %v4635
      %v4738 = vadd.f32 %v4458, %v4640
      %v4739 = vadd.f32 %v4459, %v4643
      %v4740 = vadd.f32 %v4460, %v4648
      %v4741 = vadd.f32 %v4461, %v4651
      %v4742 = vadd.f32 %v4462, %v4656
      %v4743 = vadd.f32 %v4463, %v4659
      %v4744 = vadd.f32 %v4464, %v4664
      %v4745 = vadd.f32 %v4465, %v4667
      %v4746 = vadd.f32 %v4466, %v4672
      %v4747 = vadd.f32 %v4467, %v4675
      %v4748 = vadd.f32 %v4468, %v4680
      %v4749 = vadd.f32 %v4469, %v4683
      %v4750 = vadd.f32 %v4470, %v4688
      %v4751 = vadd.f32 %v4471, %v4691
      %v4752 = vadd.f32 %v4472, %v4696
      %v4753 = vadd.f32 %v4473, %v4699
      %v4754 = vadd.f32 %v4474, %v4704
      %v4755 = vadd.f32 %v4475, %v4707
      %v4756 = vadd.f32 %v4476, %v4712
      %v4757 = vadd.f32 %v4477, %v4715
      %v4758 = vadd.f32 %v4478, %v4720
      %v4759 = vadd.f32 %v4479, %v4723
      %v4760 = vadd.f32 %v4480, %v4728
      %v4761 = vadd.f32 %v4481, %v4731
      %v4762 = vld [vmem:[#allocation3 + $0x19] sm:$0xff]
      %v4763 = vld [vmem:[#allocation3 + $0x21] sm:$0xff]
      %v4764 = vld [vmem:[#allocation3 + $0x29] sm:$0xff]
      %v4765 = vld [vmem:[#allocation3 + $0x31] sm:$0xff]
      %v4766 = vld [vmem:[#allocation3 + $0x39] sm:$0xff]
      %v4767 = vld [vmem:[#allocation3 + $0x41] sm:$0xff]
      %v4768 = vld [vmem:[#allocation3 + $0x49] sm:$0xff]
      %v4769 = vld [vmem:[#allocation3 + $0x51] sm:$0xff]
      %v4770 = vld [vmem:[#allocation3 + $0x59] sm:$0xff]
      %v4771 = vld [vmem:[#allocation3 + $0x61] sm:$0xff]
      %v4772 = vld [vmem:[#allocation3 + $0x69] sm:$0xff]
      %v4773 = vld [vmem:[#allocation3 + $0x71] sm:$0xff]
      %v4774 = vld [vmem:[#allocation3 + $0x79] sm:$0xff]
      %v4775 = vld [vmem:[#allocation3 + $0x81] sm:$0xff]
      %v4776 = vld [vmem:[#allocation3 + $0x89] sm:$0xff]
      %v4777 = vld [vmem:[#allocation3 + $0x91] sm:$0xff]
      %v4778 = vld [vmem:[#allocation3 + $0x99] sm:$0xff]
      %v4779 = vld [vmem:[#allocation3 + $0xa1] sm:$0xff]
      %v4780 = vld [vmem:[#allocation3 + $0xa9] sm:$0xff]
      %v4781 = vld [vmem:[#allocation3 + $0xb1] sm:$0xff]
      %v4782 = vld [vmem:[#allocation3 + $0xb9] sm:$0xff]
      %v4783 = vld [vmem:[#allocation3 + $0xc1] sm:$0xff]
      %v4784 = vld [vmem:[#allocation3 + $0xc9] sm:$0xff]
      %v4785 = vld [vmem:[#allocation3 + $0xd1] sm:$0xff]
      %v4786 = vld [vmem:[#allocation3 + $0xd9] sm:$0xff]
      %v4787 = vld [vmem:[#allocation3 + $0xe1] sm:$0xff]
      %v4788 = vld [vmem:[#allocation3 + $0xe9] sm:$0xff]
      %v4789 = vld [vmem:[#allocation3 + $0xf1] sm:$0xff]
      %v4790 = vpack.c.bf16 %v4763, %v4762
      %v4791 = vpack.c.bf16 %v4765, %v4764
      %v4792 = vpack.c.bf16 %v4767, %v4766
      %v4793 = vpack.c.bf16 %v4769, %v4768
      %v4794 = vpack.c.bf16 %v4771, %v4770
      %v4795 = vpack.c.bf16 %v4773, %v4772
      %v4796 = vpack.c.bf16 %v4775, %v4774
      %v4797 = vpack.c.bf16 %v4777, %v4776
      %v4798 = vpack.c.bf16 %v4779, %v4778
      %v4799 = vpack.c.bf16 %v4781, %v4780
      %v4800 = vpack.c.bf16 %v4783, %v4782
      %v4801 = vpack.c.bf16 %v4785, %v4784
      %v4802 = vpack.c.bf16 %v4787, %v4786
      %v4803 = vpack.c.bf16 %v4789, %v4788
      %s4804 = scalar_lea.vmem %s4, 320
      %v4805 = vld [vmem:[%s4804] sm:$0xf]
      %v4806 = vld [vmem:[%s4804 + $0x4] sm:$0xf]
      %v4807 = vld [vmem:[%s4804 + $0x8] sm:$0xf]
      %v4808 = vld [vmem:[%s4804 + $0xc] sm:$0xf]
      %v4809 = vld [vmem:[%s4804 + $0x10] sm:$0xf]
      %v4810 = vld [vmem:[%s4804 + $0x14] sm:$0xf]
      %v4811 = vld [vmem:[%s4804 + $0x18] sm:$0xf]
      %v4812 = vld [vmem:[%s4804 + $0x1c] sm:$0xf]
      %v4813 = vld [vmem:[%s4804 + $0x20] sm:$0xf]
      %v4814 = vld [vmem:[%s4804 + $0x24] sm:$0xf]
      %v4815 = vld [vmem:[%s4804 + $0x28] sm:$0xf]
      %v4816 = vld [vmem:[%s4804 + $0x2c] sm:$0xf]
      %v4817 = vld [vmem:[%s4804 + $0x30] sm:$0xf]
      %v4818 = vld [vmem:[%s4804 + $0x34] sm:$0xf]
      %v4819 = vld [vmem:[%s4804 + $0x38] sm:$0xf]
      %v4820 = vld [vmem:[%s4804 + $0x3c] sm:$0xf]
      %v4837 = vunpack.c.l.b16 %v4805
      %v4838 = vunpack.c.l.b16 %v4806
      %v4839 = vunpack.c.l.b16 %v4807
      %v4840 = vunpack.c.l.b16 %v4808
      %v4841 = vunpack.c.l.b16 %v4809
      %v4842 = vunpack.c.l.b16 %v4810
      %v4843 = vunpack.c.l.b16 %v4811
      %v4844 = vunpack.c.l.b16 %v4812
      %v4845 = vunpack.c.l.b16 %v4813
      %v4846 = vunpack.c.l.b16 %v4814
      %v4847 = vunpack.c.l.b16 %v4815
      %v4848 = vunpack.c.l.b16 %v4816
      %v4849 = vunpack.c.l.b16 %v4817
      %v4850 = vunpack.c.l.b16 %v4818
      %v4851 = vunpack.c.l.b16 %v4819
      %v4852 = vunpack.c.l.b16 %v4820
      %v4853 = vpack.c.b16 %v4838, %v4837
      %v4854 = vpack.c.b16 %v4840, %v4839
      %v4855 = vpack.c.b16 %v4842, %v4841
      %v4856 = vpack.c.b16 %v4844, %v4843
      %v4857 = vpack.c.b16 %v4846, %v4845
      %v4858 = vpack.c.b16 %v4848, %v4847
      %v4859 = vpack.c.b16 %v4850, %v4849
      %v4860 = vpack.c.b16 %v4852, %v4851
      %4869 = vmatprep.subr.bf16.mxu0 0
      %4870 = vmatpush1.bf16.msra.mxu0 %v4853
      %4871 = vmatprep.subr.bf16.mxu0 0
      %4872 = vmatpush1.bf16.msra.mxu0 %v4854
      %4873 = vmatprep.subr.bf16.mxu0 0
      %4874 = vmatpush1.bf16.msra.mxu0 %v4855
      %4875 = vmatprep.subr.bf16.mxu0 0
      %4876 = vmatpush1.bf16.msra.mxu0 %v4856
      %4877 = vmatprep.subr.bf16.mxu0 0
      %4878 = vmatpush1.bf16.msra.mxu0 %v4857
      %4879 = vmatprep.subr.bf16.mxu0 0
      %4880 = vmatpush1.bf16.msra.mxu0 %v4858
      %4881 = vmatprep.subr.bf16.mxu0 0
      %4882 = vmatpush1.bf16.msra.mxu0 %v4859
      %4883 = vmatprep.subr.bf16.mxu0 0
      %4884 = vmatpush1.bf16.msra.mxu0 %v4860
      %4885 = vmatprep.subr.bf16.mxu0 0
      %4886 = vmatpush1.bf16.msra.mxu0 0
      %4887 = vmatprep.subr.bf16.mxu0 0
      %4888 = vmatpush1.bf16.msra.mxu0 0
      %4889 = vmatprep.subr.bf16.mxu0 0
      %4890 = vmatpush1.bf16.msra.mxu0 0
      %4891 = vmatprep.subr.bf16.mxu0 0
      %4892 = vmatpush1.bf16.msra.mxu0 0
      %4893 = vmatprep.subr.bf16.mxu0 0
      %4894 = vmatpush1.bf16.msra.mxu0 0
      %4895 = vmatprep.subr.bf16.mxu0 0
      %4896 = vmatpush1.bf16.msra.mxu0 0
      %4897 = vmatprep.subr.bf16.mxu0 0
      %4898 = vmatpush1.bf16.msra.mxu0 0
      %4899 = vmatprep.subr.bf16.mxu0 0
      %4900 = vmatpush1.bf16.msra.mxu0 0
      %4901 = vmatprep.mubr.bf16.mxu0 0
      %4902 = vmatmul.mubr.bf16.gmra.mrb[0].mxu0 %v4790
      %v4903 = vpop.f32.mrb[0].mxu0
      %v4904 = vadd.f32 0.0, %v4903
      %v4905 = vpop.f32.mrb[0].mxu0
      %v4906 = vpop.f32.mrb[0].mxu0
      %v4907 = vadd.f32 0.0, %v4906
      %v4908 = vpop.f32.mrb[0].mxu0
      %4909 = vmatprep.mubr.bf16.mxu0 0
      %4910 = vmatmul.mubr.bf16.gmra.mrb[0].mxu0 %v4791
      %v4911 = vpop.f32.mrb[0].mxu0
      %v4912 = vadd.f32 0.0, %v4911
      %v4913 = vpop.f32.mrb[0].mxu0
      %v4914 = vpop.f32.mrb[0].mxu0
      %v4915 = vadd.f32 0.0, %v4914
      %v4916 = vpop.f32.mrb[0].mxu0
      %4917 = vmatprep.mubr.bf16.mxu0 0
      %4918 = vmatmul.mubr.bf16.gmra.mrb[0].mxu0 %v4792
      %v4919 = vpop.f32.mrb[0].mxu0
      %v4920 = vadd.f32 0.0, %v4919
      %v4921 = vpop.f32.mrb[0].mxu0
      %v4922 = vpop.f32.mrb[0].mxu0
      %v4923 = vadd.f32 0.0, %v4922
      %v4924 = vpop.f32.mrb[0].mxu0
      %4925 = vmatprep.mubr.bf16.mxu0 0
      %4926 = vmatmul.mubr.bf16.gmra.mrb[0].mxu0 %v4793
      %v4927 = vpop.f32.mrb[0].mxu0
      %v4928 = vadd.f32 0.0, %v4927
      %v4929 = vpop.f32.mrb[0].mxu0
      %v4930 = vpop.f32.mrb[0].mxu0
      %v4931 = vadd.f32 0.0, %v4930
      %v4932 = vpop.f32.mrb[0].mxu0
      %4933 = vmatprep.mubr.bf16.mxu0 0
      %4934 = vmatmul.mubr.bf16.gmra.mrb[0].mxu0 %v4794
      %v4935 = vpop.f32.mrb[0].mxu0
      %v4936 = vadd.f32 0.0, %v4935
      %v4937 = vpop.f32.mrb[0].mxu0
      %v4938 = vpop.f32.mrb[0].mxu0
      %v4939 = vadd.f32 0.0, %v4938
      %v4940 = vpop.f32.mrb[0].mxu0
      %4941 = vmatprep.mubr.bf16.mxu0 0
      %4942 = vmatmul.mubr.bf16.gmra.mrb[0].mxu0 %v4795
      %v4943 = vpop.f32.mrb[0].mxu0
      %v4944 = vadd.f32 0.0, %v4943
      %v4945 = vpop.f32.mrb[0].mxu0
      %v4946 = vpop.f32.mrb[0].mxu0
      %v4947 = vadd.f32 0.0, %v4946
      %v4948 = vpop.f32.mrb[0].mxu0
      %4949 = vmatprep.mubr.bf16.mxu0 0
      %4950 = vmatmul.mubr.bf16.gmra.mrb[0].mxu0 %v4796
      %v4951 = vpop.f32.mrb[0].mxu0
      %v4952 = vadd.f32 0.0, %v4951
      %v4953 = vpop.f32.mrb[0].mxu0
      %v4954 = vpop.f32.mrb[0].mxu0
      %v4955 = vadd.f32 0.0, %v4954
      %v4956 = vpop.f32.mrb[0].mxu0
      %4957 = vmatprep.mubr.bf16.mxu0 0
      %4958 = vmatmul.mubr.bf16.gmra.mrb[0].mxu0 %v4797
      %v4959 = vpop.f32.mrb[0].mxu0
      %v4960 = vadd.f32 0.0, %v4959
      %v4961 = vpop.f32.mrb[0].mxu0
      %v4962 = vpop.f32.mrb[0].mxu0
      %v4963 = vadd.f32 0.0, %v4962
      %v4964 = vpop.f32.mrb[0].mxu0
      %4965 = vmatprep.mubr.bf16.mxu0 0
      %4966 = vmatmul.mubr.bf16.gmra.mrb[0].mxu0 %v4798
      %v4967 = vpop.f32.mrb[0].mxu0
      %v4968 = vadd.f32 0.0, %v4967
      %v4969 = vpop.f32.mrb[0].mxu0
      %v4970 = vpop.f32.mrb[0].mxu0
      %v4971 = vadd.f32 0.0, %v4970
      %v4972 = vpop.f32.mrb[0].mxu0
      %4973 = vmatprep.mubr.bf16.mxu0 0
      %4974 = vmatmul.mubr.bf16.gmra.mrb[0].mxu0 %v4799
      %v4975 = vpop.f32.mrb[0].mxu0
      %v4976 = vadd.f32 0.0, %v4975
      %v4977 = vpop.f32.mrb[0].mxu0
      %v4978 = vpop.f32.mrb[0].mxu0
      %v4979 = vadd.f32 0.0, %v4978
      %v4980 = vpop.f32.mrb[0].mxu0
      %4981 = vmatprep.mubr.bf16.mxu0 0
      %4982 = vmatmul.mubr.bf16.gmra.mrb[0].mxu0 %v4800
      %v4983 = vpop.f32.mrb[0].mxu0
      %v4984 = vadd.f32 0.0, %v4983
      %v4985 = vpop.f32.mrb[0].mxu0
      %v4986 = vpop.f32.mrb[0].mxu0
      %v4987 = vadd.f32 0.0, %v4986
      %v4988 = vpop.f32.mrb[0].mxu0
      %4989 = vmatprep.mubr.bf16.mxu0 0
      %4990 = vmatmul.mubr.bf16.gmra.mrb[0].mxu0 %v4801
      %v4991 = vpop.f32.mrb[0].mxu0
      %v4992 = vadd.f32 0.0, %v4991
      %v4993 = vpop.f32.mrb[0].mxu0
      %v4994 = vpop.f32.mrb[0].mxu0
      %v4995 = vadd.f32 0.0, %v4994
      %v4996 = vpop.f32.mrb[0].mxu0
      %4997 = vmatprep.mubr.bf16.mxu0 0
      %4998 = vmatmul.mubr.bf16.gmra.mrb[0].mxu0 %v4802
      %v4999 = vpop.f32.mrb[0].mxu0
      %v5000 = vadd.f32 0.0, %v4999
      %v5001 = vpop.f32.mrb[0].mxu0
      %v5002 = vpop.f32.mrb[0].mxu0
      %v5003 = vadd.f32 0.0, %v5002
      %v5004 = vpop.f32.mrb[0].mxu0
      %5005 = vmatprep.mubr.bf16.mxu0 0
      %5006 = vmatmul.mubr.bf16.gmra.mrb[0].mxu0 %v4803
      %v5007 = vpop.f32.mrb[0].mxu0
      %v5008 = vadd.f32 0.0, %v5007
      %v5009 = vpop.f32.mrb[0].mxu0
      %v5010 = vpop.f32.mrb[0].mxu0
      %v5011 = vadd.f32 0.0, %v5010
      %v5012 = vpop.f32.mrb[0].mxu0
      %5013 = vdwg.mxu0
      %v5014 = vadd.f32 %v4734, %v4904
      %v5015 = vadd.f32 %v4735, %v4907
      %v5016 = vadd.f32 %v4736, %v4912
      %v5017 = vadd.f32 %v4737, %v4915
      %v5018 = vadd.f32 %v4738, %v4920
      %v5019 = vadd.f32 %v4739, %v4923
      %v5020 = vadd.f32 %v4740, %v4928
      %v5021 = vadd.f32 %v4741, %v4931
      %v5022 = vadd.f32 %v4742, %v4936
      %v5023 = vadd.f32 %v4743, %v4939
      %v5024 = vadd.f32 %v4744, %v4944
      %v5025 = vadd.f32 %v4745, %v4947
      %v5026 = vadd.f32 %v4746, %v4952
      %v5027 = vadd.f32 %v4747, %v4955
      %v5028 = vadd.f32 %v4748, %v4960
      %v5029 = vadd.f32 %v4749, %v4963
      %v5030 = vadd.f32 %v4750, %v4968
      %v5031 = vadd.f32 %v4751, %v4971
      %v5032 = vadd.f32 %v4752, %v4976
      %v5033 = vadd.f32 %v4753, %v4979
      %v5034 = vadd.f32 %v4754, %v4984
      %v5035 = vadd.f32 %v4755, %v4987
      %v5036 = vadd.f32 %v4756, %v4992
      %v5037 = vadd.f32 %v4757, %v4995
      %v5038 = vadd.f32 %v4758, %v5000
      %v5039 = vadd.f32 %v4759, %v5003
      %v5040 = vadd.f32 %v4760, %v5008
      %v5041 = vadd.f32 %v4761, %v5011
      %v5042 = vld [vmem:[#allocation3 + $0x27] sm:$0xff]
      %v5043 = vld [vmem:[#allocation3 + $0x2f] sm:$0xff]
      %v5044 = vld [vmem:[#allocation3 + $0x37] sm:$0xff]
      %v5045 = vld [vmem:[#allocation3 + $0x3f] sm:$0xff]
      %v5046 = vld [vmem:[#allocation3 + $0x47] sm:$0xff]
      %v5047 = vld [vmem:[#allocation3 + $0x4f] sm:$0xff]
      %v5048 = vld [vmem:[#allocation3 + $0x57] sm:$0xff]
      %v5049 = vld [vmem:[#allocation3 + $0x5f] sm:$0xff]
      %v5050 = vld [vmem:[#allocation3 + $0x67] sm:$0xff]
      %v5051 = vld [vmem:[#allocation3 + $0x6f] sm:$0xff]
      %v5052 = vld [vmem:[#allocation3 + $0x77] sm:$0xff]
      %v5053 = vld [vmem:[#allocation3 + $0x7f] sm:$0xff]
      %v5054 = vld [vmem:[#allocation3 + $0x87] sm:$0xff]
      %v5055 = vld [vmem:[#allocation3 + $0x8f] sm:$0xff]
      %v5056 = vld [vmem:[#allocation3 + $0x97] sm:$0xff]
      %v5057 = vld [vmem:[#allocation3 + $0x9f] sm:$0xff]
      %v5058 = vld [vmem:[#allocation3 + $0xa7] sm:$0xff]
      %v5059 = vld [vmem:[#allocation3 + $0xaf] sm:$0xff]
      %v5060 = vld [vmem:[#allocation3 + $0xb7] sm:$0xff]
      %v5061 = vld [vmem:[#allocation3 + $0xbf] sm:$0xff]
      %v5062 = vld [vmem:[#allocation3 + $0xc7] sm:$0xff]
      %v5063 = vld [vmem:[#allocation3 + $0xcf] sm:$0xff]
      %v5064 = vld [vmem:[#allocation3 + $0xd7] sm:$0xff]
      %v5065 = vld [vmem:[#allocation3 + $0xdf] sm:$0xff]
      %v5066 = vld [vmem:[#allocation3 + $0xe7] sm:$0xff]
      %v5067 = vld [vmem:[#allocation3 + $0xef] sm:$0xff]
      %v5068 = vld [vmem:[#allocation3 + $0xf7] sm:$0xff]
      %v5069 = vld [vmem:[#allocation3 + $0xff] sm:$0xff]
      %v5070 = vpack.c.bf16 %v5043, %v5042
      %v5071 = vpack.c.bf16 %v5045, %v5044
      %v5072 = vpack.c.bf16 %v5047, %v5046
      %v5073 = vpack.c.bf16 %v5049, %v5048
      %v5074 = vpack.c.bf16 %v5051, %v5050
      %v5075 = vpack.c.bf16 %v5053, %v5052
      %v5076 = vpack.c.bf16 %v5055, %v5054
      %v5077 = vpack.c.bf16 %v5057, %v5056
      %v5078 = vpack.c.bf16 %v5059, %v5058
      %v5079 = vpack.c.bf16 %v5061, %v5060
      %v5080 = vpack.c.bf16 %v5063, %v5062
      %v5081 = vpack.c.bf16 %v5065, %v5064
      %v5082 = vpack.c.bf16 %v5067, %v5066
      %v5083 = vpack.c.bf16 %v5069, %v5068
      %s5084 = scalar_lea.vmem %s4, 384
      %v5085 = vld [vmem:[%s5084] sm:$0xf]
      %v5086 = vld [vmem:[%s5084 + $0x4] sm:$0xf]
      %v5087 = vld [vmem:[%s5084 + $0x8] sm:$0xf]
      %v5088 = vld [vmem:[%s5084 + $0xc] sm:$0xf]
      %v5089 = vld [vmem:[%s5084 + $0x10] sm:$0xf]
      %v5090 = vld [vmem:[%s5084 + $0x14] sm:$0xf]
      %v5091 = vld [vmem:[%s5084 + $0x18] sm:$0xf]
      %v5092 = vld [vmem:[%s5084 + $0x1c] sm:$0xf]
      %v5093 = vld [vmem:[%s5084 + $0x20] sm:$0xf]
      %v5094 = vld [vmem:[%s5084 + $0x24] sm:$0xf]
      %v5095 = vld [vmem:[%s5084 + $0x28] sm:$0xf]
      %v5096 = vld [vmem:[%s5084 + $0x2c] sm:$0xf]
      %v5097 = vld [vmem:[%s5084 + $0x30] sm:$0xf]
      %v5098 = vld [vmem:[%s5084 + $0x34] sm:$0xf]
      %v5099 = vld [vmem:[%s5084 + $0x38] sm:$0xf]
      %v5100 = vld [vmem:[%s5084 + $0x3c] sm:$0xf]
      %v5117 = vunpack.c.l.b16 %v5085
      %v5118 = vunpack.c.l.b16 %v5086
      %v5119 = vunpack.c.l.b16 %v5087
      %v5120 = vunpack.c.l.b16 %v5088
      %v5121 = vunpack.c.l.b16 %v5089
      %v5122 = vunpack.c.l.b16 %v5090
      %v5123 = vunpack.c.l.b16 %v5091
      %v5124 = vunpack.c.l.b16 %v5092
      %v5125 = vunpack.c.l.b16 %v5093
      %v5126 = vunpack.c.l.b16 %v5094
      %v5127 = vunpack.c.l.b16 %v5095
      %v5128 = vunpack.c.l.b16 %v5096
      %v5129 = vunpack.c.l.b16 %v5097
      %v5130 = vunpack.c.l.b16 %v5098
      %v5131 = vunpack.c.l.b16 %v5099
      %v5132 = vunpack.c.l.b16 %v5100
      %v5133 = vpack.c.b16 %v5118, %v5117
      %v5134 = vpack.c.b16 %v5120, %v5119
      %v5135 = vpack.c.b16 %v5122, %v5121
      %v5136 = vpack.c.b16 %v5124, %v5123
      %v5137 = vpack.c.b16 %v5126, %v5125
      %v5138 = vpack.c.b16 %v5128, %v5127
      %v5139 = vpack.c.b16 %v5130, %v5129
      %v5140 = vpack.c.b16 %v5132, %v5131
      %5149 = vmatprep.subr.bf16.mxu0 0
      %5150 = vmatpush1.bf16.msra.mxu0 %v5133
      %5151 = vmatprep.subr.bf16.mxu0 0
      %5152 = vmatpush1.bf16.msra.mxu0 %v5134
      %5153 = vmatprep.subr.bf16.mxu0 0
      %5154 = vmatpush1.bf16.msra.mxu0 %v5135
      %5155 = vmatprep.subr.bf16.mxu0 0
      %5156 = vmatpush1.bf16.msra.mxu0 %v5136
      %5157 = vmatprep.subr.bf16.mxu0 0
      %5158 = vmatpush1.bf16.msra.mxu0 %v5137
      %5159 = vmatprep.subr.bf16.mxu0 0
      %5160 = vmatpush1.bf16.msra.mxu0 %v5138
      %5161 = vmatprep.subr.bf16.mxu0 0
      %5162 = vmatpush1.bf16.msra.mxu0 %v5139
      %5163 = vmatprep.subr.bf16.mxu0 0
      %5164 = vmatpush1.bf16.msra.mxu0 %v5140
      %5165 = vmatprep.subr.bf16.mxu0 0
      %5166 = vmatpush1.bf16.msra.mxu0 0
      %5167 = vmatprep.subr.bf16.mxu0 0
      %5168 = vmatpush1.bf16.msra.mxu0 0
      %5169 = vmatprep.subr.bf16.mxu0 0
      %5170 = vmatpush1.bf16.msra.mxu0 0
      %5171 = vmatprep.subr.bf16.mxu0 0
      %5172 = vmatpush1.bf16.msra.mxu0 0
      %5173 = vmatprep.subr.bf16.mxu0 0
      %5174 = vmatpush1.bf16.msra.mxu0 0
      %5175 = vmatprep.subr.bf16.mxu0 0
      %5176 = vmatpush1.bf16.msra.mxu0 0
      %5177 = vmatprep.subr.bf16.mxu0 0
      %5178 = vmatpush1.bf16.msra.mxu0 0
      %5179 = vmatprep.subr.bf16.mxu0 0
      %5180 = vmatpush1.bf16.msra.mxu0 0
      %5181 = vmatprep.mubr.bf16.mxu0 0
      %5182 = vmatmul.mubr.bf16.gmra.mrb[0].mxu0 %v5070
      %v5183 = vpop.f32.mrb[0].mxu0
      %v5184 = vadd.f32 0.0, %v5183
      %v5185 = vpop.f32.mrb[0].mxu0
      %v5186 = vpop.f32.mrb[0].mxu0
      %v5187 = vadd.f32 0.0, %v5186
      %v5188 = vpop.f32.mrb[0].mxu0
      %5189 = vmatprep.mubr.bf16.mxu0 0
      %5190 = vmatmul.mubr.bf16.gmra.mrb[0].mxu0 %v5071
      %v5191 = vpop.f32.mrb[0].mxu0
      %v5192 = vadd.f32 0.0, %v5191
      %v5193 = vpop.f32.mrb[0].mxu0
      %v5194 = vpop.f32.mrb[0].mxu0
      %v5195 = vadd.f32 0.0, %v5194
      %v5196 = vpop.f32.mrb[0].mxu0
      %5197 = vmatprep.mubr.bf16.mxu0 0
      %5198 = vmatmul.mubr.bf16.gmra.mrb[0].mxu0 %v5072
      %v5199 = vpop.f32.mrb[0].mxu0
      %v5200 = vadd.f32 0.0, %v5199
      %v5201 = vpop.f32.mrb[0].mxu0
      %v5202 = vpop.f32.mrb[0].mxu0
      %v5203 = vadd.f32 0.0, %v5202
      %v5204 = vpop.f32.mrb[0].mxu0
      %5205 = vmatprep.mubr.bf16.mxu0 0
      %5206 = vmatmul.mubr.bf16.gmra.mrb[0].mxu0 %v5073
      %v5207 = vpop.f32.mrb[0].mxu0
      %v5208 = vadd.f32 0.0, %v5207
      %v5209 = vpop.f32.mrb[0].mxu0
      %v5210 = vpop.f32.mrb[0].mxu0
      %v5211 = vadd.f32 0.0, %v5210
      %v5212 = vpop.f32.mrb[0].mxu0
      %5213 = vmatprep.mubr.bf16.mxu0 0
      %5214 = vmatmul.mubr.bf16.gmra.mrb[0].mxu0 %v5074
      %v5215 = vpop.f32.mrb[0].mxu0
      %v5216 = vadd.f32 0.0, %v5215
      %v5217 = vpop.f32.mrb[0].mxu0
      %v5218 = vpop.f32.mrb[0].mxu0
      %v5219 = vadd.f32 0.0, %v5218
      %v5220 = vpop.f32.mrb[0].mxu0
      %5221 = vmatprep.mubr.bf16.mxu0 0
      %5222 = vmatmul.mubr.bf16.gmra.mrb[0].mxu0 %v5075
      %v5223 = vpop.f32.mrb[0].mxu0
      %v5224 = vadd.f32 0.0, %v5223
      %v5225 = vpop.f32.mrb[0].mxu0
      %v5226 = vpop.f32.mrb[0].mxu0
      %v5227 = vadd.f32 0.0, %v5226
      %v5228 = vpop.f32.mrb[0].mxu0
      %5229 = vmatprep.mubr.bf16.mxu0 0
      %5230 = vmatmul.mubr.bf16.gmra.mrb[0].mxu0 %v5076
      %v5231 = vpop.f32.mrb[0].mxu0
      %v5232 = vadd.f32 0.0, %v5231
      %v5233 = vpop.f32.mrb[0].mxu0
      %v5234 = vpop.f32.mrb[0].mxu0
      %v5235 = vadd.f32 0.0, %v5234
      %v5236 = vpop.f32.mrb[0].mxu0
      %5237 = vmatprep.mubr.bf16.mxu0 0
      %5238 = vmatmul.mubr.bf16.gmra.mrb[0].mxu0 %v5077
      %v5239 = vpop.f32.mrb[0].mxu0
      %v5240 = vadd.f32 0.0, %v5239
      %v5241 = vpop.f32.mrb[0].mxu0
      %v5242 = vpop.f32.mrb[0].mxu0
      %v5243 = vadd.f32 0.0, %v5242
      %v5244 = vpop.f32.mrb[0].mxu0
      %5245 = vmatprep.mubr.bf16.mxu0 0
      %5246 = vmatmul.mubr.bf16.gmra.mrb[0].mxu0 %v5078
      %v5247 = vpop.f32.mrb[0].mxu0
      %v5248 = vadd.f32 0.0, %v5247
      %v5249 = vpop.f32.mrb[0].mxu0
      %v5250 = vpop.f32.mrb[0].mxu0
      %v5251 = vadd.f32 0.0, %v5250
      %v5252 = vpop.f32.mrb[0].mxu0
      %5253 = vmatprep.mubr.bf16.mxu0 0
      %5254 = vmatmul.mubr.bf16.gmra.mrb[0].mxu0 %v5079
      %v5255 = vpop.f32.mrb[0].mxu0
      %v5256 = vadd.f32 0.0, %v5255
      %v5257 = vpop.f32.mrb[0].mxu0
      %v5258 = vpop.f32.mrb[0].mxu0
      %v5259 = vadd.f32 0.0, %v5258
      %v5260 = vpop.f32.mrb[0].mxu0
      %5261 = vmatprep.mubr.bf16.mxu0 0
      %5262 = vmatmul.mubr.bf16.gmra.mrb[0].mxu0 %v5080
      %v5263 = vpop.f32.mrb[0].mxu0
      %v5264 = vadd.f32 0.0, %v5263
      %v5265 = vpop.f32.mrb[0].mxu0
      %v5266 = vpop.f32.mrb[0].mxu0
      %v5267 = vadd.f32 0.0, %v5266
      %v5268 = vpop.f32.mrb[0].mxu0
      %5269 = vmatprep.mubr.bf16.mxu0 0
      %5270 = vmatmul.mubr.bf16.gmra.mrb[0].mxu0 %v5081
      %v5271 = vpop.f32.mrb[0].mxu0
      %v5272 = vadd.f32 0.0, %v5271
      %v5273 = vpop.f32.mrb[0].mxu0
      %v5274 = vpop.f32.mrb[0].mxu0
      %v5275 = vadd.f32 0.0, %v5274
      %v5276 = vpop.f32.mrb[0].mxu0
      %5277 = vmatprep.mubr.bf16.mxu0 0
      %5278 = vmatmul.mubr.bf16.gmra.mrb[0].mxu0 %v5082
      %v5279 = vpop.f32.mrb[0].mxu0
      %v5280 = vadd.f32 0.0, %v5279
      %v5281 = vpop.f32.mrb[0].mxu0
      %v5282 = vpop.f32.mrb[0].mxu0
      %v5283 = vadd.f32 0.0, %v5282
      %v5284 = vpop.f32.mrb[0].mxu0
      %5285 = vmatprep.mubr.bf16.mxu0 0
      %5286 = vmatmul.mubr.bf16.gmra.mrb[0].mxu0 %v5083
      %v5287 = vpop.f32.mrb[0].mxu0
      %v5288 = vadd.f32 0.0, %v5287
      %v5289 = vpop.f32.mrb[0].mxu0
      %v5290 = vpop.f32.mrb[0].mxu0
      %v5291 = vadd.f32 0.0, %v5290
      %v5292 = vpop.f32.mrb[0].mxu0
      %5293 = vdwg.mxu0
      %v5294 = vadd.f32 %v5014, %v5184
      %v5295 = vadd.f32 %v5015, %v5187
      %v5296 = vadd.f32 %v5016, %v5192
      %v5297 = vadd.f32 %v5017, %v5195
      %v5298 = vadd.f32 %v5018, %v5200
      %v5299 = vadd.f32 %v5019, %v5203
      %v5300 = vadd.f32 %v5020, %v5208
      %v5301 = vadd.f32 %v5021, %v5211
      %v5302 = vadd.f32 %v5022, %v5216
      %v5303 = vadd.f32 %v5023, %v5219
      %v5304 = vadd.f32 %v5024, %v5224
      %v5305 = vadd.f32 %v5025, %v5227
      %v5306 = vadd.f32 %v5026, %v5232
      %v5307 = vadd.f32 %v5027, %v5235
      %v5308 = vadd.f32 %v5028, %v5240
      %v5309 = vadd.f32 %v5029, %v5243
      %v5310 = vadd.f32 %v5030, %v5248
      %v5311 = vadd.f32 %v5031, %v5251
      %v5312 = vadd.f32 %v5032, %v5256
      %v5313 = vadd.f32 %v5033, %v5259
      %v5314 = vadd.f32 %v5034, %v5264
      %v5315 = vadd.f32 %v5035, %v5267
      %v5316 = vadd.f32 %v5036, %v5272
      %v5317 = vadd.f32 %v5037, %v5275
      %v5318 = vadd.f32 %v5038, %v5280
      %v5319 = vadd.f32 %v5039, %v5283
      %v5320 = vadd.f32 %v5040, %v5288
      %v5321 = vadd.f32 %v5041, %v5291
      %v5322 = vld [vmem:[#allocation3 + $0x28] sm:$0xff]
      %v5323 = vld [vmem:[#allocation3 + $0x30] sm:$0xff]
      %v5324 = vld [vmem:[#allocation3 + $0x38] sm:$0xff]
      %v5325 = vld [vmem:[#allocation3 + $0x40] sm:$0xff]
      %v5326 = vld [vmem:[#allocation3 + $0x48] sm:$0xff]
      %v5327 = vld [vmem:[#allocation3 + $0x50] sm:$0xff]
      %v5328 = vld [vmem:[#allocation3 + $0x58] sm:$0xff]
      %v5329 = vld [vmem:[#allocation3 + $0x60] sm:$0xff]
      %v5330 = vld [vmem:[#allocation3 + $0x68] sm:$0xff]
      %v5331 = vld [vmem:[#allocation3 + $0x70] sm:$0xff]
      %v5332 = vld [vmem:[#allocation3 + $0x78] sm:$0xff]
      %v5333 = vld [vmem:[#allocation3 + $0x80] sm:$0xff]
      %v5334 = vld [vmem:[#allocation3 + $0x88] sm:$0xff]
      %v5335 = vld [vmem:[#allocation3 + $0x90] sm:$0xff]
      %v5336 = vld [vmem:[#allocation3 + $0x98] sm:$0xff]
      %v5337 = vld [vmem:[#allocation3 + $0xa0] sm:$0xff]
      %v5338 = vld [vmem:[#allocation3 + $0xa8] sm:$0xff]
      %v5339 = vld [vmem:[#allocation3 + $0xb0] sm:$0xff]
      %v5340 = vld [vmem:[#allocation3 + $0xb8] sm:$0xff]
      %v5341 = vld [vmem:[#allocation3 + $0xc0] sm:$0xff]
      %v5342 = vld [vmem:[#allocation3 + $0xc8] sm:$0xff]
      %v5343 = vld [vmem:[#allocation3 + $0xd0] sm:$0xff]
      %v5344 = vld [vmem:[#allocation3 + $0xd8] sm:$0xff]
      %v5345 = vld [vmem:[#allocation3 + $0xe0] sm:$0xff]
      %v5346 = vld [vmem:[#allocation3 + $0xe8] sm:$0xff]
      %v5347 = vld [vmem:[#allocation3 + $0xf0] sm:$0xff]
      %v5348 = vld [vmem:[#allocation3 + $0xf8] sm:$0xff]
      %v5349 = vld [vmem:[#allocation3 + $0x100] sm:$0xff]
      %v5350 = vpack.c.bf16 %v5323, %v5322
      %v5351 = vpack.c.bf16 %v5325, %v5324
      %v5352 = vpack.c.bf16 %v5327, %v5326
      %v5353 = vpack.c.bf16 %v5329, %v5328
      %v5354 = vpack.c.bf16 %v5331, %v5330
      %v5355 = vpack.c.bf16 %v5333, %v5332
      %v5356 = vpack.c.bf16 %v5335, %v5334
      %v5357 = vpack.c.bf16 %v5337, %v5336
      %v5358 = vpack.c.bf16 %v5339, %v5338
      %v5359 = vpack.c.bf16 %v5341, %v5340
      %v5360 = vpack.c.bf16 %v5343, %v5342
      %v5361 = vpack.c.bf16 %v5345, %v5344
      %v5362 = vpack.c.bf16 %v5347, %v5346
      %v5363 = vpack.c.bf16 %v5349, %v5348
      %s5364 = scalar_lea.vmem %s4, 448
      %v5365 = vld [vmem:[%s5364] sm:$0xf]
      %v5366 = vld [vmem:[%s5364 + $0x4] sm:$0xf]
      %v5367 = vld [vmem:[%s5364 + $0x8] sm:$0xf]
      %v5368 = vld [vmem:[%s5364 + $0xc] sm:$0xf]
      %v5369 = vld [vmem:[%s5364 + $0x10] sm:$0xf]
      %v5370 = vld [vmem:[%s5364 + $0x14] sm:$0xf]
      %v5371 = vld [vmem:[%s5364 + $0x18] sm:$0xf]
      %v5372 = vld [vmem:[%s5364 + $0x1c] sm:$0xf]
      %v5373 = vld [vmem:[%s5364 + $0x20] sm:$0xf]
      %v5374 = vld [vmem:[%s5364 + $0x24] sm:$0xf]
      %v5375 = vld [vmem:[%s5364 + $0x28] sm:$0xf]
      %v5376 = vld [vmem:[%s5364 + $0x2c] sm:$0xf]
      %v5377 = vld [vmem:[%s5364 + $0x30] sm:$0xf]
      %v5378 = vld [vmem:[%s5364 + $0x34] sm:$0xf]
      %v5379 = vld [vmem:[%s5364 + $0x38] sm:$0xf]
      %v5380 = vld [vmem:[%s5364 + $0x3c] sm:$0xf]
      %v5397 = vunpack.c.l.b16 %v5365
      %v5398 = vunpack.c.l.b16 %v5366
      %v5399 = vunpack.c.l.b16 %v5367
      %v5400 = vunpack.c.l.b16 %v5368
      %v5401 = vunpack.c.l.b16 %v5369
      %v5402 = vunpack.c.l.b16 %v5370
      %v5403 = vunpack.c.l.b16 %v5371
      %v5404 = vunpack.c.l.b16 %v5372
      %v5405 = vunpack.c.l.b16 %v5373
      %v5406 = vunpack.c.l.b16 %v5374
      %v5407 = vunpack.c.l.b16 %v5375
      %v5408 = vunpack.c.l.b16 %v5376
      %v5409 = vunpack.c.l.b16 %v5377
      %v5410 = vunpack.c.l.b16 %v5378
      %v5411 = vunpack.c.l.b16 %v5379
      %v5412 = vunpack.c.l.b16 %v5380
      %v5413 = vpack.c.b16 %v5398, %v5397
      %v5414 = vpack.c.b16 %v5400, %v5399
      %v5415 = vpack.c.b16 %v5402, %v5401
      %v5416 = vpack.c.b16 %v5404, %v5403
      %v5417 = vpack.c.b16 %v5406, %v5405
      %v5418 = vpack.c.b16 %v5408, %v5407
      %v5419 = vpack.c.b16 %v5410, %v5409
      %v5420 = vpack.c.b16 %v5412, %v5411
      %5429 = vmatprep.subr.bf16.mxu0 0
      %5430 = vmatpush1.bf16.msra.mxu0 %v5413
      %5431 = vmatprep.subr.bf16.mxu0 0
      %5432 = vmatpush1.bf16.msra.mxu0 %v5414
      %5433 = vmatprep.subr.bf16.mxu0 0
      %5434 = vmatpush1.bf16.msra.mxu0 %v5415
      %5435 = vmatprep.subr.bf16.mxu0 0
      %5436 = vmatpush1.bf16.msra.mxu0 %v5416
      %5437 = vmatprep.subr.bf16.mxu0 0
      %5438 = vmatpush1.bf16.msra.mxu0 %v5417
      %5439 = vmatprep.subr.bf16.mxu0 0
      %5440 = vmatpush1.bf16.msra.mxu0 %v5418
      %5441 = vmatprep.subr.bf16.mxu0 0
      %5442 = vmatpush1.bf16.msra.mxu0 %v5419
      %5443 = vmatprep.subr.bf16.mxu0 0
      %5444 = vmatpush1.bf16.msra.mxu0 %v5420
      %5445 = vmatprep.subr.bf16.mxu0 0
      %5446 = vmatpush1.bf16.msra.mxu0 0
      %5447 = vmatprep.subr.bf16.mxu0 0
      %5448 = vmatpush1.bf16.msra.mxu0 0
      %5449 = vmatprep.subr.bf16.mxu0 0
      %5450 = vmatpush1.bf16.msra.mxu0 0
      %5451 = vmatprep.subr.bf16.mxu0 0
      %5452 = vmatpush1.bf16.msra.mxu0 0
      %5453 = vmatprep.subr.bf16.mxu0 0
      %5454 = vmatpush1.bf16.msra.mxu0 0
      %5455 = vmatprep.subr.bf16.mxu0 0
      %5456 = vmatpush1.bf16.msra.mxu0 0
      %5457 = vmatprep.subr.bf16.mxu0 0
      %5458 = vmatpush1.bf16.msra.mxu0 0
      %5459 = vmatprep.subr.bf16.mxu0 0
      %5460 = vmatpush1.bf16.msra.mxu0 0
      %5461 = vmatprep.mubr.bf16.mxu0 0
      %5462 = vmatmul.mubr.bf16.gmra.mrb[0].mxu0 %v5350
      %v5463 = vpop.f32.mrb[0].mxu0
      %v5464 = vadd.f32 0.0, %v5463
      %v5465 = vpop.f32.mrb[0].mxu0
      %v5466 = vpop.f32.mrb[0].mxu0
      %v5467 = vadd.f32 0.0, %v5466
      %v5468 = vpop.f32.mrb[0].mxu0
      %5469 = vmatprep.mubr.bf16.mxu0 0
      %5470 = vmatmul.mubr.bf16.gmra.mrb[0].mxu0 %v5351
      %v5471 = vpop.f32.mrb[0].mxu0
      %v5472 = vadd.f32 0.0, %v5471
      %v5473 = vpop.f32.mrb[0].mxu0
      %v5474 = vpop.f32.mrb[0].mxu0
      %v5475 = vadd.f32 0.0, %v5474
      %v5476 = vpop.f32.mrb[0].mxu0
      %5477 = vmatprep.mubr.bf16.mxu0 0
      %5478 = vmatmul.mubr.bf16.gmra.mrb[0].mxu0 %v5352
      %v5479 = vpop.f32.mrb[0].mxu0
      %v5480 = vadd.f32 0.0, %v5479
      %v5481 = vpop.f32.mrb[0].mxu0
      %v5482 = vpop.f32.mrb[0].mxu0
      %v5483 = vadd.f32 0.0, %v5482
      %v5484 = vpop.f32.mrb[0].mxu0
      %5485 = vmatprep.mubr.bf16.mxu0 0
      %5486 = vmatmul.mubr.bf16.gmra.mrb[0].mxu0 %v5353
      %v5487 = vpop.f32.mrb[0].mxu0
      %v5488 = vadd.f32 0.0, %v5487
      %v5489 = vpop.f32.mrb[0].mxu0
      %v5490 = vpop.f32.mrb[0].mxu0
      %v5491 = vadd.f32 0.0, %v5490
      %v5492 = vpop.f32.mrb[0].mxu0
      %5493 = vmatprep.mubr.bf16.mxu0 0
      %5494 = vmatmul.mubr.bf16.gmra.mrb[0].mxu0 %v5354
      %v5495 = vpop.f32.mrb[0].mxu0
      %v5496 = vadd.f32 0.0, %v5495
      %v5497 = vpop.f32.mrb[0].mxu0
      %v5498 = vpop.f32.mrb[0].mxu0
      %v5499 = vadd.f32 0.0, %v5498
      %v5500 = vpop.f32.mrb[0].mxu0
      %5501 = vmatprep.mubr.bf16.mxu0 0
      %5502 = vmatmul.mubr.bf16.gmra.mrb[0].mxu0 %v5355
      %v5503 = vpop.f32.mrb[0].mxu0
      %v5504 = vadd.f32 0.0, %v5503
      %v5505 = vpop.f32.mrb[0].mxu0
      %v5506 = vpop.f32.mrb[0].mxu0
      %v5507 = vadd.f32 0.0, %v5506
      %v5508 = vpop.f32.mrb[0].mxu0
      %5509 = vmatprep.mubr.bf16.mxu0 0
      %5510 = vmatmul.mubr.bf16.gmra.mrb[0].mxu0 %v5356
      %v5511 = vpop.f32.mrb[0].mxu0
      %v5512 = vadd.f32 0.0, %v5511
      %v5513 = vpop.f32.mrb[0].mxu0
      %v5514 = vpop.f32.mrb[0].mxu0
      %v5515 = vadd.f32 0.0, %v5514
      %v5516 = vpop.f32.mrb[0].mxu0
      %5517 = vmatprep.mubr.bf16.mxu0 0
      %5518 = vmatmul.mubr.bf16.gmra.mrb[0].mxu0 %v5357
      %v5519 = vpop.f32.mrb[0].mxu0
      %v5520 = vadd.f32 0.0, %v5519
      %v5521 = vpop.f32.mrb[0].mxu0
      %v5522 = vpop.f32.mrb[0].mxu0
      %v5523 = vadd.f32 0.0, %v5522
      %v5524 = vpop.f32.mrb[0].mxu0
      %5525 = vmatprep.mubr.bf16.mxu0 0
      %5526 = vmatmul.mubr.bf16.gmra.mrb[0].mxu0 %v5358
      %v5527 = vpop.f32.mrb[0].mxu0
      %v5528 = vadd.f32 0.0, %v5527
      %v5529 = vpop.f32.mrb[0].mxu0
      %v5530 = vpop.f32.mrb[0].mxu0
      %v5531 = vadd.f32 0.0, %v5530
      %v5532 = vpop.f32.mrb[0].mxu0
      %5533 = vmatprep.mubr.bf16.mxu0 0
      %5534 = vmatmul.mubr.bf16.gmra.mrb[0].mxu0 %v5359
      %v5535 = vpop.f32.mrb[0].mxu0
      %v5536 = vadd.f32 0.0, %v5535
      %v5537 = vpop.f32.mrb[0].mxu0
      %v5538 = vpop.f32.mrb[0].mxu0
      %v5539 = vadd.f32 0.0, %v5538
      %v5540 = vpop.f32.mrb[0].mxu0
      %5541 = vmatprep.mubr.bf16.mxu0 0
      %5542 = vmatmul.mubr.bf16.gmra.mrb[0].mxu0 %v5360
      %v5543 = vpop.f32.mrb[0].mxu0
      %v5544 = vadd.f32 0.0, %v5543
      %v5545 = vpop.f32.mrb[0].mxu0
      %v5546 = vpop.f32.mrb[0].mxu0
      %v5547 = vadd.f32 0.0, %v5546
      %v5548 = vpop.f32.mrb[0].mxu0
      %5549 = vmatprep.mubr.bf16.mxu0 0
      %5550 = vmatmul.mubr.bf16.gmra.mrb[0].mxu0 %v5361
      %v5551 = vpop.f32.mrb[0].mxu0
      %v5552 = vadd.f32 0.0, %v5551
      %v5553 = vpop.f32.mrb[0].mxu0
      %v5554 = vpop.f32.mrb[0].mxu0
      %v5555 = vadd.f32 0.0, %v5554
      %v5556 = vpop.f32.mrb[0].mxu0
      %5557 = vmatprep.mubr.bf16.mxu0 0
      %5558 = vmatmul.mubr.bf16.gmra.mrb[0].mxu0 %v5362
      %v5559 = vpop.f32.mrb[0].mxu0
      %v5560 = vadd.f32 0.0, %v5559
      %v5561 = vpop.f32.mrb[0].mxu0
      %v5562 = vpop.f32.mrb[0].mxu0
      %v5563 = vadd.f32 0.0, %v5562
      %v5564 = vpop.f32.mrb[0].mxu0
      %5565 = vmatprep.mubr.bf16.mxu0 0
      %5566 = vmatmul.mubr.bf16.gmra.mrb[0].mxu0 %v5363
      %v5567 = vpop.f32.mrb[0].mxu0
      %v5568 = vadd.f32 0.0, %v5567
      %v5569 = vpop.f32.mrb[0].mxu0
      %v5570 = vpop.f32.mrb[0].mxu0
      %v5571 = vadd.f32 0.0, %v5570
      %v5572 = vpop.f32.mrb[0].mxu0
      %5573 = vdwg.mxu0
      %v5574 = vadd.f32 %v5294, %v5464
      %v5575 = vadd.f32 %v5295, %v5467
      %v5576 = vadd.f32 %v5296, %v5472
      %v5577 = vadd.f32 %v5297, %v5475
      %v5578 = vadd.f32 %v5298, %v5480
      %v5579 = vadd.f32 %v5299, %v5483
      %v5580 = vadd.f32 %v5300, %v5488
      %v5581 = vadd.f32 %v5301, %v5491
      %v5582 = vadd.f32 %v5302, %v5496
      %v5583 = vadd.f32 %v5303, %v5499
      %v5584 = vadd.f32 %v5304, %v5504
      %v5585 = vadd.f32 %v5305, %v5507
      %v5586 = vadd.f32 %v5306, %v5512
      %v5587 = vadd.f32 %v5307, %v5515
      %v5588 = vadd.f32 %v5308, %v5520
      %v5589 = vadd.f32 %v5309, %v5523
      %v5590 = vadd.f32 %v5310, %v5528
      %v5591 = vadd.f32 %v5311, %v5531
      %v5592 = vadd.f32 %v5312, %v5536
      %v5593 = vadd.f32 %v5313, %v5539
      %v5594 = vadd.f32 %v5314, %v5544
      %v5595 = vadd.f32 %v5315, %v5547
      %v5596 = vadd.f32 %v5316, %v5552
      %v5597 = vadd.f32 %v5317, %v5555
      %v5598 = vadd.f32 %v5318, %v5560
      %v5599 = vadd.f32 %v5319, %v5563
      %v5600 = vadd.f32 %v5320, %v5568
      %v5601 = vadd.f32 %v5321, %v5571
      %v5602 = vld [vmem:[#allocation3 + $0x29] sm:$0xff]
      %v5603 = vld [vmem:[#allocation3 + $0x31] sm:$0xff]
      %v5604 = vld [vmem:[#allocation3 + $0x39] sm:$0xff]
      %v5605 = vld [vmem:[#allocation3 + $0x41] sm:$0xff]
      %v5606 = vld [vmem:[#allocation3 + $0x49] sm:$0xff]
      %v5607 = vld [vmem:[#allocation3 + $0x51] sm:$0xff]
      %v5608 = vld [vmem:[#allocation3 + $0x59] sm:$0xff]
      %v5609 = vld [vmem:[#allocation3 + $0x61] sm:$0xff]
      %v5610 = vld [vmem:[#allocation3 + $0x69] sm:$0xff]
      %v5611 = vld [vmem:[#allocation3 + $0x71] sm:$0xff]
      %v5612 = vld [vmem:[#allocation3 + $0x79] sm:$0xff]
      %v5613 = vld [vmem:[#allocation3 + $0x81] sm:$0xff]
      %v5614 = vld [vmem:[#allocation3 + $0x89] sm:$0xff]
      %v5615 = vld [vmem:[#allocation3 + $0x91] sm:$0xff]
      %v5616 = vld [vmem:[#allocation3 + $0x99] sm:$0xff]
      %v5617 = vld [vmem:[#allocation3 + $0xa1] sm:$0xff]
      %v5618 = vld [vmem:[#allocation3 + $0xa9] sm:$0xff]
      %v5619 = vld [vmem:[#allocation3 + $0xb1] sm:$0xff]
      %v5620 = vld [vmem:[#allocation3 + $0xb9] sm:$0xff]
      %v5621 = vld [vmem:[#allocation3 + $0xc1] sm:$0xff]
      %v5622 = vld [vmem:[#allocation3 + $0xc9] sm:$0xff]
      %v5623 = vld [vmem:[#allocation3 + $0xd1] sm:$0xff]
      %v5624 = vld [vmem:[#allocation3 + $0xd9] sm:$0xff]
      %v5625 = vld [vmem:[#allocation3 + $0xe1] sm:$0xff]
      %v5626 = vld [vmem:[#allocation3 + $0xe9] sm:$0xff]
      %v5627 = vld [vmem:[#allocation3 + $0xf1] sm:$0xff]
      %v5628 = vld [vmem:[#allocation3 + $0xf9] sm:$0xff]
      %v5629 = vld [vmem:[#allocation3 + $0x101] sm:$0xff]
      %v5630 = vpack.c.bf16 %v5603, %v5602
      %v5631 = vpack.c.bf16 %v5605, %v5604
      %v5632 = vpack.c.bf16 %v5607, %v5606
      %v5633 = vpack.c.bf16 %v5609, %v5608
      %v5634 = vpack.c.bf16 %v5611, %v5610
      %v5635 = vpack.c.bf16 %v5613, %v5612
      %v5636 = vpack.c.bf16 %v5615, %v5614
      %v5637 = vpack.c.bf16 %v5617, %v5616
      %v5638 = vpack.c.bf16 %v5619, %v5618
      %v5639 = vpack.c.bf16 %v5621, %v5620
      %v5640 = vpack.c.bf16 %v5623, %v5622
      %v5641 = vpack.c.bf16 %v5625, %v5624
      %v5642 = vpack.c.bf16 %v5627, %v5626
      %v5643 = vpack.c.bf16 %v5629, %v5628
      %s5644 = scalar_lea.vmem %s4, 512
      %v5645 = vld [vmem:[%s5644] sm:$0xf]
      %v5646 = vld [vmem:[%s5644 + $0x4] sm:$0xf]
      %v5647 = vld [vmem:[%s5644 + $0x8] sm:$0xf]
      %v5648 = vld [vmem:[%s5644 + $0xc] sm:$0xf]
      %v5649 = vld [vmem:[%s5644 + $0x10] sm:$0xf]
      %v5650 = vld [vmem:[%s5644 + $0x14] sm:$0xf]
      %v5651 = vld [vmem:[%s5644 + $0x18] sm:$0xf]
      %v5652 = vld [vmem:[%s5644 + $0x1c] sm:$0xf]
      %v5653 = vld [vmem:[%s5644 + $0x20] sm:$0xf]
      %v5654 = vld [vmem:[%s5644 + $0x24] sm:$0xf]
      %v5655 = vld [vmem:[%s5644 + $0x28] sm:$0xf]
      %v5656 = vld [vmem:[%s5644 + $0x2c] sm:$0xf]
      %v5657 = vld [vmem:[%s5644 + $0x30] sm:$0xf]
      %v5658 = vld [vmem:[%s5644 + $0x34] sm:$0xf]
      %v5659 = vld [vmem:[%s5644 + $0x38] sm:$0xf]
      %v5660 = vld [vmem:[%s5644 + $0x3c] sm:$0xf]
      %v5677 = vunpack.c.l.b16 %v5645
      %v5678 = vunpack.c.l.b16 %v5646
      %v5679 = vunpack.c.l.b16 %v5647
      %v5680 = vunpack.c.l.b16 %v5648
      %v5681 = vunpack.c.l.b16 %v5649
      %v5682 = vunpack.c.l.b16 %v5650
      %v5683 = vunpack.c.l.b16 %v5651
      %v5684 = vunpack.c.l.b16 %v5652
      %v5685 = vunpack.c.l.b16 %v5653
      %v5686 = vunpack.c.l.b16 %v5654
      %v5687 = vunpack.c.l.b16 %v5655
      %v5688 = vunpack.c.l.b16 %v5656
      %v5689 = vunpack.c.l.b16 %v5657
      %v5690 = vunpack.c.l.b16 %v5658
      %v5691 = vunpack.c.l.b16 %v5659
      %v5692 = vunpack.c.l.b16 %v5660
      %v5693 = vpack.c.b16 %v5678, %v5677
      %v5694 = vpack.c.b16 %v5680, %v5679
      %v5695 = vpack.c.b16 %v5682, %v5681
      %v5696 = vpack.c.b16 %v5684, %v5683
      %v5697 = vpack.c.b16 %v5686, %v5685
      %v5698 = vpack.c.b16 %v5688, %v5687
      %v5699 = vpack.c.b16 %v5690, %v5689
      %v5700 = vpack.c.b16 %v5692, %v5691
      %5709 = vmatprep.subr.bf16.mxu0 0
      %5710 = vmatpush1.bf16.msra.mxu0 %v5693
      %5711 = vmatprep.subr.bf16.mxu0 0
      %5712 = vmatpush1.bf16.msra.mxu0 %v5694
      %5713 = vmatprep.subr.bf16.mxu0 0
      %5714 = vmatpush1.bf16.msra.mxu0 %v5695
      %5715 = vmatprep.subr.bf16.mxu0 0
      %5716 = vmatpush1.bf16.msra.mxu0 %v5696
      %5717 = vmatprep.subr.bf16.mxu0 0
      %5718 = vmatpush1.bf16.msra.mxu0 %v5697
      %5719 = vmatprep.subr.bf16.mxu0 0
      %5720 = vmatpush1.bf16.msra.mxu0 %v5698
      %5721 = vmatprep.subr.bf16.mxu0 0
      %5722 = vmatpush1.bf16.msra.mxu0 %v5699
      %5723 = vmatprep.subr.bf16.mxu0 0
      %5724 = vmatpush1.bf16.msra.mxu0 %v5700
      %5725 = vmatprep.subr.bf16.mxu0 0
      %5726 = vmatpush1.bf16.msra.mxu0 0
      %5727 = vmatprep.subr.bf16.mxu0 0
      %5728 = vmatpush1.bf16.msra.mxu0 0
      %5729 = vmatprep.subr.bf16.mxu0 0
      %5730 = vmatpush1.bf16.msra.mxu0 0
      %5731 = vmatprep.subr.bf16.mxu0 0
      %5732 = vmatpush1.bf16.msra.mxu0 0
      %5733 = vmatprep.subr.bf16.mxu0 0
      %5734 = vmatpush1.bf16.msra.mxu0 0
      %5735 = vmatprep.subr.bf16.mxu0 0
      %5736 = vmatpush1.bf16.msra.mxu0 0
      %5737 = vmatprep.subr.bf16.mxu0 0
      %5738 = vmatpush1.bf16.msra.mxu0 0
      %5739 = vmatprep.subr.bf16.mxu0 0
      %5740 = vmatpush1.bf16.msra.mxu0 0
      %5741 = vmatprep.mubr.bf16.mxu0 0
      %5742 = vmatmul.mubr.bf16.gmra.mrb[0].mxu0 %v5630
      %v5743 = vpop.f32.mrb[0].mxu0
      %v5744 = vadd.f32 0.0, %v5743
      %v5745 = vpop.f32.mrb[0].mxu0
      %v5746 = vpop.f32.mrb[0].mxu0
      %v5747 = vadd.f32 0.0, %v5746
      %v5748 = vpop.f32.mrb[0].mxu0
      %5749 = vmatprep.mubr.bf16.mxu0 0
      %5750 = vmatmul.mubr.bf16.gmra.mrb[0].mxu0 %v5631
      %v5751 = vpop.f32.mrb[0].mxu0
      %v5752 = vadd.f32 0.0, %v5751
      %v5753 = vpop.f32.mrb[0].mxu0
      %v5754 = vpop.f32.mrb[0].mxu0
      %v5755 = vadd.f32 0.0, %v5754
      %v5756 = vpop.f32.mrb[0].mxu0
      %5757 = vmatprep.mubr.bf16.mxu0 0
      %5758 = vmatmul.mubr.bf16.gmra.mrb[0].mxu0 %v5632
      %v5759 = vpop.f32.mrb[0].mxu0
      %v5760 = vadd.f32 0.0, %v5759
      %v5761 = vpop.f32.mrb[0].mxu0
      %v5762 = vpop.f32.mrb[0].mxu0
      %v5763 = vadd.f32 0.0, %v5762
      %v5764 = vpop.f32.mrb[0].mxu0
      %5765 = vmatprep.mubr.bf16.mxu0 0
      %5766 = vmatmul.mubr.bf16.gmra.mrb[0].mxu0 %v5633
      %v5767 = vpop.f32.mrb[0].mxu0
      %v5768 = vadd.f32 0.0, %v5767
      %v5769 = vpop.f32.mrb[0].mxu0
      %v5770 = vpop.f32.mrb[0].mxu0
      %v5771 = vadd.f32 0.0, %v5770
      %v5772 = vpop.f32.mrb[0].mxu0
      %5773 = vmatprep.mubr.bf16.mxu0 0
      %5774 = vmatmul.mubr.bf16.gmra.mrb[0].mxu0 %v5634
      %v5775 = vpop.f32.mrb[0].mxu0
      %v5776 = vadd.f32 0.0, %v5775
      %v5777 = vpop.f32.mrb[0].mxu0
      %v5778 = vpop.f32.mrb[0].mxu0
      %v5779 = vadd.f32 0.0, %v5778
      %v5780 = vpop.f32.mrb[0].mxu0
      %5781 = vmatprep.mubr.bf16.mxu0 0
      %5782 = vmatmul.mubr.bf16.gmra.mrb[0].mxu0 %v5635
      %v5783 = vpop.f32.mrb[0].mxu0
      %v5784 = vadd.f32 0.0, %v5783
      %v5785 = vpop.f32.mrb[0].mxu0
      %v5786 = vpop.f32.mrb[0].mxu0
      %v5787 = vadd.f32 0.0, %v5786
      %v5788 = vpop.f32.mrb[0].mxu0
      %5789 = vmatprep.mubr.bf16.mxu0 0
      %5790 = vmatmul.mubr.bf16.gmra.mrb[0].mxu0 %v5636
      %v5791 = vpop.f32.mrb[0].mxu0
      %v5792 = vadd.f32 0.0, %v5791
      %v5793 = vpop.f32.mrb[0].mxu0
      %v5794 = vpop.f32.mrb[0].mxu0
      %v5795 = vadd.f32 0.0, %v5794
      %v5796 = vpop.f32.mrb[0].mxu0
      %5797 = vmatprep.mubr.bf16.mxu0 0
      %5798 = vmatmul.mubr.bf16.gmra.mrb[0].mxu0 %v5637
      %v5799 = vpop.f32.mrb[0].mxu0
      %v5800 = vadd.f32 0.0, %v5799
      %v5801 = vpop.f32.mrb[0].mxu0
      %v5802 = vpop.f32.mrb[0].mxu0
      %v5803 = vadd.f32 0.0, %v5802
      %v5804 = vpop.f32.mrb[0].mxu0
      %5805 = vmatprep.mubr.bf16.mxu0 0
      %5806 = vmatmul.mubr.bf16.gmra.mrb[0].mxu0 %v5638
      %v5807 = vpop.f32.mrb[0].mxu0
      %v5808 = vadd.f32 0.0, %v5807
      %v5809 = vpop.f32.mrb[0].mxu0
      %v5810 = vpop.f32.mrb[0].mxu0
      %v5811 = vadd.f32 0.0, %v5810
      %v5812 = vpop.f32.mrb[0].mxu0
      %5813 = vmatprep.mubr.bf16.mxu0 0
      %5814 = vmatmul.mubr.bf16.gmra.mrb[0].mxu0 %v5639
      %v5815 = vpop.f32.mrb[0].mxu0
      %v5816 = vadd.f32 0.0, %v5815
      %v5817 = vpop.f32.mrb[0].mxu0
      %v5818 = vpop.f32.mrb[0].mxu0
      %v5819 = vadd.f32 0.0, %v5818
      %v5820 = vpop.f32.mrb[0].mxu0
      %5821 = vmatprep.mubr.bf16.mxu0 0
      %5822 = vmatmul.mubr.bf16.gmra.mrb[0].mxu0 %v5640
      %v5823 = vpop.f32.mrb[0].mxu0
      %v5824 = vadd.f32 0.0, %v5823
      %v5825 = vpop.f32.mrb[0].mxu0
      %v5826 = vpop.f32.mrb[0].mxu0
      %v5827 = vadd.f32 0.0, %v5826
      %v5828 = vpop.f32.mrb[0].mxu0
      %5829 = vmatprep.mubr.bf16.mxu0 0
      %5830 = vmatmul.mubr.bf16.gmra.mrb[0].mxu0 %v5641
      %v5831 = vpop.f32.mrb[0].mxu0
      %v5832 = vadd.f32 0.0, %v5831
      %v5833 = vpop.f32.mrb[0].mxu0
      %v5834 = vpop.f32.mrb[0].mxu0
      %v5835 = vadd.f32 0.0, %v5834
      %v5836 = vpop.f32.mrb[0].mxu0
      %5837 = vmatprep.mubr.bf16.mxu0 0
      %5838 = vmatmul.mubr.bf16.gmra.mrb[0].mxu0 %v5642
      %v5839 = vpop.f32.mrb[0].mxu0
      %v5840 = vadd.f32 0.0, %v5839
      %v5841 = vpop.f32.mrb[0].mxu0
      %v5842 = vpop.f32.mrb[0].mxu0
      %v5843 = vadd.f32 0.0, %v5842
      %v5844 = vpop.f32.mrb[0].mxu0
      %5845 = vmatprep.mubr.bf16.mxu0 0
      %5846 = vmatmul.mubr.bf16.gmra.mrb[0].mxu0 %v5643
      %v5847 = vpop.f32.mrb[0].mxu0
      %v5848 = vadd.f32 0.0, %v5847
      %v5849 = vpop.f32.mrb[0].mxu0
      %v5850 = vpop.f32.mrb[0].mxu0
      %v5851 = vadd.f32 0.0, %v5850
      %v5852 = vpop.f32.mrb[0].mxu0
      %5853 = vdwg.mxu0
      %v5854 = vadd.f32 %v5574, %v5744
      %v5855 = vadd.f32 %v5575, %v5747
      %v5856 = vadd.f32 %v5576, %v5752
      %v5857 = vadd.f32 %v5577, %v5755
      %v5858 = vadd.f32 %v5578, %v5760
      %v5859 = vadd.f32 %v5579, %v5763
      %v5860 = vadd.f32 %v5580, %v5768
      %v5861 = vadd.f32 %v5581, %v5771
      %v5862 = vadd.f32 %v5582, %v5776
      %v5863 = vadd.f32 %v5583, %v5779
      %v5864 = vadd.f32 %v5584, %v5784
      %v5865 = vadd.f32 %v5585, %v5787
      %v5866 = vadd.f32 %v5586, %v5792
      %v5867 = vadd.f32 %v5587, %v5795
      %v5868 = vadd.f32 %v5588, %v5800
      %v5869 = vadd.f32 %v5589, %v5803
      %v5870 = vadd.f32 %v5590, %v5808
      %v5871 = vadd.f32 %v5591, %v5811
      %v5872 = vadd.f32 %v5592, %v5816
      %v5873 = vadd.f32 %v5593, %v5819
      %v5874 = vadd.f32 %v5594, %v5824
      %v5875 = vadd.f32 %v5595, %v5827
      %v5876 = vadd.f32 %v5596, %v5832
      %v5877 = vadd.f32 %v5597, %v5835
      %v5878 = vadd.f32 %v5598, %v5840
      %v5879 = vadd.f32 %v5599, %v5843
      %v5880 = vadd.f32 %v5600, %v5848
      %v5881 = vadd.f32 %v5601, %v5851
      %v5882 = vld [vmem:[%s5] sm:$0x1]
      %v5884 = vlaneseq
      %v5885 = vshrl.u32 %v5884, 7
      %v5886 = vsub.s32 0, %v5885
      %v5887 = vrot.slane %v5882, %v5886
      %v5889 = vadd.f32 %v5854, %v5887
      %v5890 = vadd.f32 %v5855, %v5887
      %v5891 = vadd.f32 %v5856, %v5887
      %v5892 = vadd.f32 %v5857, %v5887
      %v5893 = vadd.f32 %v5858, %v5887
      %v5894 = vadd.f32 %v5859, %v5887
      %v5895 = vadd.f32 %v5860, %v5887
      %v5896 = vadd.f32 %v5861, %v5887
      %v5897 = vadd.f32 %v5862, %v5887
      %v5898 = vadd.f32 %v5863, %v5887
      %v5899 = vadd.f32 %v5864, %v5887
      %v5900 = vadd.f32 %v5865, %v5887
      %v5901 = vadd.f32 %v5866, %v5887
      %v5902 = vadd.f32 %v5867, %v5887
      %v5903 = vadd.f32 %v5868, %v5887
      %v5904 = vadd.f32 %v5869, %v5887
      %v5905 = vadd.f32 %v5870, %v5887
      %v5906 = vadd.f32 %v5871, %v5887
      %v5907 = vadd.f32 %v5872, %v5887
      %v5908 = vadd.f32 %v5873, %v5887
      %v5909 = vadd.f32 %v5874, %v5887
      %v5910 = vadd.f32 %v5875, %v5887
      %v5911 = vadd.f32 %v5876, %v5887
      %v5912 = vadd.f32 %v5877, %v5887
      %v5913 = vadd.f32 %v5878, %v5887
      %v5914 = vadd.f32 %v5879, %v5887
      %v5915 = vadd.f32 %v5880, %v5887
      %v5916 = vadd.f32 %v5881, %v5887
      %v5917 = vld [vmem:[#allocation2 + $0x18] sm:$0xff]
      %v5918 = vld [vmem:[#allocation2 + $0x20] sm:$0xff]
      %v5919 = vld [vmem:[#allocation2 + $0x28] sm:$0xff]
      %v5920 = vld [vmem:[#allocation2 + $0x30] sm:$0xff]
      %v5921 = vld [vmem:[#allocation2 + $0x38] sm:$0xff]
      %v5922 = vld [vmem:[#allocation2 + $0x40] sm:$0xff]
      %v5923 = vld [vmem:[#allocation2 + $0x48] sm:$0xff]
      %v5924 = vld [vmem:[#allocation2 + $0x50] sm:$0xff]
      %v5925 = vld [vmem:[#allocation2 + $0x58] sm:$0xff]
      %v5926 = vld [vmem:[#allocation2 + $0x60] sm:$0xff]
      %v5927 = vld [vmem:[#allocation2 + $0x68] sm:$0xff]
      %v5928 = vld [vmem:[#allocation2 + $0x70] sm:$0xff]
      %v5929 = vld [vmem:[#allocation2 + $0x78] sm:$0xff]
      %v5930 = vld [vmem:[#allocation2 + $0x80] sm:$0xff]
      %v5931 = vld [vmem:[#allocation2 + $0x88] sm:$0xff]
      %v5932 = vld [vmem:[#allocation2 + $0x90] sm:$0xff]
      %v5933 = vld [vmem:[#allocation2 + $0x98] sm:$0xff]
      %v5934 = vld [vmem:[#allocation2 + $0xa0] sm:$0xff]
      %v5935 = vld [vmem:[#allocation2 + $0xa8] sm:$0xff]
      %v5936 = vld [vmem:[#allocation2 + $0xb0] sm:$0xff]
      %v5937 = vld [vmem:[#allocation2 + $0xb8] sm:$0xff]
      %v5938 = vld [vmem:[#allocation2 + $0xc0] sm:$0xff]
      %v5939 = vld [vmem:[#allocation2 + $0xc8] sm:$0xff]
      %v5940 = vld [vmem:[#allocation2 + $0xd0] sm:$0xff]
      %v5941 = vld [vmem:[#allocation2 + $0xd8] sm:$0xff]
      %v5942 = vld [vmem:[#allocation2 + $0xe0] sm:$0xff]
      %v5943 = vld [vmem:[#allocation2 + $0xe8] sm:$0xff]
      %v5944 = vld [vmem:[#allocation2 + $0xf0] sm:$0xff]
      %v5945 = vadd.f32 %v5889, %v5917
      %v5946 = vadd.f32 %v5890, %v5918
      %v5947 = vadd.f32 %v5891, %v5919
      %v5948 = vadd.f32 %v5892, %v5920
      %v5949 = vadd.f32 %v5893, %v5921
      %v5950 = vadd.f32 %v5894, %v5922
      %v5951 = vadd.f32 %v5895, %v5923
      %v5952 = vadd.f32 %v5896, %v5924
      %v5953 = vadd.f32 %v5897, %v5925
      %v5954 = vadd.f32 %v5898, %v5926
      %v5955 = vadd.f32 %v5899, %v5927
      %v5956 = vadd.f32 %v5900, %v5928
      %v5957 = vadd.f32 %v5901, %v5929
      %v5958 = vadd.f32 %v5902, %v5930
      %v5959 = vadd.f32 %v5903, %v5931
      %v5960 = vadd.f32 %v5904, %v5932
      %v5961 = vadd.f32 %v5905, %v5933
      %v5962 = vadd.f32 %v5906, %v5934
      %v5963 = vadd.f32 %v5907, %v5935
      %v5964 = vadd.f32 %v5908, %v5936
      %v5965 = vadd.f32 %v5909, %v5937
      %v5966 = vadd.f32 %v5910, %v5938
      %v5967 = vadd.f32 %v5911, %v5939
      %v5968 = vadd.f32 %v5912, %v5940
      %v5969 = vadd.f32 %v5913, %v5941
      %v5970 = vadd.f32 %v5914, %v5942
      %v5971 = vadd.f32 %v5915, %v5943
      %v5972 = vadd.f32 %v5916, %v5944
      %v5973 = vmax.f32 %v5945, 0.0
      %v5974 = vmax.f32 %v5946, 0.0
      %v5975 = vmax.f32 %v5947, 0.0
      %v5976 = vmax.f32 %v5948, 0.0
      %v5977 = vmax.f32 %v5949, 0.0
      %v5978 = vmax.f32 %v5950, 0.0
      %v5979 = vmax.f32 %v5951, 0.0
      %v5980 = vmax.f32 %v5952, 0.0
      %v5981 = vmax.f32 %v5953, 0.0
      %v5982 = vmax.f32 %v5954, 0.0
      %v5983 = vmax.f32 %v5955, 0.0
      %v5984 = vmax.f32 %v5956, 0.0
      %v5985 = vmax.f32 %v5957, 0.0
      %v5986 = vmax.f32 %v5958, 0.0
      %v5987 = vmax.f32 %v5959, 0.0
      %v5988 = vmax.f32 %v5960, 0.0
      %v5989 = vmax.f32 %v5961, 0.0
      %v5990 = vmax.f32 %v5962, 0.0
      %v5991 = vmax.f32 %v5963, 0.0
      %v5992 = vmax.f32 %v5964, 0.0
      %v5993 = vmax.f32 %v5965, 0.0
      %v5994 = vmax.f32 %v5966, 0.0
      %v5995 = vmax.f32 %v5967, 0.0
      %v5996 = vmax.f32 %v5968, 0.0
      %v5997 = vmax.f32 %v5969, 0.0
      %v5998 = vmax.f32 %v5970, 0.0
      %v5999 = vmax.f32 %v5971, 0.0
      %v6000 = vmax.f32 %v5972, 0.0
      %6001 = vst [vmem:[%s278] sm:$0xff] %v5973
      %6002 = vst [vmem:[%s278 + $0x8] sm:$0xff] %v5974
      %6003 = vst [vmem:[%s278 + $0x10] sm:$0xff] %v5975
      %6004 = vst [vmem:[%s278 + $0x18] sm:$0xff] %v5976
      %6005 = vst [vmem:[%s278 + $0x20] sm:$0xff] %v5977
      %6006 = vst [vmem:[%s278 + $0x28] sm:$0xff] %v5978
      %6007 = vst [vmem:[%s278 + $0x30] sm:$0xff] %v5979
      %6008 = vst [vmem:[%s278 + $0x38] sm:$0xff] %v5980
      %6009 = vst [vmem:[%s278 + $0x40] sm:$0xff] %v5981
      %6010 = vst [vmem:[%s278 + $0x48] sm:$0xff] %v5982
      %6011 = vst [vmem:[%s278 + $0x50] sm:$0xff] %v5983
      %6012 = vst [vmem:[%s278 + $0x58] sm:$0xff] %v5984
      %6013 = vst [vmem:[%s278 + $0x60] sm:$0xff] %v5985
      %6014 = vst [vmem:[%s278 + $0x68] sm:$0xff] %v5986
      %6015 = vst [vmem:[%s278 + $0x70] sm:$0xff] %v5987
      %6016 = vst [vmem:[%s278 + $0x78] sm:$0xff] %v5988
      %6017 = vst [vmem:[%s278 + $0x80] sm:$0xff] %v5989
      %6018 = vst [vmem:[%s278 + $0x88] sm:$0xff] %v5990
      %6019 = vst [vmem:[%s278 + $0x90] sm:$0xff] %v5991
      %6020 = vst [vmem:[%s278 + $0x98] sm:$0xff] %v5992
      %6021 = vst [vmem:[%s278 + $0xa0] sm:$0xff] %v5993
      %6022 = vst [vmem:[%s278 + $0xa8] sm:$0xff] %v5994
      %6023 = vst [vmem:[%s278 + $0xb0] sm:$0xff] %v5995
      %6024 = vst [vmem:[%s278 + $0xb8] sm:$0xff] %v5996
      %6025 = vst [vmem:[%s278 + $0xc0] sm:$0xff] %v5997
      %6026 = vst [vmem:[%s278 + $0xc8] sm:$0xff] %v5998
      %6027 = vst [vmem:[%s278 + $0xd0] sm:$0xff] %v5999
      %6028 = vst [vmem:[%s278 + $0xd8] sm:$0xff] %v6000
      %p6029 = scmp.lt.s32.totalorder %s18, 1
      %s6030 = scalar_select %p6029, %s18, 1
      %s6031 = smul.addr %s6030, 28
      %s6032 = smul.addr %s6031, 8
      %s6033 = scalar_lea.vmem %s7, %s6032
      // Predicated region
      $region49: #{one_image_net_forward.1} parent=47 // pred_check
        %p6034 = pneg %p188
      $region50: #{one_image_net_forward.1} parent=47 // pred_check_branch
        %6036 = sbr.rel (%p6034) target = $region52
      $region51: #{one_image_net_forward.1} parent=47 // pred_region
        _
      $region52: #{one_image_net_forward.1} parent=47 // pred_fallthru
        _
    $region48: #{one_image_net_forward.1} parent=5 // pred_fallthru
      _
    %p6037 = scmp.le.s32.totalorder 2, %s13
    // Predicated region
    $region53: #{one_image_net_forward.1} parent=5 // pred_check
      %p6038 = pneg %p6037
    $region54: #{one_image_net_forward.1} parent=5 // pred_check_branch
      %6040 = sbr.rel (%p6038) target = $region56
    $region55: #{one_image_net_forward.1} parent=5 // pred_region
      %s6041 = ssub.s32 %s13, 2
      // Predicated region
      $region57: #{one_image_net_forward.1} parent=55 // pred_check
        %p6042 = pneg %p194
      $region58: #{one_image_net_forward.1} parent=55 // pred_check_branch
        %6044 = sbr.rel (%p6042) target = $region60
      $region59: #{one_image_net_forward.1} parent=55 // pred_region
        %p6045 = scmp.lt.s32.totalorder %s19, 1
        %s6046 = scalar_select %p6045, %s19, 1
        %s6047 = smul.addr %s6046, 28
        %s6048 = smul.addr %s6047, 8
        %s6049 = scalar_lea.vmem %s7, %s6048
      $region60: #{one_image_net_forward.1} parent=55 // pred_fallthru
        _
    $region56: #{one_image_net_forward.1} parent=5 // pred_fallthru
      _
  $region6: #{one_image_net_forward.1} parent=0 // loop_footer
    %s17 = sadd.s32 1, %s13
  $region7: #{one_image_net_forward.1} parent=0 // loop_footer_branch
    %12 = sbr.rel target = $region3
  $region8: #{one_image_net_forward.1} parent=0 // loop_exit
    _

</llo_original>
